<compile_context>
chip_gen: v7x
topology: tpu7x:2x2x1
jax: 0.10.0
libtpu: 0.0.40
codegen_flags: <defaults>
</compile_context>

<pallas_src>
import functools

import jax
import jax.numpy as jnp
from jax import lax
from jax.experimental import pallas as pl
from jax.experimental.pallas import tpu as pltpu

_VMEM_LIMIT_BYTES = 32 * 1024 * 1024   # explicit scoped-VMEM limit (all gens)
_VMEM_BUDGET_BYTES = 24 * 1024 * 1024  # sizing budget (headroom under the limit)


def _round_up(n, m):
    return ((n + m - 1) // m) * m


def _pick_batch_tile(batch, in_features, block_b, x_itemsize):
    """Pick the batch tile TB (multiple of 128) from a VMEM byte budget."""
    # Guard: user-supplied block_b must be a multiple of 128 (lane dim of the
    # (1, TB) output block / sublane dim of the x block).
    block_b = _round_up(max(int(block_b), 128), 128)

    # Conservative per-batch-row VMEM bytes: double-buffered x tile, in-kernel
    # bf16 copy of x, f32+bf16 hidden activations (128- and 64-wide), the
    # final-layer product, and the double-buffered (1, TB) f32 output.
    per_row = 2 * in_features * x_itemsize + 2 * in_features + 1312
    # Resident weights/biases, counted at 2x (default double buffering).
    weight_bytes = 2 * (128 * in_features * 2 + 128 * 4
                        + 64 * 128 * 2 + 64 * 4 + 64 * 4 + 4)
    budget = max(_VMEM_BUDGET_BYTES - weight_bytes, 128 * per_row)
    vmem_cap = max((budget // per_row) // 128 * 128, 128)

    tb = min(block_b, vmem_cap)
    if batch > 128:
        # Keep >= 2 grid steps so the "parallel" batch axis shards across both
        # TensorCores on v7x (no effect on single-core v5e/v6e).
        tb = min(tb, _round_up(pl.cdiv(batch, 2), 128))
    return max(tb, 128)


def mlp_kernel(x_ref, w1_ref, b1_ref, w2_ref, b2_ref, w3_ref, b3_ref, o_ref):
    # In-kernel bf16 cast of the x tile (no extra HBM pass in the wrapper).
    xb = x_ref[...].astype(jnp.bfloat16)

    # Layer 1: contract the feature axis of W1 (128, in) with the feature axis
    # of the x tile (TB, in) -> (128, TB).  Batch lives on the lane axis from
    # here on; the MXU handles the transposed-RHS contraction natively.
    h1 = lax.dot_general(
        w1_ref[...], xb,
        dimension_numbers=(((1,), (1,)), ((), ())),
        preferred_element_type=jnp.float32)
    h1 = jnp.maximum(h1 + b1_ref[...], 0.0)            # f32 epilogue, (128,1) bias
    # Dropout(0.2): identity at inference time.
    # TODO(synk): training-mode dropout (mask + 1/(1-p) scale) not implemented.

    # Layer 2: (64, 128) @ (128, TB) -> (64, TB), bf16 MXU, f32 accumulation.
    h2 = lax.dot_general(
        w2_ref[...], h1.astype(w2_ref.dtype),
        dimension_numbers=(((1,), (0,)), ((), ())),
        preferred_element_type=jnp.float32)
    h2 = jnp.maximum(h2 + b2_ref[...], 0.0)

    # Layer 3 (Linear(64, 1)): an N=1 matmul wastes the MXU -> broadcast
    # multiply on the VPU + sublane reduction (XLU), yielding a lane-dense
    # (1, TB) output block.
    out = jnp.sum(h2 * w3_ref[...], axis=0, keepdims=True) + b3_ref[...]
    o_ref[...] = out.astype(o_ref.dtype)


@functools.partial(jax.jit, static_argnames=("block_b",))
def simple_nn_forward(x, params, *, block_b=8192):
    """Forward pass of SimpleNN.  x: (B, in_features); params in PyTorch layout."""
    w1, b1, w2, b2, w3, b3 = params
    B, in_features = x.shape

    tb = _pick_batch_tile(B, in_features, block_b, x.dtype.itemsize)
    n_blocks = pl.cdiv(B, tb)
    b_pad = n_blocks * tb          # padded output extent only; x is NOT copied/padded
    grid = (n_blocks,)

    # Weights are tiny: cast once per call in the wrapper (bf16 MXU operands).
    w1b = w1.astype(jnp.bfloat16)                   # (128, in)  PyTorch (out,in) layout
    w2b = w2.astype(jnp.bfloat16)                   # (64, 128)
    b1c = b1.reshape(-1, 1).astype(jnp.float32)     # (128, 1)
    b2c = b2.reshape(-1, 1).astype(jnp.float32)     # (64, 1)
    w3c = w3.reshape(-1, 1).astype(jnp.float32)     # (64, 1)  (f32: VPU/XLU path)
    b3c = b3.reshape(1, 1).astype(jnp.float32)      # (1, 1)

    # Weights/biases: full-extent blocks with constant index_map -> loaded once,
    # VMEM-resident across all grid steps (no per-step re-DMA).
    resident = lambda a: pl.BlockSpec(a.shape, lambda i: (0, 0))

    flops = 2 * b_pad * (in_features * 128 + 128 * 64 + 64)
    bytes_accessed = (x.size * x.dtype.itemsize
                      + (w1b.size + w2b.size) * 2
                      + (b1c.size + b2c.size + w3c.size + b3c.size) * 4
                      + b_pad * 4)

    out = pl.pallas_call(
        mlp_kernel,
        out_shape=jax.ShapeDtypeStruct((1, b_pad), jnp.float32),
        grid=grid,
        in_specs=[
            pl.BlockSpec((tb, in_features), lambda i: (i, 0)),   # x: batch-tiled, pipelined
            resident(w1b), resident(b1c),
            resident(w2b), resident(b2c),
            resident(w3c), resident(b3c),
        ],
        out_specs=pl.BlockSpec((1, tb), lambda i: (0, i)),        # lane-dense output slab
        compiler_params=pltpu.CompilerParams(
            dimension_semantics=("parallel",),
            vmem_limit_bytes=_VMEM_LIMIT_BYTES),
        cost_estimate=pl.CostEstimate(
            flops=flops, transcendentals=0, bytes_accessed=bytes_accessed),
    )(x, w1b, b1c, w2b, b2c, w3c, b3c)

    return out[0, :B].reshape(B, 1)


def init_params(key, input_size):
    # Matches SimpleNN's nn.Linear layers: PyTorch (out_features, in_features)
    # weight layout, U(-1/sqrt(fan_in), 1/sqrt(fan_in)) init, float32.
    ks = jax.random.split(key, 6)

    def lin(kw, kb, fan_in, fan_out):
        bound = 1.0 / jnp.sqrt(fan_in)
        w = jax.random.uniform(kw, (fan_out, fan_in), jnp.float32, -bound, bound)
        b = jax.random.uniform(kb, (fan_out,), jnp.float32, -bound, bound)
        return w, b

    w1, b1 = lin(ks[0], ks[1], input_size, 128)
    w2, b2 = lin(ks[2], ks[3], 128, 64)
    w3, b3 = lin(ks[4], ks[5], 64, 1)
    return (w1, b1, w2, b2, w3, b3)


def _reference(x, params):
    w1, b1, w2, b2, w3, b3 = params
    h1 = jnp.maximum(x @ w1.T + b1, 0.0)
    h2 = jnp.maximum(h1 @ w2.T + b2, 0.0)
    return h2 @ w3.T + b3


if __name__ == "__main__":
    key = jax.random.PRNGKey(0)
    kx, kx2, kp = jax.random.split(key, 3)

    input_size = 32
    params = init_params(kp, input_size)

    # Small single-block case (batch=8 -> one grid step).
    batch = 8
    x = jax.random.normal(kx, (batch, input_size), jnp.float32)
    out = simple_nn_forward(x, params)
    jax.block_until_ready(out)
    ref = _reference(x, params)
    assert out.shape == (batch, 1)
    # Kernel uses bf16 MXU operands -> loose tolerance vs f32 reference.
    assert jnp.allclose(out, ref, atol=2e-2, rtol=2e-2)

    # Multi-step case (batch=300: 2 grid steps, non-multiple-of-128 remainder
    # handled by the cdiv grid without padding x).
    batch2 = 300
    x2 = jax.random.normal(kx2, (batch2, input_size), jnp.float32)
    out2 = simple_nn_forward(x2, params)
    jax.block_until_ready(out2)
    ref2 = _reference(x2, params)
    assert out2.shape == (batch2, 1)
    assert jnp.allclose(out2, ref2, atol=2e-2, rtol=2e-2)

    print("KERNEL_OK")
</pallas_src>

<mosaic_0001>
module attributes {stable_mosaic.version = 11 : i64} {
  func.func @mlp_kernel(%arg0: i32, %arg1: memref<8192x32xf32, #tpu.memory_space<vmem>>, %arg2: memref<128x32xbf16, #tpu.memory_space<vmem>>, %arg3: memref<128x1xf32, #tpu.memory_space<vmem>>, %arg4: memref<64x128xbf16, #tpu.memory_space<vmem>>, %arg5: memref<64x1xf32, #tpu.memory_space<vmem>>, %arg6: memref<64x1xf32, #tpu.memory_space<vmem>>, %arg7: memref<1x1xf32, #tpu.memory_space<vmem>>, %arg8: memref<1x8192xf32, #tpu.memory_space<vmem>>) attributes {dimension_semantics = [#tpu.dimension_semantics<parallel>], iteration_bounds = array<i64: 1>, scalar_prefetch = 0 : i64, scratch_operands = 0 : i64, tpu.core_type = #tpu.core_type<tc>, window_params = [{transform_indices = @transform_0, window_bounds = array<i64: 8192, 32>}, {pipeline_mode = #tpu.pipeline_mode<synchronous>, transform_indices = @transform_1, window_bounds = array<i64: 128, 32>}, {pipeline_mode = #tpu.pipeline_mode<synchronous>, transform_indices = @transform_2, window_bounds = array<i64: 128, 1>}, {pipeline_mode = #tpu.pipeline_mode<synchronous>, transform_indices = @transform_3, window_bounds = array<i64: 64, 128>}, {pipeline_mode = #tpu.pipeline_mode<synchronous>, transform_indices = @transform_4, window_bounds = array<i64: 64, 1>}, {pipeline_mode = #tpu.pipeline_mode<synchronous>, transform_indices = @transform_5, window_bounds = array<i64: 64, 1>}, {pipeline_mode = #tpu.pipeline_mode<synchronous>, transform_indices = @transform_6, window_bounds = array<i64: 1, 1>}, {transform_indices = @transform_7, window_bounds = array<i64: 1, 8192>}]} {
    %c0 = arith.constant 0 : index
    %c0_0 = arith.constant 0 : index
    %0 = vector.load %arg1[%c0, %c0_0] : memref<8192x32xf32, #tpu.memory_space<vmem>>, vector<8192x32xf32>
    %1 = arith.truncf %0 : vector<8192x32xf32> to vector<8192x32xbf16>
    %c0_1 = arith.constant 0 : index
    %c0_2 = arith.constant 0 : index
    %2 = vector.load %arg2[%c0_1, %c0_2] : memref<128x32xbf16, #tpu.memory_space<vmem>>, vector<128x32xbf16>
    %cst = arith.constant dense<0.000000e+00> : vector<128x8192xf32>
    %3 = tpu.matmul %2, %1, %cst {dimension_numbers = #tpu.dot_dimension_numbers<[1], [1], [0], [0], [0, 0, 1, 0], [], []>} : vector<128x32xbf16>, vector<8192x32xbf16>, vector<128x8192xf32> -> vector<128x8192xf32>
    %c0_3 = arith.constant 0 : index
    %c0_4 = arith.constant 0 : index
    %4 = vector.load %arg3[%c0_3, %c0_4] : memref<128x1xf32, #tpu.memory_space<vmem>>, vector<128x1xf32>
    %5 = vector.broadcast %4 : vector<128x1xf32> to vector<128x8192xf32>
    %6 = arith.addf %3, %5 : vector<128x8192xf32>
    %cst_5 = arith.constant 0.000000e+00 : f32
    %7 = vector.broadcast %cst_5 : f32 to vector<128x8192xf32>
    %8 = arith.maximumf %6, %7 : vector<128x8192xf32>
    %c0_6 = arith.constant 0 : index
    %c0_7 = arith.constant 0 : index
    %9 = vector.load %arg4[%c0_6, %c0_7] : memref<64x128xbf16, #tpu.memory_space<vmem>>, vector<64x128xbf16>
    %10 = arith.truncf %8 : vector<128x8192xf32> to vector<128x8192xbf16>
    %cst_8 = arith.constant dense<0.000000e+00> : vector<64x8192xf32>
    %11 = tpu.matmul %9, %10, %cst_8 {dimension_numbers = #tpu.dot_dimension_numbers<[1], [0], [0], [1], [0, 0, 1, 1], [], []>} : vector<64x128xbf16>, vector<128x8192xbf16>, vector<64x8192xf32> -> vector<64x8192xf32>
    %c0_9 = arith.constant 0 : index
    %c0_10 = arith.constant 0 : index
    %12 = vector.load %arg5[%c0_9, %c0_10] : memref<64x1xf32, #tpu.memory_space<vmem>>, vector<64x1xf32>
    %13 = vector.broadcast %12 : vector<64x1xf32> to vector<64x8192xf32>
    %14 = arith.addf %11, %13 : vector<64x8192xf32>
    %cst_11 = arith.constant 0.000000e+00 : f32
    %15 = vector.broadcast %cst_11 : f32 to vector<64x8192xf32>
    %16 = arith.maximumf %14, %15 : vector<64x8192xf32>
    %c0_12 = arith.constant 0 : index
    %c0_13 = arith.constant 0 : index
    %17 = vector.load %arg6[%c0_12, %c0_13] : memref<64x1xf32, #tpu.memory_space<vmem>>, vector<64x1xf32>
    %18 = vector.broadcast %17 : vector<64x1xf32> to vector<64x8192xf32>
    %19 = arith.mulf %16, %18 : vector<64x8192xf32>
    %cst_14 = arith.constant dense<0.000000e+00> : vector<8192xf32>
    %20 = vector.multi_reduction <add>, %19, %cst_14 [0] : vector<64x8192xf32> to vector<8192xf32>
    %21 = vector.shape_cast %20 : vector<8192xf32> to vector<1x8192xf32>
    %c0_15 = arith.constant 0 : index
    %c0_16 = arith.constant 0 : index
    %22 = vector.load %arg7[%c0_15, %c0_16] : memref<1x1xf32, #tpu.memory_space<vmem>>, vector<1x1xf32>
    %23 = vector.broadcast %22 : vector<1x1xf32> to vector<1x8192xf32>
    %24 = arith.addf %21, %23 : vector<1x8192xf32>
    %c0_17 = arith.constant 0 : index
    %c0_18 = arith.constant 0 : index
    %25 = vector.load %arg8[%c0_17, %c0_18] : memref<1x8192xf32, #tpu.memory_space<vmem>>, vector<1x8192xf32>
    tpu.vector_store %arg8[%c0_17, %c0_18], %24 {strides = array<i32>} : memref<1x8192xf32, #tpu.memory_space<vmem>>, vector<1x8192xf32>,
    return
  }
  func.func @transform_0(%arg0: i32) -> (i32, i32) {
    %c0_i32 = arith.constant 0 : i32
    %c0_i32_0 = arith.constant 0 : i32
    return %arg0, %c0_i32 : i32, i32
  }
  func.func @transform_1(%arg0: i32) -> (i32, i32) {
    %c0_i32 = arith.constant 0 : i32
    %c0_i32_0 = arith.constant 0 : i32
    %c0_i32_1 = arith.constant 0 : i32
    return %c0_i32, %c0_i32_0 : i32, i32
  }
  func.func @transform_2(%arg0: i32) -> (i32, i32) {
    %c0_i32 = arith.constant 0 : i32
    %c0_i32_0 = arith.constant 0 : i32
    %c0_i32_1 = arith.constant 0 : i32
    return %c0_i32, %c0_i32_0 : i32, i32
  }
  func.func @transform_3(%arg0: i32) -> (i32, i32) {
    %c0_i32 = arith.constant 0 : i32
    %c0_i32_0 = arith.constant 0 : i32
    %c0_i32_1 = arith.constant 0 : i32
    return %c0_i32, %c0_i32_0 : i32, i32
  }
  func.func @transform_4(%arg0: i32) -> (i32, i32) {
    %c0_i32 = arith.constant 0 : i32
    %c0_i32_0 = arith.constant 0 : i32
    %c0_i32_1 = arith.constant 0 : i32
    return %c0_i32, %c0_i32_0 : i32, i32
  }
  func.func @transform_5(%arg0: i32) -> (i32, i32) {
    %c0_i32 = arith.constant 0 : i32
    %c0_i32_0 = arith.constant 0 : i32
    %c0_i32_1 = arith.constant 0 : i32
    return %c0_i32, %c0_i32_0 : i32, i32
  }
  func.func @transform_6(%arg0: i32) -> (i32, i32) {
    %c0_i32 = arith.constant 0 : i32
    %c0_i32_0 = arith.constant 0 : i32
    %c0_i32_1 = arith.constant 0 : i32
    return %c0_i32, %c0_i32_0 : i32, i32
  }
  func.func @transform_7(%arg0: i32) -> (i32, i32) {
    %c0_i32 = arith.constant 0 : i32
    %c0_i32_0 = arith.constant 0 : i32
    return %c0_i32, %arg0 : i32, i32
  }
}

</mosaic_0001>

<llo_original>
// kernel: simple_nn_forward.1
$region0: #{simple_nn_forward.1}
  #allocation0 [shape = 'u32[]', space=smem, size = 0x4, offset = 0x4, fixed_abs, tag = 'smem constant byte address 0x4 - core index']
  #allocation1 [shape = 'u32[144,128]{1,0:T(1,128)}', space=vmem, size = 0x12000, scoped, tag = 'internal scratch']
  #allocation2 [shape = 'f32[1,1]{1,0:T(1,128)S(1)}', space=vmem, size = 0x200, scoped, tag = 'scoped memory for simple_nn_forward.1']
  %s0 = inlined_call_operand.vmem [shape: f32[8,32], index: 0, kind: input, shape index: {}]
  %s1 = inlined_call_operand.vmem [shape: bf16[128,32], index: 1, kind: input, shape index: {}]
  %s2 = inlined_call_operand.vmem [shape: f32[128,1], index: 2, kind: input, shape index: {}]
  %s3 = inlined_call_operand.vmem [shape: bf16[64,128], index: 3, kind: input, shape index: {}]
  %s4 = inlined_call_operand.vmem [shape: f32[64,1], index: 4, kind: input, shape index: {}]
  %s5 = inlined_call_operand.vmem [shape: f32[64,1], index: 5, kind: input, shape index: {}]
  %s6 = inlined_call_operand.<no memory space> [shape: f32[1,1], index: 6, kind: input, shape index: {}]
  %s7 = inlined_call_operand.vmem [shape: f32[1,8192], index: 7, kind: output, shape index: {}]
  %s8 = sld [smem:[#allocation0]]
  $region38: #{simple_nn_forward.1} parent=0
    _
  %s10 = ssub.s32 1, %s8
  %s11 = scalar_select 0, %s10, %s8
  %v12 = vstv %s6
  %13 = vst [vmem:[#allocation2] sm:$0x1] %v12
  // Predicated region
  $region2: #{simple_nn_forward.1} parent=0 // pred_check
    _
  $region3: #{simple_nn_forward.1} parent=0 // pred_check_branch
    %15 = sbr.rel (0) target = $region5
  $region4: #{simple_nn_forward.1} parent=0 // pred_region
    _
  $region5: #{simple_nn_forward.1} parent=0 // pred_fallthru
    _
  // Predicated region
  $region6: #{simple_nn_forward.1} parent=0 // pred_check
    _
  $region7: #{simple_nn_forward.1} parent=0 // pred_check_branch
    %17 = sbr.rel (0) target = $region9
  $region8: #{simple_nn_forward.1} parent=0 // pred_region
    _
  $region9: #{simple_nn_forward.1} parent=0 // pred_fallthru
    _
  // Predicated region
  $region10: #{simple_nn_forward.1} parent=0 // pred_check
    _
  $region11: #{simple_nn_forward.1} parent=0 // pred_check_branch
    %19 = sbr.rel (0) target = $region13
  $region12: #{simple_nn_forward.1} parent=0 // pred_region
    _
  $region13: #{simple_nn_forward.1} parent=0 // pred_fallthru
    _
  // Predicated region
  $region14: #{simple_nn_forward.1} parent=0 // pred_check
    _
  $region15: #{simple_nn_forward.1} parent=0 // pred_check_branch
    %21 = sbr.rel (0) target = $region17
  $region16: #{simple_nn_forward.1} parent=0 // pred_region
    _
  $region17: #{simple_nn_forward.1} parent=0 // pred_fallthru
    _
  // Predicated region
  $region18: #{simple_nn_forward.1} parent=0 // pred_check
    _
  $region19: #{simple_nn_forward.1} parent=0 // pred_check_branch
    %23 = sbr.rel (0) target = $region21
  $region20: #{simple_nn_forward.1} parent=0 // pred_region
    _
  $region21: #{simple_nn_forward.1} parent=0 // pred_fallthru
    _
  // Predicated region
  $region22: #{simple_nn_forward.1} parent=0 // pred_check
    _
  $region23: #{simple_nn_forward.1} parent=0 // pred_check_branch
    %25 = sbr.rel (0) target = $region25
  $region24: #{simple_nn_forward.1} parent=0 // pred_region
    _
  $region25: #{simple_nn_forward.1} parent=0 // pred_fallthru
    _
  // Predicated region
  $region26: #{simple_nn_forward.1} parent=0 // pred_check
    _
  $region27: #{simple_nn_forward.1} parent=0 // pred_check_branch
    %27 = sbr.rel (0) target = $region29
  $region28: #{simple_nn_forward.1} parent=0 // pred_region
    _
  $region29: #{simple_nn_forward.1} parent=0 // pred_fallthru
    _
  %v29 = vld [vmem:[%s0] sm:$0xff]
  %v30 = vld [vmem:[%s0 + $0x8] sm:$0xff]
  %v31 = vld [vmem:[%s0 + $0x10] sm:$0xff]
  %v32 = vld [vmem:[%s0 + $0x18] sm:$0xff]
  %v33 = vld [vmem:[%s0 + $0x20] sm:$0xff]
  %v34 = vld [vmem:[%s0 + $0x28] sm:$0xff]
  %v35 = vld [vmem:[%s0 + $0x30] sm:$0xff]
  %v36 = vld [vmem:[%s0 + $0x38] sm:$0xff]
  %v37 = vld [vmem:[%s0 + $0x40] sm:$0xff]
  %v38 = vld [vmem:[%s0 + $0x48] sm:$0xff]
  %v39 = vld [vmem:[%s0 + $0x50] sm:$0xff]
  %v40 = vld [vmem:[%s0 + $0x58] sm:$0xff]
  %v41 = vld [vmem:[%s0 + $0x60] sm:$0xff]
  %v42 = vld [vmem:[%s0 + $0x68] sm:$0xff]
  %v43 = vld [vmem:[%s0 + $0x70] sm:$0xff]
  %v44 = vld [vmem:[%s0 + $0x78] sm:$0xff]
  %v45 = vld [vmem:[%s0 + $0x80] sm:$0xff]
  %v46 = vld [vmem:[%s0 + $0x88] sm:$0xff]
  %v47 = vld [vmem:[%s0 + $0x90] sm:$0xff]
  %v48 = vld [vmem:[%s0 + $0x98] sm:$0xff]
  %v49 = vld [vmem:[%s0 + $0xa0] sm:$0xff]
  %v50 = vld [vmem:[%s0 + $0xa8] sm:$0xff]
  %v51 = vld [vmem:[%s0 + $0xb0] sm:$0xff]
  %v52 = vld [vmem:[%s0 + $0xb8] sm:$0xff]
  %v53 = vld [vmem:[%s0 + $0xc0] sm:$0xff]
  %v54 = vld [vmem:[%s0 + $0xc8] sm:$0xff]
  %v55 = vld [vmem:[%s0 + $0xd0] sm:$0xff]
  %v56 = vld [vmem:[%s0 + $0xd8] sm:$0xff]
  %v57 = vld [vmem:[%s0 + $0xe0] sm:$0xff]
  %v58 = vld [vmem:[%s0 + $0xe8] sm:$0xff]
  %v59 = vld [vmem:[%s0 + $0xf0] sm:$0xff]
  %v60 = vld [vmem:[%s0 + $0xf8] sm:$0xff]
  %v61 = vld [vmem:[%s0 + $0x100] sm:$0xff]
  %v62 = vld [vmem:[%s0 + $0x108] sm:$0xff]
  %v63 = vld [vmem:[%s0 + $0x110] sm:$0xff]
  %v64 = vld [vmem:[%s0 + $0x118] sm:$0xff]
  %v65 = vld [vmem:[%s0 + $0x120] sm:$0xff]
  %v66 = vld [vmem:[%s0 + $0x128] sm:$0xff]
  %v67 = vld [vmem:[%s0 + $0x130] sm:$0xff]
  %v68 = vld [vmem:[%s0 + $0x138] sm:$0xff]
  %v69 = vld [vmem:[%s0 + $0x140] sm:$0xff]
  %v70 = vld [vmem:[%s0 + $0x148] sm:$0xff]
  %v71 = vld [vmem:[%s0 + $0x150] sm:$0xff]
  %v72 = vld [vmem:[%s0 + $0x158] sm:$0xff]
  %v73 = vld [vmem:[%s0 + $0x160] sm:$0xff]
  %v74 = vld [vmem:[%s0 + $0x168] sm:$0xff]
  %v75 = vld [vmem:[%s0 + $0x170] sm:$0xff]
  %v76 = vld [vmem:[%s0 + $0x178] sm:$0xff]
  %v77 = vld [vmem:[%s0 + $0x180] sm:$0xff]
  %v78 = vld [vmem:[%s0 + $0x188] sm:$0xff]
  %v79 = vld [vmem:[%s0 + $0x190] sm:$0xff]
  %v80 = vld [vmem:[%s0 + $0x198] sm:$0xff]
  %v81 = vld [vmem:[%s0 + $0x1a0] sm:$0xff]
  %v82 = vld [vmem:[%s0 + $0x1a8] sm:$0xff]
  %v83 = vld [vmem:[%s0 + $0x1b0] sm:$0xff]
  %v84 = vld [vmem:[%s0 + $0x1b8] sm:$0xff]
  %v85 = vld [vmem:[%s0 + $0x1c0] sm:$0xff]
  %v86 = vld [vmem:[%s0 + $0x1c8] sm:$0xff]
  %v87 = vld [vmem:[%s0 + $0x1d0] sm:$0xff]
  %v88 = vld [vmem:[%s0 + $0x1d8] sm:$0xff]
  %v89 = vld [vmem:[%s0 + $0x1e0] sm:$0xff]
  %v90 = vld [vmem:[%s0 + $0x1e8] sm:$0xff]
  %v91 = vld [vmem:[%s0 + $0x1f0] sm:$0xff]
  %v92 = vld [vmem:[%s0 + $0x1f8] sm:$0xff]
  %v93 = vld [vmem:[%s0 + $0x200] sm:$0xff]
  %v94 = vld [vmem:[%s0 + $0x208] sm:$0xff]
  %v95 = vld [vmem:[%s0 + $0x210] sm:$0xff]
  %v96 = vld [vmem:[%s0 + $0x218] sm:$0xff]
  %v97 = vld [vmem:[%s0 + $0x220] sm:$0xff]
  %v98 = vld [vmem:[%s0 + $0x228] sm:$0xff]
  %v99 = vld [vmem:[%s0 + $0x230] sm:$0xff]
  %v100 = vld [vmem:[%s0 + $0x238] sm:$0xff]
  %v101 = vld [vmem:[%s0 + $0x240] sm:$0xff]
  %v102 = vld [vmem:[%s0 + $0x248] sm:$0xff]
  %v103 = vld [vmem:[%s0 + $0x250] sm:$0xff]
  %v104 = vld [vmem:[%s0 + $0x258] sm:$0xff]
  %v105 = vld [vmem:[%s0 + $0x260] sm:$0xff]
  %v106 = vld [vmem:[%s0 + $0x268] sm:$0xff]
  %v107 = vld [vmem:[%s0 + $0x270] sm:$0xff]
  %v108 = vld [vmem:[%s0 + $0x278] sm:$0xff]
  %v109 = vld [vmem:[%s0 + $0x280] sm:$0xff]
  %v110 = vld [vmem:[%s0 + $0x288] sm:$0xff]
  %v111 = vld [vmem:[%s0 + $0x290] sm:$0xff]
  %v112 = vld [vmem:[%s0 + $0x298] sm:$0xff]
  %v113 = vld [vmem:[%s0 + $0x2a0] sm:$0xff]
  %v114 = vld [vmem:[%s0 + $0x2a8] sm:$0xff]
  %v115 = vld [vmem:[%s0 + $0x2b0] sm:$0xff]
  %v116 = vld [vmem:[%s0 + $0x2b8] sm:$0xff]
  %v117 = vld [vmem:[%s0 + $0x2c0] sm:$0xff]
  %v118 = vld [vmem:[%s0 + $0x2c8] sm:$0xff]
  %v119 = vld [vmem:[%s0 + $0x2d0] sm:$0xff]
  %v120 = vld [vmem:[%s0 + $0x2d8] sm:$0xff]
  %v121 = vld [vmem:[%s0 + $0x2e0] sm:$0xff]
  %v122 = vld [vmem:[%s0 + $0x2e8] sm:$0xff]
  %v123 = vld [vmem:[%s0 + $0x2f0] sm:$0xff]
  %v124 = vld [vmem:[%s0 + $0x2f8] sm:$0xff]
  %v125 = vld [vmem:[%s0 + $0x300] sm:$0xff]
  %v126 = vld [vmem:[%s0 + $0x308] sm:$0xff]
  %v127 = vld [vmem:[%s0 + $0x310] sm:$0xff]
  %v128 = vld [vmem:[%s0 + $0x318] sm:$0xff]
  %v129 = vld [vmem:[%s0 + $0x320] sm:$0xff]
  %v130 = vld [vmem:[%s0 + $0x328] sm:$0xff]
  %v131 = vld [vmem:[%s0 + $0x330] sm:$0xff]
  %v132 = vld [vmem:[%s0 + $0x338] sm:$0xff]
  %v133 = vld [vmem:[%s0 + $0x340] sm:$0xff]
  %v134 = vld [vmem:[%s0 + $0x348] sm:$0xff]
  %v135 = vld [vmem:[%s0 + $0x350] sm:$0xff]
  %v136 = vld [vmem:[%s0 + $0x358] sm:$0xff]
  %v137 = vld [vmem:[%s0 + $0x360] sm:$0xff]
  %v138 = vld [vmem:[%s0 + $0x368] sm:$0xff]
  %v139 = vld [vmem:[%s0 + $0x370] sm:$0xff]
  %v140 = vld [vmem:[%s0 + $0x378] sm:$0xff]
  %v141 = vld [vmem:[%s0 + $0x380] sm:$0xff]
  %v142 = vld [vmem:[%s0 + $0x388] sm:$0xff]
  %v143 = vld [vmem:[%s0 + $0x390] sm:$0xff]
  %v144 = vld [vmem:[%s0 + $0x398] sm:$0xff]
  %v145 = vld [vmem:[%s0 + $0x3a0] sm:$0xff]
  %v146 = vld [vmem:[%s0 + $0x3a8] sm:$0xff]
  %v147 = vld [vmem:[%s0 + $0x3b0] sm:$0xff]
  %v148 = vld [vmem:[%s0 + $0x3b8] sm:$0xff]
  %v149 = vld [vmem:[%s0 + $0x3c0] sm:$0xff]
  %v150 = vld [vmem:[%s0 + $0x3c8] sm:$0xff]
  %v151 = vld [vmem:[%s0 + $0x3d0] sm:$0xff]
  %v152 = vld [vmem:[%s0 + $0x3d8] sm:$0xff]
  %v153 = vld [vmem:[%s0 + $0x3e0] sm:$0xff]
  %v154 = vld [vmem:[%s0 + $0x3e8] sm:$0xff]
  %v155 = vld [vmem:[%s0 + $0x3f0] sm:$0xff]
  %v156 = vld [vmem:[%s0 + $0x3f8] sm:$0xff]
  %v157 = vld [vmem:[%s0 + $0x400] sm:$0xff]
  %v158 = vld [vmem:[%s0 + $0x408] sm:$0xff]
  %v159 = vld [vmem:[%s0 + $0x410] sm:$0xff]
  %v160 = vld [vmem:[%s0 + $0x418] sm:$0xff]
  %v161 = vld [vmem:[%s0 + $0x420] sm:$0xff]
  %v162 = vld [vmem:[%s0 + $0x428] sm:$0xff]
  %v163 = vld [vmem:[%s0 + $0x430] sm:$0xff]
  %v164 = vld [vmem:[%s0 + $0x438] sm:$0xff]
  %v165 = vld [vmem:[%s0 + $0x440] sm:$0xff]
  %v166 = vld [vmem:[%s0 + $0x448] sm:$0xff]
  %v167 = vld [vmem:[%s0 + $0x450] sm:$0xff]
  %v168 = vld [vmem:[%s0 + $0x458] sm:$0xff]
  %v169 = vld [vmem:[%s0 + $0x460] sm:$0xff]
  %v170 = vld [vmem:[%s0 + $0x468] sm:$0xff]
  %v171 = vld [vmem:[%s0 + $0x470] sm:$0xff]
  %v172 = vld [vmem:[%s0 + $0x478] sm:$0xff]
  %v173 = vld [vmem:[%s0 + $0x480] sm:$0xff]
  %v174 = vld [vmem:[%s0 + $0x488] sm:$0xff]
  %v175 = vld [vmem:[%s0 + $0x490] sm:$0xff]
  %v176 = vld [vmem:[%s0 + $0x498] sm:$0xff]
  %v177 = vld [vmem:[%s0 + $0x4a0] sm:$0xff]
  %v178 = vld [vmem:[%s0 + $0x4a8] sm:$0xff]
  %v179 = vld [vmem:[%s0 + $0x4b0] sm:$0xff]
  %v180 = vld [vmem:[%s0 + $0x4b8] sm:$0xff]
  %v181 = vld [vmem:[%s0 + $0x4c0] sm:$0xff]
  %v182 = vld [vmem:[%s0 + $0x4c8] sm:$0xff]
  %v183 = vld [vmem:[%s0 + $0x4d0] sm:$0xff]
  %v184 = vld [vmem:[%s0 + $0x4d8] sm:$0xff]
  %v185 = vld [vmem:[%s0 + $0x4e0] sm:$0xff]
  %v186 = vld [vmem:[%s0 + $0x4e8] sm:$0xff]
  %v187 = vld [vmem:[%s0 + $0x4f0] sm:$0xff]
  %v188 = vld [vmem:[%s0 + $0x4f8] sm:$0xff]
  %v189 = vld [vmem:[%s0 + $0x500] sm:$0xff]
  %v190 = vld [vmem:[%s0 + $0x508] sm:$0xff]
  %v191 = vld [vmem:[%s0 + $0x510] sm:$0xff]
  %v192 = vld [vmem:[%s0 + $0x518] sm:$0xff]
  %v193 = vld [vmem:[%s0 + $0x520] sm:$0xff]
  %v194 = vld [vmem:[%s0 + $0x528] sm:$0xff]
  %v195 = vld [vmem:[%s0 + $0x530] sm:$0xff]
  %v196 = vld [vmem:[%s0 + $0x538] sm:$0xff]
  %v197 = vld [vmem:[%s0 + $0x540] sm:$0xff]
  %v198 = vld [vmem:[%s0 + $0x548] sm:$0xff]
  %v199 = vld [vmem:[%s0 + $0x550] sm:$0xff]
  %v200 = vld [vmem:[%s0 + $0x558] sm:$0xff]
  %v201 = vld [vmem:[%s0 + $0x560] sm:$0xff]
  %v202 = vld [vmem:[%s0 + $0x568] sm:$0xff]
  %v203 = vld [vmem:[%s0 + $0x570] sm:$0xff]
  %v204 = vld [vmem:[%s0 + $0x578] sm:$0xff]
  %v205 = vld [vmem:[%s0 + $0x580] sm:$0xff]
  %v206 = vld [vmem:[%s0 + $0x588] sm:$0xff]
  %v207 = vld [vmem:[%s0 + $0x590] sm:$0xff]
  %v208 = vld [vmem:[%s0 + $0x598] sm:$0xff]
  %v209 = vld [vmem:[%s0 + $0x5a0] sm:$0xff]
  %v210 = vld [vmem:[%s0 + $0x5a8] sm:$0xff]
  %v211 = vld [vmem:[%s0 + $0x5b0] sm:$0xff]
  %v212 = vld [vmem:[%s0 + $0x5b8] sm:$0xff]
  %v213 = vld [vmem:[%s0 + $0x5c0] sm:$0xff]
  %v214 = vld [vmem:[%s0 + $0x5c8] sm:$0xff]
  %v215 = vld [vmem:[%s0 + $0x5d0] sm:$0xff]
  %v216 = vld [vmem:[%s0 + $0x5d8] sm:$0xff]
  %v217 = vld [vmem:[%s0 + $0x5e0] sm:$0xff]
  %v218 = vld [vmem:[%s0 + $0x5e8] sm:$0xff]
  %v219 = vld [vmem:[%s0 + $0x5f0] sm:$0xff]
  %v220 = vld [vmem:[%s0 + $0x5f8] sm:$0xff]
  %v221 = vld [vmem:[%s0 + $0x600] sm:$0xff]
  %v222 = vld [vmem:[%s0 + $0x608] sm:$0xff]
  %v223 = vld [vmem:[%s0 + $0x610] sm:$0xff]
  %v224 = vld [vmem:[%s0 + $0x618] sm:$0xff]
  %v225 = vld [vmem:[%s0 + $0x620] sm:$0xff]
  %v226 = vld [vmem:[%s0 + $0x628] sm:$0xff]
  %v227 = vld [vmem:[%s0 + $0x630] sm:$0xff]
  %v228 = vld [vmem:[%s0 + $0x638] sm:$0xff]
  %v229 = vld [vmem:[%s0 + $0x640] sm:$0xff]
  %v230 = vld [vmem:[%s0 + $0x648] sm:$0xff]
  %v231 = vld [vmem:[%s0 + $0x650] sm:$0xff]
  %v232 = vld [vmem:[%s0 + $0x658] sm:$0xff]
  %v233 = vld [vmem:[%s0 + $0x660] sm:$0xff]
  %v234 = vld [vmem:[%s0 + $0x668] sm:$0xff]
  %v235 = vld [vmem:[%s0 + $0x670] sm:$0xff]
  %v236 = vld [vmem:[%s0 + $0x678] sm:$0xff]
  %v237 = vld [vmem:[%s0 + $0x680] sm:$0xff]
  %v238 = vld [vmem:[%s0 + $0x688] sm:$0xff]
  %v239 = vld [vmem:[%s0 + $0x690] sm:$0xff]
  %v240 = vld [vmem:[%s0 + $0x698] sm:$0xff]
  %v241 = vld [vmem:[%s0 + $0x6a0] sm:$0xff]
  %v242 = vld [vmem:[%s0 + $0x6a8] sm:$0xff]
  %v243 = vld [vmem:[%s0 + $0x6b0] sm:$0xff]
  %v244 = vld [vmem:[%s0 + $0x6b8] sm:$0xff]
  %v245 = vld [vmem:[%s0 + $0x6c0] sm:$0xff]
  %v246 = vld [vmem:[%s0 + $0x6c8] sm:$0xff]
  %v247 = vld [vmem:[%s0 + $0x6d0] sm:$0xff]
  %v248 = vld [vmem:[%s0 + $0x6d8] sm:$0xff]
  %v249 = vld [vmem:[%s0 + $0x6e0] sm:$0xff]
  %v250 = vld [vmem:[%s0 + $0x6e8] sm:$0xff]
  %v251 = vld [vmem:[%s0 + $0x6f0] sm:$0xff]
  %v252 = vld [vmem:[%s0 + $0x6f8] sm:$0xff]
  %v253 = vld [vmem:[%s0 + $0x700] sm:$0xff]
  %v254 = vld [vmem:[%s0 + $0x708] sm:$0xff]
  %v255 = vld [vmem:[%s0 + $0x710] sm:$0xff]
  %v256 = vld [vmem:[%s0 + $0x718] sm:$0xff]
  %v257 = vld [vmem:[%s0 + $0x720] sm:$0xff]
  %v258 = vld [vmem:[%s0 + $0x728] sm:$0xff]
  %v259 = vld [vmem:[%s0 + $0x730] sm:$0xff]
  %v260 = vld [vmem:[%s0 + $0x738] sm:$0xff]
  %v261 = vld [vmem:[%s0 + $0x740] sm:$0xff]
  %v262 = vld [vmem:[%s0 + $0x748] sm:$0xff]
  %v263 = vld [vmem:[%s0 + $0x750] sm:$0xff]
  %v264 = vld [vmem:[%s0 + $0x758] sm:$0xff]
  %v265 = vld [vmem:[%s0 + $0x760] sm:$0xff]
  %v266 = vld [vmem:[%s0 + $0x768] sm:$0xff]
  %v267 = vld [vmem:[%s0 + $0x770] sm:$0xff]
  %v268 = vld [vmem:[%s0 + $0x778] sm:$0xff]
  %v269 = vld [vmem:[%s0 + $0x780] sm:$0xff]
  %v270 = vld [vmem:[%s0 + $0x788] sm:$0xff]
  %v271 = vld [vmem:[%s0 + $0x790] sm:$0xff]
  %v272 = vld [vmem:[%s0 + $0x798] sm:$0xff]
  %v273 = vld [vmem:[%s0 + $0x7a0] sm:$0xff]
  %v274 = vld [vmem:[%s0 + $0x7a8] sm:$0xff]
  %v275 = vld [vmem:[%s0 + $0x7b0] sm:$0xff]
  %v276 = vld [vmem:[%s0 + $0x7b8] sm:$0xff]
  %v277 = vld [vmem:[%s0 + $0x7c0] sm:$0xff]
  %v278 = vld [vmem:[%s0 + $0x7c8] sm:$0xff]
  %v279 = vld [vmem:[%s0 + $0x7d0] sm:$0xff]
  %v280 = vld [vmem:[%s0 + $0x7d8] sm:$0xff]
  %v281 = vld [vmem:[%s0 + $0x7e0] sm:$0xff]
  %v282 = vld [vmem:[%s0 + $0x7e8] sm:$0xff]
  %v283 = vld [vmem:[%s0 + $0x7f0] sm:$0xff]
  %v284 = vld [vmem:[%s0 + $0x7f8] sm:$0xff]
  %v285 = vld [vmem:[%s0 + $0x800] sm:$0xff]
  %v286 = vld [vmem:[%s0 + $0x808] sm:$0xff]
  %v287 = vld [vmem:[%s0 + $0x810] sm:$0xff]
  %v288 = vld [vmem:[%s0 + $0x818] sm:$0xff]
  %v289 = vld [vmem:[%s0 + $0x820] sm:$0xff]
  %v290 = vld [vmem:[%s0 + $0x828] sm:$0xff]
  %v291 = vld [vmem:[%s0 + $0x830] sm:$0xff]
  %v292 = vld [vmem:[%s0 + $0x838] sm:$0xff]
  %v293 = vld [vmem:[%s0 + $0x840] sm:$0xff]
  %v294 = vld [vmem:[%s0 + $0x848] sm:$0xff]
  %v295 = vld [vmem:[%s0 + $0x850] sm:$0xff]
  %v296 = vld [vmem:[%s0 + $0x858] sm:$0xff]
  %v297 = vld [vmem:[%s0 + $0x860] sm:$0xff]
  %v298 = vld [vmem:[%s0 + $0x868] sm:$0xff]
  %v299 = vld [vmem:[%s0 + $0x870] sm:$0xff]
  %v300 = vld [vmem:[%s0 + $0x878] sm:$0xff]
  %v301 = vld [vmem:[%s0 + $0x880] sm:$0xff]
  %v302 = vld [vmem:[%s0 + $0x888] sm:$0xff]
  %v303 = vld [vmem:[%s0 + $0x890] sm:$0xff]
  %v304 = vld [vmem:[%s0 + $0x898] sm:$0xff]
  %v305 = vld [vmem:[%s0 + $0x8a0] sm:$0xff]
  %v306 = vld [vmem:[%s0 + $0x8a8] sm:$0xff]
  %v307 = vld [vmem:[%s0 + $0x8b0] sm:$0xff]
  %v308 = vld [vmem:[%s0 + $0x8b8] sm:$0xff]
  %v309 = vld [vmem:[%s0 + $0x8c0] sm:$0xff]
  %v310 = vld [vmem:[%s0 + $0x8c8] sm:$0xff]
  %v311 = vld [vmem:[%s0 + $0x8d0] sm:$0xff]
  %v312 = vld [vmem:[%s0 + $0x8d8] sm:$0xff]
  %v313 = vld [vmem:[%s0 + $0x8e0] sm:$0xff]
  %v314 = vld [vmem:[%s0 + $0x8e8] sm:$0xff]
  %v315 = vld [vmem:[%s0 + $0x8f0] sm:$0xff]
  %v316 = vld [vmem:[%s0 + $0x8f8] sm:$0xff]
  %v317 = vld [vmem:[%s0 + $0x900] sm:$0xff]
  %v318 = vld [vmem:[%s0 + $0x908] sm:$0xff]
  %v319 = vld [vmem:[%s0 + $0x910] sm:$0xff]
  %v320 = vld [vmem:[%s0 + $0x918] sm:$0xff]
  %v321 = vld [vmem:[%s0 + $0x920] sm:$0xff]
  %v322 = vld [vmem:[%s0 + $0x928] sm:$0xff]
  %v323 = vld [vmem:[%s0 + $0x930] sm:$0xff]
  %v324 = vld [vmem:[%s0 + $0x938] sm:$0xff]
  %v325 = vld [vmem:[%s0 + $0x940] sm:$0xff]
  %v326 = vld [vmem:[%s0 + $0x948] sm:$0xff]
  %v327 = vld [vmem:[%s0 + $0x950] sm:$0xff]
  %v328 = vld [vmem:[%s0 + $0x958] sm:$0xff]
  %v329 = vld [vmem:[%s0 + $0x960] sm:$0xff]
  %v330 = vld [vmem:[%s0 + $0x968] sm:$0xff]
  %v331 = vld [vmem:[%s0 + $0x970] sm:$0xff]
  %v332 = vld [vmem:[%s0 + $0x978] sm:$0xff]
  %v333 = vld [vmem:[%s0 + $0x980] sm:$0xff]
  %v334 = vld [vmem:[%s0 + $0x988] sm:$0xff]
  %v335 = vld [vmem:[%s0 + $0x990] sm:$0xff]
  %v336 = vld [vmem:[%s0 + $0x998] sm:$0xff]
  %v337 = vld [vmem:[%s0 + $0x9a0] sm:$0xff]
  %v338 = vld [vmem:[%s0 + $0x9a8] sm:$0xff]
  %v339 = vld [vmem:[%s0 + $0x9b0] sm:$0xff]
  %v340 = vld [vmem:[%s0 + $0x9b8] sm:$0xff]
  %v341 = vld [vmem:[%s0 + $0x9c0] sm:$0xff]
  %v342 = vld [vmem:[%s0 + $0x9c8] sm:$0xff]
  %v343 = vld [vmem:[%s0 + $0x9d0] sm:$0xff]
  %v344 = vld [vmem:[%s0 + $0x9d8] sm:$0xff]
  %v345 = vld [vmem:[%s0 + $0x9e0] sm:$0xff]
  %v346 = vld [vmem:[%s0 + $0x9e8] sm:$0xff]
  %v347 = vld [vmem:[%s0 + $0x9f0] sm:$0xff]
  %v348 = vld [vmem:[%s0 + $0x9f8] sm:$0xff]
  %v349 = vld [vmem:[%s0 + $0xa00] sm:$0xff]
  %v350 = vld [vmem:[%s0 + $0xa08] sm:$0xff]
  %v351 = vld [vmem:[%s0 + $0xa10] sm:$0xff]
  %v352 = vld [vmem:[%s0 + $0xa18] sm:$0xff]
  %v353 = vld [vmem:[%s0 + $0xa20] sm:$0xff]
  %v354 = vld [vmem:[%s0 + $0xa28] sm:$0xff]
  %v355 = vld [vmem:[%s0 + $0xa30] sm:$0xff]
  %v356 = vld [vmem:[%s0 + $0xa38] sm:$0xff]
  %v357 = vld [vmem:[%s0 + $0xa40] sm:$0xff]
  %v358 = vld [vmem:[%s0 + $0xa48] sm:$0xff]
  %v359 = vld [vmem:[%s0 + $0xa50] sm:$0xff]
  %v360 = vld [vmem:[%s0 + $0xa58] sm:$0xff]
  %v361 = vld [vmem:[%s0 + $0xa60] sm:$0xff]
  %v362 = vld [vmem:[%s0 + $0xa68] sm:$0xff]
  %v363 = vld [vmem:[%s0 + $0xa70] sm:$0xff]
  %v364 = vld [vmem:[%s0 + $0xa78] sm:$0xff]
  %v365 = vld [vmem:[%s0 + $0xa80] sm:$0xff]
  %v366 = vld [vmem:[%s0 + $0xa88] sm:$0xff]
  %v367 = vld [vmem:[%s0 + $0xa90] sm:$0xff]
  %v368 = vld [vmem:[%s0 + $0xa98] sm:$0xff]
  %v369 = vld [vmem:[%s0 + $0xaa0] sm:$0xff]
  %v370 = vld [vmem:[%s0 + $0xaa8] sm:$0xff]
  %v371 = vld [vmem:[%s0 + $0xab0] sm:$0xff]
  %v372 = vld [vmem:[%s0 + $0xab8] sm:$0xff]
  %v373 = vld [vmem:[%s0 + $0xac0] sm:$0xff]
  %v374 = vld [vmem:[%s0 + $0xac8] sm:$0xff]
  %v375 = vld [vmem:[%s0 + $0xad0] sm:$0xff]
  %v376 = vld [vmem:[%s0 + $0xad8] sm:$0xff]
  %v377 = vld [vmem:[%s0 + $0xae0] sm:$0xff]
  %v378 = vld [vmem:[%s0 + $0xae8] sm:$0xff]
  %v379 = vld [vmem:[%s0 + $0xaf0] sm:$0xff]
  %v380 = vld [vmem:[%s0 + $0xaf8] sm:$0xff]
  %v381 = vld [vmem:[%s0 + $0xb00] sm:$0xff]
  %v382 = vld [vmem:[%s0 + $0xb08] sm:$0xff]
  %v383 = vld [vmem:[%s0 + $0xb10] sm:$0xff]
  %v384 = vld [vmem:[%s0 + $0xb18] sm:$0xff]
  %v385 = vld [vmem:[%s0 + $0xb20] sm:$0xff]
  %v386 = vld [vmem:[%s0 + $0xb28] sm:$0xff]
  %v387 = vld [vmem:[%s0 + $0xb30] sm:$0xff]
  %v388 = vld [vmem:[%s0 + $0xb38] sm:$0xff]
  %v389 = vld [vmem:[%s0 + $0xb40] sm:$0xff]
  %v390 = vld [vmem:[%s0 + $0xb48] sm:$0xff]
  %v391 = vld [vmem:[%s0 + $0xb50] sm:$0xff]
  %v392 = vld [vmem:[%s0 + $0xb58] sm:$0xff]
  %v393 = vld [vmem:[%s0 + $0xb60] sm:$0xff]
  %v394 = vld [vmem:[%s0 + $0xb68] sm:$0xff]
  %v395 = vld [vmem:[%s0 + $0xb70] sm:$0xff]
  %v396 = vld [vmem:[%s0 + $0xb78] sm:$0xff]
  %v397 = vld [vmem:[%s0 + $0xb80] sm:$0xff]
  %v398 = vld [vmem:[%s0 + $0xb88] sm:$0xff]
  %v399 = vld [vmem:[%s0 + $0xb90] sm:$0xff]
  %v400 = vld [vmem:[%s0 + $0xb98] sm:$0xff]
  %v401 = vld [vmem:[%s0 + $0xba0] sm:$0xff]
  %v402 = vld [vmem:[%s0 + $0xba8] sm:$0xff]
  %v403 = vld [vmem:[%s0 + $0xbb0] sm:$0xff]
  %v404 = vld [vmem:[%s0 + $0xbb8] sm:$0xff]
  %v405 = vld [vmem:[%s0 + $0xbc0] sm:$0xff]
  %v406 = vld [vmem:[%s0 + $0xbc8] sm:$0xff]
  %v407 = vld [vmem:[%s0 + $0xbd0] sm:$0xff]
  %v408 = vld [vmem:[%s0 + $0xbd8] sm:$0xff]
  %v409 = vld [vmem:[%s0 + $0xbe0] sm:$0xff]
  %v410 = vld [vmem:[%s0 + $0xbe8] sm:$0xff]
  %v411 = vld [vmem:[%s0 + $0xbf0] sm:$0xff]
  %v412 = vld [vmem:[%s0 + $0xbf8] sm:$0xff]
  %v413 = vld [vmem:[%s0 + $0xc00] sm:$0xff]
  %v414 = vld [vmem:[%s0 + $0xc08] sm:$0xff]
  %v415 = vld [vmem:[%s0 + $0xc10] sm:$0xff]
  %v416 = vld [vmem:[%s0 + $0xc18] sm:$0xff]
  %v417 = vld [vmem:[%s0 + $0xc20] sm:$0xff]
  %v418 = vld [vmem:[%s0 + $0xc28] sm:$0xff]
  %v419 = vld [vmem:[%s0 + $0xc30] sm:$0xff]
  %v420 = vld [vmem:[%s0 + $0xc38] sm:$0xff]
  %v421 = vld [vmem:[%s0 + $0xc40] sm:$0xff]
  %v422 = vld [vmem:[%s0 + $0xc48] sm:$0xff]
  %v423 = vld [vmem:[%s0 + $0xc50] sm:$0xff]
  %v424 = vld [vmem:[%s0 + $0xc58] sm:$0xff]
  %v425 = vld [vmem:[%s0 + $0xc60] sm:$0xff]
  %v426 = vld [vmem:[%s0 + $0xc68] sm:$0xff]
  %v427 = vld [vmem:[%s0 + $0xc70] sm:$0xff]
  %v428 = vld [vmem:[%s0 + $0xc78] sm:$0xff]
  %v429 = vld [vmem:[%s0 + $0xc80] sm:$0xff]
  %v430 = vld [vmem:[%s0 + $0xc88] sm:$0xff]
  %v431 = vld [vmem:[%s0 + $0xc90] sm:$0xff]
  %v432 = vld [vmem:[%s0 + $0xc98] sm:$0xff]
  %v433 = vld [vmem:[%s0 + $0xca0] sm:$0xff]
  %v434 = vld [vmem:[%s0 + $0xca8] sm:$0xff]
  %v435 = vld [vmem:[%s0 + $0xcb0] sm:$0xff]
  %v436 = vld [vmem:[%s0 + $0xcb8] sm:$0xff]
  %v437 = vld [vmem:[%s0 + $0xcc0] sm:$0xff]
  %v438 = vld [vmem:[%s0 + $0xcc8] sm:$0xff]
  %v439 = vld [vmem:[%s0 + $0xcd0] sm:$0xff]
  %v440 = vld [vmem:[%s0 + $0xcd8] sm:$0xff]
  %v441 = vld [vmem:[%s0 + $0xce0] sm:$0xff]
  %v442 = vld [vmem:[%s0 + $0xce8] sm:$0xff]
  %v443 = vld [vmem:[%s0 + $0xcf0] sm:$0xff]
  %v444 = vld [vmem:[%s0 + $0xcf8] sm:$0xff]
  %v445 = vld [vmem:[%s0 + $0xd00] sm:$0xff]
  %v446 = vld [vmem:[%s0 + $0xd08] sm:$0xff]
  %v447 = vld [vmem:[%s0 + $0xd10] sm:$0xff]
  %v448 = vld [vmem:[%s0 + $0xd18] sm:$0xff]
  %v449 = vld [vmem:[%s0 + $0xd20] sm:$0xff]
  %v450 = vld [vmem:[%s0 + $0xd28] sm:$0xff]
  %v451 = vld [vmem:[%s0 + $0xd30] sm:$0xff]
  %v452 = vld [vmem:[%s0 + $0xd38] sm:$0xff]
  %v453 = vld [vmem:[%s0 + $0xd40] sm:$0xff]
  %v454 = vld [vmem:[%s0 + $0xd48] sm:$0xff]
  %v455 = vld [vmem:[%s0 + $0xd50] sm:$0xff]
  %v456 = vld [vmem:[%s0 + $0xd58] sm:$0xff]
  %v457 = vld [vmem:[%s0 + $0xd60] sm:$0xff]
  %v458 = vld [vmem:[%s0 + $0xd68] sm:$0xff]
  %v459 = vld [vmem:[%s0 + $0xd70] sm:$0xff]
  %v460 = vld [vmem:[%s0 + $0xd78] sm:$0xff]
  %v461 = vld [vmem:[%s0 + $0xd80] sm:$0xff]
  %v462 = vld [vmem:[%s0 + $0xd88] sm:$0xff]
  %v463 = vld [vmem:[%s0 + $0xd90] sm:$0xff]
  %v464 = vld [vmem:[%s0 + $0xd98] sm:$0xff]
  %v465 = vld [vmem:[%s0 + $0xda0] sm:$0xff]
  %v466 = vld [vmem:[%s0 + $0xda8] sm:$0xff]
  %v467 = vld [vmem:[%s0 + $0xdb0] sm:$0xff]
  %v468 = vld [vmem:[%s0 + $0xdb8] sm:$0xff]
  %v469 = vld [vmem:[%s0 + $0xdc0] sm:$0xff]
  %v470 = vld [vmem:[%s0 + $0xdc8] sm:$0xff]
  %v471 = vld [vmem:[%s0 + $0xdd0] sm:$0xff]
  %v472 = vld [vmem:[%s0 + $0xdd8] sm:$0xff]
  %v473 = vld [vmem:[%s0 + $0xde0] sm:$0xff]
  %v474 = vld [vmem:[%s0 + $0xde8] sm:$0xff]
  %v475 = vld [vmem:[%s0 + $0xdf0] sm:$0xff]
  %v476 = vld [vmem:[%s0 + $0xdf8] sm:$0xff]
  %v477 = vld [vmem:[%s0 + $0xe00] sm:$0xff]
  %v478 = vld [vmem:[%s0 + $0xe08] sm:$0xff]
  %v479 = vld [vmem:[%s0 + $0xe10] sm:$0xff]
  %v480 = vld [vmem:[%s0 + $0xe18] sm:$0xff]
  %v481 = vld [vmem:[%s0 + $0xe20] sm:$0xff]
  %v482 = vld [vmem:[%s0 + $0xe28] sm:$0xff]
  %v483 = vld [vmem:[%s0 + $0xe30] sm:$0xff]
  %v484 = vld [vmem:[%s0 + $0xe38] sm:$0xff]
  %v485 = vld [vmem:[%s0 + $0xe40] sm:$0xff]
  %v486 = vld [vmem:[%s0 + $0xe48] sm:$0xff]
  %v487 = vld [vmem:[%s0 + $0xe50] sm:$0xff]
  %v488 = vld [vmem:[%s0 + $0xe58] sm:$0xff]
  %v489 = vld [vmem:[%s0 + $0xe60] sm:$0xff]
  %v490 = vld [vmem:[%s0 + $0xe68] sm:$0xff]
  %v491 = vld [vmem:[%s0 + $0xe70] sm:$0xff]
  %v492 = vld [vmem:[%s0 + $0xe78] sm:$0xff]
  %v493 = vld [vmem:[%s0 + $0xe80] sm:$0xff]
  %v494 = vld [vmem:[%s0 + $0xe88] sm:$0xff]
  %v495 = vld [vmem:[%s0 + $0xe90] sm:$0xff]
  %v496 = vld [vmem:[%s0 + $0xe98] sm:$0xff]
  %v497 = vld [vmem:[%s0 + $0xea0] sm:$0xff]
  %v498 = vld [vmem:[%s0 + $0xea8] sm:$0xff]
  %v499 = vld [vmem:[%s0 + $0xeb0] sm:$0xff]
  %v500 = vld [vmem:[%s0 + $0xeb8] sm:$0xff]
  %v501 = vld [vmem:[%s0 + $0xec0] sm:$0xff]
  %v502 = vld [vmem:[%s0 + $0xec8] sm:$0xff]
  %v503 = vld [vmem:[%s0 + $0xed0] sm:$0xff]
  %v504 = vld [vmem:[%s0 + $0xed8] sm:$0xff]
  %v505 = vld [vmem:[%s0 + $0xee0] sm:$0xff]
  %v506 = vld [vmem:[%s0 + $0xee8] sm:$0xff]
  %v507 = vld [vmem:[%s0 + $0xef0] sm:$0xff]
  %v508 = vld [vmem:[%s0 + $0xef8] sm:$0xff]
  %v509 = vld [vmem:[%s0 + $0xf00] sm:$0xff]
  %v510 = vld [vmem:[%s0 + $0xf08] sm:$0xff]
  %v511 = vld [vmem:[%s0 + $0xf10] sm:$0xff]
  %v512 = vld [vmem:[%s0 + $0xf18] sm:$0xff]
  %v513 = vld [vmem:[%s0 + $0xf20] sm:$0xff]
  %v514 = vld [vmem:[%s0 + $0xf28] sm:$0xff]
  %v515 = vld [vmem:[%s0 + $0xf30] sm:$0xff]
  %v516 = vld [vmem:[%s0 + $0xf38] sm:$0xff]
  %v517 = vld [vmem:[%s0 + $0xf40] sm:$0xff]
  %v518 = vld [vmem:[%s0 + $0xf48] sm:$0xff]
  %v519 = vld [vmem:[%s0 + $0xf50] sm:$0xff]
  %v520 = vld [vmem:[%s0 + $0xf58] sm:$0xff]
  %v521 = vld [vmem:[%s0 + $0xf60] sm:$0xff]
  %v522 = vld [vmem:[%s0 + $0xf68] sm:$0xff]
  %v523 = vld [vmem:[%s0 + $0xf70] sm:$0xff]
  %v524 = vld [vmem:[%s0 + $0xf78] sm:$0xff]
  %v525 = vld [vmem:[%s0 + $0xf80] sm:$0xff]
  %v526 = vld [vmem:[%s0 + $0xf88] sm:$0xff]
  %v527 = vld [vmem:[%s0 + $0xf90] sm:$0xff]
  %v528 = vld [vmem:[%s0 + $0xf98] sm:$0xff]
  %v529 = vld [vmem:[%s0 + $0xfa0] sm:$0xff]
  %v530 = vld [vmem:[%s0 + $0xfa8] sm:$0xff]
  %v531 = vld [vmem:[%s0 + $0xfb0] sm:$0xff]
  %v532 = vld [vmem:[%s0 + $0xfb8] sm:$0xff]
  %v533 = vld [vmem:[%s0 + $0xfc0] sm:$0xff]
  %v534 = vld [vmem:[%s0 + $0xfc8] sm:$0xff]
  %v535 = vld [vmem:[%s0 + $0xfd0] sm:$0xff]
  %v536 = vld [vmem:[%s0 + $0xfd8] sm:$0xff]
  %v537 = vld [vmem:[%s0 + $0xfe0] sm:$0xff]
  %v538 = vld [vmem:[%s0 + $0xfe8] sm:$0xff]
  %v539 = vld [vmem:[%s0 + $0xff0] sm:$0xff]
  %v540 = vld [vmem:[%s0 + $0xff8] sm:$0xff]
  %v541 = vld [vmem:[%s0 + $0x1000] sm:$0xff]
  %v542 = vld [vmem:[%s0 + $0x1008] sm:$0xff]
  %v543 = vld [vmem:[%s0 + $0x1010] sm:$0xff]
  %v544 = vld [vmem:[%s0 + $0x1018] sm:$0xff]
  %v545 = vld [vmem:[%s0 + $0x1020] sm:$0xff]
  %v546 = vld [vmem:[%s0 + $0x1028] sm:$0xff]
  %v547 = vld [vmem:[%s0 + $0x1030] sm:$0xff]
  %v548 = vld [vmem:[%s0 + $0x1038] sm:$0xff]
  %v549 = vld [vmem:[%s0 + $0x1040] sm:$0xff]
  %v550 = vld [vmem:[%s0 + $0x1048] sm:$0xff]
  %v551 = vld [vmem:[%s0 + $0x1050] sm:$0xff]
  %v552 = vld [vmem:[%s0 + $0x1058] sm:$0xff]
  %v553 = vld [vmem:[%s0 + $0x1060] sm:$0xff]
  %v554 = vld [vmem:[%s0 + $0x1068] sm:$0xff]
  %v555 = vld [vmem:[%s0 + $0x1070] sm:$0xff]
  %v556 = vld [vmem:[%s0 + $0x1078] sm:$0xff]
  %v557 = vld [vmem:[%s0 + $0x1080] sm:$0xff]
  %v558 = vld [vmem:[%s0 + $0x1088] sm:$0xff]
  %v559 = vld [vmem:[%s0 + $0x1090] sm:$0xff]
  %v560 = vld [vmem:[%s0 + $0x1098] sm:$0xff]
  %v561 = vld [vmem:[%s0 + $0x10a0] sm:$0xff]
  %v562 = vld [vmem:[%s0 + $0x10a8] sm:$0xff]
  %v563 = vld [vmem:[%s0 + $0x10b0] sm:$0xff]
  %v564 = vld [vmem:[%s0 + $0x10b8] sm:$0xff]
  %v565 = vld [vmem:[%s0 + $0x10c0] sm:$0xff]
  %v566 = vld [vmem:[%s0 + $0x10c8] sm:$0xff]
  %v567 = vld [vmem:[%s0 + $0x10d0] sm:$0xff]
  %v568 = vld [vmem:[%s0 + $0x10d8] sm:$0xff]
  %v569 = vld [vmem:[%s0 + $0x10e0] sm:$0xff]
  %v570 = vld [vmem:[%s0 + $0x10e8] sm:$0xff]
  %v571 = vld [vmem:[%s0 + $0x10f0] sm:$0xff]
  %v572 = vld [vmem:[%s0 + $0x10f8] sm:$0xff]
  %v573 = vld [vmem:[%s0 + $0x1100] sm:$0xff]
  %v574 = vld [vmem:[%s0 + $0x1108] sm:$0xff]
  %v575 = vld [vmem:[%s0 + $0x1110] sm:$0xff]
  %v576 = vld [vmem:[%s0 + $0x1118] sm:$0xff]
  %v577 = vld [vmem:[%s0 + $0x1120] sm:$0xff]
  %v578 = vld [vmem:[%s0 + $0x1128] sm:$0xff]
  %v579 = vld [vmem:[%s0 + $0x1130] sm:$0xff]
  %v580 = vld [vmem:[%s0 + $0x1138] sm:$0xff]
  %v581 = vld [vmem:[%s0 + $0x1140] sm:$0xff]
  %v582 = vld [vmem:[%s0 + $0x1148] sm:$0xff]
  %v583 = vld [vmem:[%s0 + $0x1150] sm:$0xff]
  %v584 = vld [vmem:[%s0 + $0x1158] sm:$0xff]
  %v585 = vld [vmem:[%s0 + $0x1160] sm:$0xff]
  %v586 = vld [vmem:[%s0 + $0x1168] sm:$0xff]
  %v587 = vld [vmem:[%s0 + $0x1170] sm:$0xff]
  %v588 = vld [vmem:[%s0 + $0x1178] sm:$0xff]
  %v589 = vld [vmem:[%s0 + $0x1180] sm:$0xff]
  %v590 = vld [vmem:[%s0 + $0x1188] sm:$0xff]
  %v591 = vld [vmem:[%s0 + $0x1190] sm:$0xff]
  %v592 = vld [vmem:[%s0 + $0x1198] sm:$0xff]
  %v593 = vld [vmem:[%s0 + $0x11a0] sm:$0xff]
  %v594 = vld [vmem:[%s0 + $0x11a8] sm:$0xff]
  %v595 = vld [vmem:[%s0 + $0x11b0] sm:$0xff]
  %v596 = vld [vmem:[%s0 + $0x11b8] sm:$0xff]
  %v597 = vld [vmem:[%s0 + $0x11c0] sm:$0xff]
  %v598 = vld [vmem:[%s0 + $0x11c8] sm:$0xff]
  %v599 = vld [vmem:[%s0 + $0x11d0] sm:$0xff]
  %v600 = vld [vmem:[%s0 + $0x11d8] sm:$0xff]
  %v601 = vld [vmem:[%s0 + $0x11e0] sm:$0xff]
  %v602 = vld [vmem:[%s0 + $0x11e8] sm:$0xff]
  %v603 = vld [vmem:[%s0 + $0x11f0] sm:$0xff]
  %v604 = vld [vmem:[%s0 + $0x11f8] sm:$0xff]
  %v605 = vld [vmem:[%s0 + $0x1200] sm:$0xff]
  %v606 = vld [vmem:[%s0 + $0x1208] sm:$0xff]
  %v607 = vld [vmem:[%s0 + $0x1210] sm:$0xff]
  %v608 = vld [vmem:[%s0 + $0x1218] sm:$0xff]
  %v609 = vld [vmem:[%s0 + $0x1220] sm:$0xff]
  %v610 = vld [vmem:[%s0 + $0x1228] sm:$0xff]
  %v611 = vld [vmem:[%s0 + $0x1230] sm:$0xff]
  %v612 = vld [vmem:[%s0 + $0x1238] sm:$0xff]
  %v613 = vld [vmem:[%s0 + $0x1240] sm:$0xff]
  %v614 = vld [vmem:[%s0 + $0x1248] sm:$0xff]
  %v615 = vld [vmem:[%s0 + $0x1250] sm:$0xff]
  %v616 = vld [vmem:[%s0 + $0x1258] sm:$0xff]
  %v617 = vld [vmem:[%s0 + $0x1260] sm:$0xff]
  %v618 = vld [vmem:[%s0 + $0x1268] sm:$0xff]
  %v619 = vld [vmem:[%s0 + $0x1270] sm:$0xff]
  %v620 = vld [vmem:[%s0 + $0x1278] sm:$0xff]
  %v621 = vld [vmem:[%s0 + $0x1280] sm:$0xff]
  %v622 = vld [vmem:[%s0 + $0x1288] sm:$0xff]
  %v623 = vld [vmem:[%s0 + $0x1290] sm:$0xff]
  %v624 = vld [vmem:[%s0 + $0x1298] sm:$0xff]
  %v625 = vld [vmem:[%s0 + $0x12a0] sm:$0xff]
  %v626 = vld [vmem:[%s0 + $0x12a8] sm:$0xff]
  %v627 = vld [vmem:[%s0 + $0x12b0] sm:$0xff]
  %v628 = vld [vmem:[%s0 + $0x12b8] sm:$0xff]
  %v629 = vld [vmem:[%s0 + $0x12c0] sm:$0xff]
  %v630 = vld [vmem:[%s0 + $0x12c8] sm:$0xff]
  %v631 = vld [vmem:[%s0 + $0x12d0] sm:$0xff]
  %v632 = vld [vmem:[%s0 + $0x12d8] sm:$0xff]
  %v633 = vld [vmem:[%s0 + $0x12e0] sm:$0xff]
  %v634 = vld [vmem:[%s0 + $0x12e8] sm:$0xff]
  %v635 = vld [vmem:[%s0 + $0x12f0] sm:$0xff]
  %v636 = vld [vmem:[%s0 + $0x12f8] sm:$0xff]
  %v637 = vld [vmem:[%s0 + $0x1300] sm:$0xff]
  %v638 = vld [vmem:[%s0 + $0x1308] sm:$0xff]
  %v639 = vld [vmem:[%s0 + $0x1310] sm:$0xff]
  %v640 = vld [vmem:[%s0 + $0x1318] sm:$0xff]
  %v641 = vld [vmem:[%s0 + $0x1320] sm:$0xff]
  %v642 = vld [vmem:[%s0 + $0x1328] sm:$0xff]
  %v643 = vld [vmem:[%s0 + $0x1330] sm:$0xff]
  %v644 = vld [vmem:[%s0 + $0x1338] sm:$0xff]
  %v645 = vld [vmem:[%s0 + $0x1340] sm:$0xff]
  %v646 = vld [vmem:[%s0 + $0x1348] sm:$0xff]
  %v647 = vld [vmem:[%s0 + $0x1350] sm:$0xff]
  %v648 = vld [vmem:[%s0 + $0x1358] sm:$0xff]
  %v649 = vld [vmem:[%s0 + $0x1360] sm:$0xff]
  %v650 = vld [vmem:[%s0 + $0x1368] sm:$0xff]
  %v651 = vld [vmem:[%s0 + $0x1370] sm:$0xff]
  %v652 = vld [vmem:[%s0 + $0x1378] sm:$0xff]
  %v653 = vld [vmem:[%s0 + $0x1380] sm:$0xff]
  %v654 = vld [vmem:[%s0 + $0x1388] sm:$0xff]
  %v655 = vld [vmem:[%s0 + $0x1390] sm:$0xff]
  %v656 = vld [vmem:[%s0 + $0x1398] sm:$0xff]
  %v657 = vld [vmem:[%s0 + $0x13a0] sm:$0xff]
  %v658 = vld [vmem:[%s0 + $0x13a8] sm:$0xff]
  %v659 = vld [vmem:[%s0 + $0x13b0] sm:$0xff]
  %v660 = vld [vmem:[%s0 + $0x13b8] sm:$0xff]
  %v661 = vld [vmem:[%s0 + $0x13c0] sm:$0xff]
  %v662 = vld [vmem:[%s0 + $0x13c8] sm:$0xff]
  %v663 = vld [vmem:[%s0 + $0x13d0] sm:$0xff]
  %v664 = vld [vmem:[%s0 + $0x13d8] sm:$0xff]
  %v665 = vld [vmem:[%s0 + $0x13e0] sm:$0xff]
  %v666 = vld [vmem:[%s0 + $0x13e8] sm:$0xff]
  %v667 = vld [vmem:[%s0 + $0x13f0] sm:$0xff]
  %v668 = vld [vmem:[%s0 + $0x13f8] sm:$0xff]
  %v669 = vld [vmem:[%s0 + $0x1400] sm:$0xff]
  %v670 = vld [vmem:[%s0 + $0x1408] sm:$0xff]
  %v671 = vld [vmem:[%s0 + $0x1410] sm:$0xff]
  %v672 = vld [vmem:[%s0 + $0x1418] sm:$0xff]
  %v673 = vld [vmem:[%s0 + $0x1420] sm:$0xff]
  %v674 = vld [vmem:[%s0 + $0x1428] sm:$0xff]
  %v675 = vld [vmem:[%s0 + $0x1430] sm:$0xff]
  %v676 = vld [vmem:[%s0 + $0x1438] sm:$0xff]
  %v677 = vld [vmem:[%s0 + $0x1440] sm:$0xff]
  %v678 = vld [vmem:[%s0 + $0x1448] sm:$0xff]
  %v679 = vld [vmem:[%s0 + $0x1450] sm:$0xff]
  %v680 = vld [vmem:[%s0 + $0x1458] sm:$0xff]
  %v681 = vld [vmem:[%s0 + $0x1460] sm:$0xff]
  %v682 = vld [vmem:[%s0 + $0x1468] sm:$0xff]
  %v683 = vld [vmem:[%s0 + $0x1470] sm:$0xff]
  %v684 = vld [vmem:[%s0 + $0x1478] sm:$0xff]
  %v685 = vld [vmem:[%s0 + $0x1480] sm:$0xff]
  %v686 = vld [vmem:[%s0 + $0x1488] sm:$0xff]
  %v687 = vld [vmem:[%s0 + $0x1490] sm:$0xff]
  %v688 = vld [vmem:[%s0 + $0x1498] sm:$0xff]
  %v689 = vld [vmem:[%s0 + $0x14a0] sm:$0xff]
  %v690 = vld [vmem:[%s0 + $0x14a8] sm:$0xff]
  %v691 = vld [vmem:[%s0 + $0x14b0] sm:$0xff]
  %v692 = vld [vmem:[%s0 + $0x14b8] sm:$0xff]
  %v693 = vld [vmem:[%s0 + $0x14c0] sm:$0xff]
  %v694 = vld [vmem:[%s0 + $0x14c8] sm:$0xff]
  %v695 = vld [vmem:[%s0 + $0x14d0] sm:$0xff]
  %v696 = vld [vmem:[%s0 + $0x14d8] sm:$0xff]
  %v697 = vld [vmem:[%s0 + $0x14e0] sm:$0xff]
  %v698 = vld [vmem:[%s0 + $0x14e8] sm:$0xff]
  %v699 = vld [vmem:[%s0 + $0x14f0] sm:$0xff]
  %v700 = vld [vmem:[%s0 + $0x14f8] sm:$0xff]
  %v701 = vld [vmem:[%s0 + $0x1500] sm:$0xff]
  %v702 = vld [vmem:[%s0 + $0x1508] sm:$0xff]
  %v703 = vld [vmem:[%s0 + $0x1510] sm:$0xff]
  %v704 = vld [vmem:[%s0 + $0x1518] sm:$0xff]
  %v705 = vld [vmem:[%s0 + $0x1520] sm:$0xff]
  %v706 = vld [vmem:[%s0 + $0x1528] sm:$0xff]
  %v707 = vld [vmem:[%s0 + $0x1530] sm:$0xff]
  %v708 = vld [vmem:[%s0 + $0x1538] sm:$0xff]
  %v709 = vld [vmem:[%s0 + $0x1540] sm:$0xff]
  %v710 = vld [vmem:[%s0 + $0x1548] sm:$0xff]
  %v711 = vld [vmem:[%s0 + $0x1550] sm:$0xff]
  %v712 = vld [vmem:[%s0 + $0x1558] sm:$0xff]
  %v713 = vld [vmem:[%s0 + $0x1560] sm:$0xff]
  %v714 = vld [vmem:[%s0 + $0x1568] sm:$0xff]
  %v715 = vld [vmem:[%s0 + $0x1570] sm:$0xff]
  %v716 = vld [vmem:[%s0 + $0x1578] sm:$0xff]
  %v717 = vld [vmem:[%s0 + $0x1580] sm:$0xff]
  %v718 = vld [vmem:[%s0 + $0x1588] sm:$0xff]
  %v719 = vld [vmem:[%s0 + $0x1590] sm:$0xff]
  %v720 = vld [vmem:[%s0 + $0x1598] sm:$0xff]
  %v721 = vld [vmem:[%s0 + $0x15a0] sm:$0xff]
  %v722 = vld [vmem:[%s0 + $0x15a8] sm:$0xff]
  %v723 = vld [vmem:[%s0 + $0x15b0] sm:$0xff]
  %v724 = vld [vmem:[%s0 + $0x15b8] sm:$0xff]
  %v725 = vld [vmem:[%s0 + $0x15c0] sm:$0xff]
  %v726 = vld [vmem:[%s0 + $0x15c8] sm:$0xff]
  %v727 = vld [vmem:[%s0 + $0x15d0] sm:$0xff]
  %v728 = vld [vmem:[%s0 + $0x15d8] sm:$0xff]
  %v729 = vld [vmem:[%s0 + $0x15e0] sm:$0xff]
  %v730 = vld [vmem:[%s0 + $0x15e8] sm:$0xff]
  %v731 = vld [vmem:[%s0 + $0x15f0] sm:$0xff]
  %v732 = vld [vmem:[%s0 + $0x15f8] sm:$0xff]
  %v733 = vld [vmem:[%s0 + $0x1600] sm:$0xff]
  %v734 = vld [vmem:[%s0 + $0x1608] sm:$0xff]
  %v735 = vld [vmem:[%s0 + $0x1610] sm:$0xff]
  %v736 = vld [vmem:[%s0 + $0x1618] sm:$0xff]
  %v737 = vld [vmem:[%s0 + $0x1620] sm:$0xff]
  %v738 = vld [vmem:[%s0 + $0x1628] sm:$0xff]
  %v739 = vld [vmem:[%s0 + $0x1630] sm:$0xff]
  %v740 = vld [vmem:[%s0 + $0x1638] sm:$0xff]
  %v741 = vld [vmem:[%s0 + $0x1640] sm:$0xff]
  %v742 = vld [vmem:[%s0 + $0x1648] sm:$0xff]
  %v743 = vld [vmem:[%s0 + $0x1650] sm:$0xff]
  %v744 = vld [vmem:[%s0 + $0x1658] sm:$0xff]
  %v745 = vld [vmem:[%s0 + $0x1660] sm:$0xff]
  %v746 = vld [vmem:[%s0 + $0x1668] sm:$0xff]
  %v747 = vld [vmem:[%s0 + $0x1670] sm:$0xff]
  %v748 = vld [vmem:[%s0 + $0x1678] sm:$0xff]
  %v749 = vld [vmem:[%s0 + $0x1680] sm:$0xff]
  %v750 = vld [vmem:[%s0 + $0x1688] sm:$0xff]
  %v751 = vld [vmem:[%s0 + $0x1690] sm:$0xff]
  %v752 = vld [vmem:[%s0 + $0x1698] sm:$0xff]
  %v753 = vld [vmem:[%s0 + $0x16a0] sm:$0xff]
  %v754 = vld [vmem:[%s0 + $0x16a8] sm:$0xff]
  %v755 = vld [vmem:[%s0 + $0x16b0] sm:$0xff]
  %v756 = vld [vmem:[%s0 + $0x16b8] sm:$0xff]
  %v757 = vld [vmem:[%s0 + $0x16c0] sm:$0xff]
  %v758 = vld [vmem:[%s0 + $0x16c8] sm:$0xff]
  %v759 = vld [vmem:[%s0 + $0x16d0] sm:$0xff]
  %v760 = vld [vmem:[%s0 + $0x16d8] sm:$0xff]
  %v761 = vld [vmem:[%s0 + $0x16e0] sm:$0xff]
  %v762 = vld [vmem:[%s0 + $0x16e8] sm:$0xff]
  %v763 = vld [vmem:[%s0 + $0x16f0] sm:$0xff]
  %v764 = vld [vmem:[%s0 + $0x16f8] sm:$0xff]
  %v765 = vld [vmem:[%s0 + $0x1700] sm:$0xff]
  %v766 = vld [vmem:[%s0 + $0x1708] sm:$0xff]
  %v767 = vld [vmem:[%s0 + $0x1710] sm:$0xff]
  %v768 = vld [vmem:[%s0 + $0x1718] sm:$0xff]
  %v769 = vld [vmem:[%s0 + $0x1720] sm:$0xff]
  %v770 = vld [vmem:[%s0 + $0x1728] sm:$0xff]
  %v771 = vld [vmem:[%s0 + $0x1730] sm:$0xff]
  %v772 = vld [vmem:[%s0 + $0x1738] sm:$0xff]
  %v773 = vld [vmem:[%s0 + $0x1740] sm:$0xff]
  %v774 = vld [vmem:[%s0 + $0x1748] sm:$0xff]
  %v775 = vld [vmem:[%s0 + $0x1750] sm:$0xff]
  %v776 = vld [vmem:[%s0 + $0x1758] sm:$0xff]
  %v777 = vld [vmem:[%s0 + $0x1760] sm:$0xff]
  %v778 = vld [vmem:[%s0 + $0x1768] sm:$0xff]
  %v779 = vld [vmem:[%s0 + $0x1770] sm:$0xff]
  %v780 = vld [vmem:[%s0 + $0x1778] sm:$0xff]
  %v781 = vld [vmem:[%s0 + $0x1780] sm:$0xff]
  %v782 = vld [vmem:[%s0 + $0x1788] sm:$0xff]
  %v783 = vld [vmem:[%s0 + $0x1790] sm:$0xff]
  %v784 = vld [vmem:[%s0 + $0x1798] sm:$0xff]
  %v785 = vld [vmem:[%s0 + $0x17a0] sm:$0xff]
  %v786 = vld [vmem:[%s0 + $0x17a8] sm:$0xff]
  %v787 = vld [vmem:[%s0 + $0x17b0] sm:$0xff]
  %v788 = vld [vmem:[%s0 + $0x17b8] sm:$0xff]
  %v789 = vld [vmem:[%s0 + $0x17c0] sm:$0xff]
  %v790 = vld [vmem:[%s0 + $0x17c8] sm:$0xff]
  %v791 = vld [vmem:[%s0 + $0x17d0] sm:$0xff]
  %v792 = vld [vmem:[%s0 + $0x17d8] sm:$0xff]
  %v793 = vld [vmem:[%s0 + $0x17e0] sm:$0xff]
  %v794 = vld [vmem:[%s0 + $0x17e8] sm:$0xff]
  %v795 = vld [vmem:[%s0 + $0x17f0] sm:$0xff]
  %v796 = vld [vmem:[%s0 + $0x17f8] sm:$0xff]
  %v797 = vld [vmem:[%s0 + $0x1800] sm:$0xff]
  %v798 = vld [vmem:[%s0 + $0x1808] sm:$0xff]
  %v799 = vld [vmem:[%s0 + $0x1810] sm:$0xff]
  %v800 = vld [vmem:[%s0 + $0x1818] sm:$0xff]
  %v801 = vld [vmem:[%s0 + $0x1820] sm:$0xff]
  %v802 = vld [vmem:[%s0 + $0x1828] sm:$0xff]
  %v803 = vld [vmem:[%s0 + $0x1830] sm:$0xff]
  %v804 = vld [vmem:[%s0 + $0x1838] sm:$0xff]
  %v805 = vld [vmem:[%s0 + $0x1840] sm:$0xff]
  %v806 = vld [vmem:[%s0 + $0x1848] sm:$0xff]
  %v807 = vld [vmem:[%s0 + $0x1850] sm:$0xff]
  %v808 = vld [vmem:[%s0 + $0x1858] sm:$0xff]
  %v809 = vld [vmem:[%s0 + $0x1860] sm:$0xff]
  %v810 = vld [vmem:[%s0 + $0x1868] sm:$0xff]
  %v811 = vld [vmem:[%s0 + $0x1870] sm:$0xff]
  %v812 = vld [vmem:[%s0 + $0x1878] sm:$0xff]
  %v813 = vld [vmem:[%s0 + $0x1880] sm:$0xff]
  %v814 = vld [vmem:[%s0 + $0x1888] sm:$0xff]
  %v815 = vld [vmem:[%s0 + $0x1890] sm:$0xff]
  %v816 = vld [vmem:[%s0 + $0x1898] sm:$0xff]
  %v817 = vld [vmem:[%s0 + $0x18a0] sm:$0xff]
  %v818 = vld [vmem:[%s0 + $0x18a8] sm:$0xff]
  %v819 = vld [vmem:[%s0 + $0x18b0] sm:$0xff]
  %v820 = vld [vmem:[%s0 + $0x18b8] sm:$0xff]
  %v821 = vld [vmem:[%s0 + $0x18c0] sm:$0xff]
  %v822 = vld [vmem:[%s0 + $0x18c8] sm:$0xff]
  %v823 = vld [vmem:[%s0 + $0x18d0] sm:$0xff]
  %v824 = vld [vmem:[%s0 + $0x18d8] sm:$0xff]
  %v825 = vld [vmem:[%s0 + $0x18e0] sm:$0xff]
  %v826 = vld [vmem:[%s0 + $0x18e8] sm:$0xff]
  %v827 = vld [vmem:[%s0 + $0x18f0] sm:$0xff]
  %v828 = vld [vmem:[%s0 + $0x18f8] sm:$0xff]
  %v829 = vld [vmem:[%s0 + $0x1900] sm:$0xff]
  %v830 = vld [vmem:[%s0 + $0x1908] sm:$0xff]
  %v831 = vld [vmem:[%s0 + $0x1910] sm:$0xff]
  %v832 = vld [vmem:[%s0 + $0x1918] sm:$0xff]
  %v833 = vld [vmem:[%s0 + $0x1920] sm:$0xff]
  %v834 = vld [vmem:[%s0 + $0x1928] sm:$0xff]
  %v835 = vld [vmem:[%s0 + $0x1930] sm:$0xff]
  %v836 = vld [vmem:[%s0 + $0x1938] sm:$0xff]
  %v837 = vld [vmem:[%s0 + $0x1940] sm:$0xff]
  %v838 = vld [vmem:[%s0 + $0x1948] sm:$0xff]
  %v839 = vld [vmem:[%s0 + $0x1950] sm:$0xff]
  %v840 = vld [vmem:[%s0 + $0x1958] sm:$0xff]
  %v841 = vld [vmem:[%s0 + $0x1960] sm:$0xff]
  %v842 = vld [vmem:[%s0 + $0x1968] sm:$0xff]
  %v843 = vld [vmem:[%s0 + $0x1970] sm:$0xff]
  %v844 = vld [vmem:[%s0 + $0x1978] sm:$0xff]
  %v845 = vld [vmem:[%s0 + $0x1980] sm:$0xff]
  %v846 = vld [vmem:[%s0 + $0x1988] sm:$0xff]
  %v847 = vld [vmem:[%s0 + $0x1990] sm:$0xff]
  %v848 = vld [vmem:[%s0 + $0x1998] sm:$0xff]
  %v849 = vld [vmem:[%s0 + $0x19a0] sm:$0xff]
  %v850 = vld [vmem:[%s0 + $0x19a8] sm:$0xff]
  %v851 = vld [vmem:[%s0 + $0x19b0] sm:$0xff]
  %v852 = vld [vmem:[%s0 + $0x19b8] sm:$0xff]
  %v853 = vld [vmem:[%s0 + $0x19c0] sm:$0xff]
  %v854 = vld [vmem:[%s0 + $0x19c8] sm:$0xff]
  %v855 = vld [vmem:[%s0 + $0x19d0] sm:$0xff]
  %v856 = vld [vmem:[%s0 + $0x19d8] sm:$0xff]
  %v857 = vld [vmem:[%s0 + $0x19e0] sm:$0xff]
  %v858 = vld [vmem:[%s0 + $0x19e8] sm:$0xff]
  %v859 = vld [vmem:[%s0 + $0x19f0] sm:$0xff]
  %v860 = vld [vmem:[%s0 + $0x19f8] sm:$0xff]
  %v861 = vld [vmem:[%s0 + $0x1a00] sm:$0xff]
  %v862 = vld [vmem:[%s0 + $0x1a08] sm:$0xff]
  %v863 = vld [vmem:[%s0 + $0x1a10] sm:$0xff]
  %v864 = vld [vmem:[%s0 + $0x1a18] sm:$0xff]
  %v865 = vld [vmem:[%s0 + $0x1a20] sm:$0xff]
  %v866 = vld [vmem:[%s0 + $0x1a28] sm:$0xff]
  %v867 = vld [vmem:[%s0 + $0x1a30] sm:$0xff]
  %v868 = vld [vmem:[%s0 + $0x1a38] sm:$0xff]
  %v869 = vld [vmem:[%s0 + $0x1a40] sm:$0xff]
  %v870 = vld [vmem:[%s0 + $0x1a48] sm:$0xff]
  %v871 = vld [vmem:[%s0 + $0x1a50] sm:$0xff]
  %v872 = vld [vmem:[%s0 + $0x1a58] sm:$0xff]
  %v873 = vld [vmem:[%s0 + $0x1a60] sm:$0xff]
  %v874 = vld [vmem:[%s0 + $0x1a68] sm:$0xff]
  %v875 = vld [vmem:[%s0 + $0x1a70] sm:$0xff]
  %v876 = vld [vmem:[%s0 + $0x1a78] sm:$0xff]
  %v877 = vld [vmem:[%s0 + $0x1a80] sm:$0xff]
  %v878 = vld [vmem:[%s0 + $0x1a88] sm:$0xff]
  %v879 = vld [vmem:[%s0 + $0x1a90] sm:$0xff]
  %v880 = vld [vmem:[%s0 + $0x1a98] sm:$0xff]
  %v881 = vld [vmem:[%s0 + $0x1aa0] sm:$0xff]
  %v882 = vld [vmem:[%s0 + $0x1aa8] sm:$0xff]
  %v883 = vld [vmem:[%s0 + $0x1ab0] sm:$0xff]
  %v884 = vld [vmem:[%s0 + $0x1ab8] sm:$0xff]
  %v885 = vld [vmem:[%s0 + $0x1ac0] sm:$0xff]
  %v886 = vld [vmem:[%s0 + $0x1ac8] sm:$0xff]
  %v887 = vld [vmem:[%s0 + $0x1ad0] sm:$0xff]
  %v888 = vld [vmem:[%s0 + $0x1ad8] sm:$0xff]
  %v889 = vld [vmem:[%s0 + $0x1ae0] sm:$0xff]
  %v890 = vld [vmem:[%s0 + $0x1ae8] sm:$0xff]
  %v891 = vld [vmem:[%s0 + $0x1af0] sm:$0xff]
  %v892 = vld [vmem:[%s0 + $0x1af8] sm:$0xff]
  %v893 = vld [vmem:[%s0 + $0x1b00] sm:$0xff]
  %v894 = vld [vmem:[%s0 + $0x1b08] sm:$0xff]
  %v895 = vld [vmem:[%s0 + $0x1b10] sm:$0xff]
  %v896 = vld [vmem:[%s0 + $0x1b18] sm:$0xff]
  %v897 = vld [vmem:[%s0 + $0x1b20] sm:$0xff]
  %v898 = vld [vmem:[%s0 + $0x1b28] sm:$0xff]
  %v899 = vld [vmem:[%s0 + $0x1b30] sm:$0xff]
  %v900 = vld [vmem:[%s0 + $0x1b38] sm:$0xff]
  %v901 = vld [vmem:[%s0 + $0x1b40] sm:$0xff]
  %v902 = vld [vmem:[%s0 + $0x1b48] sm:$0xff]
  %v903 = vld [vmem:[%s0 + $0x1b50] sm:$0xff]
  %v904 = vld [vmem:[%s0 + $0x1b58] sm:$0xff]
  %v905 = vld [vmem:[%s0 + $0x1b60] sm:$0xff]
  %v906 = vld [vmem:[%s0 + $0x1b68] sm:$0xff]
  %v907 = vld [vmem:[%s0 + $0x1b70] sm:$0xff]
  %v908 = vld [vmem:[%s0 + $0x1b78] sm:$0xff]
  %v909 = vld [vmem:[%s0 + $0x1b80] sm:$0xff]
  %v910 = vld [vmem:[%s0 + $0x1b88] sm:$0xff]
  %v911 = vld [vmem:[%s0 + $0x1b90] sm:$0xff]
  %v912 = vld [vmem:[%s0 + $0x1b98] sm:$0xff]
  %v913 = vld [vmem:[%s0 + $0x1ba0] sm:$0xff]
  %v914 = vld [vmem:[%s0 + $0x1ba8] sm:$0xff]
  %v915 = vld [vmem:[%s0 + $0x1bb0] sm:$0xff]
  %v916 = vld [vmem:[%s0 + $0x1bb8] sm:$0xff]
  %v917 = vld [vmem:[%s0 + $0x1bc0] sm:$0xff]
  %v918 = vld [vmem:[%s0 + $0x1bc8] sm:$0xff]
  %v919 = vld [vmem:[%s0 + $0x1bd0] sm:$0xff]
  %v920 = vld [vmem:[%s0 + $0x1bd8] sm:$0xff]
  %v921 = vld [vmem:[%s0 + $0x1be0] sm:$0xff]
  %v922 = vld [vmem:[%s0 + $0x1be8] sm:$0xff]
  %v923 = vld [vmem:[%s0 + $0x1bf0] sm:$0xff]
  %v924 = vld [vmem:[%s0 + $0x1bf8] sm:$0xff]
  %v925 = vld [vmem:[%s0 + $0x1c00] sm:$0xff]
  %v926 = vld [vmem:[%s0 + $0x1c08] sm:$0xff]
  %v927 = vld [vmem:[%s0 + $0x1c10] sm:$0xff]
  %v928 = vld [vmem:[%s0 + $0x1c18] sm:$0xff]
  %v929 = vld [vmem:[%s0 + $0x1c20] sm:$0xff]
  %v930 = vld [vmem:[%s0 + $0x1c28] sm:$0xff]
  %v931 = vld [vmem:[%s0 + $0x1c30] sm:$0xff]
  %v932 = vld [vmem:[%s0 + $0x1c38] sm:$0xff]
  %v933 = vld [vmem:[%s0 + $0x1c40] sm:$0xff]
  %v934 = vld [vmem:[%s0 + $0x1c48] sm:$0xff]
  %v935 = vld [vmem:[%s0 + $0x1c50] sm:$0xff]
  %v936 = vld [vmem:[%s0 + $0x1c58] sm:$0xff]
  %v937 = vld [vmem:[%s0 + $0x1c60] sm:$0xff]
  %v938 = vld [vmem:[%s0 + $0x1c68] sm:$0xff]
  %v939 = vld [vmem:[%s0 + $0x1c70] sm:$0xff]
  %v940 = vld [vmem:[%s0 + $0x1c78] sm:$0xff]
  %v941 = vld [vmem:[%s0 + $0x1c80] sm:$0xff]
  %v942 = vld [vmem:[%s0 + $0x1c88] sm:$0xff]
  %v943 = vld [vmem:[%s0 + $0x1c90] sm:$0xff]
  %v944 = vld [vmem:[%s0 + $0x1c98] sm:$0xff]
  %v945 = vld [vmem:[%s0 + $0x1ca0] sm:$0xff]
  %v946 = vld [vmem:[%s0 + $0x1ca8] sm:$0xff]
  %v947 = vld [vmem:[%s0 + $0x1cb0] sm:$0xff]
  %v948 = vld [vmem:[%s0 + $0x1cb8] sm:$0xff]
  %v949 = vld [vmem:[%s0 + $0x1cc0] sm:$0xff]
  %v950 = vld [vmem:[%s0 + $0x1cc8] sm:$0xff]
  %v951 = vld [vmem:[%s0 + $0x1cd0] sm:$0xff]
  %v952 = vld [vmem:[%s0 + $0x1cd8] sm:$0xff]
  %v953 = vld [vmem:[%s0 + $0x1ce0] sm:$0xff]
  %v954 = vld [vmem:[%s0 + $0x1ce8] sm:$0xff]
  %v955 = vld [vmem:[%s0 + $0x1cf0] sm:$0xff]
  %v956 = vld [vmem:[%s0 + $0x1cf8] sm:$0xff]
  %v957 = vld [vmem:[%s0 + $0x1d00] sm:$0xff]
  %v958 = vld [vmem:[%s0 + $0x1d08] sm:$0xff]
  %v959 = vld [vmem:[%s0 + $0x1d10] sm:$0xff]
  %v960 = vld [vmem:[%s0 + $0x1d18] sm:$0xff]
  %v961 = vld [vmem:[%s0 + $0x1d20] sm:$0xff]
  %v962 = vld [vmem:[%s0 + $0x1d28] sm:$0xff]
  %v963 = vld [vmem:[%s0 + $0x1d30] sm:$0xff]
  %v964 = vld [vmem:[%s0 + $0x1d38] sm:$0xff]
  %v965 = vld [vmem:[%s0 + $0x1d40] sm:$0xff]
  %v966 = vld [vmem:[%s0 + $0x1d48] sm:$0xff]
  %v967 = vld [vmem:[%s0 + $0x1d50] sm:$0xff]
  %v968 = vld [vmem:[%s0 + $0x1d58] sm:$0xff]
  %v969 = vld [vmem:[%s0 + $0x1d60] sm:$0xff]
  %v970 = vld [vmem:[%s0 + $0x1d68] sm:$0xff]
  %v971 = vld [vmem:[%s0 + $0x1d70] sm:$0xff]
  %v972 = vld [vmem:[%s0 + $0x1d78] sm:$0xff]
  %v973 = vld [vmem:[%s0 + $0x1d80] sm:$0xff]
  %v974 = vld [vmem:[%s0 + $0x1d88] sm:$0xff]
  %v975 = vld [vmem:[%s0 + $0x1d90] sm:$0xff]
  %v976 = vld [vmem:[%s0 + $0x1d98] sm:$0xff]
  %v977 = vld [vmem:[%s0 + $0x1da0] sm:$0xff]
  %v978 = vld [vmem:[%s0 + $0x1da8] sm:$0xff]
  %v979 = vld [vmem:[%s0 + $0x1db0] sm:$0xff]
  %v980 = vld [vmem:[%s0 + $0x1db8] sm:$0xff]
  %v981 = vld [vmem:[%s0 + $0x1dc0] sm:$0xff]
  %v982 = vld [vmem:[%s0 + $0x1dc8] sm:$0xff]
  %v983 = vld [vmem:[%s0 + $0x1dd0] sm:$0xff]
  %v984 = vld [vmem:[%s0 + $0x1dd8] sm:$0xff]
  %v985 = vld [vmem:[%s0 + $0x1de0] sm:$0xff]
  %v986 = vld [vmem:[%s0 + $0x1de8] sm:$0xff]
  %v987 = vld [vmem:[%s0 + $0x1df0] sm:$0xff]
  %v988 = vld [vmem:[%s0 + $0x1df8] sm:$0xff]
  %v989 = vld [vmem:[%s0 + $0x1e00] sm:$0xff]
  %v990 = vld [vmem:[%s0 + $0x1e08] sm:$0xff]
  %v991 = vld [vmem:[%s0 + $0x1e10] sm:$0xff]
  %v992 = vld [vmem:[%s0 + $0x1e18] sm:$0xff]
  %v993 = vld [vmem:[%s0 + $0x1e20] sm:$0xff]
  %v994 = vld [vmem:[%s0 + $0x1e28] sm:$0xff]
  %v995 = vld [vmem:[%s0 + $0x1e30] sm:$0xff]
  %v996 = vld [vmem:[%s0 + $0x1e38] sm:$0xff]
  %v997 = vld [vmem:[%s0 + $0x1e40] sm:$0xff]
  %v998 = vld [vmem:[%s0 + $0x1e48] sm:$0xff]
  %v999 = vld [vmem:[%s0 + $0x1e50] sm:$0xff]
  %v1000 = vld [vmem:[%s0 + $0x1e58] sm:$0xff]
  %v1001 = vld [vmem:[%s0 + $0x1e60] sm:$0xff]
  %v1002 = vld [vmem:[%s0 + $0x1e68] sm:$0xff]
  %v1003 = vld [vmem:[%s0 + $0x1e70] sm:$0xff]
  %v1004 = vld [vmem:[%s0 + $0x1e78] sm:$0xff]
  %v1005 = vld [vmem:[%s0 + $0x1e80] sm:$0xff]
  %v1006 = vld [vmem:[%s0 + $0x1e88] sm:$0xff]
  %v1007 = vld [vmem:[%s0 + $0x1e90] sm:$0xff]
  %v1008 = vld [vmem:[%s0 + $0x1e98] sm:$0xff]
  %v1009 = vld [vmem:[%s0 + $0x1ea0] sm:$0xff]
  %v1010 = vld [vmem:[%s0 + $0x1ea8] sm:$0xff]
  %v1011 = vld [vmem:[%s0 + $0x1eb0] sm:$0xff]
  %v1012 = vld [vmem:[%s0 + $0x1eb8] sm:$0xff]
  %v1013 = vld [vmem:[%s0 + $0x1ec0] sm:$0xff]
  %v1014 = vld [vmem:[%s0 + $0x1ec8] sm:$0xff]
  %v1015 = vld [vmem:[%s0 + $0x1ed0] sm:$0xff]
  %v1016 = vld [vmem:[%s0 + $0x1ed8] sm:$0xff]
  %v1017 = vld [vmem:[%s0 + $0x1ee0] sm:$0xff]
  %v1018 = vld [vmem:[%s0 + $0x1ee8] sm:$0xff]
  %v1019 = vld [vmem:[%s0 + $0x1ef0] sm:$0xff]
  %v1020 = vld [vmem:[%s0 + $0x1ef8] sm:$0xff]
  %v1021 = vld [vmem:[%s0 + $0x1f00] sm:$0xff]
  %v1022 = vld [vmem:[%s0 + $0x1f08] sm:$0xff]
  %v1023 = vld [vmem:[%s0 + $0x1f10] sm:$0xff]
  %v1024 = vld [vmem:[%s0 + $0x1f18] sm:$0xff]
  %v1025 = vld [vmem:[%s0 + $0x1f20] sm:$0xff]
  %v1026 = vld [vmem:[%s0 + $0x1f28] sm:$0xff]
  %v1027 = vld [vmem:[%s0 + $0x1f30] sm:$0xff]
  %v1028 = vld [vmem:[%s0 + $0x1f38] sm:$0xff]
  %v1029 = vld [vmem:[%s0 + $0x1f40] sm:$0xff]
  %v1030 = vld [vmem:[%s0 + $0x1f48] sm:$0xff]
  %v1031 = vld [vmem:[%s0 + $0x1f50] sm:$0xff]
  %v1032 = vld [vmem:[%s0 + $0x1f58] sm:$0xff]
  %v1033 = vld [vmem:[%s0 + $0x1f60] sm:$0xff]
  %v1034 = vld [vmem:[%s0 + $0x1f68] sm:$0xff]
  %v1035 = vld [vmem:[%s0 + $0x1f70] sm:$0xff]
  %v1036 = vld [vmem:[%s0 + $0x1f78] sm:$0xff]
  %v1037 = vld [vmem:[%s0 + $0x1f80] sm:$0xff]
  %v1038 = vld [vmem:[%s0 + $0x1f88] sm:$0xff]
  %v1039 = vld [vmem:[%s0 + $0x1f90] sm:$0xff]
  %v1040 = vld [vmem:[%s0 + $0x1f98] sm:$0xff]
  %v1041 = vld [vmem:[%s0 + $0x1fa0] sm:$0xff]
  %v1042 = vld [vmem:[%s0 + $0x1fa8] sm:$0xff]
  %v1043 = vld [vmem:[%s0 + $0x1fb0] sm:$0xff]
  %v1044 = vld [vmem:[%s0 + $0x1fb8] sm:$0xff]
  %v1045 = vld [vmem:[%s0 + $0x1fc0] sm:$0xff]
  %v1046 = vld [vmem:[%s0 + $0x1fc8] sm:$0xff]
  %v1047 = vld [vmem:[%s0 + $0x1fd0] sm:$0xff]
  %v1048 = vld [vmem:[%s0 + $0x1fd8] sm:$0xff]
  %v1049 = vld [vmem:[%s0 + $0x1fe0] sm:$0xff]
  %v1050 = vld [vmem:[%s0 + $0x1fe8] sm:$0xff]
  %v1051 = vld [vmem:[%s0 + $0x1ff0] sm:$0xff]
  %v1052 = vld [vmem:[%s0 + $0x1ff8] sm:$0xff]
  %v1053 = vpack.c.bf16 %v30, %v29
  %v1054 = vpack.c.bf16 %v32, %v31
  %v1055 = vpack.c.bf16 %v34, %v33
  %v1056 = vpack.c.bf16 %v36, %v35
  %v1057 = vpack.c.bf16 %v38, %v37
  %v1058 = vpack.c.bf16 %v40, %v39
  %v1059 = vpack.c.bf16 %v42, %v41
  %v1060 = vpack.c.bf16 %v44, %v43
  %v1061 = vpack.c.bf16 %v46, %v45
  %v1062 = vpack.c.bf16 %v48, %v47
  %v1063 = vpack.c.bf16 %v50, %v49
  %v1064 = vpack.c.bf16 %v52, %v51
  %v1065 = vpack.c.bf16 %v54, %v53
  %v1066 = vpack.c.bf16 %v56, %v55
  %v1067 = vpack.c.bf16 %v58, %v57
  %v1068 = vpack.c.bf16 %v60, %v59
  %v1069 = vpack.c.bf16 %v62, %v61
  %v1070 = vpack.c.bf16 %v64, %v63
  %v1071 = vpack.c.bf16 %v66, %v65
  %v1072 = vpack.c.bf16 %v68, %v67
  %v1073 = vpack.c.bf16 %v70, %v69
  %v1074 = vpack.c.bf16 %v72, %v71
  %v1075 = vpack.c.bf16 %v74, %v73
  %v1076 = vpack.c.bf16 %v76, %v75
  %v1077 = vpack.c.bf16 %v78, %v77
  %v1078 = vpack.c.bf16 %v80, %v79
  %v1079 = vpack.c.bf16 %v82, %v81
  %v1080 = vpack.c.bf16 %v84, %v83
  %v1081 = vpack.c.bf16 %v86, %v85
  %v1082 = vpack.c.bf16 %v88, %v87
  %v1083 = vpack.c.bf16 %v90, %v89
  %v1084 = vpack.c.bf16 %v92, %v91
  %v1085 = vpack.c.bf16 %v94, %v93
  %v1086 = vpack.c.bf16 %v96, %v95
  %v1087 = vpack.c.bf16 %v98, %v97
  %v1088 = vpack.c.bf16 %v100, %v99
  %v1089 = vpack.c.bf16 %v102, %v101
  %v1090 = vpack.c.bf16 %v104, %v103
  %v1091 = vpack.c.bf16 %v106, %v105
  %v1092 = vpack.c.bf16 %v108, %v107
  %v1093 = vpack.c.bf16 %v110, %v109
  %v1094 = vpack.c.bf16 %v112, %v111
  %v1095 = vpack.c.bf16 %v114, %v113
  %v1096 = vpack.c.bf16 %v116, %v115
  %v1097 = vpack.c.bf16 %v118, %v117
  %v1098 = vpack.c.bf16 %v120, %v119
  %v1099 = vpack.c.bf16 %v122, %v121
  %v1100 = vpack.c.bf16 %v124, %v123
  %v1101 = vpack.c.bf16 %v126, %v125
  %v1102 = vpack.c.bf16 %v128, %v127
  %v1103 = vpack.c.bf16 %v130, %v129
  %v1104 = vpack.c.bf16 %v132, %v131
  %v1105 = vpack.c.bf16 %v134, %v133
  %v1106 = vpack.c.bf16 %v136, %v135
  %v1107 = vpack.c.bf16 %v138, %v137
  %v1108 = vpack.c.bf16 %v140, %v139
  %v1109 = vpack.c.bf16 %v142, %v141
  %v1110 = vpack.c.bf16 %v144, %v143
  %v1111 = vpack.c.bf16 %v146, %v145
  %v1112 = vpack.c.bf16 %v148, %v147
  %v1113 = vpack.c.bf16 %v150, %v149
  %v1114 = vpack.c.bf16 %v152, %v151
  %v1115 = vpack.c.bf16 %v154, %v153
  %v1116 = vpack.c.bf16 %v156, %v155
  %v1117 = vpack.c.bf16 %v158, %v157
  %v1118 = vpack.c.bf16 %v160, %v159
  %v1119 = vpack.c.bf16 %v162, %v161
  %v1120 = vpack.c.bf16 %v164, %v163
  %v1121 = vpack.c.bf16 %v166, %v165
  %v1122 = vpack.c.bf16 %v168, %v167
  %v1123 = vpack.c.bf16 %v170, %v169
  %v1124 = vpack.c.bf16 %v172, %v171
  %v1125 = vpack.c.bf16 %v174, %v173
  %v1126 = vpack.c.bf16 %v176, %v175
  %v1127 = vpack.c.bf16 %v178, %v177
  %v1128 = vpack.c.bf16 %v180, %v179
  %v1129 = vpack.c.bf16 %v182, %v181
  %v1130 = vpack.c.bf16 %v184, %v183
  %v1131 = vpack.c.bf16 %v186, %v185
  %v1132 = vpack.c.bf16 %v188, %v187
  %v1133 = vpack.c.bf16 %v190, %v189
  %v1134 = vpack.c.bf16 %v192, %v191
  %v1135 = vpack.c.bf16 %v194, %v193
  %v1136 = vpack.c.bf16 %v196, %v195
  %v1137 = vpack.c.bf16 %v198, %v197
  %v1138 = vpack.c.bf16 %v200, %v199
  %v1139 = vpack.c.bf16 %v202, %v201
  %v1140 = vpack.c.bf16 %v204, %v203
  %v1141 = vpack.c.bf16 %v206, %v205
  %v1142 = vpack.c.bf16 %v208, %v207
  %v1143 = vpack.c.bf16 %v210, %v209
  %v1144 = vpack.c.bf16 %v212, %v211
  %v1145 = vpack.c.bf16 %v214, %v213
  %v1146 = vpack.c.bf16 %v216, %v215
  %v1147 = vpack.c.bf16 %v218, %v217
  %v1148 = vpack.c.bf16 %v220, %v219
  %v1149 = vpack.c.bf16 %v222, %v221
  %v1150 = vpack.c.bf16 %v224, %v223
  %v1151 = vpack.c.bf16 %v226, %v225
  %v1152 = vpack.c.bf16 %v228, %v227
  %v1153 = vpack.c.bf16 %v230, %v229
  %v1154 = vpack.c.bf16 %v232, %v231
  %v1155 = vpack.c.bf16 %v234, %v233
  %v1156 = vpack.c.bf16 %v236, %v235
  %v1157 = vpack.c.bf16 %v238, %v237
  %v1158 = vpack.c.bf16 %v240, %v239
  %v1159 = vpack.c.bf16 %v242, %v241
  %v1160 = vpack.c.bf16 %v244, %v243
  %v1161 = vpack.c.bf16 %v246, %v245
  %v1162 = vpack.c.bf16 %v248, %v247
  %v1163 = vpack.c.bf16 %v250, %v249
  %v1164 = vpack.c.bf16 %v252, %v251
  %v1165 = vpack.c.bf16 %v254, %v253
  %v1166 = vpack.c.bf16 %v256, %v255
  %v1167 = vpack.c.bf16 %v258, %v257
  %v1168 = vpack.c.bf16 %v260, %v259
  %v1169 = vpack.c.bf16 %v262, %v261
  %v1170 = vpack.c.bf16 %v264, %v263
  %v1171 = vpack.c.bf16 %v266, %v265
  %v1172 = vpack.c.bf16 %v268, %v267
  %v1173 = vpack.c.bf16 %v270, %v269
  %v1174 = vpack.c.bf16 %v272, %v271
  %v1175 = vpack.c.bf16 %v274, %v273
  %v1176 = vpack.c.bf16 %v276, %v275
  %v1177 = vpack.c.bf16 %v278, %v277
  %v1178 = vpack.c.bf16 %v280, %v279
  %v1179 = vpack.c.bf16 %v282, %v281
  %v1180 = vpack.c.bf16 %v284, %v283
  %v1181 = vpack.c.bf16 %v286, %v285
  %v1182 = vpack.c.bf16 %v288, %v287
  %v1183 = vpack.c.bf16 %v290, %v289
  %v1184 = vpack.c.bf16 %v292, %v291
  %v1185 = vpack.c.bf16 %v294, %v293
  %v1186 = vpack.c.bf16 %v296, %v295
  %v1187 = vpack.c.bf16 %v298, %v297
  %v1188 = vpack.c.bf16 %v300, %v299
  %v1189 = vpack.c.bf16 %v302, %v301
  %v1190 = vpack.c.bf16 %v304, %v303
  %v1191 = vpack.c.bf16 %v306, %v305
  %v1192 = vpack.c.bf16 %v308, %v307
  %v1193 = vpack.c.bf16 %v310, %v309
  %v1194 = vpack.c.bf16 %v312, %v311
  %v1195 = vpack.c.bf16 %v314, %v313
  %v1196 = vpack.c.bf16 %v316, %v315
  %v1197 = vpack.c.bf16 %v318, %v317
  %v1198 = vpack.c.bf16 %v320, %v319
  %v1199 = vpack.c.bf16 %v322, %v321
  %v1200 = vpack.c.bf16 %v324, %v323
  %v1201 = vpack.c.bf16 %v326, %v325
  %v1202 = vpack.c.bf16 %v328, %v327
  %v1203 = vpack.c.bf16 %v330, %v329
  %v1204 = vpack.c.bf16 %v332, %v331
  %v1205 = vpack.c.bf16 %v334, %v333
  %v1206 = vpack.c.bf16 %v336, %v335
  %v1207 = vpack.c.bf16 %v338, %v337
  %v1208 = vpack.c.bf16 %v340, %v339
  %v1209 = vpack.c.bf16 %v342, %v341
  %v1210 = vpack.c.bf16 %v344, %v343
  %v1211 = vpack.c.bf16 %v346, %v345
  %v1212 = vpack.c.bf16 %v348, %v347
  %v1213 = vpack.c.bf16 %v350, %v349
  %v1214 = vpack.c.bf16 %v352, %v351
  %v1215 = vpack.c.bf16 %v354, %v353
  %v1216 = vpack.c.bf16 %v356, %v355
  %v1217 = vpack.c.bf16 %v358, %v357
  %v1218 = vpack.c.bf16 %v360, %v359
  %v1219 = vpack.c.bf16 %v362, %v361
  %v1220 = vpack.c.bf16 %v364, %v363
  %v1221 = vpack.c.bf16 %v366, %v365
  %v1222 = vpack.c.bf16 %v368, %v367
  %v1223 = vpack.c.bf16 %v370, %v369
  %v1224 = vpack.c.bf16 %v372, %v371
  %v1225 = vpack.c.bf16 %v374, %v373
  %v1226 = vpack.c.bf16 %v376, %v375
  %v1227 = vpack.c.bf16 %v378, %v377
  %v1228 = vpack.c.bf16 %v380, %v379
  %v1229 = vpack.c.bf16 %v382, %v381
  %v1230 = vpack.c.bf16 %v384, %v383
  %v1231 = vpack.c.bf16 %v386, %v385
  %v1232 = vpack.c.bf16 %v388, %v387
  %v1233 = vpack.c.bf16 %v390, %v389
  %v1234 = vpack.c.bf16 %v392, %v391
  %v1235 = vpack.c.bf16 %v394, %v393
  %v1236 = vpack.c.bf16 %v396, %v395
  %v1237 = vpack.c.bf16 %v398, %v397
  %v1238 = vpack.c.bf16 %v400, %v399
  %v1239 = vpack.c.bf16 %v402, %v401
  %v1240 = vpack.c.bf16 %v404, %v403
  %v1241 = vpack.c.bf16 %v406, %v405
  %v1242 = vpack.c.bf16 %v408, %v407
  %v1243 = vpack.c.bf16 %v410, %v409
  %v1244 = vpack.c.bf16 %v412, %v411
  %v1245 = vpack.c.bf16 %v414, %v413
  %v1246 = vpack.c.bf16 %v416, %v415
  %v1247 = vpack.c.bf16 %v418, %v417
  %v1248 = vpack.c.bf16 %v420, %v419
  %v1249 = vpack.c.bf16 %v422, %v421
  %v1250 = vpack.c.bf16 %v424, %v423
  %v1251 = vpack.c.bf16 %v426, %v425
  %v1252 = vpack.c.bf16 %v428, %v427
  %v1253 = vpack.c.bf16 %v430, %v429
  %v1254 = vpack.c.bf16 %v432, %v431
  %v1255 = vpack.c.bf16 %v434, %v433
  %v1256 = vpack.c.bf16 %v436, %v435
  %v1257 = vpack.c.bf16 %v438, %v437
  %v1258 = vpack.c.bf16 %v440, %v439
  %v1259 = vpack.c.bf16 %v442, %v441
  %v1260 = vpack.c.bf16 %v444, %v443
  %v1261 = vpack.c.bf16 %v446, %v445
  %v1262 = vpack.c.bf16 %v448, %v447
  %v1263 = vpack.c.bf16 %v450, %v449
  %v1264 = vpack.c.bf16 %v452, %v451
  %v1265 = vpack.c.bf16 %v454, %v453
  %v1266 = vpack.c.bf16 %v456, %v455
  %v1267 = vpack.c.bf16 %v458, %v457
  %v1268 = vpack.c.bf16 %v460, %v459
  %v1269 = vpack.c.bf16 %v462, %v461
  %v1270 = vpack.c.bf16 %v464, %v463
  %v1271 = vpack.c.bf16 %v466, %v465
  %v1272 = vpack.c.bf16 %v468, %v467
  %v1273 = vpack.c.bf16 %v470, %v469
  %v1274 = vpack.c.bf16 %v472, %v471
  %v1275 = vpack.c.bf16 %v474, %v473
  %v1276 = vpack.c.bf16 %v476, %v475
  %v1277 = vpack.c.bf16 %v478, %v477
  %v1278 = vpack.c.bf16 %v480, %v479
  %v1279 = vpack.c.bf16 %v482, %v481
  %v1280 = vpack.c.bf16 %v484, %v483
  %v1281 = vpack.c.bf16 %v486, %v485
  %v1282 = vpack.c.bf16 %v488, %v487
  %v1283 = vpack.c.bf16 %v490, %v489
  %v1284 = vpack.c.bf16 %v492, %v491
  %v1285 = vpack.c.bf16 %v494, %v493
  %v1286 = vpack.c.bf16 %v496, %v495
  %v1287 = vpack.c.bf16 %v498, %v497
  %v1288 = vpack.c.bf16 %v500, %v499
  %v1289 = vpack.c.bf16 %v502, %v501
  %v1290 = vpack.c.bf16 %v504, %v503
  %v1291 = vpack.c.bf16 %v506, %v505
  %v1292 = vpack.c.bf16 %v508, %v507
  %v1293 = vpack.c.bf16 %v510, %v509
  %v1294 = vpack.c.bf16 %v512, %v511
  %v1295 = vpack.c.bf16 %v514, %v513
  %v1296 = vpack.c.bf16 %v516, %v515
  %v1297 = vpack.c.bf16 %v518, %v517
  %v1298 = vpack.c.bf16 %v520, %v519
  %v1299 = vpack.c.bf16 %v522, %v521
  %v1300 = vpack.c.bf16 %v524, %v523
  %v1301 = vpack.c.bf16 %v526, %v525
  %v1302 = vpack.c.bf16 %v528, %v527
  %v1303 = vpack.c.bf16 %v530, %v529
  %v1304 = vpack.c.bf16 %v532, %v531
  %v1305 = vpack.c.bf16 %v534, %v533
  %v1306 = vpack.c.bf16 %v536, %v535
  %v1307 = vpack.c.bf16 %v538, %v537
  %v1308 = vpack.c.bf16 %v540, %v539
  %v1309 = vpack.c.bf16 %v542, %v541
  %v1310 = vpack.c.bf16 %v544, %v543
  %v1311 = vpack.c.bf16 %v546, %v545
  %v1312 = vpack.c.bf16 %v548, %v547
  %v1313 = vpack.c.bf16 %v550, %v549
  %v1314 = vpack.c.bf16 %v552, %v551
  %v1315 = vpack.c.bf16 %v554, %v553
  %v1316 = vpack.c.bf16 %v556, %v555
  %v1317 = vpack.c.bf16 %v558, %v557
  %v1318 = vpack.c.bf16 %v560, %v559
  %v1319 = vpack.c.bf16 %v562, %v561
  %v1320 = vpack.c.bf16 %v564, %v563
  %v1321 = vpack.c.bf16 %v566, %v565
  %v1322 = vpack.c.bf16 %v568, %v567
  %v1323 = vpack.c.bf16 %v570, %v569
  %v1324 = vpack.c.bf16 %v572, %v571
  %v1325 = vpack.c.bf16 %v574, %v573
  %v1326 = vpack.c.bf16 %v576, %v575
  %v1327 = vpack.c.bf16 %v578, %v577
  %v1328 = vpack.c.bf16 %v580, %v579
  %v1329 = vpack.c.bf16 %v582, %v581
  %v1330 = vpack.c.bf16 %v584, %v583
  %v1331 = vpack.c.bf16 %v586, %v585
  %v1332 = vpack.c.bf16 %v588, %v587
  %v1333 = vpack.c.bf16 %v590, %v589
  %v1334 = vpack.c.bf16 %v592, %v591
  %v1335 = vpack.c.bf16 %v594, %v593
  %v1336 = vpack.c.bf16 %v596, %v595
  %v1337 = vpack.c.bf16 %v598, %v597
  %v1338 = vpack.c.bf16 %v600, %v599
  %v1339 = vpack.c.bf16 %v602, %v601
  %v1340 = vpack.c.bf16 %v604, %v603
  %v1341 = vpack.c.bf16 %v606, %v605
  %v1342 = vpack.c.bf16 %v608, %v607
  %v1343 = vpack.c.bf16 %v610, %v609
  %v1344 = vpack.c.bf16 %v612, %v611
  %v1345 = vpack.c.bf16 %v614, %v613
  %v1346 = vpack.c.bf16 %v616, %v615
  %v1347 = vpack.c.bf16 %v618, %v617
  %v1348 = vpack.c.bf16 %v620, %v619
  %v1349 = vpack.c.bf16 %v622, %v621
  %v1350 = vpack.c.bf16 %v624, %v623
  %v1351 = vpack.c.bf16 %v626, %v625
  %v1352 = vpack.c.bf16 %v628, %v627
  %v1353 = vpack.c.bf16 %v630, %v629
  %v1354 = vpack.c.bf16 %v632, %v631
  %v1355 = vpack.c.bf16 %v634, %v633
  %v1356 = vpack.c.bf16 %v636, %v635
  %v1357 = vpack.c.bf16 %v638, %v637
  %v1358 = vpack.c.bf16 %v640, %v639
  %v1359 = vpack.c.bf16 %v642, %v641
  %v1360 = vpack.c.bf16 %v644, %v643
  %v1361 = vpack.c.bf16 %v646, %v645
  %v1362 = vpack.c.bf16 %v648, %v647
  %v1363 = vpack.c.bf16 %v650, %v649
  %v1364 = vpack.c.bf16 %v652, %v651
  %v1365 = vpack.c.bf16 %v654, %v653
  %v1366 = vpack.c.bf16 %v656, %v655
  %v1367 = vpack.c.bf16 %v658, %v657
  %v1368 = vpack.c.bf16 %v660, %v659
  %v1369 = vpack.c.bf16 %v662, %v661
  %v1370 = vpack.c.bf16 %v664, %v663
  %v1371 = vpack.c.bf16 %v666, %v665
  %v1372 = vpack.c.bf16 %v668, %v667
  %v1373 = vpack.c.bf16 %v670, %v669
  %v1374 = vpack.c.bf16 %v672, %v671
  %v1375 = vpack.c.bf16 %v674, %v673
  %v1376 = vpack.c.bf16 %v676, %v675
  %v1377 = vpack.c.bf16 %v678, %v677
  %v1378 = vpack.c.bf16 %v680, %v679
  %v1379 = vpack.c.bf16 %v682, %v681
  %v1380 = vpack.c.bf16 %v684, %v683
  %v1381 = vpack.c.bf16 %v686, %v685
  %v1382 = vpack.c.bf16 %v688, %v687
  %v1383 = vpack.c.bf16 %v690, %v689
  %v1384 = vpack.c.bf16 %v692, %v691
  %v1385 = vpack.c.bf16 %v694, %v693
  %v1386 = vpack.c.bf16 %v696, %v695
  %v1387 = vpack.c.bf16 %v698, %v697
  %v1388 = vpack.c.bf16 %v700, %v699
  %v1389 = vpack.c.bf16 %v702, %v701
  %v1390 = vpack.c.bf16 %v704, %v703
  %v1391 = vpack.c.bf16 %v706, %v705
  %v1392 = vpack.c.bf16 %v708, %v707
  %v1393 = vpack.c.bf16 %v710, %v709
  %v1394 = vpack.c.bf16 %v712, %v711
  %v1395 = vpack.c.bf16 %v714, %v713
  %v1396 = vpack.c.bf16 %v716, %v715
  %v1397 = vpack.c.bf16 %v718, %v717
  %v1398 = vpack.c.bf16 %v720, %v719
  %v1399 = vpack.c.bf16 %v722, %v721
  %v1400 = vpack.c.bf16 %v724, %v723
  %v1401 = vpack.c.bf16 %v726, %v725
  %v1402 = vpack.c.bf16 %v728, %v727
  %v1403 = vpack.c.bf16 %v730, %v729
  %v1404 = vpack.c.bf16 %v732, %v731
  %v1405 = vpack.c.bf16 %v734, %v733
  %v1406 = vpack.c.bf16 %v736, %v735
  %v1407 = vpack.c.bf16 %v738, %v737
  %v1408 = vpack.c.bf16 %v740, %v739
  %v1409 = vpack.c.bf16 %v742, %v741
  %v1410 = vpack.c.bf16 %v744, %v743
  %v1411 = vpack.c.bf16 %v746, %v745
  %v1412 = vpack.c.bf16 %v748, %v747
  %v1413 = vpack.c.bf16 %v750, %v749
  %v1414 = vpack.c.bf16 %v752, %v751
  %v1415 = vpack.c.bf16 %v754, %v753
  %v1416 = vpack.c.bf16 %v756, %v755
  %v1417 = vpack.c.bf16 %v758, %v757
  %v1418 = vpack.c.bf16 %v760, %v759
  %v1419 = vpack.c.bf16 %v762, %v761
  %v1420 = vpack.c.bf16 %v764, %v763
  %v1421 = vpack.c.bf16 %v766, %v765
  %v1422 = vpack.c.bf16 %v768, %v767
  %v1423 = vpack.c.bf16 %v770, %v769
  %v1424 = vpack.c.bf16 %v772, %v771
  %v1425 = vpack.c.bf16 %v774, %v773
  %v1426 = vpack.c.bf16 %v776, %v775
  %v1427 = vpack.c.bf16 %v778, %v777
  %v1428 = vpack.c.bf16 %v780, %v779
  %v1429 = vpack.c.bf16 %v782, %v781
  %v1430 = vpack.c.bf16 %v784, %v783
  %v1431 = vpack.c.bf16 %v786, %v785
  %v1432 = vpack.c.bf16 %v788, %v787
  %v1433 = vpack.c.bf16 %v790, %v789
  %v1434 = vpack.c.bf16 %v792, %v791
  %v1435 = vpack.c.bf16 %v794, %v793
  %v1436 = vpack.c.bf16 %v796, %v795
  %v1437 = vpack.c.bf16 %v798, %v797
  %v1438 = vpack.c.bf16 %v800, %v799
  %v1439 = vpack.c.bf16 %v802, %v801
  %v1440 = vpack.c.bf16 %v804, %v803
  %v1441 = vpack.c.bf16 %v806, %v805
  %v1442 = vpack.c.bf16 %v808, %v807
  %v1443 = vpack.c.bf16 %v810, %v809
  %v1444 = vpack.c.bf16 %v812, %v811
  %v1445 = vpack.c.bf16 %v814, %v813
  %v1446 = vpack.c.bf16 %v816, %v815
  %v1447 = vpack.c.bf16 %v818, %v817
  %v1448 = vpack.c.bf16 %v820, %v819
  %v1449 = vpack.c.bf16 %v822, %v821
  %v1450 = vpack.c.bf16 %v824, %v823
  %v1451 = vpack.c.bf16 %v826, %v825
  %v1452 = vpack.c.bf16 %v828, %v827
  %v1453 = vpack.c.bf16 %v830, %v829
  %v1454 = vpack.c.bf16 %v832, %v831
  %v1455 = vpack.c.bf16 %v834, %v833
  %v1456 = vpack.c.bf16 %v836, %v835
  %v1457 = vpack.c.bf16 %v838, %v837
  %v1458 = vpack.c.bf16 %v840, %v839
  %v1459 = vpack.c.bf16 %v842, %v841
  %v1460 = vpack.c.bf16 %v844, %v843
  %v1461 = vpack.c.bf16 %v846, %v845
  %v1462 = vpack.c.bf16 %v848, %v847
  %v1463 = vpack.c.bf16 %v850, %v849
  %v1464 = vpack.c.bf16 %v852, %v851
  %v1465 = vpack.c.bf16 %v854, %v853
  %v1466 = vpack.c.bf16 %v856, %v855
  %v1467 = vpack.c.bf16 %v858, %v857
  %v1468 = vpack.c.bf16 %v860, %v859
  %v1469 = vpack.c.bf16 %v862, %v861
  %v1470 = vpack.c.bf16 %v864, %v863
  %v1471 = vpack.c.bf16 %v866, %v865
  %v1472 = vpack.c.bf16 %v868, %v867
  %v1473 = vpack.c.bf16 %v870, %v869
  %v1474 = vpack.c.bf16 %v872, %v871
  %v1475 = vpack.c.bf16 %v874, %v873
  %v1476 = vpack.c.bf16 %v876, %v875
  %v1477 = vpack.c.bf16 %v878, %v877
  %v1478 = vpack.c.bf16 %v880, %v879
  %v1479 = vpack.c.bf16 %v882, %v881
  %v1480 = vpack.c.bf16 %v884, %v883
  %v1481 = vpack.c.bf16 %v886, %v885
  %v1482 = vpack.c.bf16 %v888, %v887
  %v1483 = vpack.c.bf16 %v890, %v889
  %v1484 = vpack.c.bf16 %v892, %v891
  %v1485 = vpack.c.bf16 %v894, %v893
  %v1486 = vpack.c.bf16 %v896, %v895
  %v1487 = vpack.c.bf16 %v898, %v897
  %v1488 = vpack.c.bf16 %v900, %v899
  %v1489 = vpack.c.bf16 %v902, %v901
  %v1490 = vpack.c.bf16 %v904, %v903
  %v1491 = vpack.c.bf16 %v906, %v905
  %v1492 = vpack.c.bf16 %v908, %v907
  %v1493 = vpack.c.bf16 %v910, %v909
  %v1494 = vpack.c.bf16 %v912, %v911
  %v1495 = vpack.c.bf16 %v914, %v913
  %v1496 = vpack.c.bf16 %v916, %v915
  %v1497 = vpack.c.bf16 %v918, %v917
  %v1498 = vpack.c.bf16 %v920, %v919
  %v1499 = vpack.c.bf16 %v922, %v921
  %v1500 = vpack.c.bf16 %v924, %v923
  %v1501 = vpack.c.bf16 %v926, %v925
  %v1502 = vpack.c.bf16 %v928, %v927
  %v1503 = vpack.c.bf16 %v930, %v929
  %v1504 = vpack.c.bf16 %v932, %v931
  %v1505 = vpack.c.bf16 %v934, %v933
  %v1506 = vpack.c.bf16 %v936, %v935
  %v1507 = vpack.c.bf16 %v938, %v937
  %v1508 = vpack.c.bf16 %v940, %v939
  %v1509 = vpack.c.bf16 %v942, %v941
  %v1510 = vpack.c.bf16 %v944, %v943
  %v1511 = vpack.c.bf16 %v946, %v945
  %v1512 = vpack.c.bf16 %v948, %v947
  %v1513 = vpack.c.bf16 %v950, %v949
  %v1514 = vpack.c.bf16 %v952, %v951
  %v1515 = vpack.c.bf16 %v954, %v953
  %v1516 = vpack.c.bf16 %v956, %v955
  %v1517 = vpack.c.bf16 %v958, %v957
  %v1518 = vpack.c.bf16 %v960, %v959
  %v1519 = vpack.c.bf16 %v962, %v961
  %v1520 = vpack.c.bf16 %v964, %v963
  %v1521 = vpack.c.bf16 %v966, %v965
  %v1522 = vpack.c.bf16 %v968, %v967
  %v1523 = vpack.c.bf16 %v970, %v969
  %v1524 = vpack.c.bf16 %v972, %v971
  %v1525 = vpack.c.bf16 %v974, %v973
  %v1526 = vpack.c.bf16 %v976, %v975
  %v1527 = vpack.c.bf16 %v978, %v977
  %v1528 = vpack.c.bf16 %v980, %v979
  %v1529 = vpack.c.bf16 %v982, %v981
  %v1530 = vpack.c.bf16 %v984, %v983
  %v1531 = vpack.c.bf16 %v986, %v985
  %v1532 = vpack.c.bf16 %v988, %v987
  %v1533 = vpack.c.bf16 %v990, %v989
  %v1534 = vpack.c.bf16 %v992, %v991
  %v1535 = vpack.c.bf16 %v994, %v993
  %v1536 = vpack.c.bf16 %v996, %v995
  %v1537 = vpack.c.bf16 %v998, %v997
  %v1538 = vpack.c.bf16 %v1000, %v999
  %v1539 = vpack.c.bf16 %v1002, %v1001
  %v1540 = vpack.c.bf16 %v1004, %v1003
  %v1541 = vpack.c.bf16 %v1006, %v1005
  %v1542 = vpack.c.bf16 %v1008, %v1007
  %v1543 = vpack.c.bf16 %v1010, %v1009
  %v1544 = vpack.c.bf16 %v1012, %v1011
  %v1545 = vpack.c.bf16 %v1014, %v1013
  %v1546 = vpack.c.bf16 %v1016, %v1015
  %v1547 = vpack.c.bf16 %v1018, %v1017
  %v1548 = vpack.c.bf16 %v1020, %v1019
  %v1549 = vpack.c.bf16 %v1022, %v1021
  %v1550 = vpack.c.bf16 %v1024, %v1023
  %v1551 = vpack.c.bf16 %v1026, %v1025
  %v1552 = vpack.c.bf16 %v1028, %v1027
  %v1553 = vpack.c.bf16 %v1030, %v1029
  %v1554 = vpack.c.bf16 %v1032, %v1031
  %v1555 = vpack.c.bf16 %v1034, %v1033
  %v1556 = vpack.c.bf16 %v1036, %v1035
  %v1557 = vpack.c.bf16 %v1038, %v1037
  %v1558 = vpack.c.bf16 %v1040, %v1039
  %v1559 = vpack.c.bf16 %v1042, %v1041
  %v1560 = vpack.c.bf16 %v1044, %v1043
  %v1561 = vpack.c.bf16 %v1046, %v1045
  %v1562 = vpack.c.bf16 %v1048, %v1047
  %v1563 = vpack.c.bf16 %v1050, %v1049
  %v1564 = vpack.c.bf16 %v1052, %v1051
  %v1565 = vld [vmem:[%s1] sm:$0xf]
  %v1566 = vld [vmem:[%s1 + $0x4] sm:$0xf]
  %v1567 = vld [vmem:[%s1 + $0x8] sm:$0xf]
  %v1568 = vld [vmem:[%s1 + $0xc] sm:$0xf]
  %v1569 = vld [vmem:[%s1 + $0x10] sm:$0xf]
  %v1570 = vld [vmem:[%s1 + $0x14] sm:$0xf]
  %v1571 = vld [vmem:[%s1 + $0x18] sm:$0xf]
  %v1572 = vld [vmem:[%s1 + $0x1c] sm:$0xf]
  %v1573 = vld [vmem:[%s1 + $0x20] sm:$0xf]
  %v1574 = vld [vmem:[%s1 + $0x24] sm:$0xf]
  %v1575 = vld [vmem:[%s1 + $0x28] sm:$0xf]
  %v1576 = vld [vmem:[%s1 + $0x2c] sm:$0xf]
  %v1577 = vld [vmem:[%s1 + $0x30] sm:$0xf]
  %v1578 = vld [vmem:[%s1 + $0x34] sm:$0xf]
  %v1579 = vld [vmem:[%s1 + $0x38] sm:$0xf]
  %v1580 = vld [vmem:[%s1 + $0x3c] sm:$0xf]
  %v1581 = vld [vmem:[%s2] sm:$0xff]
  %v1582 = vld [vmem:[%s2 + $0x8] sm:$0xff]
  %v1583 = vld [vmem:[%s2 + $0x10] sm:$0xff]
  %v1584 = vld [vmem:[%s2 + $0x18] sm:$0xff]
  %v1585 = vld [vmem:[%s2 + $0x20] sm:$0xff]
  %v1586 = vld [vmem:[%s2 + $0x28] sm:$0xff]
  %v1587 = vld [vmem:[%s2 + $0x30] sm:$0xff]
  %v1588 = vld [vmem:[%s2 + $0x38] sm:$0xff]
  %v1589 = vld [vmem:[%s2 + $0x40] sm:$0xff]
  %v1590 = vld [vmem:[%s2 + $0x48] sm:$0xff]
  %v1591 = vld [vmem:[%s2 + $0x50] sm:$0xff]
  %v1592 = vld [vmem:[%s2 + $0x58] sm:$0xff]
  %v1593 = vld [vmem:[%s2 + $0x60] sm:$0xff]
  %v1594 = vld [vmem:[%s2 + $0x68] sm:$0xff]
  %v1595 = vld [vmem:[%s2 + $0x70] sm:$0xff]
  %v1596 = vld [vmem:[%s2 + $0x78] sm:$0xff]
  %1598 = vset.pattern.permute.xlu0 0
  %1599 = vperm.xlu0 %1598, %v1581
  %v1600 = vpop.permute.xlu0 %1599
  %1603 = vset.pattern.permute.xlu0 0
  %1604 = vperm.xlu0 %1603, %v1582
  %v1605 = vpop.permute.xlu0 %1604
  %1608 = vset.pattern.permute.xlu0 0
  %1609 = vperm.xlu0 %1608, %v1583
  %v1610 = vpop.permute.xlu0 %1609
  %1613 = vset.pattern.permute.xlu0 0
  %1614 = vperm.xlu0 %1613, %v1584
  %v1615 = vpop.permute.xlu0 %1614
  %1618 = vset.pattern.permute.xlu0 0
  %1619 = vperm.xlu0 %1618, %v1585
  %v1620 = vpop.permute.xlu0 %1619
  %1623 = vset.pattern.permute.xlu0 0
  %1624 = vperm.xlu0 %1623, %v1586
  %v1625 = vpop.permute.xlu0 %1624
  %1628 = vset.pattern.permute.xlu0 0
  %1629 = vperm.xlu0 %1628, %v1587
  %v1630 = vpop.permute.xlu0 %1629
  %1633 = vset.pattern.permute.xlu0 0
  %1634 = vperm.xlu0 %1633, %v1588
  %v1635 = vpop.permute.xlu0 %1634
  %1638 = vset.pattern.permute.xlu0 0
  %1639 = vperm.xlu0 %1638, %v1589
  %v1640 = vpop.permute.xlu0 %1639
  %1643 = vset.pattern.permute.xlu0 0
  %1644 = vperm.xlu0 %1643, %v1590
  %v1645 = vpop.permute.xlu0 %1644
  %1648 = vset.pattern.permute.xlu0 0
  %1649 = vperm.xlu0 %1648, %v1591
  %v1650 = vpop.permute.xlu0 %1649
  %1653 = vset.pattern.permute.xlu0 0
  %1654 = vperm.xlu0 %1653, %v1592
  %v1655 = vpop.permute.xlu0 %1654
  %1658 = vset.pattern.permute.xlu0 0
  %1659 = vperm.xlu0 %1658, %v1593
  %v1660 = vpop.permute.xlu0 %1659
  %1663 = vset.pattern.permute.xlu0 0
  %1664 = vperm.xlu0 %1663, %v1594
  %v1665 = vpop.permute.xlu0 %1664
  %1668 = vset.pattern.permute.xlu0 0
  %1669 = vperm.xlu0 %1668, %v1595
  %v1670 = vpop.permute.xlu0 %1669
  %1673 = vset.pattern.permute.xlu0 0
  %1674 = vperm.xlu0 %1673, %v1596
  %v1675 = vpop.permute.xlu0 %1674
  %v1693 = vunpack.c.l.b16 %v1565
  %v1694 = vunpack.c.l.b16 %v1566
  %v1695 = vunpack.c.l.b16 %v1567
  %v1696 = vunpack.c.l.b16 %v1568
  %v1697 = vunpack.c.l.b16 %v1569
  %v1698 = vunpack.c.l.b16 %v1570
  %v1699 = vunpack.c.l.b16 %v1571
  %v1700 = vunpack.c.l.b16 %v1572
  %v1701 = vunpack.c.l.b16 %v1573
  %v1702 = vunpack.c.l.b16 %v1574
  %v1703 = vunpack.c.l.b16 %v1575
  %v1704 = vunpack.c.l.b16 %v1576
  %v1705 = vunpack.c.l.b16 %v1577
  %v1706 = vunpack.c.l.b16 %v1578
  %v1707 = vunpack.c.l.b16 %v1579
  %v1708 = vunpack.c.l.b16 %v1580
  %v1709 = vpack.c.b16 %v1694, %v1693
  %v1710 = vpack.c.b16 %v1696, %v1695
  %v1711 = vpack.c.b16 %v1698, %v1697
  %v1712 = vpack.c.b16 %v1700, %v1699
  %v1713 = vpack.c.b16 %v1702, %v1701
  %v1714 = vpack.c.b16 %v1704, %v1703
  %v1715 = vpack.c.b16 %v1706, %v1705
  %v1716 = vpack.c.b16 %v1708, %v1707
  %vm1717 = vcmask 261120
  %v1719 = vsel %vm1717, %v1709, 0
  %v1722 = vsel %vm1717, %v1710, 0
  %v1725 = vsel %vm1717, %v1711, 0
  %v1728 = vsel %vm1717, %v1712, 0
  %v1731 = vsel %vm1717, %v1713, 0
  %v1734 = vsel %vm1717, %v1714, 0
  %v1737 = vsel %vm1717, %v1715, 0
  %v1740 = vsel %vm1717, %v1716, 0
  %v1743 = vsel %vm1717, %v1053, 0
  %v1746 = vsel %vm1717, %v1054, 0
  %v1749 = vsel %vm1717, %v1055, 0
  %v1752 = vsel %vm1717, %v1056, 0
  %v1755 = vsel %vm1717, %v1057, 0
  %v1758 = vsel %vm1717, %v1058, 0
  %v1761 = vsel %vm1717, %v1059, 0
  %v1764 = vsel %vm1717, %v1060, 0
  %v1767 = vsel %vm1717, %v1061, 0
  %v1770 = vsel %vm1717, %v1062, 0
  %v1773 = vsel %vm1717, %v1063, 0
  %v1776 = vsel %vm1717, %v1064, 0
  %v1779 = vsel %vm1717, %v1065, 0
  %v1782 = vsel %vm1717, %v1066, 0
  %v1785 = vsel %vm1717, %v1067, 0
  %v1788 = vsel %vm1717, %v1068, 0
  %v1791 = vsel %vm1717, %v1069, 0
  %v1794 = vsel %vm1717, %v1070, 0
  %v1797 = vsel %vm1717, %v1071, 0
  %v1800 = vsel %vm1717, %v1072, 0
  %v1803 = vsel %vm1717, %v1073, 0
  %v1806 = vsel %vm1717, %v1074, 0
  %v1809 = vsel %vm1717, %v1075, 0
  %v1812 = vsel %vm1717, %v1076, 0
  %v1815 = vsel %vm1717, %v1077, 0
  %v1818 = vsel %vm1717, %v1078, 0
  %v1821 = vsel %vm1717, %v1079, 0
  %v1824 = vsel %vm1717, %v1080, 0
  %v1827 = vsel %vm1717, %v1081, 0
  %v1830 = vsel %vm1717, %v1082, 0
  %v1833 = vsel %vm1717, %v1083, 0
  %v1836 = vsel %vm1717, %v1084, 0
  %v1839 = vsel %vm1717, %v1085, 0
  %v1842 = vsel %vm1717, %v1086, 0
  %v1845 = vsel %vm1717, %v1087, 0
  %v1848 = vsel %vm1717, %v1088, 0
  %v1851 = vsel %vm1717, %v1089, 0
  %v1854 = vsel %vm1717, %v1090, 0
  %v1857 = vsel %vm1717, %v1091, 0
  %v1860 = vsel %vm1717, %v1092, 0
  %v1863 = vsel %vm1717, %v1093, 0
  %v1866 = vsel %vm1717, %v1094, 0
  %v1869 = vsel %vm1717, %v1095, 0
  %v1872 = vsel %vm1717, %v1096, 0
  %v1875 = vsel %vm1717, %v1097, 0
  %v1878 = vsel %vm1717, %v1098, 0
  %v1881 = vsel %vm1717, %v1099, 0
  %v1884 = vsel %vm1717, %v1100, 0
  %v1887 = vsel %vm1717, %v1101, 0
  %v1890 = vsel %vm1717, %v1102, 0
  %v1893 = vsel %vm1717, %v1103, 0
  %v1896 = vsel %vm1717, %v1104, 0
  %v1899 = vsel %vm1717, %v1105, 0
  %v1902 = vsel %vm1717, %v1106, 0
  %v1905 = vsel %vm1717, %v1107, 0
  %v1908 = vsel %vm1717, %v1108, 0
  %v1911 = vsel %vm1717, %v1109, 0
  %v1914 = vsel %vm1717, %v1110, 0
  %v1917 = vsel %vm1717, %v1111, 0
  %v1920 = vsel %vm1717, %v1112, 0
  %v1923 = vsel %vm1717, %v1113, 0
  %v1926 = vsel %vm1717, %v1114, 0
  %v1929 = vsel %vm1717, %v1115, 0
  %v1932 = vsel %vm1717, %v1116, 0
  %v1935 = vsel %vm1717, %v1117, 0
  %v1938 = vsel %vm1717, %v1118, 0
  %v1941 = vsel %vm1717, %v1119, 0
  %v1944 = vsel %vm1717, %v1120, 0
  %v1947 = vsel %vm1717, %v1121, 0
  %v1950 = vsel %vm1717, %v1122, 0
  %v1953 = vsel %vm1717, %v1123, 0
  %v1956 = vsel %vm1717, %v1124, 0
  %v1959 = vsel %vm1717, %v1125, 0
  %v1962 = vsel %vm1717, %v1126, 0
  %v1965 = vsel %vm1717, %v1127, 0
  %v1968 = vsel %vm1717, %v1128, 0
  %v1971 = vsel %vm1717, %v1129, 0
  %v1974 = vsel %vm1717, %v1130, 0
  %v1977 = vsel %vm1717, %v1131, 0
  %v1980 = vsel %vm1717, %v1132, 0
  %v1983 = vsel %vm1717, %v1133, 0
  %v1986 = vsel %vm1717, %v1134, 0
  %v1989 = vsel %vm1717, %v1135, 0
  %v1992 = vsel %vm1717, %v1136, 0
  %v1995 = vsel %vm1717, %v1137, 0
  %v1998 = vsel %vm1717, %v1138, 0
  %v2001 = vsel %vm1717, %v1139, 0
  %v2004 = vsel %vm1717, %v1140, 0
  %v2007 = vsel %vm1717, %v1141, 0
  %v2010 = vsel %vm1717, %v1142, 0
  %v2013 = vsel %vm1717, %v1143, 0
  %v2016 = vsel %vm1717, %v1144, 0
  %v2019 = vsel %vm1717, %v1145, 0
  %v2022 = vsel %vm1717, %v1146, 0
  %v2025 = vsel %vm1717, %v1147, 0
  %v2028 = vsel %vm1717, %v1148, 0
  %v2031 = vsel %vm1717, %v1149, 0
  %v2034 = vsel %vm1717, %v1150, 0
  %v2037 = vsel %vm1717, %v1151, 0
  %v2040 = vsel %vm1717, %v1152, 0
  %v2043 = vsel %vm1717, %v1153, 0
  %v2046 = vsel %vm1717, %v1154, 0
  %v2049 = vsel %vm1717, %v1155, 0
  %v2052 = vsel %vm1717, %v1156, 0
  %v2055 = vsel %vm1717, %v1157, 0
  %v2058 = vsel %vm1717, %v1158, 0
  %v2061 = vsel %vm1717, %v1159, 0
  %v2064 = vsel %vm1717, %v1160, 0
  %v2067 = vsel %vm1717, %v1161, 0
  %v2070 = vsel %vm1717, %v1162, 0
  %v2073 = vsel %vm1717, %v1163, 0
  %v2076 = vsel %vm1717, %v1164, 0
  %v2079 = vsel %vm1717, %v1165, 0
  %v2082 = vsel %vm1717, %v1166, 0
  %v2085 = vsel %vm1717, %v1167, 0
  %v2088 = vsel %vm1717, %v1168, 0
  %v2091 = vsel %vm1717, %v1169, 0
  %v2094 = vsel %vm1717, %v1170, 0
  %v2097 = vsel %vm1717, %v1171, 0
  %v2100 = vsel %vm1717, %v1172, 0
  %v2103 = vsel %vm1717, %v1173, 0
  %v2106 = vsel %vm1717, %v1174, 0
  %v2109 = vsel %vm1717, %v1175, 0
  %v2112 = vsel %vm1717, %v1176, 0
  %v2115 = vsel %vm1717, %v1177, 0
  %v2118 = vsel %vm1717, %v1178, 0
  %v2121 = vsel %vm1717, %v1179, 0
  %v2124 = vsel %vm1717, %v1180, 0
  %v2127 = vsel %vm1717, %v1181, 0
  %v2130 = vsel %vm1717, %v1182, 0
  %v2133 = vsel %vm1717, %v1183, 0
  %v2136 = vsel %vm1717, %v1184, 0
  %v2139 = vsel %vm1717, %v1185, 0
  %v2142 = vsel %vm1717, %v1186, 0
  %v2145 = vsel %vm1717, %v1187, 0
  %v2148 = vsel %vm1717, %v1188, 0
  %v2151 = vsel %vm1717, %v1189, 0
  %v2154 = vsel %vm1717, %v1190, 0
  %v2157 = vsel %vm1717, %v1191, 0
  %v2160 = vsel %vm1717, %v1192, 0
  %v2163 = vsel %vm1717, %v1193, 0
  %v2166 = vsel %vm1717, %v1194, 0
  %v2169 = vsel %vm1717, %v1195, 0
  %v2172 = vsel %vm1717, %v1196, 0
  %v2175 = vsel %vm1717, %v1197, 0
  %v2178 = vsel %vm1717, %v1198, 0
  %v2181 = vsel %vm1717, %v1199, 0
  %v2184 = vsel %vm1717, %v1200, 0
  %v2187 = vsel %vm1717, %v1201, 0
  %v2190 = vsel %vm1717, %v1202, 0
  %v2193 = vsel %vm1717, %v1203, 0
  %v2196 = vsel %vm1717, %v1204, 0
  %v2199 = vsel %vm1717, %v1205, 0
  %v2202 = vsel %vm1717, %v1206, 0
  %v2205 = vsel %vm1717, %v1207, 0
  %v2208 = vsel %vm1717, %v1208, 0
  %v2211 = vsel %vm1717, %v1209, 0
  %v2214 = vsel %vm1717, %v1210, 0
  %v2217 = vsel %vm1717, %v1211, 0
  %v2220 = vsel %vm1717, %v1212, 0
  %v2223 = vsel %vm1717, %v1213, 0
  %v2226 = vsel %vm1717, %v1214, 0
  %v2229 = vsel %vm1717, %v1215, 0
  %v2232 = vsel %vm1717, %v1216, 0
  %v2235 = vsel %vm1717, %v1217, 0
  %v2238 = vsel %vm1717, %v1218, 0
  %v2241 = vsel %vm1717, %v1219, 0
  %v2244 = vsel %vm1717, %v1220, 0
  %v2247 = vsel %vm1717, %v1221, 0
  %v2250 = vsel %vm1717, %v1222, 0
  %v2253 = vsel %vm1717, %v1223, 0
  %v2256 = vsel %vm1717, %v1224, 0
  %v2259 = vsel %vm1717, %v1225, 0
  %v2262 = vsel %vm1717, %v1226, 0
  %v2265 = vsel %vm1717, %v1227, 0
  %v2268 = vsel %vm1717, %v1228, 0
  %v2271 = vsel %vm1717, %v1229, 0
  %v2274 = vsel %vm1717, %v1230, 0
  %v2277 = vsel %vm1717, %v1231, 0
  %v2280 = vsel %vm1717, %v1232, 0
  %v2283 = vsel %vm1717, %v1233, 0
  %v2286 = vsel %vm1717, %v1234, 0
  %v2289 = vsel %vm1717, %v1235, 0
  %v2292 = vsel %vm1717, %v1236, 0
  %v2295 = vsel %vm1717, %v1237, 0
  %v2298 = vsel %vm1717, %v1238, 0
  %v2301 = vsel %vm1717, %v1239, 0
  %v2304 = vsel %vm1717, %v1240, 0
  %v2307 = vsel %vm1717, %v1241, 0
  %v2310 = vsel %vm1717, %v1242, 0
  %v2313 = vsel %vm1717, %v1243, 0
  %v2316 = vsel %vm1717, %v1244, 0
  %v2319 = vsel %vm1717, %v1245, 0
  %v2322 = vsel %vm1717, %v1246, 0
  %v2325 = vsel %vm1717, %v1247, 0
  %v2328 = vsel %vm1717, %v1248, 0
  %v2331 = vsel %vm1717, %v1249, 0
  %v2334 = vsel %vm1717, %v1250, 0
  %v2337 = vsel %vm1717, %v1251, 0
  %v2340 = vsel %vm1717, %v1252, 0
  %v2343 = vsel %vm1717, %v1253, 0
  %v2346 = vsel %vm1717, %v1254, 0
  %v2349 = vsel %vm1717, %v1255, 0
  %v2352 = vsel %vm1717, %v1256, 0
  %v2355 = vsel %vm1717, %v1257, 0
  %v2358 = vsel %vm1717, %v1258, 0
  %v2361 = vsel %vm1717, %v1259, 0
  %v2364 = vsel %vm1717, %v1260, 0
  %v2367 = vsel %vm1717, %v1261, 0
  %v2370 = vsel %vm1717, %v1262, 0
  %v2373 = vsel %vm1717, %v1263, 0
  %v2376 = vsel %vm1717, %v1264, 0
  %v2379 = vsel %vm1717, %v1265, 0
  %v2382 = vsel %vm1717, %v1266, 0
  %v2385 = vsel %vm1717, %v1267, 0
  %v2388 = vsel %vm1717, %v1268, 0
  %v2391 = vsel %vm1717, %v1269, 0
  %v2394 = vsel %vm1717, %v1270, 0
  %v2397 = vsel %vm1717, %v1271, 0
  %v2400 = vsel %vm1717, %v1272, 0
  %v2403 = vsel %vm1717, %v1273, 0
  %v2406 = vsel %vm1717, %v1274, 0
  %v2409 = vsel %vm1717, %v1275, 0
  %v2412 = vsel %vm1717, %v1276, 0
  %v2415 = vsel %vm1717, %v1277, 0
  %v2418 = vsel %vm1717, %v1278, 0
  %v2421 = vsel %vm1717, %v1279, 0
  %v2424 = vsel %vm1717, %v1280, 0
  %v2427 = vsel %vm1717, %v1281, 0
  %v2430 = vsel %vm1717, %v1282, 0
  %v2433 = vsel %vm1717, %v1283, 0
  %v2436 = vsel %vm1717, %v1284, 0
  %v2439 = vsel %vm1717, %v1285, 0
  %v2442 = vsel %vm1717, %v1286, 0
  %v2445 = vsel %vm1717, %v1287, 0
  %v2448 = vsel %vm1717, %v1288, 0
  %v2451 = vsel %vm1717, %v1289, 0
  %v2454 = vsel %vm1717, %v1290, 0
  %v2457 = vsel %vm1717, %v1291, 0
  %v2460 = vsel %vm1717, %v1292, 0
  %v2463 = vsel %vm1717, %v1293, 0
  %v2466 = vsel %vm1717, %v1294, 0
  %v2469 = vsel %vm1717, %v1295, 0
  %v2472 = vsel %vm1717, %v1296, 0
  %v2475 = vsel %vm1717, %v1297, 0
  %v2478 = vsel %vm1717, %v1298, 0
  %v2481 = vsel %vm1717, %v1299, 0
  %v2484 = vsel %vm1717, %v1300, 0
  %v2487 = vsel %vm1717, %v1301, 0
  %v2490 = vsel %vm1717, %v1302, 0
  %v2493 = vsel %vm1717, %v1303, 0
  %v2496 = vsel %vm1717, %v1304, 0
  %v2499 = vsel %vm1717, %v1305, 0
  %v2502 = vsel %vm1717, %v1306, 0
  %v2505 = vsel %vm1717, %v1307, 0
  %v2508 = vsel %vm1717, %v1308, 0
  %v2511 = vsel %vm1717, %v1309, 0
  %v2514 = vsel %vm1717, %v1310, 0
  %v2517 = vsel %vm1717, %v1311, 0
  %v2520 = vsel %vm1717, %v1312, 0
  %v2523 = vsel %vm1717, %v1313, 0
  %v2526 = vsel %vm1717, %v1314, 0
  %v2529 = vsel %vm1717, %v1315, 0
  %v2532 = vsel %vm1717, %v1316, 0
  %v2535 = vsel %vm1717, %v1317, 0
  %v2538 = vsel %vm1717, %v1318, 0
  %v2541 = vsel %vm1717, %v1319, 0
  %v2544 = vsel %vm1717, %v1320, 0
  %v2547 = vsel %vm1717, %v1321, 0
  %v2550 = vsel %vm1717, %v1322, 0
  %v2553 = vsel %vm1717, %v1323, 0
  %v2556 = vsel %vm1717, %v1324, 0
  %v2559 = vsel %vm1717, %v1325, 0
  %v2562 = vsel %vm1717, %v1326, 0
  %v2565 = vsel %vm1717, %v1327, 0
  %v2568 = vsel %vm1717, %v1328, 0
  %v2571 = vsel %vm1717, %v1329, 0
  %v2574 = vsel %vm1717, %v1330, 0
  %v2577 = vsel %vm1717, %v1331, 0
  %v2580 = vsel %vm1717, %v1332, 0
  %v2583 = vsel %vm1717, %v1333, 0
  %v2586 = vsel %vm1717, %v1334, 0
  %v2589 = vsel %vm1717, %v1335, 0
  %v2592 = vsel %vm1717, %v1336, 0
  %v2595 = vsel %vm1717, %v1337, 0
  %v2598 = vsel %vm1717, %v1338, 0
  %v2601 = vsel %vm1717, %v1339, 0
  %v2604 = vsel %vm1717, %v1340, 0
  %v2607 = vsel %vm1717, %v1341, 0
  %v2610 = vsel %vm1717, %v1342, 0
  %v2613 = vsel %vm1717, %v1343, 0
  %v2616 = vsel %vm1717, %v1344, 0
  %v2619 = vsel %vm1717, %v1345, 0
  %v2622 = vsel %vm1717, %v1346, 0
  %v2625 = vsel %vm1717, %v1347, 0
  %v2628 = vsel %vm1717, %v1348, 0
  %v2631 = vsel %vm1717, %v1349, 0
  %v2634 = vsel %vm1717, %v1350, 0
  %v2637 = vsel %vm1717, %v1351, 0
  %v2640 = vsel %vm1717, %v1352, 0
  %v2643 = vsel %vm1717, %v1353, 0
  %v2646 = vsel %vm1717, %v1354, 0
  %v2649 = vsel %vm1717, %v1355, 0
  %v2652 = vsel %vm1717, %v1356, 0
  %v2655 = vsel %vm1717, %v1357, 0
  %v2658 = vsel %vm1717, %v1358, 0
  %v2661 = vsel %vm1717, %v1359, 0
  %v2664 = vsel %vm1717, %v1360, 0
  %v2667 = vsel %vm1717, %v1361, 0
  %v2670 = vsel %vm1717, %v1362, 0
  %v2673 = vsel %vm1717, %v1363, 0
  %v2676 = vsel %vm1717, %v1364, 0
  %v2679 = vsel %vm1717, %v1365, 0
  %v2682 = vsel %vm1717, %v1366, 0
  %v2685 = vsel %vm1717, %v1367, 0
  %v2688 = vsel %vm1717, %v1368, 0
  %v2691 = vsel %vm1717, %v1369, 0
  %v2694 = vsel %vm1717, %v1370, 0
  %v2697 = vsel %vm1717, %v1371, 0
  %v2700 = vsel %vm1717, %v1372, 0
  %v2703 = vsel %vm1717, %v1373, 0
  %v2706 = vsel %vm1717, %v1374, 0
  %v2709 = vsel %vm1717, %v1375, 0
  %v2712 = vsel %vm1717, %v1376, 0
  %v2715 = vsel %vm1717, %v1377, 0
  %v2718 = vsel %vm1717, %v1378, 0
  %v2721 = vsel %vm1717, %v1379, 0
  %v2724 = vsel %vm1717, %v1380, 0
  %v2727 = vsel %vm1717, %v1381, 0
  %v2730 = vsel %vm1717, %v1382, 0
  %v2733 = vsel %vm1717, %v1383, 0
  %v2736 = vsel %vm1717, %v1384, 0
  %v2739 = vsel %vm1717, %v1385, 0
  %v2742 = vsel %vm1717, %v1386, 0
  %v2745 = vsel %vm1717, %v1387, 0
  %v2748 = vsel %vm1717, %v1388, 0
  %v2751 = vsel %vm1717, %v1389, 0
  %v2754 = vsel %vm1717, %v1390, 0
  %v2757 = vsel %vm1717, %v1391, 0
  %v2760 = vsel %vm1717, %v1392, 0
  %v2763 = vsel %vm1717, %v1393, 0
  %v2766 = vsel %vm1717, %v1394, 0
  %v2769 = vsel %vm1717, %v1395, 0
  %v2772 = vsel %vm1717, %v1396, 0
  %v2775 = vsel %vm1717, %v1397, 0
  %v2778 = vsel %vm1717, %v1398, 0
  %v2781 = vsel %vm1717, %v1399, 0
  %v2784 = vsel %vm1717, %v1400, 0
  %v2787 = vsel %vm1717, %v1401, 0
  %v2790 = vsel %vm1717, %v1402, 0
  %v2793 = vsel %vm1717, %v1403, 0
  %v2796 = vsel %vm1717, %v1404, 0
  %v2799 = vsel %vm1717, %v1405, 0
  %v2802 = vsel %vm1717, %v1406, 0
  %v2805 = vsel %vm1717, %v1407, 0
  %v2808 = vsel %vm1717, %v1408, 0
  %v2811 = vsel %vm1717, %v1409, 0
  %v2814 = vsel %vm1717, %v1410, 0
  %v2817 = vsel %vm1717, %v1411, 0
  %v2820 = vsel %vm1717, %v1412, 0
  %v2823 = vsel %vm1717, %v1413, 0
  %v2826 = vsel %vm1717, %v1414, 0
  %v2829 = vsel %vm1717, %v1415, 0
  %v2832 = vsel %vm1717, %v1416, 0
  %v2835 = vsel %vm1717, %v1417, 0
  %v2838 = vsel %vm1717, %v1418, 0
  %v2841 = vsel %vm1717, %v1419, 0
  %v2844 = vsel %vm1717, %v1420, 0
  %v2847 = vsel %vm1717, %v1421, 0
  %v2850 = vsel %vm1717, %v1422, 0
  %v2853 = vsel %vm1717, %v1423, 0
  %v2856 = vsel %vm1717, %v1424, 0
  %v2859 = vsel %vm1717, %v1425, 0
  %v2862 = vsel %vm1717, %v1426, 0
  %v2865 = vsel %vm1717, %v1427, 0
  %v2868 = vsel %vm1717, %v1428, 0
  %v2871 = vsel %vm1717, %v1429, 0
  %v2874 = vsel %vm1717, %v1430, 0
  %v2877 = vsel %vm1717, %v1431, 0
  %v2880 = vsel %vm1717, %v1432, 0
  %v2883 = vsel %vm1717, %v1433, 0
  %v2886 = vsel %vm1717, %v1434, 0
  %v2889 = vsel %vm1717, %v1435, 0
  %v2892 = vsel %vm1717, %v1436, 0
  %v2895 = vsel %vm1717, %v1437, 0
  %v2898 = vsel %vm1717, %v1438, 0
  %v2901 = vsel %vm1717, %v1439, 0
  %v2904 = vsel %vm1717, %v1440, 0
  %v2907 = vsel %vm1717, %v1441, 0
  %v2910 = vsel %vm1717, %v1442, 0
  %v2913 = vsel %vm1717, %v1443, 0
  %v2916 = vsel %vm1717, %v1444, 0
  %v2919 = vsel %vm1717, %v1445, 0
  %v2922 = vsel %vm1717, %v1446, 0
  %v2925 = vsel %vm1717, %v1447, 0
  %v2928 = vsel %vm1717, %v1448, 0
  %v2931 = vsel %vm1717, %v1449, 0
  %v2934 = vsel %vm1717, %v1450, 0
  %v2937 = vsel %vm1717, %v1451, 0
  %v2940 = vsel %vm1717, %v1452, 0
  %v2943 = vsel %vm1717, %v1453, 0
  %v2946 = vsel %vm1717, %v1454, 0
  %v2949 = vsel %vm1717, %v1455, 0
  %v2952 = vsel %vm1717, %v1456, 0
  %v2955 = vsel %vm1717, %v1457, 0
  %v2958 = vsel %vm1717, %v1458, 0
  %v2961 = vsel %vm1717, %v1459, 0
  %v2964 = vsel %vm1717, %v1460, 0
  %v2967 = vsel %vm1717, %v1461, 0
  %v2970 = vsel %vm1717, %v1462, 0
  %v2973 = vsel %vm1717, %v1463, 0
  %v2976 = vsel %vm1717, %v1464, 0
  %v2979 = vsel %vm1717, %v1465, 0
  %v2982 = vsel %vm1717, %v1466, 0
  %v2985 = vsel %vm1717, %v1467, 0
  %v2988 = vsel %vm1717, %v1468, 0
  %v2991 = vsel %vm1717, %v1469, 0
  %v2994 = vsel %vm1717, %v1470, 0
  %v2997 = vsel %vm1717, %v1471, 0
  %v3000 = vsel %vm1717, %v1472, 0
  %v3003 = vsel %vm1717, %v1473, 0
  %v3006 = vsel %vm1717, %v1474, 0
  %v3009 = vsel %vm1717, %v1475, 0
  %v3012 = vsel %vm1717, %v1476, 0
  %v3015 = vsel %vm1717, %v1477, 0
  %v3018 = vsel %vm1717, %v1478, 0
  %v3021 = vsel %vm1717, %v1479, 0
  %v3024 = vsel %vm1717, %v1480, 0
  %v3027 = vsel %vm1717, %v1481, 0
  %v3030 = vsel %vm1717, %v1482, 0
  %v3033 = vsel %vm1717, %v1483, 0
  %v3036 = vsel %vm1717, %v1484, 0
  %v3039 = vsel %vm1717, %v1485, 0
  %v3042 = vsel %vm1717, %v1486, 0
  %v3045 = vsel %vm1717, %v1487, 0
  %v3048 = vsel %vm1717, %v1488, 0
  %v3051 = vsel %vm1717, %v1489, 0
  %v3054 = vsel %vm1717, %v1490, 0
  %v3057 = vsel %vm1717, %v1491, 0
  %v3060 = vsel %vm1717, %v1492, 0
  %v3063 = vsel %vm1717, %v1493, 0
  %v3066 = vsel %vm1717, %v1494, 0
  %v3069 = vsel %vm1717, %v1495, 0
  %v3072 = vsel %vm1717, %v1496, 0
  %v3075 = vsel %vm1717, %v1497, 0
  %v3078 = vsel %vm1717, %v1498, 0
  %v3081 = vsel %vm1717, %v1499, 0
  %v3084 = vsel %vm1717, %v1500, 0
  %v3087 = vsel %vm1717, %v1501, 0
  %v3090 = vsel %vm1717, %v1502, 0
  %v3093 = vsel %vm1717, %v1503, 0
  %v3096 = vsel %vm1717, %v1504, 0
  %v3099 = vsel %vm1717, %v1505, 0
  %v3102 = vsel %vm1717, %v1506, 0
  %v3105 = vsel %vm1717, %v1507, 0
  %v3108 = vsel %vm1717, %v1508, 0
  %v3111 = vsel %vm1717, %v1509, 0
  %v3114 = vsel %vm1717, %v1510, 0
  %v3117 = vsel %vm1717, %v1511, 0
  %v3120 = vsel %vm1717, %v1512, 0
  %v3123 = vsel %vm1717, %v1513, 0
  %v3126 = vsel %vm1717, %v1514, 0
  %v3129 = vsel %vm1717, %v1515, 0
  %v3132 = vsel %vm1717, %v1516, 0
  %v3135 = vsel %vm1717, %v1517, 0
  %v3138 = vsel %vm1717, %v1518, 0
  %v3141 = vsel %vm1717, %v1519, 0
  %v3144 = vsel %vm1717, %v1520, 0
  %v3147 = vsel %vm1717, %v1521, 0
  %v3150 = vsel %vm1717, %v1522, 0
  %v3153 = vsel %vm1717, %v1523, 0
  %v3156 = vsel %vm1717, %v1524, 0
  %v3159 = vsel %vm1717, %v1525, 0
  %v3162 = vsel %vm1717, %v1526, 0
  %v3165 = vsel %vm1717, %v1527, 0
  %v3168 = vsel %vm1717, %v1528, 0
  %v3171 = vsel %vm1717, %v1529, 0
  %v3174 = vsel %vm1717, %v1530, 0
  %v3177 = vsel %vm1717, %v1531, 0
  %v3180 = vsel %vm1717, %v1532, 0
  %v3183 = vsel %vm1717, %v1533, 0
  %v3186 = vsel %vm1717, %v1534, 0
  %v3189 = vsel %vm1717, %v1535, 0
  %v3192 = vsel %vm1717, %v1536, 0
  %v3195 = vsel %vm1717, %v1537, 0
  %v3198 = vsel %vm1717, %v1538, 0
  %v3201 = vsel %vm1717, %v1539, 0
  %v3204 = vsel %vm1717, %v1540, 0
  %v3207 = vsel %vm1717, %v1541, 0
  %v3210 = vsel %vm1717, %v1542, 0
  %v3213 = vsel %vm1717, %v1543, 0
  %v3216 = vsel %vm1717, %v1544, 0
  %v3219 = vsel %vm1717, %v1545, 0
  %v3222 = vsel %vm1717, %v1546, 0
  %v3225 = vsel %vm1717, %v1547, 0
  %v3228 = vsel %vm1717, %v1548, 0
  %v3231 = vsel %vm1717, %v1549, 0
  %v3234 = vsel %vm1717, %v1550, 0
  %v3237 = vsel %vm1717, %v1551, 0
  %v3240 = vsel %vm1717, %v1552, 0
  %v3243 = vsel %vm1717, %v1553, 0
  %v3246 = vsel %vm1717, %v1554, 0
  %v3249 = vsel %vm1717, %v1555, 0
  %v3252 = vsel %vm1717, %v1556, 0
  %v3255 = vsel %vm1717, %v1557, 0
  %v3258 = vsel %vm1717, %v1558, 0
  %v3261 = vsel %vm1717, %v1559, 0
  %v3264 = vsel %vm1717, %v1560, 0
  %v3267 = vsel %vm1717, %v1561, 0
  %v3270 = vsel %vm1717, %v1562, 0
  %v3273 = vsel %vm1717, %v1563, 0
  %v3276 = vsel %vm1717, %v1564, 0
  %3278 = vmatprep.subr.bf16.mxu0 0
  %3279 = vmatpush1.bf16.xpose.msra.mxu0 %v1743
  %3280 = vmatprep.subr.bf16.mxu0 0
  %3281 = vmatpush1.bf16.xpose.msra.mxu0 %v1746
  %3282 = vmatprep.subr.bf16.mxu0 0
  %3283 = vmatpush1.bf16.xpose.msra.mxu0 %v1749
  %3284 = vmatprep.subr.bf16.mxu0 0
  %3285 = vmatpush1.bf16.xpose.msra.mxu0 %v1752
  %3286 = vmatprep.subr.bf16.mxu0 0
  %3287 = vmatpush1.bf16.xpose.msra.mxu0 %v1755
  %3288 = vmatprep.subr.bf16.mxu0 0
  %3289 = vmatpush1.bf16.xpose.msra.mxu0 %v1758
  %3290 = vmatprep.subr.bf16.mxu0 0
  %3291 = vmatpush1.bf16.xpose.msra.mxu0 %v1761
  %3292 = vmatprep.subr.bf16.mxu0 0
  %3293 = vmatpush1.bf16.xpose.msra.mxu0 %v1764
  %3294 = vmatprep.subr.bf16.mxu0 0
  %3295 = vmatpush1.bf16.xpose.msra.mxu0 %v1767
  %3296 = vmatprep.subr.bf16.mxu0 0
  %3297 = vmatpush1.bf16.xpose.msra.mxu0 %v1770
  %3298 = vmatprep.subr.bf16.mxu0 0
  %3299 = vmatpush1.bf16.xpose.msra.mxu0 %v1773
  %3300 = vmatprep.subr.bf16.mxu0 0
  %3301 = vmatpush1.bf16.xpose.msra.mxu0 %v1776
  %3302 = vmatprep.subr.bf16.mxu0 0
  %3303 = vmatpush1.bf16.xpose.msra.mxu0 %v1779
  %3304 = vmatprep.subr.bf16.mxu0 0
  %3305 = vmatpush1.bf16.xpose.msra.mxu0 %v1782
  %3306 = vmatprep.subr.bf16.mxu0 0
  %3307 = vmatpush1.bf16.xpose.msra.mxu0 %v1785
  %3308 = vmatprep.subr.bf16.mxu0 0
  %3309 = vmatpush1.bf16.xpose.msra.mxu0 %v1788
  %3310 = vmatprep.mubr.bf16.mxu0 0
  %3311 = vmatmul.mubr.bf16.gmra.mrb[0].mxu0 %v1719
  %v3312 = vpop.f32.mrb[0].mxu0
  %v3313 = vadd.f32 %v1600, %v3312
  %v3314 = vpop.f32.mrb[0].mxu0
  %v3315 = vadd.f32 %v1600, %v3314
  %v3316 = vpop.f32.mrb[0].mxu0
  %v3317 = vadd.f32 %v1605, %v3316
  %v3318 = vpop.f32.mrb[0].mxu0
  %v3319 = vadd.f32 %v1605, %v3318
  %3320 = vmatprep.mubr.bf16.mxu0 0
  %3321 = vmatmul.mubr.bf16.gmra.mrb[0].mxu0 %v1722
  %v3322 = vpop.f32.mrb[0].mxu0
  %v3323 = vadd.f32 %v1610, %v3322
  %v3324 = vpop.f32.mrb[0].mxu0
  %v3325 = vadd.f32 %v1610, %v3324
  %v3326 = vpop.f32.mrb[0].mxu0
  %v3327 = vadd.f32 %v1615, %v3326
  %v3328 = vpop.f32.mrb[0].mxu0
  %v3329 = vadd.f32 %v1615, %v3328
  %3330 = vmatprep.mubr.bf16.mxu0 0
  %3331 = vmatmul.mubr.bf16.gmra.mrb[0].mxu0 %v1725
  %v3332 = vpop.f32.mrb[0].mxu0
  %v3333 = vadd.f32 %v1620, %v3332
  %v3334 = vpop.f32.mrb[0].mxu0
  %v3335 = vadd.f32 %v1620, %v3334
  %v3336 = vpop.f32.mrb[0].mxu0
  %v3337 = vadd.f32 %v1625, %v3336
  %v3338 = vpop.f32.mrb[0].mxu0
  %v3339 = vadd.f32 %v1625, %v3338
  %3340 = vmatprep.mubr.bf16.mxu0 0
  %3341 = vmatmul.mubr.bf16.gmra.mrb[0].mxu0 %v1728
  %v3342 = vpop.f32.mrb[0].mxu0
  %v3343 = vadd.f32 %v1630, %v3342
  %v3344 = vpop.f32.mrb[0].mxu0
  %v3345 = vadd.f32 %v1630, %v3344
  %v3346 = vpop.f32.mrb[0].mxu0
  %v3347 = vadd.f32 %v1635, %v3346
  %v3348 = vpop.f32.mrb[0].mxu0
  %v3349 = vadd.f32 %v1635, %v3348
  %3350 = vmatprep.mubr.bf16.mxu0 0
  %3351 = vmatmul.mubr.bf16.gmra.mrb[0].mxu0 %v1731
  %v3352 = vpop.f32.mrb[0].mxu0
  %v3353 = vadd.f32 %v1640, %v3352
  %v3354 = vpop.f32.mrb[0].mxu0
  %v3355 = vadd.f32 %v1640, %v3354
  %v3356 = vpop.f32.mrb[0].mxu0
  %v3357 = vadd.f32 %v1645, %v3356
  %v3358 = vpop.f32.mrb[0].mxu0
  %v3359 = vadd.f32 %v1645, %v3358
  %3360 = vmatprep.mubr.bf16.mxu0 0
  %3361 = vmatmul.mubr.bf16.gmra.mrb[0].mxu0 %v1734
  %v3362 = vpop.f32.mrb[0].mxu0
  %v3363 = vadd.f32 %v1650, %v3362
  %v3364 = vpop.f32.mrb[0].mxu0
  %v3365 = vadd.f32 %v1650, %v3364
  %v3366 = vpop.f32.mrb[0].mxu0
  %v3367 = vadd.f32 %v1655, %v3366
  %v3368 = vpop.f32.mrb[0].mxu0
  %v3369 = vadd.f32 %v1655, %v3368
  %3370 = vmatprep.mubr.bf16.mxu0 0
  %3371 = vmatmul.mubr.bf16.gmra.mrb[0].mxu0 %v1737
  %v3372 = vpop.f32.mrb[0].mxu0
  %v3373 = vadd.f32 %v1660, %v3372
  %v3374 = vpop.f32.mrb[0].mxu0
  %v3375 = vadd.f32 %v1660, %v3374
  %v3376 = vpop.f32.mrb[0].mxu0
  %v3377 = vadd.f32 %v1665, %v3376
  %v3378 = vpop.f32.mrb[0].mxu0
  %v3379 = vadd.f32 %v1665, %v3378
  %3380 = vmatprep.mubr.bf16.mxu0 0
  %3381 = vmatmul.mubr.bf16.gmra.mrb[0].mxu0 %v1740
  %v3382 = vpop.f32.mrb[0].mxu0
  %v3383 = vadd.f32 %v1670, %v3382
  %v3384 = vpop.f32.mrb[0].mxu0
  %v3385 = vadd.f32 %v1670, %v3384
  %v3386 = vpop.f32.mrb[0].mxu0
  %v3387 = vadd.f32 %v1675, %v3386
  %v3388 = vpop.f32.mrb[0].mxu0
  %v3389 = vadd.f32 %v1675, %v3388
  %3390 = vdwg.mxu0
  %3391 = vmatprep.subr.bf16.mxu0 0
  %3392 = vmatpush1.bf16.xpose.msra.mxu0 %v1791
  %3393 = vmatprep.subr.bf16.mxu0 0
  %3394 = vmatpush1.bf16.xpose.msra.mxu0 %v1794
  %3395 = vmatprep.subr.bf16.mxu0 0
  %3396 = vmatpush1.bf16.xpose.msra.mxu0 %v1797
  %3397 = vmatprep.subr.bf16.mxu0 0
  %3398 = vmatpush1.bf16.xpose.msra.mxu0 %v1800
  %3399 = vmatprep.subr.bf16.mxu0 0
  %3400 = vmatpush1.bf16.xpose.msra.mxu0 %v1803
  %3401 = vmatprep.subr.bf16.mxu0 0
  %3402 = vmatpush1.bf16.xpose.msra.mxu0 %v1806
  %3403 = vmatprep.subr.bf16.mxu0 0
  %3404 = vmatpush1.bf16.xpose.msra.mxu0 %v1809
  %3405 = vmatprep.subr.bf16.mxu0 0
  %3406 = vmatpush1.bf16.xpose.msra.mxu0 %v1812
  %3407 = vmatprep.subr.bf16.mxu0 0
  %3408 = vmatpush1.bf16.xpose.msra.mxu0 %v1815
  %3409 = vmatprep.subr.bf16.mxu0 0
  %3410 = vmatpush1.bf16.xpose.msra.mxu0 %v1818
  %3411 = vmatprep.subr.bf16.mxu0 0
  %3412 = vmatpush1.bf16.xpose.msra.mxu0 %v1821
  %3413 = vmatprep.subr.bf16.mxu0 0
  %3414 = vmatpush1.bf16.xpose.msra.mxu0 %v1824
  %3415 = vmatprep.subr.bf16.mxu0 0
  %3416 = vmatpush1.bf16.xpose.msra.mxu0 %v1827
  %3417 = vmatprep.subr.bf16.mxu0 0
  %3418 = vmatpush1.bf16.xpose.msra.mxu0 %v1830
  %3419 = vmatprep.subr.bf16.mxu0 0
  %3420 = vmatpush1.bf16.xpose.msra.mxu0 %v1833
  %3421 = vmatprep.subr.bf16.mxu0 0
  %3422 = vmatpush1.bf16.xpose.msra.mxu0 %v1836
  %3423 = vmatprep.mubr.bf16.mxu0 0
  %3424 = vmatmul.mubr.bf16.gmra.mrb[0].mxu0 %v1719
  %v3425 = vpop.f32.mrb[0].mxu0
  %v3426 = vadd.f32 %v1600, %v3425
  %v3427 = vpop.f32.mrb[0].mxu0
  %v3428 = vadd.f32 %v1600, %v3427
  %v3429 = vpop.f32.mrb[0].mxu0
  %v3430 = vadd.f32 %v1605, %v3429
  %v3431 = vpop.f32.mrb[0].mxu0
  %v3432 = vadd.f32 %v1605, %v3431
  %3433 = vmatprep.mubr.bf16.mxu0 0
  %3434 = vmatmul.mubr.bf16.gmra.mrb[0].mxu0 %v1722
  %v3435 = vpop.f32.mrb[0].mxu0
  %v3436 = vadd.f32 %v1610, %v3435
  %v3437 = vpop.f32.mrb[0].mxu0
  %v3438 = vadd.f32 %v1610, %v3437
  %v3439 = vpop.f32.mrb[0].mxu0
  %v3440 = vadd.f32 %v1615, %v3439
  %v3441 = vpop.f32.mrb[0].mxu0
  %v3442 = vadd.f32 %v1615, %v3441
  %3443 = vmatprep.mubr.bf16.mxu0 0
  %3444 = vmatmul.mubr.bf16.gmra.mrb[0].mxu0 %v1725
  %v3445 = vpop.f32.mrb[0].mxu0
  %v3446 = vadd.f32 %v1620, %v3445
  %v3447 = vpop.f32.mrb[0].mxu0
  %v3448 = vadd.f32 %v1620, %v3447
  %v3449 = vpop.f32.mrb[0].mxu0
  %v3450 = vadd.f32 %v1625, %v3449
  %v3451 = vpop.f32.mrb[0].mxu0
  %v3452 = vadd.f32 %v1625, %v3451
  %3453 = vmatprep.mubr.bf16.mxu0 0
  %3454 = vmatmul.mubr.bf16.gmra.mrb[0].mxu0 %v1728
  %v3455 = vpop.f32.mrb[0].mxu0
  %v3456 = vadd.f32 %v1630, %v3455
  %v3457 = vpop.f32.mrb[0].mxu0
  %v3458 = vadd.f32 %v1630, %v3457
  %v3459 = vpop.f32.mrb[0].mxu0
  %v3460 = vadd.f32 %v1635, %v3459
  %v3461 = vpop.f32.mrb[0].mxu0
  %v3462 = vadd.f32 %v1635, %v3461
  %3463 = vmatprep.mubr.bf16.mxu0 0
  %3464 = vmatmul.mubr.bf16.gmra.mrb[0].mxu0 %v1731
  %v3465 = vpop.f32.mrb[0].mxu0
  %v3466 = vadd.f32 %v1640, %v3465
  %v3467 = vpop.f32.mrb[0].mxu0
  %v3468 = vadd.f32 %v1640, %v3467
  %v3469 = vpop.f32.mrb[0].mxu0
  %v3470 = vadd.f32 %v1645, %v3469
  %v3471 = vpop.f32.mrb[0].mxu0
  %v3472 = vadd.f32 %v1645, %v3471
  %3473 = vmatprep.mubr.bf16.mxu0 0
  %3474 = vmatmul.mubr.bf16.gmra.mrb[0].mxu0 %v1734
  %v3475 = vpop.f32.mrb[0].mxu0
  %v3476 = vadd.f32 %v1650, %v3475
  %v3477 = vpop.f32.mrb[0].mxu0
  %v3478 = vadd.f32 %v1650, %v3477
  %v3479 = vpop.f32.mrb[0].mxu0
  %v3480 = vadd.f32 %v1655, %v3479
  %v3481 = vpop.f32.mrb[0].mxu0
  %v3482 = vadd.f32 %v1655, %v3481
  %3483 = vmatprep.mubr.bf16.mxu0 0
  %3484 = vmatmul.mubr.bf16.gmra.mrb[0].mxu0 %v1737
  %v3485 = vpop.f32.mrb[0].mxu0
  %v3486 = vadd.f32 %v1660, %v3485
  %v3487 = vpop.f32.mrb[0].mxu0
  %v3488 = vadd.f32 %v1660, %v3487
  %v3489 = vpop.f32.mrb[0].mxu0
  %v3490 = vadd.f32 %v1665, %v3489
  %v3491 = vpop.f32.mrb[0].mxu0
  %v3492 = vadd.f32 %v1665, %v3491
  %3493 = vmatprep.mubr.bf16.mxu0 0
  %3494 = vmatmul.mubr.bf16.gmra.mrb[0].mxu0 %v1740
  %v3495 = vpop.f32.mrb[0].mxu0
  %v3496 = vadd.f32 %v1670, %v3495
  %v3497 = vpop.f32.mrb[0].mxu0
  %v3498 = vadd.f32 %v1670, %v3497
  %v3499 = vpop.f32.mrb[0].mxu0
  %v3500 = vadd.f32 %v1675, %v3499
  %v3501 = vpop.f32.mrb[0].mxu0
  %v3502 = vadd.f32 %v1675, %v3501
  %3503 = vdwg.mxu0
  %3504 = vmatprep.subr.bf16.mxu0 0
  %3505 = vmatpush1.bf16.xpose.msra.mxu0 %v1839
  %3506 = vmatprep.subr.bf16.mxu0 0
  %3507 = vmatpush1.bf16.xpose.msra.mxu0 %v1842
  %3508 = vmatprep.subr.bf16.mxu0 0
  %3509 = vmatpush1.bf16.xpose.msra.mxu0 %v1845
  %3510 = vmatprep.subr.bf16.mxu0 0
  %3511 = vmatpush1.bf16.xpose.msra.mxu0 %v1848
  %3512 = vmatprep.subr.bf16.mxu0 0
  %3513 = vmatpush1.bf16.xpose.msra.mxu0 %v1851
  %3514 = vmatprep.subr.bf16.mxu0 0
  %3515 = vmatpush1.bf16.xpose.msra.mxu0 %v1854
  %3516 = vmatprep.subr.bf16.mxu0 0
  %3517 = vmatpush1.bf16.xpose.msra.mxu0 %v1857
  %3518 = vmatprep.subr.bf16.mxu0 0
  %3519 = vmatpush1.bf16.xpose.msra.mxu0 %v1860
  %3520 = vmatprep.subr.bf16.mxu0 0
  %3521 = vmatpush1.bf16.xpose.msra.mxu0 %v1863
  %3522 = vmatprep.subr.bf16.mxu0 0
  %3523 = vmatpush1.bf16.xpose.msra.mxu0 %v1866
  %3524 = vmatprep.subr.bf16.mxu0 0
  %3525 = vmatpush1.bf16.xpose.msra.mxu0 %v1869
  %3526 = vmatprep.subr.bf16.mxu0 0
  %3527 = vmatpush1.bf16.xpose.msra.mxu0 %v1872
  %3528 = vmatprep.subr.bf16.mxu0 0
  %3529 = vmatpush1.bf16.xpose.msra.mxu0 %v1875
  %3530 = vmatprep.subr.bf16.mxu0 0
  %3531 = vmatpush1.bf16.xpose.msra.mxu0 %v1878
  %3532 = vmatprep.subr.bf16.mxu0 0
  %3533 = vmatpush1.bf16.xpose.msra.mxu0 %v1881
  %3534 = vmatprep.subr.bf16.mxu0 0
  %3535 = vmatpush1.bf16.xpose.msra.mxu0 %v1884
  %3536 = vmatprep.mubr.bf16.mxu0 0
  %3537 = vmatmul.mubr.bf16.gmra.mrb[0].mxu0 %v1719
  %v3538 = vpop.f32.mrb[0].mxu0
  %v3539 = vadd.f32 %v1600, %v3538
  %v3540 = vpop.f32.mrb[0].mxu0
  %v3541 = vadd.f32 %v1600, %v3540
  %v3542 = vpop.f32.mrb[0].mxu0
  %v3543 = vadd.f32 %v1605, %v3542
  %v3544 = vpop.f32.mrb[0].mxu0
  %v3545 = vadd.f32 %v1605, %v3544
  %3546 = vmatprep.mubr.bf16.mxu0 0
  %3547 = vmatmul.mubr.bf16.gmra.mrb[0].mxu0 %v1722
  %v3548 = vpop.f32.mrb[0].mxu0
  %v3549 = vadd.f32 %v1610, %v3548
  %v3550 = vpop.f32.mrb[0].mxu0
  %v3551 = vadd.f32 %v1610, %v3550
  %v3552 = vpop.f32.mrb[0].mxu0
  %v3553 = vadd.f32 %v1615, %v3552
  %v3554 = vpop.f32.mrb[0].mxu0
  %v3555 = vadd.f32 %v1615, %v3554
  %3556 = vmatprep.mubr.bf16.mxu0 0
  %3557 = vmatmul.mubr.bf16.gmra.mrb[0].mxu0 %v1725
  %v3558 = vpop.f32.mrb[0].mxu0
  %v3559 = vadd.f32 %v1620, %v3558
  %v3560 = vpop.f32.mrb[0].mxu0
  %v3561 = vadd.f32 %v1620, %v3560
  %v3562 = vpop.f32.mrb[0].mxu0
  %v3563 = vadd.f32 %v1625, %v3562
  %v3564 = vpop.f32.mrb[0].mxu0
  %v3565 = vadd.f32 %v1625, %v3564
  %3566 = vmatprep.mubr.bf16.mxu0 0
  %3567 = vmatmul.mubr.bf16.gmra.mrb[0].mxu0 %v1728
  %v3568 = vpop.f32.mrb[0].mxu0
  %v3569 = vadd.f32 %v1630, %v3568
  %v3570 = vpop.f32.mrb[0].mxu0
  %v3571 = vadd.f32 %v1630, %v3570
  %v3572 = vpop.f32.mrb[0].mxu0
  %v3573 = vadd.f32 %v1635, %v3572
  %v3574 = vpop.f32.mrb[0].mxu0
  %v3575 = vadd.f32 %v1635, %v3574
  %3576 = vmatprep.mubr.bf16.mxu0 0
  %3577 = vmatmul.mubr.bf16.gmra.mrb[0].mxu0 %v1731
  %v3578 = vpop.f32.mrb[0].mxu0
  %v3579 = vadd.f32 %v1640, %v3578
  %v3580 = vpop.f32.mrb[0].mxu0
  %v3581 = vadd.f32 %v1640, %v3580
  %v3582 = vpop.f32.mrb[0].mxu0
  %v3583 = vadd.f32 %v1645, %v3582
  %v3584 = vpop.f32.mrb[0].mxu0
  %v3585 = vadd.f32 %v1645, %v3584
  %3586 = vmatprep.mubr.bf16.mxu0 0
  %3587 = vmatmul.mubr.bf16.gmra.mrb[0].mxu0 %v1734
  %v3588 = vpop.f32.mrb[0].mxu0
  %v3589 = vadd.f32 %v1650, %v3588
  %v3590 = vpop.f32.mrb[0].mxu0
  %v3591 = vadd.f32 %v1650, %v3590
  %v3592 = vpop.f32.mrb[0].mxu0
  %v3593 = vadd.f32 %v1655, %v3592
  %v3594 = vpop.f32.mrb[0].mxu0
  %v3595 = vadd.f32 %v1655, %v3594
  %3596 = vmatprep.mubr.bf16.mxu0 0
  %3597 = vmatmul.mubr.bf16.gmra.mrb[0].mxu0 %v1737
  %v3598 = vpop.f32.mrb[0].mxu0
  %v3599 = vadd.f32 %v1660, %v3598
  %v3600 = vpop.f32.mrb[0].mxu0
  %v3601 = vadd.f32 %v1660, %v3600
  %v3602 = vpop.f32.mrb[0].mxu0
  %v3603 = vadd.f32 %v1665, %v3602
  %v3604 = vpop.f32.mrb[0].mxu0
  %v3605 = vadd.f32 %v1665, %v3604
  %3606 = vmatprep.mubr.bf16.mxu0 0
  %3607 = vmatmul.mubr.bf16.gmra.mrb[0].mxu0 %v1740
  %v3608 = vpop.f32.mrb[0].mxu0
  %v3609 = vadd.f32 %v1670, %v3608
  %v3610 = vpop.f32.mrb[0].mxu0
  %v3611 = vadd.f32 %v1670, %v3610
  %v3612 = vpop.f32.mrb[0].mxu0
  %v3613 = vadd.f32 %v1675, %v3612
  %v3614 = vpop.f32.mrb[0].mxu0
  %v3615 = vadd.f32 %v1675, %v3614
  %3616 = vdwg.mxu0
  %3617 = vmatprep.subr.bf16.mxu0 0
  %3618 = vmatpush1.bf16.xpose.msra.mxu0 %v1887
  %3619 = vmatprep.subr.bf16.mxu0 0
  %3620 = vmatpush1.bf16.xpose.msra.mxu0 %v1890
  %3621 = vmatprep.subr.bf16.mxu0 0
  %3622 = vmatpush1.bf16.xpose.msra.mxu0 %v1893
  %3623 = vmatprep.subr.bf16.mxu0 0
  %3624 = vmatpush1.bf16.xpose.msra.mxu0 %v1896
  %3625 = vmatprep.subr.bf16.mxu0 0
  %3626 = vmatpush1.bf16.xpose.msra.mxu0 %v1899
  %3627 = vmatprep.subr.bf16.mxu0 0
  %3628 = vmatpush1.bf16.xpose.msra.mxu0 %v1902
  %3629 = vmatprep.subr.bf16.mxu0 0
  %3630 = vmatpush1.bf16.xpose.msra.mxu0 %v1905
  %3631 = vmatprep.subr.bf16.mxu0 0
  %3632 = vmatpush1.bf16.xpose.msra.mxu0 %v1908
  %3633 = vmatprep.subr.bf16.mxu0 0
  %3634 = vmatpush1.bf16.xpose.msra.mxu0 %v1911
  %3635 = vmatprep.subr.bf16.mxu0 0
  %3636 = vmatpush1.bf16.xpose.msra.mxu0 %v1914
  %3637 = vmatprep.subr.bf16.mxu0 0
  %3638 = vmatpush1.bf16.xpose.msra.mxu0 %v1917
  %3639 = vmatprep.subr.bf16.mxu0 0
  %3640 = vmatpush1.bf16.xpose.msra.mxu0 %v1920
  %3641 = vmatprep.subr.bf16.mxu0 0
  %3642 = vmatpush1.bf16.xpose.msra.mxu0 %v1923
  %3643 = vmatprep.subr.bf16.mxu0 0
  %3644 = vmatpush1.bf16.xpose.msra.mxu0 %v1926
  %3645 = vmatprep.subr.bf16.mxu0 0
  %3646 = vmatpush1.bf16.xpose.msra.mxu0 %v1929
  %3647 = vmatprep.subr.bf16.mxu0 0
  %3648 = vmatpush1.bf16.xpose.msra.mxu0 %v1932
  %3649 = vmatprep.mubr.bf16.mxu0 0
  %3650 = vmatmul.mubr.bf16.gmra.mrb[0].mxu0 %v1719
  %v3651 = vpop.f32.mrb[0].mxu0
  %v3652 = vadd.f32 %v1600, %v3651
  %v3653 = vpop.f32.mrb[0].mxu0
  %v3654 = vadd.f32 %v1600, %v3653
  %v3655 = vpop.f32.mrb[0].mxu0
  %v3656 = vadd.f32 %v1605, %v3655
  %v3657 = vpop.f32.mrb[0].mxu0
  %v3658 = vadd.f32 %v1605, %v3657
  %3659 = vmatprep.mubr.bf16.mxu0 0
  %3660 = vmatmul.mubr.bf16.gmra.mrb[0].mxu0 %v1722
  %v3661 = vpop.f32.mrb[0].mxu0
  %v3662 = vadd.f32 %v1610, %v3661
  %v3663 = vpop.f32.mrb[0].mxu0
  %v3664 = vadd.f32 %v1610, %v3663
  %v3665 = vpop.f32.mrb[0].mxu0
  %v3666 = vadd.f32 %v1615, %v3665
  %v3667 = vpop.f32.mrb[0].mxu0
  %v3668 = vadd.f32 %v1615, %v3667
  %3669 = vmatprep.mubr.bf16.mxu0 0
  %3670 = vmatmul.mubr.bf16.gmra.mrb[0].mxu0 %v1725
  %v3671 = vpop.f32.mrb[0].mxu0
  %v3672 = vadd.f32 %v1620, %v3671
  %v3673 = vpop.f32.mrb[0].mxu0
  %v3674 = vadd.f32 %v1620, %v3673
  %v3675 = vpop.f32.mrb[0].mxu0
  %v3676 = vadd.f32 %v1625, %v3675
  %v3677 = vpop.f32.mrb[0].mxu0
  %v3678 = vadd.f32 %v1625, %v3677
  %3679 = vmatprep.mubr.bf16.mxu0 0
  %3680 = vmatmul.mubr.bf16.gmra.mrb[0].mxu0 %v1728
  %v3681 = vpop.f32.mrb[0].mxu0
  %v3682 = vadd.f32 %v1630, %v3681
  %v3683 = vpop.f32.mrb[0].mxu0
  %v3684 = vadd.f32 %v1630, %v3683
  %v3685 = vpop.f32.mrb[0].mxu0
  %v3686 = vadd.f32 %v1635, %v3685
  %v3687 = vpop.f32.mrb[0].mxu0
  %v3688 = vadd.f32 %v1635, %v3687
  %3689 = vmatprep.mubr.bf16.mxu0 0
  %3690 = vmatmul.mubr.bf16.gmra.mrb[0].mxu0 %v1731
  %v3691 = vpop.f32.mrb[0].mxu0
  %v3692 = vadd.f32 %v1640, %v3691
  %v3693 = vpop.f32.mrb[0].mxu0
  %v3694 = vadd.f32 %v1640, %v3693
  %v3695 = vpop.f32.mrb[0].mxu0
  %v3696 = vadd.f32 %v1645, %v3695
  %v3697 = vpop.f32.mrb[0].mxu0
  %v3698 = vadd.f32 %v1645, %v3697
  %3699 = vmatprep.mubr.bf16.mxu0 0
  %3700 = vmatmul.mubr.bf16.gmra.mrb[0].mxu0 %v1734
  %v3701 = vpop.f32.mrb[0].mxu0
  %v3702 = vadd.f32 %v1650, %v3701
  %v3703 = vpop.f32.mrb[0].mxu0
  %v3704 = vadd.f32 %v1650, %v3703
  %v3705 = vpop.f32.mrb[0].mxu0
  %v3706 = vadd.f32 %v1655, %v3705
  %v3707 = vpop.f32.mrb[0].mxu0
  %v3708 = vadd.f32 %v1655, %v3707
  %3709 = vmatprep.mubr.bf16.mxu0 0
  %3710 = vmatmul.mubr.bf16.gmra.mrb[0].mxu0 %v1737
  %v3711 = vpop.f32.mrb[0].mxu0
  %v3712 = vadd.f32 %v1660, %v3711
  %v3713 = vpop.f32.mrb[0].mxu0
  %v3714 = vadd.f32 %v1660, %v3713
  %v3715 = vpop.f32.mrb[0].mxu0
  %v3716 = vadd.f32 %v1665, %v3715
  %v3717 = vpop.f32.mrb[0].mxu0
  %v3718 = vadd.f32 %v1665, %v3717
  %3719 = vmatprep.mubr.bf16.mxu0 0
  %3720 = vmatmul.mubr.bf16.gmra.mrb[0].mxu0 %v1740
  %v3721 = vpop.f32.mrb[0].mxu0
  %v3722 = vadd.f32 %v1670, %v3721
  %v3723 = vpop.f32.mrb[0].mxu0
  %v3724 = vadd.f32 %v1670, %v3723
  %v3725 = vpop.f32.mrb[0].mxu0
  %v3726 = vadd.f32 %v1675, %v3725
  %v3727 = vpop.f32.mrb[0].mxu0
  %v3728 = vadd.f32 %v1675, %v3727
  %3729 = vdwg.mxu0
  %3730 = vmatprep.subr.bf16.mxu0 0
  %3731 = vmatpush1.bf16.xpose.msra.mxu0 %v1935
  %3732 = vmatprep.subr.bf16.mxu0 0
  %3733 = vmatpush1.bf16.xpose.msra.mxu0 %v1938
  %3734 = vmatprep.subr.bf16.mxu0 0
  %3735 = vmatpush1.bf16.xpose.msra.mxu0 %v1941
  %3736 = vmatprep.subr.bf16.mxu0 0
  %3737 = vmatpush1.bf16.xpose.msra.mxu0 %v1944
  %3738 = vmatprep.subr.bf16.mxu0 0
  %3739 = vmatpush1.bf16.xpose.msra.mxu0 %v1947
  %3740 = vmatprep.subr.bf16.mxu0 0
  %3741 = vmatpush1.bf16.xpose.msra.mxu0 %v1950
  %3742 = vmatprep.subr.bf16.mxu0 0
  %3743 = vmatpush1.bf16.xpose.msra.mxu0 %v1953
  %3744 = vmatprep.subr.bf16.mxu0 0
  %3745 = vmatpush1.bf16.xpose.msra.mxu0 %v1956
  %3746 = vmatprep.subr.bf16.mxu0 0
  %3747 = vmatpush1.bf16.xpose.msra.mxu0 %v1959
  %3748 = vmatprep.subr.bf16.mxu0 0
  %3749 = vmatpush1.bf16.xpose.msra.mxu0 %v1962
  %3750 = vmatprep.subr.bf16.mxu0 0
  %3751 = vmatpush1.bf16.xpose.msra.mxu0 %v1965
  %3752 = vmatprep.subr.bf16.mxu0 0
  %3753 = vmatpush1.bf16.xpose.msra.mxu0 %v1968
  %3754 = vmatprep.subr.bf16.mxu0 0
  %3755 = vmatpush1.bf16.xpose.msra.mxu0 %v1971
  %3756 = vmatprep.subr.bf16.mxu0 0
  %3757 = vmatpush1.bf16.xpose.msra.mxu0 %v1974
  %3758 = vmatprep.subr.bf16.mxu0 0
  %3759 = vmatpush1.bf16.xpose.msra.mxu0 %v1977
  %3760 = vmatprep.subr.bf16.mxu0 0
  %3761 = vmatpush1.bf16.xpose.msra.mxu0 %v1980
  %3762 = vmatprep.mubr.bf16.mxu0 0
  %3763 = vmatmul.mubr.bf16.gmra.mrb[0].mxu0 %v1719
  %v3764 = vpop.f32.mrb[0].mxu0
  %v3765 = vadd.f32 %v1600, %v3764
  %v3766 = vpop.f32.mrb[0].mxu0
  %v3767 = vadd.f32 %v1600, %v3766
  %v3768 = vpop.f32.mrb[0].mxu0
  %v3769 = vadd.f32 %v1605, %v3768
  %v3770 = vpop.f32.mrb[0].mxu0
  %v3771 = vadd.f32 %v1605, %v3770
  %3772 = vmatprep.mubr.bf16.mxu0 0
  %3773 = vmatmul.mubr.bf16.gmra.mrb[0].mxu0 %v1722
  %v3774 = vpop.f32.mrb[0].mxu0
  %v3775 = vadd.f32 %v1610, %v3774
  %v3776 = vpop.f32.mrb[0].mxu0
  %v3777 = vadd.f32 %v1610, %v3776
  %v3778 = vpop.f32.mrb[0].mxu0
  %v3779 = vadd.f32 %v1615, %v3778
  %v3780 = vpop.f32.mrb[0].mxu0
  %v3781 = vadd.f32 %v1615, %v3780
  %3782 = vmatprep.mubr.bf16.mxu0 0
  %3783 = vmatmul.mubr.bf16.gmra.mrb[0].mxu0 %v1725
  %v3784 = vpop.f32.mrb[0].mxu0
  %v3785 = vadd.f32 %v1620, %v3784
  %v3786 = vpop.f32.mrb[0].mxu0
  %v3787 = vadd.f32 %v1620, %v3786
  %v3788 = vpop.f32.mrb[0].mxu0
  %v3789 = vadd.f32 %v1625, %v3788
  %v3790 = vpop.f32.mrb[0].mxu0
  %v3791 = vadd.f32 %v1625, %v3790
  %3792 = vmatprep.mubr.bf16.mxu0 0
  %3793 = vmatmul.mubr.bf16.gmra.mrb[0].mxu0 %v1728
  %v3794 = vpop.f32.mrb[0].mxu0
  %v3795 = vadd.f32 %v1630, %v3794
  %v3796 = vpop.f32.mrb[0].mxu0
  %v3797 = vadd.f32 %v1630, %v3796
  %v3798 = vpop.f32.mrb[0].mxu0
  %v3799 = vadd.f32 %v1635, %v3798
  %v3800 = vpop.f32.mrb[0].mxu0
  %v3801 = vadd.f32 %v1635, %v3800
  %3802 = vmatprep.mubr.bf16.mxu0 0
  %3803 = vmatmul.mubr.bf16.gmra.mrb[0].mxu0 %v1731
  %v3804 = vpop.f32.mrb[0].mxu0
  %v3805 = vadd.f32 %v1640, %v3804
  %v3806 = vpop.f32.mrb[0].mxu0
  %v3807 = vadd.f32 %v1640, %v3806
  %v3808 = vpop.f32.mrb[0].mxu0
  %v3809 = vadd.f32 %v1645, %v3808
  %v3810 = vpop.f32.mrb[0].mxu0
  %v3811 = vadd.f32 %v1645, %v3810
  %3812 = vmatprep.mubr.bf16.mxu0 0
  %3813 = vmatmul.mubr.bf16.gmra.mrb[0].mxu0 %v1734
  %v3814 = vpop.f32.mrb[0].mxu0
  %v3815 = vadd.f32 %v1650, %v3814
  %v3816 = vpop.f32.mrb[0].mxu0
  %v3817 = vadd.f32 %v1650, %v3816
  %v3818 = vpop.f32.mrb[0].mxu0
  %v3819 = vadd.f32 %v1655, %v3818
  %v3820 = vpop.f32.mrb[0].mxu0
  %v3821 = vadd.f32 %v1655, %v3820
  %3822 = vmatprep.mubr.bf16.mxu0 0
  %3823 = vmatmul.mubr.bf16.gmra.mrb[0].mxu0 %v1737
  %v3824 = vpop.f32.mrb[0].mxu0
  %v3825 = vadd.f32 %v1660, %v3824
  %v3826 = vpop.f32.mrb[0].mxu0
  %v3827 = vadd.f32 %v1660, %v3826
  %v3828 = vpop.f32.mrb[0].mxu0
  %v3829 = vadd.f32 %v1665, %v3828
  %v3830 = vpop.f32.mrb[0].mxu0
  %v3831 = vadd.f32 %v1665, %v3830
  %3832 = vmatprep.mubr.bf16.mxu0 0
  %3833 = vmatmul.mubr.bf16.gmra.mrb[0].mxu0 %v1740
  %v3834 = vpop.f32.mrb[0].mxu0
  %v3835 = vadd.f32 %v1670, %v3834
  %v3836 = vpop.f32.mrb[0].mxu0
  %v3837 = vadd.f32 %v1670, %v3836
  %v3838 = vpop.f32.mrb[0].mxu0
  %v3839 = vadd.f32 %v1675, %v3838
  %v3840 = vpop.f32.mrb[0].mxu0
  %v3841 = vadd.f32 %v1675, %v3840
  %3842 = vdwg.mxu0
  %3843 = vmatprep.subr.bf16.mxu0 0
  %3844 = vmatpush1.bf16.xpose.msra.mxu0 %v1983
  %3845 = vmatprep.subr.bf16.mxu0 0
  %3846 = vmatpush1.bf16.xpose.msra.mxu0 %v1986
  %3847 = vmatprep.subr.bf16.mxu0 0
  %3848 = vmatpush1.bf16.xpose.msra.mxu0 %v1989
  %3849 = vmatprep.subr.bf16.mxu0 0
  %3850 = vmatpush1.bf16.xpose.msra.mxu0 %v1992
  %3851 = vmatprep.subr.bf16.mxu0 0
  %3852 = vmatpush1.bf16.xpose.msra.mxu0 %v1995
  %3853 = vmatprep.subr.bf16.mxu0 0
  %3854 = vmatpush1.bf16.xpose.msra.mxu0 %v1998
  %3855 = vmatprep.subr.bf16.mxu0 0
  %3856 = vmatpush1.bf16.xpose.msra.mxu0 %v2001
  %3857 = vmatprep.subr.bf16.mxu0 0
  %3858 = vmatpush1.bf16.xpose.msra.mxu0 %v2004
  %3859 = vmatprep.subr.bf16.mxu0 0
  %3860 = vmatpush1.bf16.xpose.msra.mxu0 %v2007
  %3861 = vmatprep.subr.bf16.mxu0 0
  %3862 = vmatpush1.bf16.xpose.msra.mxu0 %v2010
  %3863 = vmatprep.subr.bf16.mxu0 0
  %3864 = vmatpush1.bf16.xpose.msra.mxu0 %v2013
  %3865 = vmatprep.subr.bf16.mxu0 0
  %3866 = vmatpush1.bf16.xpose.msra.mxu0 %v2016
  %3867 = vmatprep.subr.bf16.mxu0 0
  %3868 = vmatpush1.bf16.xpose.msra.mxu0 %v2019
  %3869 = vmatprep.subr.bf16.mxu0 0
  %3870 = vmatpush1.bf16.xpose.msra.mxu0 %v2022
  %3871 = vmatprep.subr.bf16.mxu0 0
  %3872 = vmatpush1.bf16.xpose.msra.mxu0 %v2025
  %3873 = vmatprep.subr.bf16.mxu0 0
  %3874 = vmatpush1.bf16.xpose.msra.mxu0 %v2028
  %3875 = vmatprep.mubr.bf16.mxu0 0
  %3876 = vmatmul.mubr.bf16.gmra.mrb[0].mxu0 %v1719
  %v3877 = vpop.f32.mrb[0].mxu0
  %v3878 = vadd.f32 %v1600, %v3877
  %v3879 = vpop.f32.mrb[0].mxu0
  %v3880 = vadd.f32 %v1600, %v3879
  %v3881 = vpop.f32.mrb[0].mxu0
  %v3882 = vadd.f32 %v1605, %v3881
  %v3883 = vpop.f32.mrb[0].mxu0
  %v3884 = vadd.f32 %v1605, %v3883
  %3885 = vmatprep.mubr.bf16.mxu0 0
  %3886 = vmatmul.mubr.bf16.gmra.mrb[0].mxu0 %v1722
  %v3887 = vpop.f32.mrb[0].mxu0
  %v3888 = vadd.f32 %v1610, %v3887
  %v3889 = vpop.f32.mrb[0].mxu0
  %v3890 = vadd.f32 %v1610, %v3889
  %v3891 = vpop.f32.mrb[0].mxu0
  %v3892 = vadd.f32 %v1615, %v3891
  %v3893 = vpop.f32.mrb[0].mxu0
  %v3894 = vadd.f32 %v1615, %v3893
  %3895 = vmatprep.mubr.bf16.mxu0 0
  %3896 = vmatmul.mubr.bf16.gmra.mrb[0].mxu0 %v1725
  %v3897 = vpop.f32.mrb[0].mxu0
  %v3898 = vadd.f32 %v1620, %v3897
  %v3899 = vpop.f32.mrb[0].mxu0
  %v3900 = vadd.f32 %v1620, %v3899
  %v3901 = vpop.f32.mrb[0].mxu0
  %v3902 = vadd.f32 %v1625, %v3901
  %v3903 = vpop.f32.mrb[0].mxu0
  %v3904 = vadd.f32 %v1625, %v3903
  %3905 = vmatprep.mubr.bf16.mxu0 0
  %3906 = vmatmul.mubr.bf16.gmra.mrb[0].mxu0 %v1728
  %v3907 = vpop.f32.mrb[0].mxu0
  %v3908 = vadd.f32 %v1630, %v3907
  %v3909 = vpop.f32.mrb[0].mxu0
  %v3910 = vadd.f32 %v1630, %v3909
  %v3911 = vpop.f32.mrb[0].mxu0
  %v3912 = vadd.f32 %v1635, %v3911
  %v3913 = vpop.f32.mrb[0].mxu0
  %v3914 = vadd.f32 %v1635, %v3913
  %3915 = vmatprep.mubr.bf16.mxu0 0
  %3916 = vmatmul.mubr.bf16.gmra.mrb[0].mxu0 %v1731
  %v3917 = vpop.f32.mrb[0].mxu0
  %v3918 = vadd.f32 %v1640, %v3917
  %v3919 = vpop.f32.mrb[0].mxu0
  %v3920 = vadd.f32 %v1640, %v3919
  %v3921 = vpop.f32.mrb[0].mxu0
  %v3922 = vadd.f32 %v1645, %v3921
  %v3923 = vpop.f32.mrb[0].mxu0
  %v3924 = vadd.f32 %v1645, %v3923
  %3925 = vmatprep.mubr.bf16.mxu0 0
  %3926 = vmatmul.mubr.bf16.gmra.mrb[0].mxu0 %v1734
  %v3927 = vpop.f32.mrb[0].mxu0
  %v3928 = vadd.f32 %v1650, %v3927
  %v3929 = vpop.f32.mrb[0].mxu0
  %v3930 = vadd.f32 %v1650, %v3929
  %v3931 = vpop.f32.mrb[0].mxu0
  %v3932 = vadd.f32 %v1655, %v3931
  %v3933 = vpop.f32.mrb[0].mxu0
  %v3934 = vadd.f32 %v1655, %v3933
  %3935 = vmatprep.mubr.bf16.mxu0 0
  %3936 = vmatmul.mubr.bf16.gmra.mrb[0].mxu0 %v1737
  %v3937 = vpop.f32.mrb[0].mxu0
  %v3938 = vadd.f32 %v1660, %v3937
  %v3939 = vpop.f32.mrb[0].mxu0
  %v3940 = vadd.f32 %v1660, %v3939
  %v3941 = vpop.f32.mrb[0].mxu0
  %v3942 = vadd.f32 %v1665, %v3941
  %v3943 = vpop.f32.mrb[0].mxu0
  %v3944 = vadd.f32 %v1665, %v3943
  %3945 = vmatprep.mubr.bf16.mxu0 0
  %3946 = vmatmul.mubr.bf16.gmra.mrb[0].mxu0 %v1740
  %v3947 = vpop.f32.mrb[0].mxu0
  %v3948 = vadd.f32 %v1670, %v3947
  %v3949 = vpop.f32.mrb[0].mxu0
  %v3950 = vadd.f32 %v1670, %v3949
  %v3951 = vpop.f32.mrb[0].mxu0
  %v3952 = vadd.f32 %v1675, %v3951
  %v3953 = vpop.f32.mrb[0].mxu0
  %v3954 = vadd.f32 %v1675, %v3953
  %3955 = vdwg.mxu0
  %3956 = vmatprep.subr.bf16.mxu0 0
  %3957 = vmatpush1.bf16.xpose.msra.mxu0 %v2031
  %3958 = vmatprep.subr.bf16.mxu0 0
  %3959 = vmatpush1.bf16.xpose.msra.mxu0 %v2034
  %3960 = vmatprep.subr.bf16.mxu0 0
  %3961 = vmatpush1.bf16.xpose.msra.mxu0 %v2037
  %3962 = vmatprep.subr.bf16.mxu0 0
  %3963 = vmatpush1.bf16.xpose.msra.mxu0 %v2040
  %3964 = vmatprep.subr.bf16.mxu0 0
  %3965 = vmatpush1.bf16.xpose.msra.mxu0 %v2043
  %3966 = vmatprep.subr.bf16.mxu0 0
  %3967 = vmatpush1.bf16.xpose.msra.mxu0 %v2046
  %3968 = vmatprep.subr.bf16.mxu0 0
  %3969 = vmatpush1.bf16.xpose.msra.mxu0 %v2049
  %3970 = vmatprep.subr.bf16.mxu0 0
  %3971 = vmatpush1.bf16.xpose.msra.mxu0 %v2052
  %3972 = vmatprep.subr.bf16.mxu0 0
  %3973 = vmatpush1.bf16.xpose.msra.mxu0 %v2055
  %3974 = vmatprep.subr.bf16.mxu0 0
  %3975 = vmatpush1.bf16.xpose.msra.mxu0 %v2058
  %3976 = vmatprep.subr.bf16.mxu0 0
  %3977 = vmatpush1.bf16.xpose.msra.mxu0 %v2061
  %3978 = vmatprep.subr.bf16.mxu0 0
  %3979 = vmatpush1.bf16.xpose.msra.mxu0 %v2064
  %3980 = vmatprep.subr.bf16.mxu0 0
  %3981 = vmatpush1.bf16.xpose.msra.mxu0 %v2067
  %3982 = vmatprep.subr.bf16.mxu0 0
  %3983 = vmatpush1.bf16.xpose.msra.mxu0 %v2070
  %3984 = vmatprep.subr.bf16.mxu0 0
  %3985 = vmatpush1.bf16.xpose.msra.mxu0 %v2073
  %3986 = vmatprep.subr.bf16.mxu0 0
  %3987 = vmatpush1.bf16.xpose.msra.mxu0 %v2076
  %3988 = vmatprep.mubr.bf16.mxu0 0
  %3989 = vmatmul.mubr.bf16.gmra.mrb[0].mxu0 %v1719
  %v3990 = vpop.f32.mrb[0].mxu0
  %v3991 = vadd.f32 %v1600, %v3990
  %v3992 = vpop.f32.mrb[0].mxu0
  %v3993 = vadd.f32 %v1600, %v3992
  %v3994 = vpop.f32.mrb[0].mxu0
  %v3995 = vadd.f32 %v1605, %v3994
  %v3996 = vpop.f32.mrb[0].mxu0
  %v3997 = vadd.f32 %v1605, %v3996
  %3998 = vmatprep.mubr.bf16.mxu0 0
  %3999 = vmatmul.mubr.bf16.gmra.mrb[0].mxu0 %v1722
  %v4000 = vpop.f32.mrb[0].mxu0
  %v4001 = vadd.f32 %v1610, %v4000
  %v4002 = vpop.f32.mrb[0].mxu0
  %v4003 = vadd.f32 %v1610, %v4002
  %v4004 = vpop.f32.mrb[0].mxu0
  %v4005 = vadd.f32 %v1615, %v4004
  %v4006 = vpop.f32.mrb[0].mxu0
  %v4007 = vadd.f32 %v1615, %v4006
  %4008 = vmatprep.mubr.bf16.mxu0 0
  %4009 = vmatmul.mubr.bf16.gmra.mrb[0].mxu0 %v1725
  %v4010 = vpop.f32.mrb[0].mxu0
  %v4011 = vadd.f32 %v1620, %v4010
  %v4012 = vpop.f32.mrb[0].mxu0
  %v4013 = vadd.f32 %v1620, %v4012
  %v4014 = vpop.f32.mrb[0].mxu0
  %v4015 = vadd.f32 %v1625, %v4014
  %v4016 = vpop.f32.mrb[0].mxu0
  %v4017 = vadd.f32 %v1625, %v4016
  %4018 = vmatprep.mubr.bf16.mxu0 0
  %4019 = vmatmul.mubr.bf16.gmra.mrb[0].mxu0 %v1728
  %v4020 = vpop.f32.mrb[0].mxu0
  %v4021 = vadd.f32 %v1630, %v4020
  %v4022 = vpop.f32.mrb[0].mxu0
  %v4023 = vadd.f32 %v1630, %v4022
  %v4024 = vpop.f32.mrb[0].mxu0
  %v4025 = vadd.f32 %v1635, %v4024
  %v4026 = vpop.f32.mrb[0].mxu0
  %v4027 = vadd.f32 %v1635, %v4026
  %4028 = vmatprep.mubr.bf16.mxu0 0
  %4029 = vmatmul.mubr.bf16.gmra.mrb[0].mxu0 %v1731
  %v4030 = vpop.f32.mrb[0].mxu0
  %v4031 = vadd.f32 %v1640, %v4030
  %v4032 = vpop.f32.mrb[0].mxu0
  %v4033 = vadd.f32 %v1640, %v4032
  %v4034 = vpop.f32.mrb[0].mxu0
  %v4035 = vadd.f32 %v1645, %v4034
  %v4036 = vpop.f32.mrb[0].mxu0
  %v4037 = vadd.f32 %v1645, %v4036
  %4038 = vmatprep.mubr.bf16.mxu0 0
  %4039 = vmatmul.mubr.bf16.gmra.mrb[0].mxu0 %v1734
  %v4040 = vpop.f32.mrb[0].mxu0
  %v4041 = vadd.f32 %v1650, %v4040
  %v4042 = vpop.f32.mrb[0].mxu0
  %v4043 = vadd.f32 %v1650, %v4042
  %v4044 = vpop.f32.mrb[0].mxu0
  %v4045 = vadd.f32 %v1655, %v4044
  %v4046 = vpop.f32.mrb[0].mxu0
  %v4047 = vadd.f32 %v1655, %v4046
  %4048 = vmatprep.mubr.bf16.mxu0 0
  %4049 = vmatmul.mubr.bf16.gmra.mrb[0].mxu0 %v1737
  %v4050 = vpop.f32.mrb[0].mxu0
  %v4051 = vadd.f32 %v1660, %v4050
  %v4052 = vpop.f32.mrb[0].mxu0
  %v4053 = vadd.f32 %v1660, %v4052
  %v4054 = vpop.f32.mrb[0].mxu0
  %v4055 = vadd.f32 %v1665, %v4054
  %v4056 = vpop.f32.mrb[0].mxu0
  %v4057 = vadd.f32 %v1665, %v4056
  %4058 = vmatprep.mubr.bf16.mxu0 0
  %4059 = vmatmul.mubr.bf16.gmra.mrb[0].mxu0 %v1740
  %v4060 = vpop.f32.mrb[0].mxu0
  %v4061 = vadd.f32 %v1670, %v4060
  %v4062 = vpop.f32.mrb[0].mxu0
  %v4063 = vadd.f32 %v1670, %v4062
  %v4064 = vpop.f32.mrb[0].mxu0
  %v4065 = vadd.f32 %v1675, %v4064
  %v4066 = vpop.f32.mrb[0].mxu0
  %v4067 = vadd.f32 %v1675, %v4066
  %4068 = vdwg.mxu0
  %4069 = vmatprep.subr.bf16.mxu0 0
  %4070 = vmatpush1.bf16.xpose.msra.mxu0 %v2079
  %4071 = vmatprep.subr.bf16.mxu0 0
  %4072 = vmatpush1.bf16.xpose.msra.mxu0 %v2082
  %4073 = vmatprep.subr.bf16.mxu0 0
  %4074 = vmatpush1.bf16.xpose.msra.mxu0 %v2085
  %4075 = vmatprep.subr.bf16.mxu0 0
  %4076 = vmatpush1.bf16.xpose.msra.mxu0 %v2088
  %4077 = vmatprep.subr.bf16.mxu0 0
  %4078 = vmatpush1.bf16.xpose.msra.mxu0 %v2091
  %4079 = vmatprep.subr.bf16.mxu0 0
  %4080 = vmatpush1.bf16.xpose.msra.mxu0 %v2094
  %4081 = vmatprep.subr.bf16.mxu0 0
  %4082 = vmatpush1.bf16.xpose.msra.mxu0 %v2097
  %4083 = vmatprep.subr.bf16.mxu0 0
  %4084 = vmatpush1.bf16.xpose.msra.mxu0 %v2100
  %4085 = vmatprep.subr.bf16.mxu0 0
  %4086 = vmatpush1.bf16.xpose.msra.mxu0 %v2103
  %4087 = vmatprep.subr.bf16.mxu0 0
  %4088 = vmatpush1.bf16.xpose.msra.mxu0 %v2106
  %4089 = vmatprep.subr.bf16.mxu0 0
  %4090 = vmatpush1.bf16.xpose.msra.mxu0 %v2109
  %4091 = vmatprep.subr.bf16.mxu0 0
  %4092 = vmatpush1.bf16.xpose.msra.mxu0 %v2112
  %4093 = vmatprep.subr.bf16.mxu0 0
  %4094 = vmatpush1.bf16.xpose.msra.mxu0 %v2115
  %4095 = vmatprep.subr.bf16.mxu0 0
  %4096 = vmatpush1.bf16.xpose.msra.mxu0 %v2118
  %4097 = vmatprep.subr.bf16.mxu0 0
  %4098 = vmatpush1.bf16.xpose.msra.mxu0 %v2121
  %4099 = vmatprep.subr.bf16.mxu0 0
  %4100 = vmatpush1.bf16.xpose.msra.mxu0 %v2124
  %4101 = vmatprep.mubr.bf16.mxu0 0
  %4102 = vmatmul.mubr.bf16.gmra.mrb[0].mxu0 %v1719
  %v4103 = vpop.f32.mrb[0].mxu0
  %v4104 = vadd.f32 %v1600, %v4103
  %v4105 = vpop.f32.mrb[0].mxu0
  %v4106 = vadd.f32 %v1600, %v4105
  %v4107 = vpop.f32.mrb[0].mxu0
  %v4108 = vadd.f32 %v1605, %v4107
  %v4109 = vpop.f32.mrb[0].mxu0
  %v4110 = vadd.f32 %v1605, %v4109
  %4111 = vmatprep.mubr.bf16.mxu0 0
  %4112 = vmatmul.mubr.bf16.gmra.mrb[0].mxu0 %v1722
  %v4113 = vpop.f32.mrb[0].mxu0
  %v4114 = vadd.f32 %v1610, %v4113
  %v4115 = vpop.f32.mrb[0].mxu0
  %v4116 = vadd.f32 %v1610, %v4115
  %v4117 = vpop.f32.mrb[0].mxu0
  %v4118 = vadd.f32 %v1615, %v4117
  %v4119 = vpop.f32.mrb[0].mxu0
  %v4120 = vadd.f32 %v1615, %v4119
  %4121 = vmatprep.mubr.bf16.mxu0 0
  %4122 = vmatmul.mubr.bf16.gmra.mrb[0].mxu0 %v1725
  %v4123 = vpop.f32.mrb[0].mxu0
  %v4124 = vadd.f32 %v1620, %v4123
  %v4125 = vpop.f32.mrb[0].mxu0
  %v4126 = vadd.f32 %v1620, %v4125
  %v4127 = vpop.f32.mrb[0].mxu0
  %v4128 = vadd.f32 %v1625, %v4127
  %v4129 = vpop.f32.mrb[0].mxu0
  %v4130 = vadd.f32 %v1625, %v4129
  %4131 = vmatprep.mubr.bf16.mxu0 0
  %4132 = vmatmul.mubr.bf16.gmra.mrb[0].mxu0 %v1728
  %v4133 = vpop.f32.mrb[0].mxu0
  %v4134 = vadd.f32 %v1630, %v4133
  %v4135 = vpop.f32.mrb[0].mxu0
  %v4136 = vadd.f32 %v1630, %v4135
  %v4137 = vpop.f32.mrb[0].mxu0
  %v4138 = vadd.f32 %v1635, %v4137
  %v4139 = vpop.f32.mrb[0].mxu0
  %v4140 = vadd.f32 %v1635, %v4139
  %4141 = vmatprep.mubr.bf16.mxu0 0
  %4142 = vmatmul.mubr.bf16.gmra.mrb[0].mxu0 %v1731
  %v4143 = vpop.f32.mrb[0].mxu0
  %v4144 = vadd.f32 %v1640, %v4143
  %v4145 = vpop.f32.mrb[0].mxu0
  %v4146 = vadd.f32 %v1640, %v4145
  %v4147 = vpop.f32.mrb[0].mxu0
  %v4148 = vadd.f32 %v1645, %v4147
  %v4149 = vpop.f32.mrb[0].mxu0
  %v4150 = vadd.f32 %v1645, %v4149
  %4151 = vmatprep.mubr.bf16.mxu0 0
  %4152 = vmatmul.mubr.bf16.gmra.mrb[0].mxu0 %v1734
  %v4153 = vpop.f32.mrb[0].mxu0
  %v4154 = vadd.f32 %v1650, %v4153
  %v4155 = vpop.f32.mrb[0].mxu0
  %v4156 = vadd.f32 %v1650, %v4155
  %v4157 = vpop.f32.mrb[0].mxu0
  %v4158 = vadd.f32 %v1655, %v4157
  %v4159 = vpop.f32.mrb[0].mxu0
  %v4160 = vadd.f32 %v1655, %v4159
  %4161 = vmatprep.mubr.bf16.mxu0 0
  %4162 = vmatmul.mubr.bf16.gmra.mrb[0].mxu0 %v1737
  %v4163 = vpop.f32.mrb[0].mxu0
  %v4164 = vadd.f32 %v1660, %v4163
  %v4165 = vpop.f32.mrb[0].mxu0
  %v4166 = vadd.f32 %v1660, %v4165
  %v4167 = vpop.f32.mrb[0].mxu0
  %v4168 = vadd.f32 %v1665, %v4167
  %v4169 = vpop.f32.mrb[0].mxu0
  %v4170 = vadd.f32 %v1665, %v4169
  %4171 = vmatprep.mubr.bf16.mxu0 0
  %4172 = vmatmul.mubr.bf16.gmra.mrb[0].mxu0 %v1740
  %v4173 = vpop.f32.mrb[0].mxu0
  %v4174 = vadd.f32 %v1670, %v4173
  %v4175 = vpop.f32.mrb[0].mxu0
  %v4176 = vadd.f32 %v1670, %v4175
  %v4177 = vpop.f32.mrb[0].mxu0
  %v4178 = vadd.f32 %v1675, %v4177
  %v4179 = vpop.f32.mrb[0].mxu0
  %v4180 = vadd.f32 %v1675, %v4179
  %4181 = vdwg.mxu0
  %4182 = vmatprep.subr.bf16.mxu0 0
  %4183 = vmatpush1.bf16.xpose.msra.mxu0 %v2127
  %4184 = vmatprep.subr.bf16.mxu0 0
  %4185 = vmatpush1.bf16.xpose.msra.mxu0 %v2130
  %4186 = vmatprep.subr.bf16.mxu0 0
  %4187 = vmatpush1.bf16.xpose.msra.mxu0 %v2133
  %4188 = vmatprep.subr.bf16.mxu0 0
  %4189 = vmatpush1.bf16.xpose.msra.mxu0 %v2136
  %4190 = vmatprep.subr.bf16.mxu0 0
  %4191 = vmatpush1.bf16.xpose.msra.mxu0 %v2139
  %4192 = vmatprep.subr.bf16.mxu0 0
  %4193 = vmatpush1.bf16.xpose.msra.mxu0 %v2142
  %4194 = vmatprep.subr.bf16.mxu0 0
  %4195 = vmatpush1.bf16.xpose.msra.mxu0 %v2145
  %4196 = vmatprep.subr.bf16.mxu0 0
  %4197 = vmatpush1.bf16.xpose.msra.mxu0 %v2148
  %4198 = vmatprep.subr.bf16.mxu0 0
  %4199 = vmatpush1.bf16.xpose.msra.mxu0 %v2151
  %4200 = vmatprep.subr.bf16.mxu0 0
  %4201 = vmatpush1.bf16.xpose.msra.mxu0 %v2154
  %4202 = vmatprep.subr.bf16.mxu0 0
  %4203 = vmatpush1.bf16.xpose.msra.mxu0 %v2157
  %4204 = vmatprep.subr.bf16.mxu0 0
  %4205 = vmatpush1.bf16.xpose.msra.mxu0 %v2160
  %4206 = vmatprep.subr.bf16.mxu0 0
  %4207 = vmatpush1.bf16.xpose.msra.mxu0 %v2163
  %4208 = vmatprep.subr.bf16.mxu0 0
  %4209 = vmatpush1.bf16.xpose.msra.mxu0 %v2166
  %4210 = vmatprep.subr.bf16.mxu0 0
  %4211 = vmatpush1.bf16.xpose.msra.mxu0 %v2169
  %4212 = vmatprep.subr.bf16.mxu0 0
  %4213 = vmatpush1.bf16.xpose.msra.mxu0 %v2172
  %4214 = vmatprep.mubr.bf16.mxu0 0
  %4215 = vmatmul.mubr.bf16.gmra.mrb[0].mxu0 %v1719
  %v4216 = vpop.f32.mrb[0].mxu0
  %v4217 = vadd.f32 %v1600, %v4216
  %v4218 = vpop.f32.mrb[0].mxu0
  %v4219 = vadd.f32 %v1600, %v4218
  %v4220 = vpop.f32.mrb[0].mxu0
  %v4221 = vadd.f32 %v1605, %v4220
  %v4222 = vpop.f32.mrb[0].mxu0
  %v4223 = vadd.f32 %v1605, %v4222
  %4224 = vmatprep.mubr.bf16.mxu0 0
  %4225 = vmatmul.mubr.bf16.gmra.mrb[0].mxu0 %v1722
  %v4226 = vpop.f32.mrb[0].mxu0
  %v4227 = vadd.f32 %v1610, %v4226
  %v4228 = vpop.f32.mrb[0].mxu0
  %v4229 = vadd.f32 %v1610, %v4228
  %v4230 = vpop.f32.mrb[0].mxu0
  %v4231 = vadd.f32 %v1615, %v4230
  %v4232 = vpop.f32.mrb[0].mxu0
  %v4233 = vadd.f32 %v1615, %v4232
  %4234 = vmatprep.mubr.bf16.mxu0 0
  %4235 = vmatmul.mubr.bf16.gmra.mrb[0].mxu0 %v1725
  %v4236 = vpop.f32.mrb[0].mxu0
  %v4237 = vadd.f32 %v1620, %v4236
  %v4238 = vpop.f32.mrb[0].mxu0
  %v4239 = vadd.f32 %v1620, %v4238
  %v4240 = vpop.f32.mrb[0].mxu0
  %v4241 = vadd.f32 %v1625, %v4240
  %v4242 = vpop.f32.mrb[0].mxu0
  %v4243 = vadd.f32 %v1625, %v4242
  %4244 = vmatprep.mubr.bf16.mxu0 0
  %4245 = vmatmul.mubr.bf16.gmra.mrb[0].mxu0 %v1728
  %v4246 = vpop.f32.mrb[0].mxu0
  %v4247 = vadd.f32 %v1630, %v4246
  %v4248 = vpop.f32.mrb[0].mxu0
  %v4249 = vadd.f32 %v1630, %v4248
  %v4250 = vpop.f32.mrb[0].mxu0
  %v4251 = vadd.f32 %v1635, %v4250
  %v4252 = vpop.f32.mrb[0].mxu0
  %v4253 = vadd.f32 %v1635, %v4252
  %4254 = vmatprep.mubr.bf16.mxu0 0
  %4255 = vmatmul.mubr.bf16.gmra.mrb[0].mxu0 %v1731
  %v4256 = vpop.f32.mrb[0].mxu0
  %v4257 = vadd.f32 %v1640, %v4256
  %v4258 = vpop.f32.mrb[0].mxu0
  %v4259 = vadd.f32 %v1640, %v4258
  %v4260 = vpop.f32.mrb[0].mxu0
  %v4261 = vadd.f32 %v1645, %v4260
  %v4262 = vpop.f32.mrb[0].mxu0
  %v4263 = vadd.f32 %v1645, %v4262
  %4264 = vmatprep.mubr.bf16.mxu0 0
  %4265 = vmatmul.mubr.bf16.gmra.mrb[0].mxu0 %v1734
  %v4266 = vpop.f32.mrb[0].mxu0
  %v4267 = vadd.f32 %v1650, %v4266
  %v4268 = vpop.f32.mrb[0].mxu0
  %v4269 = vadd.f32 %v1650, %v4268
  %v4270 = vpop.f32.mrb[0].mxu0
  %v4271 = vadd.f32 %v1655, %v4270
  %v4272 = vpop.f32.mrb[0].mxu0
  %v4273 = vadd.f32 %v1655, %v4272
  %4274 = vmatprep.mubr.bf16.mxu0 0
  %4275 = vmatmul.mubr.bf16.gmra.mrb[0].mxu0 %v1737
  %v4276 = vpop.f32.mrb[0].mxu0
  %v4277 = vadd.f32 %v1660, %v4276
  %v4278 = vpop.f32.mrb[0].mxu0
  %v4279 = vadd.f32 %v1660, %v4278
  %v4280 = vpop.f32.mrb[0].mxu0
  %v4281 = vadd.f32 %v1665, %v4280
  %v4282 = vpop.f32.mrb[0].mxu0
  %v4283 = vadd.f32 %v1665, %v4282
  %4284 = vmatprep.mubr.bf16.mxu0 0
  %4285 = vmatmul.mubr.bf16.gmra.mrb[0].mxu0 %v1740
  %v4286 = vpop.f32.mrb[0].mxu0
  %v4287 = vadd.f32 %v1670, %v4286
  %v4288 = vpop.f32.mrb[0].mxu0
  %v4289 = vadd.f32 %v1670, %v4288
  %v4290 = vpop.f32.mrb[0].mxu0
  %v4291 = vadd.f32 %v1675, %v4290
  %v4292 = vpop.f32.mrb[0].mxu0
  %v4293 = vadd.f32 %v1675, %v4292
  %4294 = vdwg.mxu0
  %4295 = vmatprep.subr.bf16.mxu0 0
  %4296 = vmatpush1.bf16.xpose.msra.mxu0 %v2175
  %4297 = vmatprep.subr.bf16.mxu0 0
  %4298 = vmatpush1.bf16.xpose.msra.mxu0 %v2178
  %4299 = vmatprep.subr.bf16.mxu0 0
  %4300 = vmatpush1.bf16.xpose.msra.mxu0 %v2181
  %4301 = vmatprep.subr.bf16.mxu0 0
  %4302 = vmatpush1.bf16.xpose.msra.mxu0 %v2184
  %4303 = vmatprep.subr.bf16.mxu0 0
  %4304 = vmatpush1.bf16.xpose.msra.mxu0 %v2187
  %4305 = vmatprep.subr.bf16.mxu0 0
  %4306 = vmatpush1.bf16.xpose.msra.mxu0 %v2190
  %4307 = vmatprep.subr.bf16.mxu0 0
  %4308 = vmatpush1.bf16.xpose.msra.mxu0 %v2193
  %4309 = vmatprep.subr.bf16.mxu0 0
  %4310 = vmatpush1.bf16.xpose.msra.mxu0 %v2196
  %4311 = vmatprep.subr.bf16.mxu0 0
  %4312 = vmatpush1.bf16.xpose.msra.mxu0 %v2199
  %4313 = vmatprep.subr.bf16.mxu0 0
  %4314 = vmatpush1.bf16.xpose.msra.mxu0 %v2202
  %4315 = vmatprep.subr.bf16.mxu0 0
  %4316 = vmatpush1.bf16.xpose.msra.mxu0 %v2205
  %4317 = vmatprep.subr.bf16.mxu0 0
  %4318 = vmatpush1.bf16.xpose.msra.mxu0 %v2208
  %4319 = vmatprep.subr.bf16.mxu0 0
  %4320 = vmatpush1.bf16.xpose.msra.mxu0 %v2211
  %4321 = vmatprep.subr.bf16.mxu0 0
  %4322 = vmatpush1.bf16.xpose.msra.mxu0 %v2214
  %4323 = vmatprep.subr.bf16.mxu0 0
  %4324 = vmatpush1.bf16.xpose.msra.mxu0 %v2217
  %4325 = vmatprep.subr.bf16.mxu0 0
  %4326 = vmatpush1.bf16.xpose.msra.mxu0 %v2220
  %4327 = vmatprep.mubr.bf16.mxu0 0
  %4328 = vmatmul.mubr.bf16.gmra.mrb[0].mxu0 %v1719
  %v4329 = vpop.f32.mrb[0].mxu0
  %v4330 = vadd.f32 %v1600, %v4329
  %v4331 = vpop.f32.mrb[0].mxu0
  %v4332 = vadd.f32 %v1600, %v4331
  %v4333 = vpop.f32.mrb[0].mxu0
  %v4334 = vadd.f32 %v1605, %v4333
  %v4335 = vpop.f32.mrb[0].mxu0
  %v4336 = vadd.f32 %v1605, %v4335
  %4337 = vmatprep.mubr.bf16.mxu0 0
  %4338 = vmatmul.mubr.bf16.gmra.mrb[0].mxu0 %v1722
  %v4339 = vpop.f32.mrb[0].mxu0
  %v4340 = vadd.f32 %v1610, %v4339
  %v4341 = vpop.f32.mrb[0].mxu0
  %v4342 = vadd.f32 %v1610, %v4341
  %v4343 = vpop.f32.mrb[0].mxu0
  %v4344 = vadd.f32 %v1615, %v4343
  %v4345 = vpop.f32.mrb[0].mxu0
  %v4346 = vadd.f32 %v1615, %v4345
  %4347 = vmatprep.mubr.bf16.mxu0 0
  %4348 = vmatmul.mubr.bf16.gmra.mrb[0].mxu0 %v1725
  %v4349 = vpop.f32.mrb[0].mxu0
  %v4350 = vadd.f32 %v1620, %v4349
  %v4351 = vpop.f32.mrb[0].mxu0
  %v4352 = vadd.f32 %v1620, %v4351
  %v4353 = vpop.f32.mrb[0].mxu0
  %v4354 = vadd.f32 %v1625, %v4353
  %v4355 = vpop.f32.mrb[0].mxu0
  %v4356 = vadd.f32 %v1625, %v4355
  %4357 = vmatprep.mubr.bf16.mxu0 0
  %4358 = vmatmul.mubr.bf16.gmra.mrb[0].mxu0 %v1728
  %v4359 = vpop.f32.mrb[0].mxu0
  %v4360 = vadd.f32 %v1630, %v4359
  %v4361 = vpop.f32.mrb[0].mxu0
  %v4362 = vadd.f32 %v1630, %v4361
  %v4363 = vpop.f32.mrb[0].mxu0
  %v4364 = vadd.f32 %v1635, %v4363
  %v4365 = vpop.f32.mrb[0].mxu0
  %v4366 = vadd.f32 %v1635, %v4365
  %4367 = vmatprep.mubr.bf16.mxu0 0
  %4368 = vmatmul.mubr.bf16.gmra.mrb[0].mxu0 %v1731
  %v4369 = vpop.f32.mrb[0].mxu0
  %v4370 = vadd.f32 %v1640, %v4369
  %v4371 = vpop.f32.mrb[0].mxu0
  %v4372 = vadd.f32 %v1640, %v4371
  %v4373 = vpop.f32.mrb[0].mxu0
  %v4374 = vadd.f32 %v1645, %v4373
  %v4375 = vpop.f32.mrb[0].mxu0
  %v4376 = vadd.f32 %v1645, %v4375
  %4377 = vmatprep.mubr.bf16.mxu0 0
  %4378 = vmatmul.mubr.bf16.gmra.mrb[0].mxu0 %v1734
  %v4379 = vpop.f32.mrb[0].mxu0
  %v4380 = vadd.f32 %v1650, %v4379
  %v4381 = vpop.f32.mrb[0].mxu0
  %v4382 = vadd.f32 %v1650, %v4381
  %v4383 = vpop.f32.mrb[0].mxu0
  %v4384 = vadd.f32 %v1655, %v4383
  %v4385 = vpop.f32.mrb[0].mxu0
  %v4386 = vadd.f32 %v1655, %v4385
  %4387 = vmatprep.mubr.bf16.mxu0 0
  %4388 = vmatmul.mubr.bf16.gmra.mrb[0].mxu0 %v1737
  %v4389 = vpop.f32.mrb[0].mxu0
  %v4390 = vadd.f32 %v1660, %v4389
  %v4391 = vpop.f32.mrb[0].mxu0
  %v4392 = vadd.f32 %v1660, %v4391
  %v4393 = vpop.f32.mrb[0].mxu0
  %v4394 = vadd.f32 %v1665, %v4393
  %v4395 = vpop.f32.mrb[0].mxu0
  %v4396 = vadd.f32 %v1665, %v4395
  %4397 = vmatprep.mubr.bf16.mxu0 0
  %4398 = vmatmul.mubr.bf16.gmra.mrb[0].mxu0 %v1740
  %v4399 = vpop.f32.mrb[0].mxu0
  %v4400 = vadd.f32 %v1670, %v4399
  %v4401 = vpop.f32.mrb[0].mxu0
  %v4402 = vadd.f32 %v1670, %v4401
  %v4403 = vpop.f32.mrb[0].mxu0
  %v4404 = vadd.f32 %v1675, %v4403
  %v4405 = vpop.f32.mrb[0].mxu0
  %v4406 = vadd.f32 %v1675, %v4405
  %4407 = vdwg.mxu0
  %4408 = vmatprep.subr.bf16.mxu0 0
  %4409 = vmatpush1.bf16.xpose.msra.mxu0 %v2223
  %4410 = vmatprep.subr.bf16.mxu0 0
  %4411 = vmatpush1.bf16.xpose.msra.mxu0 %v2226
  %4412 = vmatprep.subr.bf16.mxu0 0
  %4413 = vmatpush1.bf16.xpose.msra.mxu0 %v2229
  %4414 = vmatprep.subr.bf16.mxu0 0
  %4415 = vmatpush1.bf16.xpose.msra.mxu0 %v2232
  %4416 = vmatprep.subr.bf16.mxu0 0
  %4417 = vmatpush1.bf16.xpose.msra.mxu0 %v2235
  %4418 = vmatprep.subr.bf16.mxu0 0
  %4419 = vmatpush1.bf16.xpose.msra.mxu0 %v2238
  %4420 = vmatprep.subr.bf16.mxu0 0
  %4421 = vmatpush1.bf16.xpose.msra.mxu0 %v2241
  %4422 = vmatprep.subr.bf16.mxu0 0
  %4423 = vmatpush1.bf16.xpose.msra.mxu0 %v2244
  %4424 = vmatprep.subr.bf16.mxu0 0
  %4425 = vmatpush1.bf16.xpose.msra.mxu0 %v2247
  %4426 = vmatprep.subr.bf16.mxu0 0
  %4427 = vmatpush1.bf16.xpose.msra.mxu0 %v2250
  %4428 = vmatprep.subr.bf16.mxu0 0
  %4429 = vmatpush1.bf16.xpose.msra.mxu0 %v2253
  %4430 = vmatprep.subr.bf16.mxu0 0
  %4431 = vmatpush1.bf16.xpose.msra.mxu0 %v2256
  %4432 = vmatprep.subr.bf16.mxu0 0
  %4433 = vmatpush1.bf16.xpose.msra.mxu0 %v2259
  %4434 = vmatprep.subr.bf16.mxu0 0
  %4435 = vmatpush1.bf16.xpose.msra.mxu0 %v2262
  %4436 = vmatprep.subr.bf16.mxu0 0
  %4437 = vmatpush1.bf16.xpose.msra.mxu0 %v2265
  %4438 = vmatprep.subr.bf16.mxu0 0
  %4439 = vmatpush1.bf16.xpose.msra.mxu0 %v2268
  %4440 = vmatprep.mubr.bf16.mxu0 0
  %4441 = vmatmul.mubr.bf16.gmra.mrb[0].mxu0 %v1719
  %v4442 = vpop.f32.mrb[0].mxu0
  %v4443 = vadd.f32 %v1600, %v4442
  %v4444 = vpop.f32.mrb[0].mxu0
  %v4445 = vadd.f32 %v1600, %v4444
  %v4446 = vpop.f32.mrb[0].mxu0
  %v4447 = vadd.f32 %v1605, %v4446
  %v4448 = vpop.f32.mrb[0].mxu0
  %v4449 = vadd.f32 %v1605, %v4448
  %4450 = vmatprep.mubr.bf16.mxu0 0
  %4451 = vmatmul.mubr.bf16.gmra.mrb[0].mxu0 %v1722
  %v4452 = vpop.f32.mrb[0].mxu0
  %v4453 = vadd.f32 %v1610, %v4452
  %v4454 = vpop.f32.mrb[0].mxu0
  %v4455 = vadd.f32 %v1610, %v4454
  %v4456 = vpop.f32.mrb[0].mxu0
  %v4457 = vadd.f32 %v1615, %v4456
  %v4458 = vpop.f32.mrb[0].mxu0
  %v4459 = vadd.f32 %v1615, %v4458
  %4460 = vmatprep.mubr.bf16.mxu0 0
  %4461 = vmatmul.mubr.bf16.gmra.mrb[0].mxu0 %v1725
  %v4462 = vpop.f32.mrb[0].mxu0
  %v4463 = vadd.f32 %v1620, %v4462
  %v4464 = vpop.f32.mrb[0].mxu0
  %v4465 = vadd.f32 %v1620, %v4464
  %v4466 = vpop.f32.mrb[0].mxu0
  %v4467 = vadd.f32 %v1625, %v4466
  %v4468 = vpop.f32.mrb[0].mxu0
  %v4469 = vadd.f32 %v1625, %v4468
  %4470 = vmatprep.mubr.bf16.mxu0 0
  %4471 = vmatmul.mubr.bf16.gmra.mrb[0].mxu0 %v1728
  %v4472 = vpop.f32.mrb[0].mxu0
  %v4473 = vadd.f32 %v1630, %v4472
  %v4474 = vpop.f32.mrb[0].mxu0
  %v4475 = vadd.f32 %v1630, %v4474
  %v4476 = vpop.f32.mrb[0].mxu0
  %v4477 = vadd.f32 %v1635, %v4476
  %v4478 = vpop.f32.mrb[0].mxu0
  %v4479 = vadd.f32 %v1635, %v4478
  %4480 = vmatprep.mubr.bf16.mxu0 0
  %4481 = vmatmul.mubr.bf16.gmra.mrb[0].mxu0 %v1731
  %v4482 = vpop.f32.mrb[0].mxu0
  %v4483 = vadd.f32 %v1640, %v4482
  %v4484 = vpop.f32.mrb[0].mxu0
  %v4485 = vadd.f32 %v1640, %v4484
  %v4486 = vpop.f32.mrb[0].mxu0
  %v4487 = vadd.f32 %v1645, %v4486
  %v4488 = vpop.f32.mrb[0].mxu0
  %v4489 = vadd.f32 %v1645, %v4488
  %4490 = vmatprep.mubr.bf16.mxu0 0
  %4491 = vmatmul.mubr.bf16.gmra.mrb[0].mxu0 %v1734
  %v4492 = vpop.f32.mrb[0].mxu0
  %v4493 = vadd.f32 %v1650, %v4492
  %v4494 = vpop.f32.mrb[0].mxu0
  %v4495 = vadd.f32 %v1650, %v4494
  %v4496 = vpop.f32.mrb[0].mxu0
  %v4497 = vadd.f32 %v1655, %v4496
  %v4498 = vpop.f32.mrb[0].mxu0
  %v4499 = vadd.f32 %v1655, %v4498
  %4500 = vmatprep.mubr.bf16.mxu0 0
  %4501 = vmatmul.mubr.bf16.gmra.mrb[0].mxu0 %v1737
  %v4502 = vpop.f32.mrb[0].mxu0
  %v4503 = vadd.f32 %v1660, %v4502
  %v4504 = vpop.f32.mrb[0].mxu0
  %v4505 = vadd.f32 %v1660, %v4504
  %v4506 = vpop.f32.mrb[0].mxu0
  %v4507 = vadd.f32 %v1665, %v4506
  %v4508 = vpop.f32.mrb[0].mxu0
  %v4509 = vadd.f32 %v1665, %v4508
  %4510 = vmatprep.mubr.bf16.mxu0 0
  %4511 = vmatmul.mubr.bf16.gmra.mrb[0].mxu0 %v1740
  %v4512 = vpop.f32.mrb[0].mxu0
  %v4513 = vadd.f32 %v1670, %v4512
  %v4514 = vpop.f32.mrb[0].mxu0
  %v4515 = vadd.f32 %v1670, %v4514
  %v4516 = vpop.f32.mrb[0].mxu0
  %v4517 = vadd.f32 %v1675, %v4516
  %v4518 = vpop.f32.mrb[0].mxu0
  %v4519 = vadd.f32 %v1675, %v4518
  %4520 = vdwg.mxu0
  %4521 = vmatprep.subr.bf16.mxu0 0
  %4522 = vmatpush1.bf16.xpose.msra.mxu0 %v2271
  %4523 = vmatprep.subr.bf16.mxu0 0
  %4524 = vmatpush1.bf16.xpose.msra.mxu0 %v2274
  %4525 = vmatprep.subr.bf16.mxu0 0
  %4526 = vmatpush1.bf16.xpose.msra.mxu0 %v2277
  %4527 = vmatprep.subr.bf16.mxu0 0
  %4528 = vmatpush1.bf16.xpose.msra.mxu0 %v2280
  %4529 = vmatprep.subr.bf16.mxu0 0
  %4530 = vmatpush1.bf16.xpose.msra.mxu0 %v2283
  %4531 = vmatprep.subr.bf16.mxu0 0
  %4532 = vmatpush1.bf16.xpose.msra.mxu0 %v2286
  %4533 = vmatprep.subr.bf16.mxu0 0
  %4534 = vmatpush1.bf16.xpose.msra.mxu0 %v2289
  %4535 = vmatprep.subr.bf16.mxu0 0
  %4536 = vmatpush1.bf16.xpose.msra.mxu0 %v2292
  %4537 = vmatprep.subr.bf16.mxu0 0
  %4538 = vmatpush1.bf16.xpose.msra.mxu0 %v2295
  %4539 = vmatprep.subr.bf16.mxu0 0
  %4540 = vmatpush1.bf16.xpose.msra.mxu0 %v2298
  %4541 = vmatprep.subr.bf16.mxu0 0
  %4542 = vmatpush1.bf16.xpose.msra.mxu0 %v2301
  %4543 = vmatprep.subr.bf16.mxu0 0
  %4544 = vmatpush1.bf16.xpose.msra.mxu0 %v2304
  %4545 = vmatprep.subr.bf16.mxu0 0
  %4546 = vmatpush1.bf16.xpose.msra.mxu0 %v2307
  %4547 = vmatprep.subr.bf16.mxu0 0
  %4548 = vmatpush1.bf16.xpose.msra.mxu0 %v2310
  %4549 = vmatprep.subr.bf16.mxu0 0
  %4550 = vmatpush1.bf16.xpose.msra.mxu0 %v2313
  %4551 = vmatprep.subr.bf16.mxu0 0
  %4552 = vmatpush1.bf16.xpose.msra.mxu0 %v2316
  %4553 = vmatprep.mubr.bf16.mxu0 0
  %4554 = vmatmul.mubr.bf16.gmra.mrb[0].mxu0 %v1719
  %v4555 = vpop.f32.mrb[0].mxu0
  %v4556 = vadd.f32 %v1600, %v4555
  %v4557 = vpop.f32.mrb[0].mxu0
  %v4558 = vadd.f32 %v1600, %v4557
  %v4559 = vpop.f32.mrb[0].mxu0
  %v4560 = vadd.f32 %v1605, %v4559
  %v4561 = vpop.f32.mrb[0].mxu0
  %v4562 = vadd.f32 %v1605, %v4561
  %4563 = vmatprep.mubr.bf16.mxu0 0
  %4564 = vmatmul.mubr.bf16.gmra.mrb[0].mxu0 %v1722
  %v4565 = vpop.f32.mrb[0].mxu0
  %v4566 = vadd.f32 %v1610, %v4565
  %v4567 = vpop.f32.mrb[0].mxu0
  %v4568 = vadd.f32 %v1610, %v4567
  %v4569 = vpop.f32.mrb[0].mxu0
  %v4570 = vadd.f32 %v1615, %v4569
  %v4571 = vpop.f32.mrb[0].mxu0
  %v4572 = vadd.f32 %v1615, %v4571
  %4573 = vmatprep.mubr.bf16.mxu0 0
  %4574 = vmatmul.mubr.bf16.gmra.mrb[0].mxu0 %v1725
  %v4575 = vpop.f32.mrb[0].mxu0
  %v4576 = vadd.f32 %v1620, %v4575
  %v4577 = vpop.f32.mrb[0].mxu0
  %v4578 = vadd.f32 %v1620, %v4577
  %v4579 = vpop.f32.mrb[0].mxu0
  %v4580 = vadd.f32 %v1625, %v4579
  %v4581 = vpop.f32.mrb[0].mxu0
  %v4582 = vadd.f32 %v1625, %v4581
  %4583 = vmatprep.mubr.bf16.mxu0 0
  %4584 = vmatmul.mubr.bf16.gmra.mrb[0].mxu0 %v1728
  %v4585 = vpop.f32.mrb[0].mxu0
  %v4586 = vadd.f32 %v1630, %v4585
  %v4587 = vpop.f32.mrb[0].mxu0
  %v4588 = vadd.f32 %v1630, %v4587
  %v4589 = vpop.f32.mrb[0].mxu0
  %v4590 = vadd.f32 %v1635, %v4589
  %v4591 = vpop.f32.mrb[0].mxu0
  %v4592 = vadd.f32 %v1635, %v4591
  %4593 = vmatprep.mubr.bf16.mxu0 0
  %4594 = vmatmul.mubr.bf16.gmra.mrb[0].mxu0 %v1731
  %v4595 = vpop.f32.mrb[0].mxu0
  %v4596 = vadd.f32 %v1640, %v4595
  %v4597 = vpop.f32.mrb[0].mxu0
  %v4598 = vadd.f32 %v1640, %v4597
  %v4599 = vpop.f32.mrb[0].mxu0
  %v4600 = vadd.f32 %v1645, %v4599
  %v4601 = vpop.f32.mrb[0].mxu0
  %v4602 = vadd.f32 %v1645, %v4601
  %4603 = vmatprep.mubr.bf16.mxu0 0
  %4604 = vmatmul.mubr.bf16.gmra.mrb[0].mxu0 %v1734
  %v4605 = vpop.f32.mrb[0].mxu0
  %v4606 = vadd.f32 %v1650, %v4605
  %v4607 = vpop.f32.mrb[0].mxu0
  %v4608 = vadd.f32 %v1650, %v4607
  %v4609 = vpop.f32.mrb[0].mxu0
  %v4610 = vadd.f32 %v1655, %v4609
  %v4611 = vpop.f32.mrb[0].mxu0
  %v4612 = vadd.f32 %v1655, %v4611
  %4613 = vmatprep.mubr.bf16.mxu0 0
  %4614 = vmatmul.mubr.bf16.gmra.mrb[0].mxu0 %v1737
  %v4615 = vpop.f32.mrb[0].mxu0
  %v4616 = vadd.f32 %v1660, %v4615
  %v4617 = vpop.f32.mrb[0].mxu0
  %v4618 = vadd.f32 %v1660, %v4617
  %v4619 = vpop.f32.mrb[0].mxu0
  %v4620 = vadd.f32 %v1665, %v4619
  %v4621 = vpop.f32.mrb[0].mxu0
  %v4622 = vadd.f32 %v1665, %v4621
  %4623 = vmatprep.mubr.bf16.mxu0 0
  %4624 = vmatmul.mubr.bf16.gmra.mrb[0].mxu0 %v1740
  %v4625 = vpop.f32.mrb[0].mxu0
  %v4626 = vadd.f32 %v1670, %v4625
  %v4627 = vpop.f32.mrb[0].mxu0
  %v4628 = vadd.f32 %v1670, %v4627
  %v4629 = vpop.f32.mrb[0].mxu0
  %v4630 = vadd.f32 %v1675, %v4629
  %v4631 = vpop.f32.mrb[0].mxu0
  %v4632 = vadd.f32 %v1675, %v4631
  %4633 = vdwg.mxu0
  %4634 = vmatprep.subr.bf16.mxu0 0
  %4635 = vmatpush1.bf16.xpose.msra.mxu0 %v2319
  %4636 = vmatprep.subr.bf16.mxu0 0
  %4637 = vmatpush1.bf16.xpose.msra.mxu0 %v2322
  %4638 = vmatprep.subr.bf16.mxu0 0
  %4639 = vmatpush1.bf16.xpose.msra.mxu0 %v2325
  %4640 = vmatprep.subr.bf16.mxu0 0
  %4641 = vmatpush1.bf16.xpose.msra.mxu0 %v2328
  %4642 = vmatprep.subr.bf16.mxu0 0
  %4643 = vmatpush1.bf16.xpose.msra.mxu0 %v2331
  %4644 = vmatprep.subr.bf16.mxu0 0
  %4645 = vmatpush1.bf16.xpose.msra.mxu0 %v2334
  %4646 = vmatprep.subr.bf16.mxu0 0
  %4647 = vmatpush1.bf16.xpose.msra.mxu0 %v2337
  %4648 = vmatprep.subr.bf16.mxu0 0
  %4649 = vmatpush1.bf16.xpose.msra.mxu0 %v2340
  %4650 = vmatprep.subr.bf16.mxu0 0
  %4651 = vmatpush1.bf16.xpose.msra.mxu0 %v2343
  %4652 = vmatprep.subr.bf16.mxu0 0
  %4653 = vmatpush1.bf16.xpose.msra.mxu0 %v2346
  %4654 = vmatprep.subr.bf16.mxu0 0
  %4655 = vmatpush1.bf16.xpose.msra.mxu0 %v2349
  %4656 = vmatprep.subr.bf16.mxu0 0
  %4657 = vmatpush1.bf16.xpose.msra.mxu0 %v2352
  %4658 = vmatprep.subr.bf16.mxu0 0
  %4659 = vmatpush1.bf16.xpose.msra.mxu0 %v2355
  %4660 = vmatprep.subr.bf16.mxu0 0
  %4661 = vmatpush1.bf16.xpose.msra.mxu0 %v2358
  %4662 = vmatprep.subr.bf16.mxu0 0
  %4663 = vmatpush1.bf16.xpose.msra.mxu0 %v2361
  %4664 = vmatprep.subr.bf16.mxu0 0
  %4665 = vmatpush1.bf16.xpose.msra.mxu0 %v2364
  %4666 = vmatprep.mubr.bf16.mxu0 0
  %4667 = vmatmul.mubr.bf16.gmra.mrb[0].mxu0 %v1719
  %v4668 = vpop.f32.mrb[0].mxu0
  %v4669 = vadd.f32 %v1600, %v4668
  %v4670 = vpop.f32.mrb[0].mxu0
  %v4671 = vadd.f32 %v1600, %v4670
  %v4672 = vpop.f32.mrb[0].mxu0
  %v4673 = vadd.f32 %v1605, %v4672
  %v4674 = vpop.f32.mrb[0].mxu0
  %v4675 = vadd.f32 %v1605, %v4674
  %4676 = vmatprep.mubr.bf16.mxu0 0
  %4677 = vmatmul.mubr.bf16.gmra.mrb[0].mxu0 %v1722
  %v4678 = vpop.f32.mrb[0].mxu0
  %v4679 = vadd.f32 %v1610, %v4678
  %v4680 = vpop.f32.mrb[0].mxu0
  %v4681 = vadd.f32 %v1610, %v4680
  %v4682 = vpop.f32.mrb[0].mxu0
  %v4683 = vadd.f32 %v1615, %v4682
  %v4684 = vpop.f32.mrb[0].mxu0
  %v4685 = vadd.f32 %v1615, %v4684
  %4686 = vmatprep.mubr.bf16.mxu0 0
  %4687 = vmatmul.mubr.bf16.gmra.mrb[0].mxu0 %v1725
  %v4688 = vpop.f32.mrb[0].mxu0
  %v4689 = vadd.f32 %v1620, %v4688
  %v4690 = vpop.f32.mrb[0].mxu0
  %v4691 = vadd.f32 %v1620, %v4690
  %v4692 = vpop.f32.mrb[0].mxu0
  %v4693 = vadd.f32 %v1625, %v4692
  %v4694 = vpop.f32.mrb[0].mxu0
  %v4695 = vadd.f32 %v1625, %v4694
  %4696 = vmatprep.mubr.bf16.mxu0 0
  %4697 = vmatmul.mubr.bf16.gmra.mrb[0].mxu0 %v1728
  %v4698 = vpop.f32.mrb[0].mxu0
  %v4699 = vadd.f32 %v1630, %v4698
  %v4700 = vpop.f32.mrb[0].mxu0
  %v4701 = vadd.f32 %v1630, %v4700
  %v4702 = vpop.f32.mrb[0].mxu0
  %v4703 = vadd.f32 %v1635, %v4702
  %v4704 = vpop.f32.mrb[0].mxu0
  %v4705 = vadd.f32 %v1635, %v4704
  %4706 = vmatprep.mubr.bf16.mxu0 0
  %4707 = vmatmul.mubr.bf16.gmra.mrb[0].mxu0 %v1731
  %v4708 = vpop.f32.mrb[0].mxu0
  %v4709 = vadd.f32 %v1640, %v4708
  %v4710 = vpop.f32.mrb[0].mxu0
  %v4711 = vadd.f32 %v1640, %v4710
  %v4712 = vpop.f32.mrb[0].mxu0
  %v4713 = vadd.f32 %v1645, %v4712
  %v4714 = vpop.f32.mrb[0].mxu0
  %v4715 = vadd.f32 %v1645, %v4714
  %4716 = vmatprep.mubr.bf16.mxu0 0
  %4717 = vmatmul.mubr.bf16.gmra.mrb[0].mxu0 %v1734
  %v4718 = vpop.f32.mrb[0].mxu0
  %v4719 = vadd.f32 %v1650, %v4718
  %v4720 = vpop.f32.mrb[0].mxu0
  %v4721 = vadd.f32 %v1650, %v4720
  %v4722 = vpop.f32.mrb[0].mxu0
  %v4723 = vadd.f32 %v1655, %v4722
  %v4724 = vpop.f32.mrb[0].mxu0
  %v4725 = vadd.f32 %v1655, %v4724
  %4726 = vmatprep.mubr.bf16.mxu0 0
  %4727 = vmatmul.mubr.bf16.gmra.mrb[0].mxu0 %v1737
  %v4728 = vpop.f32.mrb[0].mxu0
  %v4729 = vadd.f32 %v1660, %v4728
  %v4730 = vpop.f32.mrb[0].mxu0
  %v4731 = vadd.f32 %v1660, %v4730
  %v4732 = vpop.f32.mrb[0].mxu0
  %v4733 = vadd.f32 %v1665, %v4732
  %v4734 = vpop.f32.mrb[0].mxu0
  %v4735 = vadd.f32 %v1665, %v4734
  %4736 = vmatprep.mubr.bf16.mxu0 0
  %4737 = vmatmul.mubr.bf16.gmra.mrb[0].mxu0 %v1740
  %v4738 = vpop.f32.mrb[0].mxu0
  %v4739 = vadd.f32 %v1670, %v4738
  %v4740 = vpop.f32.mrb[0].mxu0
  %v4741 = vadd.f32 %v1670, %v4740
  %v4742 = vpop.f32.mrb[0].mxu0
  %v4743 = vadd.f32 %v1675, %v4742
  %v4744 = vpop.f32.mrb[0].mxu0
  %v4745 = vadd.f32 %v1675, %v4744
  %4746 = vdwg.mxu0
  %4747 = vmatprep.subr.bf16.mxu0 0
  %4748 = vmatpush1.bf16.xpose.msra.mxu0 %v2367
  %4749 = vmatprep.subr.bf16.mxu0 0
  %4750 = vmatpush1.bf16.xpose.msra.mxu0 %v2370
  %4751 = vmatprep.subr.bf16.mxu0 0
  %4752 = vmatpush1.bf16.xpose.msra.mxu0 %v2373
  %4753 = vmatprep.subr.bf16.mxu0 0
  %4754 = vmatpush1.bf16.xpose.msra.mxu0 %v2376
  %4755 = vmatprep.subr.bf16.mxu0 0
  %4756 = vmatpush1.bf16.xpose.msra.mxu0 %v2379
  %4757 = vmatprep.subr.bf16.mxu0 0
  %4758 = vmatpush1.bf16.xpose.msra.mxu0 %v2382
  %4759 = vmatprep.subr.bf16.mxu0 0
  %4760 = vmatpush1.bf16.xpose.msra.mxu0 %v2385
  %4761 = vmatprep.subr.bf16.mxu0 0
  %4762 = vmatpush1.bf16.xpose.msra.mxu0 %v2388
  %4763 = vmatprep.subr.bf16.mxu0 0
  %4764 = vmatpush1.bf16.xpose.msra.mxu0 %v2391
  %4765 = vmatprep.subr.bf16.mxu0 0
  %4766 = vmatpush1.bf16.xpose.msra.mxu0 %v2394
  %4767 = vmatprep.subr.bf16.mxu0 0
  %4768 = vmatpush1.bf16.xpose.msra.mxu0 %v2397
  %4769 = vmatprep.subr.bf16.mxu0 0
  %4770 = vmatpush1.bf16.xpose.msra.mxu0 %v2400
  %4771 = vmatprep.subr.bf16.mxu0 0
  %4772 = vmatpush1.bf16.xpose.msra.mxu0 %v2403
  %4773 = vmatprep.subr.bf16.mxu0 0
  %4774 = vmatpush1.bf16.xpose.msra.mxu0 %v2406
  %4775 = vmatprep.subr.bf16.mxu0 0
  %4776 = vmatpush1.bf16.xpose.msra.mxu0 %v2409
  %4777 = vmatprep.subr.bf16.mxu0 0
  %4778 = vmatpush1.bf16.xpose.msra.mxu0 %v2412
  %4779 = vmatprep.mubr.bf16.mxu0 0
  %4780 = vmatmul.mubr.bf16.gmra.mrb[0].mxu0 %v1719
  %v4781 = vpop.f32.mrb[0].mxu0
  %v4782 = vadd.f32 %v1600, %v4781
  %v4783 = vpop.f32.mrb[0].mxu0
  %v4784 = vadd.f32 %v1600, %v4783
  %v4785 = vpop.f32.mrb[0].mxu0
  %v4786 = vadd.f32 %v1605, %v4785
  %v4787 = vpop.f32.mrb[0].mxu0
  %v4788 = vadd.f32 %v1605, %v4787
  %4789 = vmatprep.mubr.bf16.mxu0 0
  %4790 = vmatmul.mubr.bf16.gmra.mrb[0].mxu0 %v1722
  %v4791 = vpop.f32.mrb[0].mxu0
  %v4792 = vadd.f32 %v1610, %v4791
  %v4793 = vpop.f32.mrb[0].mxu0
  %v4794 = vadd.f32 %v1610, %v4793
  %v4795 = vpop.f32.mrb[0].mxu0
  %v4796 = vadd.f32 %v1615, %v4795
  %v4797 = vpop.f32.mrb[0].mxu0
  %v4798 = vadd.f32 %v1615, %v4797
  %4799 = vmatprep.mubr.bf16.mxu0 0
  %4800 = vmatmul.mubr.bf16.gmra.mrb[0].mxu0 %v1725
  %v4801 = vpop.f32.mrb[0].mxu0
  %v4802 = vadd.f32 %v1620, %v4801
  %v4803 = vpop.f32.mrb[0].mxu0
  %v4804 = vadd.f32 %v1620, %v4803
  %v4805 = vpop.f32.mrb[0].mxu0
  %v4806 = vadd.f32 %v1625, %v4805
  %v4807 = vpop.f32.mrb[0].mxu0
  %v4808 = vadd.f32 %v1625, %v4807
  %4809 = vmatprep.mubr.bf16.mxu0 0
  %4810 = vmatmul.mubr.bf16.gmra.mrb[0].mxu0 %v1728
  %v4811 = vpop.f32.mrb[0].mxu0
  %v4812 = vadd.f32 %v1630, %v4811
  %v4813 = vpop.f32.mrb[0].mxu0
  %v4814 = vadd.f32 %v1630, %v4813
  %v4815 = vpop.f32.mrb[0].mxu0
  %v4816 = vadd.f32 %v1635, %v4815
  %v4817 = vpop.f32.mrb[0].mxu0
  %v4818 = vadd.f32 %v1635, %v4817
  %4819 = vmatprep.mubr.bf16.mxu0 0
  %4820 = vmatmul.mubr.bf16.gmra.mrb[0].mxu0 %v1731
  %v4821 = vpop.f32.mrb[0].mxu0
  %v4822 = vadd.f32 %v1640, %v4821
  %v4823 = vpop.f32.mrb[0].mxu0
  %v4824 = vadd.f32 %v1640, %v4823
  %v4825 = vpop.f32.mrb[0].mxu0
  %v4826 = vadd.f32 %v1645, %v4825
  %v4827 = vpop.f32.mrb[0].mxu0
  %v4828 = vadd.f32 %v1645, %v4827
  %4829 = vmatprep.mubr.bf16.mxu0 0
  %4830 = vmatmul.mubr.bf16.gmra.mrb[0].mxu0 %v1734
  %v4831 = vpop.f32.mrb[0].mxu0
  %v4832 = vadd.f32 %v1650, %v4831
  %v4833 = vpop.f32.mrb[0].mxu0
  %v4834 = vadd.f32 %v1650, %v4833
  %v4835 = vpop.f32.mrb[0].mxu0
  %v4836 = vadd.f32 %v1655, %v4835
  %v4837 = vpop.f32.mrb[0].mxu0
  %v4838 = vadd.f32 %v1655, %v4837
  %4839 = vmatprep.mubr.bf16.mxu0 0
  %4840 = vmatmul.mubr.bf16.gmra.mrb[0].mxu0 %v1737
  %v4841 = vpop.f32.mrb[0].mxu0
  %v4842 = vadd.f32 %v1660, %v4841
  %v4843 = vpop.f32.mrb[0].mxu0
  %v4844 = vadd.f32 %v1660, %v4843
  %v4845 = vpop.f32.mrb[0].mxu0
  %v4846 = vadd.f32 %v1665, %v4845
  %v4847 = vpop.f32.mrb[0].mxu0
  %v4848 = vadd.f32 %v1665, %v4847
  %4849 = vmatprep.mubr.bf16.mxu0 0
  %4850 = vmatmul.mubr.bf16.gmra.mrb[0].mxu0 %v1740
  %v4851 = vpop.f32.mrb[0].mxu0
  %v4852 = vadd.f32 %v1670, %v4851
  %v4853 = vpop.f32.mrb[0].mxu0
  %v4854 = vadd.f32 %v1670, %v4853
  %v4855 = vpop.f32.mrb[0].mxu0
  %v4856 = vadd.f32 %v1675, %v4855
  %v4857 = vpop.f32.mrb[0].mxu0
  %v4858 = vadd.f32 %v1675, %v4857
  %4859 = vdwg.mxu0
  %4860 = vmatprep.subr.bf16.mxu0 0
  %4861 = vmatpush1.bf16.xpose.msra.mxu0 %v2415
  %4862 = vmatprep.subr.bf16.mxu0 0
  %4863 = vmatpush1.bf16.xpose.msra.mxu0 %v2418
  %4864 = vmatprep.subr.bf16.mxu0 0
  %4865 = vmatpush1.bf16.xpose.msra.mxu0 %v2421
  %4866 = vmatprep.subr.bf16.mxu0 0
  %4867 = vmatpush1.bf16.xpose.msra.mxu0 %v2424
  %4868 = vmatprep.subr.bf16.mxu0 0
  %4869 = vmatpush1.bf16.xpose.msra.mxu0 %v2427
  %4870 = vmatprep.subr.bf16.mxu0 0
  %4871 = vmatpush1.bf16.xpose.msra.mxu0 %v2430
  %4872 = vmatprep.subr.bf16.mxu0 0
  %4873 = vmatpush1.bf16.xpose.msra.mxu0 %v2433
  %4874 = vmatprep.subr.bf16.mxu0 0
  %4875 = vmatpush1.bf16.xpose.msra.mxu0 %v2436
  %4876 = vmatprep.subr.bf16.mxu0 0
  %4877 = vmatpush1.bf16.xpose.msra.mxu0 %v2439
  %4878 = vmatprep.subr.bf16.mxu0 0
  %4879 = vmatpush1.bf16.xpose.msra.mxu0 %v2442
  %4880 = vmatprep.subr.bf16.mxu0 0
  %4881 = vmatpush1.bf16.xpose.msra.mxu0 %v2445
  %4882 = vmatprep.subr.bf16.mxu0 0
  %4883 = vmatpush1.bf16.xpose.msra.mxu0 %v2448
  %4884 = vmatprep.subr.bf16.mxu0 0
  %4885 = vmatpush1.bf16.xpose.msra.mxu0 %v2451
  %4886 = vmatprep.subr.bf16.mxu0 0
  %4887 = vmatpush1.bf16.xpose.msra.mxu0 %v2454
  %4888 = vmatprep.subr.bf16.mxu0 0
  %4889 = vmatpush1.bf16.xpose.msra.mxu0 %v2457
  %4890 = vmatprep.subr.bf16.mxu0 0
  %4891 = vmatpush1.bf16.xpose.msra.mxu0 %v2460
  %4892 = vmatprep.mubr.bf16.mxu0 0
  %4893 = vmatmul.mubr.bf16.gmra.mrb[0].mxu0 %v1719
  %v4894 = vpop.f32.mrb[0].mxu0
  %v4895 = vadd.f32 %v1600, %v4894
  %v4896 = vpop.f32.mrb[0].mxu0
  %v4897 = vadd.f32 %v1600, %v4896
  %v4898 = vpop.f32.mrb[0].mxu0
  %v4899 = vadd.f32 %v1605, %v4898
  %v4900 = vpop.f32.mrb[0].mxu0
  %v4901 = vadd.f32 %v1605, %v4900
  %4902 = vmatprep.mubr.bf16.mxu0 0
  %4903 = vmatmul.mubr.bf16.gmra.mrb[0].mxu0 %v1722
  %v4904 = vpop.f32.mrb[0].mxu0
  %v4905 = vadd.f32 %v1610, %v4904
  %v4906 = vpop.f32.mrb[0].mxu0
  %v4907 = vadd.f32 %v1610, %v4906
  %v4908 = vpop.f32.mrb[0].mxu0
  %v4909 = vadd.f32 %v1615, %v4908
  %v4910 = vpop.f32.mrb[0].mxu0
  %v4911 = vadd.f32 %v1615, %v4910
  %4912 = vmatprep.mubr.bf16.mxu0 0
  %4913 = vmatmul.mubr.bf16.gmra.mrb[0].mxu0 %v1725
  %v4914 = vpop.f32.mrb[0].mxu0
  %v4915 = vadd.f32 %v1620, %v4914
  %v4916 = vpop.f32.mrb[0].mxu0
  %v4917 = vadd.f32 %v1620, %v4916
  %v4918 = vpop.f32.mrb[0].mxu0
  %v4919 = vadd.f32 %v1625, %v4918
  %v4920 = vpop.f32.mrb[0].mxu0
  %v4921 = vadd.f32 %v1625, %v4920
  %4922 = vmatprep.mubr.bf16.mxu0 0
  %4923 = vmatmul.mubr.bf16.gmra.mrb[0].mxu0 %v1728
  %v4924 = vpop.f32.mrb[0].mxu0
  %v4925 = vadd.f32 %v1630, %v4924
  %v4926 = vpop.f32.mrb[0].mxu0
  %v4927 = vadd.f32 %v1630, %v4926
  %v4928 = vpop.f32.mrb[0].mxu0
  %v4929 = vadd.f32 %v1635, %v4928
  %v4930 = vpop.f32.mrb[0].mxu0
  %v4931 = vadd.f32 %v1635, %v4930
  %4932 = vmatprep.mubr.bf16.mxu0 0
  %4933 = vmatmul.mubr.bf16.gmra.mrb[0].mxu0 %v1731
  %v4934 = vpop.f32.mrb[0].mxu0
  %v4935 = vadd.f32 %v1640, %v4934
  %v4936 = vpop.f32.mrb[0].mxu0
  %v4937 = vadd.f32 %v1640, %v4936
  %v4938 = vpop.f32.mrb[0].mxu0
  %v4939 = vadd.f32 %v1645, %v4938
  %v4940 = vpop.f32.mrb[0].mxu0
  %v4941 = vadd.f32 %v1645, %v4940
  %4942 = vmatprep.mubr.bf16.mxu0 0
  %4943 = vmatmul.mubr.bf16.gmra.mrb[0].mxu0 %v1734
  %v4944 = vpop.f32.mrb[0].mxu0
  %v4945 = vadd.f32 %v1650, %v4944
  %v4946 = vpop.f32.mrb[0].mxu0
  %v4947 = vadd.f32 %v1650, %v4946
  %v4948 = vpop.f32.mrb[0].mxu0
  %v4949 = vadd.f32 %v1655, %v4948
  %v4950 = vpop.f32.mrb[0].mxu0
  %v4951 = vadd.f32 %v1655, %v4950
  %4952 = vmatprep.mubr.bf16.mxu0 0
  %4953 = vmatmul.mubr.bf16.gmra.mrb[0].mxu0 %v1737
  %v4954 = vpop.f32.mrb[0].mxu0
  %v4955 = vadd.f32 %v1660, %v4954
  %v4956 = vpop.f32.mrb[0].mxu0
  %v4957 = vadd.f32 %v1660, %v4956
  %v4958 = vpop.f32.mrb[0].mxu0
  %v4959 = vadd.f32 %v1665, %v4958
  %v4960 = vpop.f32.mrb[0].mxu0
  %v4961 = vadd.f32 %v1665, %v4960
  %4962 = vmatprep.mubr.bf16.mxu0 0
  %4963 = vmatmul.mubr.bf16.gmra.mrb[0].mxu0 %v1740
  %v4964 = vpop.f32.mrb[0].mxu0
  %v4965 = vadd.f32 %v1670, %v4964
  %v4966 = vpop.f32.mrb[0].mxu0
  %v4967 = vadd.f32 %v1670, %v4966
  %v4968 = vpop.f32.mrb[0].mxu0
  %v4969 = vadd.f32 %v1675, %v4968
  %v4970 = vpop.f32.mrb[0].mxu0
  %v4971 = vadd.f32 %v1675, %v4970
  %4972 = vdwg.mxu0
  %4973 = vmatprep.subr.bf16.mxu0 0
  %4974 = vmatpush1.bf16.xpose.msra.mxu0 %v2463
  %4975 = vmatprep.subr.bf16.mxu0 0
  %4976 = vmatpush1.bf16.xpose.msra.mxu0 %v2466
  %4977 = vmatprep.subr.bf16.mxu0 0
  %4978 = vmatpush1.bf16.xpose.msra.mxu0 %v2469
  %4979 = vmatprep.subr.bf16.mxu0 0
  %4980 = vmatpush1.bf16.xpose.msra.mxu0 %v2472
  %4981 = vmatprep.subr.bf16.mxu0 0
  %4982 = vmatpush1.bf16.xpose.msra.mxu0 %v2475
  %4983 = vmatprep.subr.bf16.mxu0 0
  %4984 = vmatpush1.bf16.xpose.msra.mxu0 %v2478
  %4985 = vmatprep.subr.bf16.mxu0 0
  %4986 = vmatpush1.bf16.xpose.msra.mxu0 %v2481
  %4987 = vmatprep.subr.bf16.mxu0 0
  %4988 = vmatpush1.bf16.xpose.msra.mxu0 %v2484
  %4989 = vmatprep.subr.bf16.mxu0 0
  %4990 = vmatpush1.bf16.xpose.msra.mxu0 %v2487
  %4991 = vmatprep.subr.bf16.mxu0 0
  %4992 = vmatpush1.bf16.xpose.msra.mxu0 %v2490
  %4993 = vmatprep.subr.bf16.mxu0 0
  %4994 = vmatpush1.bf16.xpose.msra.mxu0 %v2493
  %4995 = vmatprep.subr.bf16.mxu0 0
  %4996 = vmatpush1.bf16.xpose.msra.mxu0 %v2496
  %4997 = vmatprep.subr.bf16.mxu0 0
  %4998 = vmatpush1.bf16.xpose.msra.mxu0 %v2499
  %4999 = vmatprep.subr.bf16.mxu0 0
  %5000 = vmatpush1.bf16.xpose.msra.mxu0 %v2502
  %5001 = vmatprep.subr.bf16.mxu0 0
  %5002 = vmatpush1.bf16.xpose.msra.mxu0 %v2505
  %5003 = vmatprep.subr.bf16.mxu0 0
  %5004 = vmatpush1.bf16.xpose.msra.mxu0 %v2508
  %5005 = vmatprep.mubr.bf16.mxu0 0
  %5006 = vmatmul.mubr.bf16.gmra.mrb[0].mxu0 %v1719
  %v5007 = vpop.f32.mrb[0].mxu0
  %v5008 = vadd.f32 %v1600, %v5007
  %v5009 = vpop.f32.mrb[0].mxu0
  %v5010 = vadd.f32 %v1600, %v5009
  %v5011 = vpop.f32.mrb[0].mxu0
  %v5012 = vadd.f32 %v1605, %v5011
  %v5013 = vpop.f32.mrb[0].mxu0
  %v5014 = vadd.f32 %v1605, %v5013
  %5015 = vmatprep.mubr.bf16.mxu0 0
  %5016 = vmatmul.mubr.bf16.gmra.mrb[0].mxu0 %v1722
  %v5017 = vpop.f32.mrb[0].mxu0
  %v5018 = vadd.f32 %v1610, %v5017
  %v5019 = vpop.f32.mrb[0].mxu0
  %v5020 = vadd.f32 %v1610, %v5019
  %v5021 = vpop.f32.mrb[0].mxu0
  %v5022 = vadd.f32 %v1615, %v5021
  %v5023 = vpop.f32.mrb[0].mxu0
  %v5024 = vadd.f32 %v1615, %v5023
  %5025 = vmatprep.mubr.bf16.mxu0 0
  %5026 = vmatmul.mubr.bf16.gmra.mrb[0].mxu0 %v1725
  %v5027 = vpop.f32.mrb[0].mxu0
  %v5028 = vadd.f32 %v1620, %v5027
  %v5029 = vpop.f32.mrb[0].mxu0
  %v5030 = vadd.f32 %v1620, %v5029
  %v5031 = vpop.f32.mrb[0].mxu0
  %v5032 = vadd.f32 %v1625, %v5031
  %v5033 = vpop.f32.mrb[0].mxu0
  %v5034 = vadd.f32 %v1625, %v5033
  %5035 = vmatprep.mubr.bf16.mxu0 0
  %5036 = vmatmul.mubr.bf16.gmra.mrb[0].mxu0 %v1728
  %v5037 = vpop.f32.mrb[0].mxu0
  %v5038 = vadd.f32 %v1630, %v5037
  %v5039 = vpop.f32.mrb[0].mxu0
  %v5040 = vadd.f32 %v1630, %v5039
  %v5041 = vpop.f32.mrb[0].mxu0
  %v5042 = vadd.f32 %v1635, %v5041
  %v5043 = vpop.f32.mrb[0].mxu0
  %v5044 = vadd.f32 %v1635, %v5043
  %5045 = vmatprep.mubr.bf16.mxu0 0
  %5046 = vmatmul.mubr.bf16.gmra.mrb[0].mxu0 %v1731
  %v5047 = vpop.f32.mrb[0].mxu0
  %v5048 = vadd.f32 %v1640, %v5047
  %v5049 = vpop.f32.mrb[0].mxu0
  %v5050 = vadd.f32 %v1640, %v5049
  %v5051 = vpop.f32.mrb[0].mxu0
  %v5052 = vadd.f32 %v1645, %v5051
  %v5053 = vpop.f32.mrb[0].mxu0
  %v5054 = vadd.f32 %v1645, %v5053
  %5055 = vmatprep.mubr.bf16.mxu0 0
  %5056 = vmatmul.mubr.bf16.gmra.mrb[0].mxu0 %v1734
  %v5057 = vpop.f32.mrb[0].mxu0
  %v5058 = vadd.f32 %v1650, %v5057
  %v5059 = vpop.f32.mrb[0].mxu0
  %v5060 = vadd.f32 %v1650, %v5059
  %v5061 = vpop.f32.mrb[0].mxu0
  %v5062 = vadd.f32 %v1655, %v5061
  %v5063 = vpop.f32.mrb[0].mxu0
  %v5064 = vadd.f32 %v1655, %v5063
  %5065 = vmatprep.mubr.bf16.mxu0 0
  %5066 = vmatmul.mubr.bf16.gmra.mrb[0].mxu0 %v1737
  %v5067 = vpop.f32.mrb[0].mxu0
  %v5068 = vadd.f32 %v1660, %v5067
  %v5069 = vpop.f32.mrb[0].mxu0
  %v5070 = vadd.f32 %v1660, %v5069
  %v5071 = vpop.f32.mrb[0].mxu0
  %v5072 = vadd.f32 %v1665, %v5071
  %v5073 = vpop.f32.mrb[0].mxu0
  %v5074 = vadd.f32 %v1665, %v5073
  %5075 = vmatprep.mubr.bf16.mxu0 0
  %5076 = vmatmul.mubr.bf16.gmra.mrb[0].mxu0 %v1740
  %v5077 = vpop.f32.mrb[0].mxu0
  %v5078 = vadd.f32 %v1670, %v5077
  %v5079 = vpop.f32.mrb[0].mxu0
  %v5080 = vadd.f32 %v1670, %v5079
  %v5081 = vpop.f32.mrb[0].mxu0
  %v5082 = vadd.f32 %v1675, %v5081
  %v5083 = vpop.f32.mrb[0].mxu0
  %v5084 = vadd.f32 %v1675, %v5083
  %5085 = vdwg.mxu0
  %5086 = vmatprep.subr.bf16.mxu0 0
  %5087 = vmatpush1.bf16.xpose.msra.mxu0 %v2511
  %5088 = vmatprep.subr.bf16.mxu0 0
  %5089 = vmatpush1.bf16.xpose.msra.mxu0 %v2514
  %5090 = vmatprep.subr.bf16.mxu0 0
  %5091 = vmatpush1.bf16.xpose.msra.mxu0 %v2517
  %5092 = vmatprep.subr.bf16.mxu0 0
  %5093 = vmatpush1.bf16.xpose.msra.mxu0 %v2520
  %5094 = vmatprep.subr.bf16.mxu0 0
  %5095 = vmatpush1.bf16.xpose.msra.mxu0 %v2523
  %5096 = vmatprep.subr.bf16.mxu0 0
  %5097 = vmatpush1.bf16.xpose.msra.mxu0 %v2526
  %5098 = vmatprep.subr.bf16.mxu0 0
  %5099 = vmatpush1.bf16.xpose.msra.mxu0 %v2529
  %5100 = vmatprep.subr.bf16.mxu0 0
  %5101 = vmatpush1.bf16.xpose.msra.mxu0 %v2532
  %5102 = vmatprep.subr.bf16.mxu0 0
  %5103 = vmatpush1.bf16.xpose.msra.mxu0 %v2535
  %5104 = vmatprep.subr.bf16.mxu0 0
  %5105 = vmatpush1.bf16.xpose.msra.mxu0 %v2538
  %5106 = vmatprep.subr.bf16.mxu0 0
  %5107 = vmatpush1.bf16.xpose.msra.mxu0 %v2541
  %5108 = vmatprep.subr.bf16.mxu0 0
  %5109 = vmatpush1.bf16.xpose.msra.mxu0 %v2544
  %5110 = vmatprep.subr.bf16.mxu0 0
  %5111 = vmatpush1.bf16.xpose.msra.mxu0 %v2547
  %5112 = vmatprep.subr.bf16.mxu0 0
  %5113 = vmatpush1.bf16.xpose.msra.mxu0 %v2550
  %5114 = vmatprep.subr.bf16.mxu0 0
  %5115 = vmatpush1.bf16.xpose.msra.mxu0 %v2553
  %5116 = vmatprep.subr.bf16.mxu0 0
  %5117 = vmatpush1.bf16.xpose.msra.mxu0 %v2556
  %5118 = vmatprep.mubr.bf16.mxu0 0
  %5119 = vmatmul.mubr.bf16.gmra.mrb[0].mxu0 %v1719
  %v5120 = vpop.f32.mrb[0].mxu0
  %v5121 = vadd.f32 %v1600, %v5120
  %v5122 = vpop.f32.mrb[0].mxu0
  %v5123 = vadd.f32 %v1600, %v5122
  %v5124 = vpop.f32.mrb[0].mxu0
  %v5125 = vadd.f32 %v1605, %v5124
  %v5126 = vpop.f32.mrb[0].mxu0
  %v5127 = vadd.f32 %v1605, %v5126
  %5128 = vmatprep.mubr.bf16.mxu0 0
  %5129 = vmatmul.mubr.bf16.gmra.mrb[0].mxu0 %v1722
  %v5130 = vpop.f32.mrb[0].mxu0
  %v5131 = vadd.f32 %v1610, %v5130
  %v5132 = vpop.f32.mrb[0].mxu0
  %v5133 = vadd.f32 %v1610, %v5132
  %v5134 = vpop.f32.mrb[0].mxu0
  %v5135 = vadd.f32 %v1615, %v5134
  %v5136 = vpop.f32.mrb[0].mxu0
  %v5137 = vadd.f32 %v1615, %v5136
  %5138 = vmatprep.mubr.bf16.mxu0 0
  %5139 = vmatmul.mubr.bf16.gmra.mrb[0].mxu0 %v1725
  %v5140 = vpop.f32.mrb[0].mxu0
  %v5141 = vadd.f32 %v1620, %v5140
  %v5142 = vpop.f32.mrb[0].mxu0
  %v5143 = vadd.f32 %v1620, %v5142
  %v5144 = vpop.f32.mrb[0].mxu0
  %v5145 = vadd.f32 %v1625, %v5144
  %v5146 = vpop.f32.mrb[0].mxu0
  %v5147 = vadd.f32 %v1625, %v5146
  %5148 = vmatprep.mubr.bf16.mxu0 0
  %5149 = vmatmul.mubr.bf16.gmra.mrb[0].mxu0 %v1728
  %v5150 = vpop.f32.mrb[0].mxu0
  %v5151 = vadd.f32 %v1630, %v5150
  %v5152 = vpop.f32.mrb[0].mxu0
  %v5153 = vadd.f32 %v1630, %v5152
  %v5154 = vpop.f32.mrb[0].mxu0
  %v5155 = vadd.f32 %v1635, %v5154
  %v5156 = vpop.f32.mrb[0].mxu0
  %v5157 = vadd.f32 %v1635, %v5156
  %5158 = vmatprep.mubr.bf16.mxu0 0
  %5159 = vmatmul.mubr.bf16.gmra.mrb[0].mxu0 %v1731
  %v5160 = vpop.f32.mrb[0].mxu0
  %v5161 = vadd.f32 %v1640, %v5160
  %v5162 = vpop.f32.mrb[0].mxu0
  %v5163 = vadd.f32 %v1640, %v5162
  %v5164 = vpop.f32.mrb[0].mxu0
  %v5165 = vadd.f32 %v1645, %v5164
  %v5166 = vpop.f32.mrb[0].mxu0
  %v5167 = vadd.f32 %v1645, %v5166
  %5168 = vmatprep.mubr.bf16.mxu0 0
  %5169 = vmatmul.mubr.bf16.gmra.mrb[0].mxu0 %v1734
  %v5170 = vpop.f32.mrb[0].mxu0
  %v5171 = vadd.f32 %v1650, %v5170
  %v5172 = vpop.f32.mrb[0].mxu0
  %v5173 = vadd.f32 %v1650, %v5172
  %v5174 = vpop.f32.mrb[0].mxu0
  %v5175 = vadd.f32 %v1655, %v5174
  %v5176 = vpop.f32.mrb[0].mxu0
  %v5177 = vadd.f32 %v1655, %v5176
  %5178 = vmatprep.mubr.bf16.mxu0 0
  %5179 = vmatmul.mubr.bf16.gmra.mrb[0].mxu0 %v1737
  %v5180 = vpop.f32.mrb[0].mxu0
  %v5181 = vadd.f32 %v1660, %v5180
  %v5182 = vpop.f32.mrb[0].mxu0
  %v5183 = vadd.f32 %v1660, %v5182
  %v5184 = vpop.f32.mrb[0].mxu0
  %v5185 = vadd.f32 %v1665, %v5184
  %v5186 = vpop.f32.mrb[0].mxu0
  %v5187 = vadd.f32 %v1665, %v5186
  %5188 = vmatprep.mubr.bf16.mxu0 0
  %5189 = vmatmul.mubr.bf16.gmra.mrb[0].mxu0 %v1740
  %v5190 = vpop.f32.mrb[0].mxu0
  %v5191 = vadd.f32 %v1670, %v5190
  %v5192 = vpop.f32.mrb[0].mxu0
  %v5193 = vadd.f32 %v1670, %v5192
  %v5194 = vpop.f32.mrb[0].mxu0
  %v5195 = vadd.f32 %v1675, %v5194
  %v5196 = vpop.f32.mrb[0].mxu0
  %v5197 = vadd.f32 %v1675, %v5196
  %5198 = vdwg.mxu0
  %5199 = vmatprep.subr.bf16.mxu0 0
  %5200 = vmatpush1.bf16.xpose.msra.mxu0 %v2559
  %5201 = vmatprep.subr.bf16.mxu0 0
  %5202 = vmatpush1.bf16.xpose.msra.mxu0 %v2562
  %5203 = vmatprep.subr.bf16.mxu0 0
  %5204 = vmatpush1.bf16.xpose.msra.mxu0 %v2565
  %5205 = vmatprep.subr.bf16.mxu0 0
  %5206 = vmatpush1.bf16.xpose.msra.mxu0 %v2568
  %5207 = vmatprep.subr.bf16.mxu0 0
  %5208 = vmatpush1.bf16.xpose.msra.mxu0 %v2571
  %5209 = vmatprep.subr.bf16.mxu0 0
  %5210 = vmatpush1.bf16.xpose.msra.mxu0 %v2574
  %5211 = vmatprep.subr.bf16.mxu0 0
  %5212 = vmatpush1.bf16.xpose.msra.mxu0 %v2577
  %5213 = vmatprep.subr.bf16.mxu0 0
  %5214 = vmatpush1.bf16.xpose.msra.mxu0 %v2580
  %5215 = vmatprep.subr.bf16.mxu0 0
  %5216 = vmatpush1.bf16.xpose.msra.mxu0 %v2583
  %5217 = vmatprep.subr.bf16.mxu0 0
  %5218 = vmatpush1.bf16.xpose.msra.mxu0 %v2586
  %5219 = vmatprep.subr.bf16.mxu0 0
  %5220 = vmatpush1.bf16.xpose.msra.mxu0 %v2589
  %5221 = vmatprep.subr.bf16.mxu0 0
  %5222 = vmatpush1.bf16.xpose.msra.mxu0 %v2592
  %5223 = vmatprep.subr.bf16.mxu0 0
  %5224 = vmatpush1.bf16.xpose.msra.mxu0 %v2595
  %5225 = vmatprep.subr.bf16.mxu0 0
  %5226 = vmatpush1.bf16.xpose.msra.mxu0 %v2598
  %5227 = vmatprep.subr.bf16.mxu0 0
  %5228 = vmatpush1.bf16.xpose.msra.mxu0 %v2601
  %5229 = vmatprep.subr.bf16.mxu0 0
  %5230 = vmatpush1.bf16.xpose.msra.mxu0 %v2604
  %5231 = vmatprep.mubr.bf16.mxu0 0
  %5232 = vmatmul.mubr.bf16.gmra.mrb[0].mxu0 %v1719
  %v5233 = vpop.f32.mrb[0].mxu0
  %v5234 = vadd.f32 %v1600, %v5233
  %v5235 = vpop.f32.mrb[0].mxu0
  %v5236 = vadd.f32 %v1600, %v5235
  %v5237 = vpop.f32.mrb[0].mxu0
  %v5238 = vadd.f32 %v1605, %v5237
  %v5239 = vpop.f32.mrb[0].mxu0
  %v5240 = vadd.f32 %v1605, %v5239
  %5241 = vmatprep.mubr.bf16.mxu0 0
  %5242 = vmatmul.mubr.bf16.gmra.mrb[0].mxu0 %v1722
  %v5243 = vpop.f32.mrb[0].mxu0
  %v5244 = vadd.f32 %v1610, %v5243
  %v5245 = vpop.f32.mrb[0].mxu0
  %v5246 = vadd.f32 %v1610, %v5245
  %v5247 = vpop.f32.mrb[0].mxu0
  %v5248 = vadd.f32 %v1615, %v5247
  %v5249 = vpop.f32.mrb[0].mxu0
  %v5250 = vadd.f32 %v1615, %v5249
  %5251 = vmatprep.mubr.bf16.mxu0 0
  %5252 = vmatmul.mubr.bf16.gmra.mrb[0].mxu0 %v1725
  %v5253 = vpop.f32.mrb[0].mxu0
  %v5254 = vadd.f32 %v1620, %v5253
  %v5255 = vpop.f32.mrb[0].mxu0
  %v5256 = vadd.f32 %v1620, %v5255
  %v5257 = vpop.f32.mrb[0].mxu0
  %v5258 = vadd.f32 %v1625, %v5257
  %v5259 = vpop.f32.mrb[0].mxu0
  %v5260 = vadd.f32 %v1625, %v5259
  %5261 = vmatprep.mubr.bf16.mxu0 0
  %5262 = vmatmul.mubr.bf16.gmra.mrb[0].mxu0 %v1728
  %v5263 = vpop.f32.mrb[0].mxu0
  %v5264 = vadd.f32 %v1630, %v5263
  %v5265 = vpop.f32.mrb[0].mxu0
  %v5266 = vadd.f32 %v1630, %v5265
  %v5267 = vpop.f32.mrb[0].mxu0
  %v5268 = vadd.f32 %v1635, %v5267
  %v5269 = vpop.f32.mrb[0].mxu0
  %v5270 = vadd.f32 %v1635, %v5269
  %5271 = vmatprep.mubr.bf16.mxu0 0
  %5272 = vmatmul.mubr.bf16.gmra.mrb[0].mxu0 %v1731
  %v5273 = vpop.f32.mrb[0].mxu0
  %v5274 = vadd.f32 %v1640, %v5273
  %v5275 = vpop.f32.mrb[0].mxu0
  %v5276 = vadd.f32 %v1640, %v5275
  %v5277 = vpop.f32.mrb[0].mxu0
  %v5278 = vadd.f32 %v1645, %v5277
  %v5279 = vpop.f32.mrb[0].mxu0
  %v5280 = vadd.f32 %v1645, %v5279
  %5281 = vmatprep.mubr.bf16.mxu0 0
  %5282 = vmatmul.mubr.bf16.gmra.mrb[0].mxu0 %v1734
  %v5283 = vpop.f32.mrb[0].mxu0
  %v5284 = vadd.f32 %v1650, %v5283
  %v5285 = vpop.f32.mrb[0].mxu0
  %v5286 = vadd.f32 %v1650, %v5285
  %v5287 = vpop.f32.mrb[0].mxu0
  %v5288 = vadd.f32 %v1655, %v5287
  %v5289 = vpop.f32.mrb[0].mxu0
  %v5290 = vadd.f32 %v1655, %v5289
  %5291 = vmatprep.mubr.bf16.mxu0 0
  %5292 = vmatmul.mubr.bf16.gmra.mrb[0].mxu0 %v1737
  %v5293 = vpop.f32.mrb[0].mxu0
  %v5294 = vadd.f32 %v1660, %v5293
  %v5295 = vpop.f32.mrb[0].mxu0
  %v5296 = vadd.f32 %v1660, %v5295
  %v5297 = vpop.f32.mrb[0].mxu0
  %v5298 = vadd.f32 %v1665, %v5297
  %v5299 = vpop.f32.mrb[0].mxu0
  %v5300 = vadd.f32 %v1665, %v5299
  %5301 = vmatprep.mubr.bf16.mxu0 0
  %5302 = vmatmul.mubr.bf16.gmra.mrb[0].mxu0 %v1740
  %v5303 = vpop.f32.mrb[0].mxu0
  %v5304 = vadd.f32 %v1670, %v5303
  %v5305 = vpop.f32.mrb[0].mxu0
  %v5306 = vadd.f32 %v1670, %v5305
  %v5307 = vpop.f32.mrb[0].mxu0
  %v5308 = vadd.f32 %v1675, %v5307
  %v5309 = vpop.f32.mrb[0].mxu0
  %v5310 = vadd.f32 %v1675, %v5309
  %5311 = vdwg.mxu0
  %5312 = vmatprep.subr.bf16.mxu0 0
  %5313 = vmatpush1.bf16.xpose.msra.mxu0 %v2607
  %5314 = vmatprep.subr.bf16.mxu0 0
  %5315 = vmatpush1.bf16.xpose.msra.mxu0 %v2610
  %5316 = vmatprep.subr.bf16.mxu0 0
  %5317 = vmatpush1.bf16.xpose.msra.mxu0 %v2613
  %5318 = vmatprep.subr.bf16.mxu0 0
  %5319 = vmatpush1.bf16.xpose.msra.mxu0 %v2616
  %5320 = vmatprep.subr.bf16.mxu0 0
  %5321 = vmatpush1.bf16.xpose.msra.mxu0 %v2619
  %5322 = vmatprep.subr.bf16.mxu0 0
  %5323 = vmatpush1.bf16.xpose.msra.mxu0 %v2622
  %5324 = vmatprep.subr.bf16.mxu0 0
  %5325 = vmatpush1.bf16.xpose.msra.mxu0 %v2625
  %5326 = vmatprep.subr.bf16.mxu0 0
  %5327 = vmatpush1.bf16.xpose.msra.mxu0 %v2628
  %5328 = vmatprep.subr.bf16.mxu0 0
  %5329 = vmatpush1.bf16.xpose.msra.mxu0 %v2631
  %5330 = vmatprep.subr.bf16.mxu0 0
  %5331 = vmatpush1.bf16.xpose.msra.mxu0 %v2634
  %5332 = vmatprep.subr.bf16.mxu0 0
  %5333 = vmatpush1.bf16.xpose.msra.mxu0 %v2637
  %5334 = vmatprep.subr.bf16.mxu0 0
  %5335 = vmatpush1.bf16.xpose.msra.mxu0 %v2640
  %5336 = vmatprep.subr.bf16.mxu0 0
  %5337 = vmatpush1.bf16.xpose.msra.mxu0 %v2643
  %5338 = vmatprep.subr.bf16.mxu0 0
  %5339 = vmatpush1.bf16.xpose.msra.mxu0 %v2646
  %5340 = vmatprep.subr.bf16.mxu0 0
  %5341 = vmatpush1.bf16.xpose.msra.mxu0 %v2649
  %5342 = vmatprep.subr.bf16.mxu0 0
  %5343 = vmatpush1.bf16.xpose.msra.mxu0 %v2652
  %5344 = vmatprep.mubr.bf16.mxu0 0
  %5345 = vmatmul.mubr.bf16.gmra.mrb[0].mxu0 %v1719
  %v5346 = vpop.f32.mrb[0].mxu0
  %v5347 = vadd.f32 %v1600, %v5346
  %v5348 = vpop.f32.mrb[0].mxu0
  %v5349 = vadd.f32 %v1600, %v5348
  %v5350 = vpop.f32.mrb[0].mxu0
  %v5351 = vadd.f32 %v1605, %v5350
  %v5352 = vpop.f32.mrb[0].mxu0
  %v5353 = vadd.f32 %v1605, %v5352
  %5354 = vmatprep.mubr.bf16.mxu0 0
  %5355 = vmatmul.mubr.bf16.gmra.mrb[0].mxu0 %v1722
  %v5356 = vpop.f32.mrb[0].mxu0
  %v5357 = vadd.f32 %v1610, %v5356
  %v5358 = vpop.f32.mrb[0].mxu0
  %v5359 = vadd.f32 %v1610, %v5358
  %v5360 = vpop.f32.mrb[0].mxu0
  %v5361 = vadd.f32 %v1615, %v5360
  %v5362 = vpop.f32.mrb[0].mxu0
  %v5363 = vadd.f32 %v1615, %v5362
  %5364 = vmatprep.mubr.bf16.mxu0 0
  %5365 = vmatmul.mubr.bf16.gmra.mrb[0].mxu0 %v1725
  %v5366 = vpop.f32.mrb[0].mxu0
  %v5367 = vadd.f32 %v1620, %v5366
  %v5368 = vpop.f32.mrb[0].mxu0
  %v5369 = vadd.f32 %v1620, %v5368
  %v5370 = vpop.f32.mrb[0].mxu0
  %v5371 = vadd.f32 %v1625, %v5370
  %v5372 = vpop.f32.mrb[0].mxu0
  %v5373 = vadd.f32 %v1625, %v5372
  %5374 = vmatprep.mubr.bf16.mxu0 0
  %5375 = vmatmul.mubr.bf16.gmra.mrb[0].mxu0 %v1728
  %v5376 = vpop.f32.mrb[0].mxu0
  %v5377 = vadd.f32 %v1630, %v5376
  %v5378 = vpop.f32.mrb[0].mxu0
  %v5379 = vadd.f32 %v1630, %v5378
  %v5380 = vpop.f32.mrb[0].mxu0
  %v5381 = vadd.f32 %v1635, %v5380
  %v5382 = vpop.f32.mrb[0].mxu0
  %v5383 = vadd.f32 %v1635, %v5382
  %5384 = vmatprep.mubr.bf16.mxu0 0
  %5385 = vmatmul.mubr.bf16.gmra.mrb[0].mxu0 %v1731
  %v5386 = vpop.f32.mrb[0].mxu0
  %v5387 = vadd.f32 %v1640, %v5386
  %v5388 = vpop.f32.mrb[0].mxu0
  %v5389 = vadd.f32 %v1640, %v5388
  %v5390 = vpop.f32.mrb[0].mxu0
  %v5391 = vadd.f32 %v1645, %v5390
  %v5392 = vpop.f32.mrb[0].mxu0
  %v5393 = vadd.f32 %v1645, %v5392
  %5394 = vmatprep.mubr.bf16.mxu0 0
  %5395 = vmatmul.mubr.bf16.gmra.mrb[0].mxu0 %v1734
  %v5396 = vpop.f32.mrb[0].mxu0
  %v5397 = vadd.f32 %v1650, %v5396
  %v5398 = vpop.f32.mrb[0].mxu0
  %v5399 = vadd.f32 %v1650, %v5398
  %v5400 = vpop.f32.mrb[0].mxu0
  %v5401 = vadd.f32 %v1655, %v5400
  %v5402 = vpop.f32.mrb[0].mxu0
  %v5403 = vadd.f32 %v1655, %v5402
  %5404 = vmatprep.mubr.bf16.mxu0 0
  %5405 = vmatmul.mubr.bf16.gmra.mrb[0].mxu0 %v1737
  %v5406 = vpop.f32.mrb[0].mxu0
  %v5407 = vadd.f32 %v1660, %v5406
  %v5408 = vpop.f32.mrb[0].mxu0
  %v5409 = vadd.f32 %v1660, %v5408
  %v5410 = vpop.f32.mrb[0].mxu0
  %v5411 = vadd.f32 %v1665, %v5410
  %v5412 = vpop.f32.mrb[0].mxu0
  %v5413 = vadd.f32 %v1665, %v5412
  %5414 = vmatprep.mubr.bf16.mxu0 0
  %5415 = vmatmul.mubr.bf16.gmra.mrb[0].mxu0 %v1740
  %v5416 = vpop.f32.mrb[0].mxu0
  %v5417 = vadd.f32 %v1670, %v5416
  %v5418 = vpop.f32.mrb[0].mxu0
  %v5419 = vadd.f32 %v1670, %v5418
  %v5420 = vpop.f32.mrb[0].mxu0
  %v5421 = vadd.f32 %v1675, %v5420
  %v5422 = vpop.f32.mrb[0].mxu0
  %v5423 = vadd.f32 %v1675, %v5422
  %5424 = vdwg.mxu0
  %5425 = vmatprep.subr.bf16.mxu0 0
  %5426 = vmatpush1.bf16.xpose.msra.mxu0 %v2655
  %5427 = vmatprep.subr.bf16.mxu0 0
  %5428 = vmatpush1.bf16.xpose.msra.mxu0 %v2658
  %5429 = vmatprep.subr.bf16.mxu0 0
  %5430 = vmatpush1.bf16.xpose.msra.mxu0 %v2661
  %5431 = vmatprep.subr.bf16.mxu0 0
  %5432 = vmatpush1.bf16.xpose.msra.mxu0 %v2664
  %5433 = vmatprep.subr.bf16.mxu0 0
  %5434 = vmatpush1.bf16.xpose.msra.mxu0 %v2667
  %5435 = vmatprep.subr.bf16.mxu0 0
  %5436 = vmatpush1.bf16.xpose.msra.mxu0 %v2670
  %5437 = vmatprep.subr.bf16.mxu0 0
  %5438 = vmatpush1.bf16.xpose.msra.mxu0 %v2673
  %5439 = vmatprep.subr.bf16.mxu0 0
  %5440 = vmatpush1.bf16.xpose.msra.mxu0 %v2676
  %5441 = vmatprep.subr.bf16.mxu0 0
  %5442 = vmatpush1.bf16.xpose.msra.mxu0 %v2679
  %5443 = vmatprep.subr.bf16.mxu0 0
  %5444 = vmatpush1.bf16.xpose.msra.mxu0 %v2682
  %5445 = vmatprep.subr.bf16.mxu0 0
  %5446 = vmatpush1.bf16.xpose.msra.mxu0 %v2685
  %5447 = vmatprep.subr.bf16.mxu0 0
  %5448 = vmatpush1.bf16.xpose.msra.mxu0 %v2688
  %5449 = vmatprep.subr.bf16.mxu0 0
  %5450 = vmatpush1.bf16.xpose.msra.mxu0 %v2691
  %5451 = vmatprep.subr.bf16.mxu0 0
  %5452 = vmatpush1.bf16.xpose.msra.mxu0 %v2694
  %5453 = vmatprep.subr.bf16.mxu0 0
  %5454 = vmatpush1.bf16.xpose.msra.mxu0 %v2697
  %5455 = vmatprep.subr.bf16.mxu0 0
  %5456 = vmatpush1.bf16.xpose.msra.mxu0 %v2700
  %5457 = vmatprep.mubr.bf16.mxu0 0
  %5458 = vmatmul.mubr.bf16.gmra.mrb[0].mxu0 %v1719
  %v5459 = vpop.f32.mrb[0].mxu0
  %v5460 = vadd.f32 %v1600, %v5459
  %v5461 = vpop.f32.mrb[0].mxu0
  %v5462 = vadd.f32 %v1600, %v5461
  %v5463 = vpop.f32.mrb[0].mxu0
  %v5464 = vadd.f32 %v1605, %v5463
  %v5465 = vpop.f32.mrb[0].mxu0
  %v5466 = vadd.f32 %v1605, %v5465
  %5467 = vmatprep.mubr.bf16.mxu0 0
  %5468 = vmatmul.mubr.bf16.gmra.mrb[0].mxu0 %v1722
  %v5469 = vpop.f32.mrb[0].mxu0
  %v5470 = vadd.f32 %v1610, %v5469
  %v5471 = vpop.f32.mrb[0].mxu0
  %v5472 = vadd.f32 %v1610, %v5471
  %v5473 = vpop.f32.mrb[0].mxu0
  %v5474 = vadd.f32 %v1615, %v5473
  %v5475 = vpop.f32.mrb[0].mxu0
  %v5476 = vadd.f32 %v1615, %v5475
  %5477 = vmatprep.mubr.bf16.mxu0 0
  %5478 = vmatmul.mubr.bf16.gmra.mrb[0].mxu0 %v1725
  %v5479 = vpop.f32.mrb[0].mxu0
  %v5480 = vadd.f32 %v1620, %v5479
  %v5481 = vpop.f32.mrb[0].mxu0
  %v5482 = vadd.f32 %v1620, %v5481
  %v5483 = vpop.f32.mrb[0].mxu0
  %v5484 = vadd.f32 %v1625, %v5483
  %v5485 = vpop.f32.mrb[0].mxu0
  %v5486 = vadd.f32 %v1625, %v5485
  %5487 = vmatprep.mubr.bf16.mxu0 0
  %5488 = vmatmul.mubr.bf16.gmra.mrb[0].mxu0 %v1728
  %v5489 = vpop.f32.mrb[0].mxu0
  %v5490 = vadd.f32 %v1630, %v5489
  %v5491 = vpop.f32.mrb[0].mxu0
  %v5492 = vadd.f32 %v1630, %v5491
  %v5493 = vpop.f32.mrb[0].mxu0
  %v5494 = vadd.f32 %v1635, %v5493
  %v5495 = vpop.f32.mrb[0].mxu0
  %v5496 = vadd.f32 %v1635, %v5495
  %5497 = vmatprep.mubr.bf16.mxu0 0
  %5498 = vmatmul.mubr.bf16.gmra.mrb[0].mxu0 %v1731
  %v5499 = vpop.f32.mrb[0].mxu0
  %v5500 = vadd.f32 %v1640, %v5499
  %v5501 = vpop.f32.mrb[0].mxu0
  %v5502 = vadd.f32 %v1640, %v5501
  %v5503 = vpop.f32.mrb[0].mxu0
  %v5504 = vadd.f32 %v1645, %v5503
  %v5505 = vpop.f32.mrb[0].mxu0
  %v5506 = vadd.f32 %v1645, %v5505
  %5507 = vmatprep.mubr.bf16.mxu0 0
  %5508 = vmatmul.mubr.bf16.gmra.mrb[0].mxu0 %v1734
  %v5509 = vpop.f32.mrb[0].mxu0
  %v5510 = vadd.f32 %v1650, %v5509
  %v5511 = vpop.f32.mrb[0].mxu0
  %v5512 = vadd.f32 %v1650, %v5511
  %v5513 = vpop.f32.mrb[0].mxu0
  %v5514 = vadd.f32 %v1655, %v5513
  %v5515 = vpop.f32.mrb[0].mxu0
  %v5516 = vadd.f32 %v1655, %v5515
  %5517 = vmatprep.mubr.bf16.mxu0 0
  %5518 = vmatmul.mubr.bf16.gmra.mrb[0].mxu0 %v1737
  %v5519 = vpop.f32.mrb[0].mxu0
  %v5520 = vadd.f32 %v1660, %v5519
  %v5521 = vpop.f32.mrb[0].mxu0
  %v5522 = vadd.f32 %v1660, %v5521
  %v5523 = vpop.f32.mrb[0].mxu0
  %v5524 = vadd.f32 %v1665, %v5523
  %v5525 = vpop.f32.mrb[0].mxu0
  %v5526 = vadd.f32 %v1665, %v5525
  %5527 = vmatprep.mubr.bf16.mxu0 0
  %5528 = vmatmul.mubr.bf16.gmra.mrb[0].mxu0 %v1740
  %v5529 = vpop.f32.mrb[0].mxu0
  %v5530 = vadd.f32 %v1670, %v5529
  %v5531 = vpop.f32.mrb[0].mxu0
  %v5532 = vadd.f32 %v1670, %v5531
  %v5533 = vpop.f32.mrb[0].mxu0
  %v5534 = vadd.f32 %v1675, %v5533
  %v5535 = vpop.f32.mrb[0].mxu0
  %v5536 = vadd.f32 %v1675, %v5535
  %5537 = vdwg.mxu0
  %5538 = vmatprep.subr.bf16.mxu0 0
  %5539 = vmatpush1.bf16.xpose.msra.mxu0 %v2703
  %5540 = vmatprep.subr.bf16.mxu0 0
  %5541 = vmatpush1.bf16.xpose.msra.mxu0 %v2706
  %5542 = vmatprep.subr.bf16.mxu0 0
  %5543 = vmatpush1.bf16.xpose.msra.mxu0 %v2709
  %5544 = vmatprep.subr.bf16.mxu0 0
  %5545 = vmatpush1.bf16.xpose.msra.mxu0 %v2712
  %5546 = vmatprep.subr.bf16.mxu0 0
  %5547 = vmatpush1.bf16.xpose.msra.mxu0 %v2715
  %5548 = vmatprep.subr.bf16.mxu0 0
  %5549 = vmatpush1.bf16.xpose.msra.mxu0 %v2718
  %5550 = vmatprep.subr.bf16.mxu0 0
  %5551 = vmatpush1.bf16.xpose.msra.mxu0 %v2721
  %5552 = vmatprep.subr.bf16.mxu0 0
  %5553 = vmatpush1.bf16.xpose.msra.mxu0 %v2724
  %5554 = vmatprep.subr.bf16.mxu0 0
  %5555 = vmatpush1.bf16.xpose.msra.mxu0 %v2727
  %5556 = vmatprep.subr.bf16.mxu0 0
  %5557 = vmatpush1.bf16.xpose.msra.mxu0 %v2730
  %5558 = vmatprep.subr.bf16.mxu0 0
  %5559 = vmatpush1.bf16.xpose.msra.mxu0 %v2733
  %5560 = vmatprep.subr.bf16.mxu0 0
  %5561 = vmatpush1.bf16.xpose.msra.mxu0 %v2736
  %5562 = vmatprep.subr.bf16.mxu0 0
  %5563 = vmatpush1.bf16.xpose.msra.mxu0 %v2739
  %5564 = vmatprep.subr.bf16.mxu0 0
  %5565 = vmatpush1.bf16.xpose.msra.mxu0 %v2742
  %5566 = vmatprep.subr.bf16.mxu0 0
  %5567 = vmatpush1.bf16.xpose.msra.mxu0 %v2745
  %5568 = vmatprep.subr.bf16.mxu0 0
  %5569 = vmatpush1.bf16.xpose.msra.mxu0 %v2748
  %5570 = vmatprep.mubr.bf16.mxu0 0
  %5571 = vmatmul.mubr.bf16.gmra.mrb[0].mxu0 %v1719
  %v5572 = vpop.f32.mrb[0].mxu0
  %v5573 = vadd.f32 %v1600, %v5572
  %v5574 = vpop.f32.mrb[0].mxu0
  %v5575 = vadd.f32 %v1600, %v5574
  %v5576 = vpop.f32.mrb[0].mxu0
  %v5577 = vadd.f32 %v1605, %v5576
  %v5578 = vpop.f32.mrb[0].mxu0
  %v5579 = vadd.f32 %v1605, %v5578
  %5580 = vmatprep.mubr.bf16.mxu0 0
  %5581 = vmatmul.mubr.bf16.gmra.mrb[0].mxu0 %v1722
  %v5582 = vpop.f32.mrb[0].mxu0
  %v5583 = vadd.f32 %v1610, %v5582
  %v5584 = vpop.f32.mrb[0].mxu0
  %v5585 = vadd.f32 %v1610, %v5584
  %v5586 = vpop.f32.mrb[0].mxu0
  %v5587 = vadd.f32 %v1615, %v5586
  %v5588 = vpop.f32.mrb[0].mxu0
  %v5589 = vadd.f32 %v1615, %v5588
  %5590 = vmatprep.mubr.bf16.mxu0 0
  %5591 = vmatmul.mubr.bf16.gmra.mrb[0].mxu0 %v1725
  %v5592 = vpop.f32.mrb[0].mxu0
  %v5593 = vadd.f32 %v1620, %v5592
  %v5594 = vpop.f32.mrb[0].mxu0
  %v5595 = vadd.f32 %v1620, %v5594
  %v5596 = vpop.f32.mrb[0].mxu0
  %v5597 = vadd.f32 %v1625, %v5596
  %v5598 = vpop.f32.mrb[0].mxu0
  %v5599 = vadd.f32 %v1625, %v5598
  %5600 = vmatprep.mubr.bf16.mxu0 0
  %5601 = vmatmul.mubr.bf16.gmra.mrb[0].mxu0 %v1728
  %v5602 = vpop.f32.mrb[0].mxu0
  %v5603 = vadd.f32 %v1630, %v5602
  %v5604 = vpop.f32.mrb[0].mxu0
  %v5605 = vadd.f32 %v1630, %v5604
  %v5606 = vpop.f32.mrb[0].mxu0
  %v5607 = vadd.f32 %v1635, %v5606
  %v5608 = vpop.f32.mrb[0].mxu0
  %v5609 = vadd.f32 %v1635, %v5608
  %5610 = vmatprep.mubr.bf16.mxu0 0
  %5611 = vmatmul.mubr.bf16.gmra.mrb[0].mxu0 %v1731
  %v5612 = vpop.f32.mrb[0].mxu0
  %v5613 = vadd.f32 %v1640, %v5612
  %v5614 = vpop.f32.mrb[0].mxu0
  %v5615 = vadd.f32 %v1640, %v5614
  %v5616 = vpop.f32.mrb[0].mxu0
  %v5617 = vadd.f32 %v1645, %v5616
  %v5618 = vpop.f32.mrb[0].mxu0
  %v5619 = vadd.f32 %v1645, %v5618
  %5620 = vmatprep.mubr.bf16.mxu0 0
  %5621 = vmatmul.mubr.bf16.gmra.mrb[0].mxu0 %v1734
  %v5622 = vpop.f32.mrb[0].mxu0
  %v5623 = vadd.f32 %v1650, %v5622
  %v5624 = vpop.f32.mrb[0].mxu0
  %v5625 = vadd.f32 %v1650, %v5624
  %v5626 = vpop.f32.mrb[0].mxu0
  %v5627 = vadd.f32 %v1655, %v5626
  %v5628 = vpop.f32.mrb[0].mxu0
  %v5629 = vadd.f32 %v1655, %v5628
  %5630 = vmatprep.mubr.bf16.mxu0 0
  %5631 = vmatmul.mubr.bf16.gmra.mrb[0].mxu0 %v1737
  %v5632 = vpop.f32.mrb[0].mxu0
  %v5633 = vadd.f32 %v1660, %v5632
  %v5634 = vpop.f32.mrb[0].mxu0
  %v5635 = vadd.f32 %v1660, %v5634
  %v5636 = vpop.f32.mrb[0].mxu0
  %v5637 = vadd.f32 %v1665, %v5636
  %v5638 = vpop.f32.mrb[0].mxu0
  %v5639 = vadd.f32 %v1665, %v5638
  %5640 = vmatprep.mubr.bf16.mxu0 0
  %5641 = vmatmul.mubr.bf16.gmra.mrb[0].mxu0 %v1740
  %v5642 = vpop.f32.mrb[0].mxu0
  %v5643 = vadd.f32 %v1670, %v5642
  %v5644 = vpop.f32.mrb[0].mxu0
  %v5645 = vadd.f32 %v1670, %v5644
  %v5646 = vpop.f32.mrb[0].mxu0
  %v5647 = vadd.f32 %v1675, %v5646
  %v5648 = vpop.f32.mrb[0].mxu0
  %v5649 = vadd.f32 %v1675, %v5648
  %5650 = vdwg.mxu0
  %5651 = vmatprep.subr.bf16.mxu0 0
  %5652 = vmatpush1.bf16.xpose.msra.mxu0 %v2751
  %5653 = vmatprep.subr.bf16.mxu0 0
  %5654 = vmatpush1.bf16.xpose.msra.mxu0 %v2754
  %5655 = vmatprep.subr.bf16.mxu0 0
  %5656 = vmatpush1.bf16.xpose.msra.mxu0 %v2757
  %5657 = vmatprep.subr.bf16.mxu0 0
  %5658 = vmatpush1.bf16.xpose.msra.mxu0 %v2760
  %5659 = vmatprep.subr.bf16.mxu0 0
  %5660 = vmatpush1.bf16.xpose.msra.mxu0 %v2763
  %5661 = vmatprep.subr.bf16.mxu0 0
  %5662 = vmatpush1.bf16.xpose.msra.mxu0 %v2766
  %5663 = vmatprep.subr.bf16.mxu0 0
  %5664 = vmatpush1.bf16.xpose.msra.mxu0 %v2769
  %5665 = vmatprep.subr.bf16.mxu0 0
  %5666 = vmatpush1.bf16.xpose.msra.mxu0 %v2772
  %5667 = vmatprep.subr.bf16.mxu0 0
  %5668 = vmatpush1.bf16.xpose.msra.mxu0 %v2775
  %5669 = vmatprep.subr.bf16.mxu0 0
  %5670 = vmatpush1.bf16.xpose.msra.mxu0 %v2778
  %5671 = vmatprep.subr.bf16.mxu0 0
  %5672 = vmatpush1.bf16.xpose.msra.mxu0 %v2781
  %5673 = vmatprep.subr.bf16.mxu0 0
  %5674 = vmatpush1.bf16.xpose.msra.mxu0 %v2784
  %5675 = vmatprep.subr.bf16.mxu0 0
  %5676 = vmatpush1.bf16.xpose.msra.mxu0 %v2787
  %5677 = vmatprep.subr.bf16.mxu0 0
  %5678 = vmatpush1.bf16.xpose.msra.mxu0 %v2790
  %5679 = vmatprep.subr.bf16.mxu0 0
  %5680 = vmatpush1.bf16.xpose.msra.mxu0 %v2793
  %5681 = vmatprep.subr.bf16.mxu0 0
  %5682 = vmatpush1.bf16.xpose.msra.mxu0 %v2796
  %5683 = vmatprep.mubr.bf16.mxu0 0
  %5684 = vmatmul.mubr.bf16.gmra.mrb[0].mxu0 %v1719
  %v5685 = vpop.f32.mrb[0].mxu0
  %v5686 = vadd.f32 %v1600, %v5685
  %v5687 = vpop.f32.mrb[0].mxu0
  %v5688 = vadd.f32 %v1600, %v5687
  %v5689 = vpop.f32.mrb[0].mxu0
  %v5690 = vadd.f32 %v1605, %v5689
  %v5691 = vpop.f32.mrb[0].mxu0
  %v5692 = vadd.f32 %v1605, %v5691
  %5693 = vmatprep.mubr.bf16.mxu0 0
  %5694 = vmatmul.mubr.bf16.gmra.mrb[0].mxu0 %v1722
  %v5695 = vpop.f32.mrb[0].mxu0
  %v5696 = vadd.f32 %v1610, %v5695
  %v5697 = vpop.f32.mrb[0].mxu0
  %v5698 = vadd.f32 %v1610, %v5697
  %v5699 = vpop.f32.mrb[0].mxu0
  %v5700 = vadd.f32 %v1615, %v5699
  %v5701 = vpop.f32.mrb[0].mxu0
  %v5702 = vadd.f32 %v1615, %v5701
  %5703 = vmatprep.mubr.bf16.mxu0 0
  %5704 = vmatmul.mubr.bf16.gmra.mrb[0].mxu0 %v1725
  %v5705 = vpop.f32.mrb[0].mxu0
  %v5706 = vadd.f32 %v1620, %v5705
  %v5707 = vpop.f32.mrb[0].mxu0
  %v5708 = vadd.f32 %v1620, %v5707
  %v5709 = vpop.f32.mrb[0].mxu0
  %v5710 = vadd.f32 %v1625, %v5709
  %v5711 = vpop.f32.mrb[0].mxu0
  %v5712 = vadd.f32 %v1625, %v5711
  %5713 = vmatprep.mubr.bf16.mxu0 0
  %5714 = vmatmul.mubr.bf16.gmra.mrb[0].mxu0 %v1728
  %v5715 = vpop.f32.mrb[0].mxu0
  %v5716 = vadd.f32 %v1630, %v5715
  %v5717 = vpop.f32.mrb[0].mxu0
  %v5718 = vadd.f32 %v1630, %v5717
  %v5719 = vpop.f32.mrb[0].mxu0
  %v5720 = vadd.f32 %v1635, %v5719
  %v5721 = vpop.f32.mrb[0].mxu0
  %v5722 = vadd.f32 %v1635, %v5721
  %5723 = vmatprep.mubr.bf16.mxu0 0
  %5724 = vmatmul.mubr.bf16.gmra.mrb[0].mxu0 %v1731
  %v5725 = vpop.f32.mrb[0].mxu0
  %v5726 = vadd.f32 %v1640, %v5725
  %v5727 = vpop.f32.mrb[0].mxu0
  %v5728 = vadd.f32 %v1640, %v5727
  %v5729 = vpop.f32.mrb[0].mxu0
  %v5730 = vadd.f32 %v1645, %v5729
  %v5731 = vpop.f32.mrb[0].mxu0
  %v5732 = vadd.f32 %v1645, %v5731
  %5733 = vmatprep.mubr.bf16.mxu0 0
  %5734 = vmatmul.mubr.bf16.gmra.mrb[0].mxu0 %v1734
  %v5735 = vpop.f32.mrb[0].mxu0
  %v5736 = vadd.f32 %v1650, %v5735
  %v5737 = vpop.f32.mrb[0].mxu0
  %v5738 = vadd.f32 %v1650, %v5737
  %v5739 = vpop.f32.mrb[0].mxu0
  %v5740 = vadd.f32 %v1655, %v5739
  %v5741 = vpop.f32.mrb[0].mxu0
  %v5742 = vadd.f32 %v1655, %v5741
  %5743 = vmatprep.mubr.bf16.mxu0 0
  %5744 = vmatmul.mubr.bf16.gmra.mrb[0].mxu0 %v1737
  %v5745 = vpop.f32.mrb[0].mxu0
  %v5746 = vadd.f32 %v1660, %v5745
  %v5747 = vpop.f32.mrb[0].mxu0
  %v5748 = vadd.f32 %v1660, %v5747
  %v5749 = vpop.f32.mrb[0].mxu0
  %v5750 = vadd.f32 %v1665, %v5749
  %v5751 = vpop.f32.mrb[0].mxu0
  %v5752 = vadd.f32 %v1665, %v5751
  %5753 = vmatprep.mubr.bf16.mxu0 0
  %5754 = vmatmul.mubr.bf16.gmra.mrb[0].mxu0 %v1740
  %v5755 = vpop.f32.mrb[0].mxu0
  %v5756 = vadd.f32 %v1670, %v5755
  %v5757 = vpop.f32.mrb[0].mxu0
  %v5758 = vadd.f32 %v1670, %v5757
  %v5759 = vpop.f32.mrb[0].mxu0
  %v5760 = vadd.f32 %v1675, %v5759
  %v5761 = vpop.f32.mrb[0].mxu0
  %v5762 = vadd.f32 %v1675, %v5761
  %5763 = vdwg.mxu0
  %5764 = vmatprep.subr.bf16.mxu0 0
  %5765 = vmatpush1.bf16.xpose.msra.mxu0 %v2799
  %5766 = vmatprep.subr.bf16.mxu0 0
  %5767 = vmatpush1.bf16.xpose.msra.mxu0 %v2802
  %5768 = vmatprep.subr.bf16.mxu0 0
  %5769 = vmatpush1.bf16.xpose.msra.mxu0 %v2805
  %5770 = vmatprep.subr.bf16.mxu0 0
  %5771 = vmatpush1.bf16.xpose.msra.mxu0 %v2808
  %5772 = vmatprep.subr.bf16.mxu0 0
  %5773 = vmatpush1.bf16.xpose.msra.mxu0 %v2811
  %5774 = vmatprep.subr.bf16.mxu0 0
  %5775 = vmatpush1.bf16.xpose.msra.mxu0 %v2814
  %5776 = vmatprep.subr.bf16.mxu0 0
  %5777 = vmatpush1.bf16.xpose.msra.mxu0 %v2817
  %5778 = vmatprep.subr.bf16.mxu0 0
  %5779 = vmatpush1.bf16.xpose.msra.mxu0 %v2820
  %5780 = vmatprep.subr.bf16.mxu0 0
  %5781 = vmatpush1.bf16.xpose.msra.mxu0 %v2823
  %5782 = vmatprep.subr.bf16.mxu0 0
  %5783 = vmatpush1.bf16.xpose.msra.mxu0 %v2826
  %5784 = vmatprep.subr.bf16.mxu0 0
  %5785 = vmatpush1.bf16.xpose.msra.mxu0 %v2829
  %5786 = vmatprep.subr.bf16.mxu0 0
  %5787 = vmatpush1.bf16.xpose.msra.mxu0 %v2832
  %5788 = vmatprep.subr.bf16.mxu0 0
  %5789 = vmatpush1.bf16.xpose.msra.mxu0 %v2835
  %5790 = vmatprep.subr.bf16.mxu0 0
  %5791 = vmatpush1.bf16.xpose.msra.mxu0 %v2838
  %5792 = vmatprep.subr.bf16.mxu0 0
  %5793 = vmatpush1.bf16.xpose.msra.mxu0 %v2841
  %5794 = vmatprep.subr.bf16.mxu0 0
  %5795 = vmatpush1.bf16.xpose.msra.mxu0 %v2844
  %5796 = vmatprep.mubr.bf16.mxu0 0
  %5797 = vmatmul.mubr.bf16.gmra.mrb[0].mxu0 %v1719
  %v5798 = vpop.f32.mrb[0].mxu0
  %v5799 = vadd.f32 %v1600, %v5798
  %v5800 = vpop.f32.mrb[0].mxu0
  %v5801 = vadd.f32 %v1600, %v5800
  %v5802 = vpop.f32.mrb[0].mxu0
  %v5803 = vadd.f32 %v1605, %v5802
  %v5804 = vpop.f32.mrb[0].mxu0
  %v5805 = vadd.f32 %v1605, %v5804
  %5806 = vmatprep.mubr.bf16.mxu0 0
  %5807 = vmatmul.mubr.bf16.gmra.mrb[0].mxu0 %v1722
  %v5808 = vpop.f32.mrb[0].mxu0
  %v5809 = vadd.f32 %v1610, %v5808
  %v5810 = vpop.f32.mrb[0].mxu0
  %v5811 = vadd.f32 %v1610, %v5810
  %v5812 = vpop.f32.mrb[0].mxu0
  %v5813 = vadd.f32 %v1615, %v5812
  %v5814 = vpop.f32.mrb[0].mxu0
  %v5815 = vadd.f32 %v1615, %v5814
  %5816 = vmatprep.mubr.bf16.mxu0 0
  %5817 = vmatmul.mubr.bf16.gmra.mrb[0].mxu0 %v1725
  %v5818 = vpop.f32.mrb[0].mxu0
  %v5819 = vadd.f32 %v1620, %v5818
  %v5820 = vpop.f32.mrb[0].mxu0
  %v5821 = vadd.f32 %v1620, %v5820
  %v5822 = vpop.f32.mrb[0].mxu0
  %v5823 = vadd.f32 %v1625, %v5822
  %v5824 = vpop.f32.mrb[0].mxu0
  %v5825 = vadd.f32 %v1625, %v5824
  %5826 = vmatprep.mubr.bf16.mxu0 0
  %5827 = vmatmul.mubr.bf16.gmra.mrb[0].mxu0 %v1728
  %v5828 = vpop.f32.mrb[0].mxu0
  %v5829 = vadd.f32 %v1630, %v5828
  %v5830 = vpop.f32.mrb[0].mxu0
  %v5831 = vadd.f32 %v1630, %v5830
  %v5832 = vpop.f32.mrb[0].mxu0
  %v5833 = vadd.f32 %v1635, %v5832
  %v5834 = vpop.f32.mrb[0].mxu0
  %v5835 = vadd.f32 %v1635, %v5834
  %5836 = vmatprep.mubr.bf16.mxu0 0
  %5837 = vmatmul.mubr.bf16.gmra.mrb[0].mxu0 %v1731
  %v5838 = vpop.f32.mrb[0].mxu0
  %v5839 = vadd.f32 %v1640, %v5838
  %v5840 = vpop.f32.mrb[0].mxu0
  %v5841 = vadd.f32 %v1640, %v5840
  %v5842 = vpop.f32.mrb[0].mxu0
  %v5843 = vadd.f32 %v1645, %v5842
  %v5844 = vpop.f32.mrb[0].mxu0
  %v5845 = vadd.f32 %v1645, %v5844
  %5846 = vmatprep.mubr.bf16.mxu0 0
  %5847 = vmatmul.mubr.bf16.gmra.mrb[0].mxu0 %v1734
  %v5848 = vpop.f32.mrb[0].mxu0
  %v5849 = vadd.f32 %v1650, %v5848
  %v5850 = vpop.f32.mrb[0].mxu0
  %v5851 = vadd.f32 %v1650, %v5850
  %v5852 = vpop.f32.mrb[0].mxu0
  %v5853 = vadd.f32 %v1655, %v5852
  %v5854 = vpop.f32.mrb[0].mxu0
  %v5855 = vadd.f32 %v1655, %v5854
  %5856 = vmatprep.mubr.bf16.mxu0 0
  %5857 = vmatmul.mubr.bf16.gmra.mrb[0].mxu0 %v1737
  %v5858 = vpop.f32.mrb[0].mxu0
  %v5859 = vadd.f32 %v1660, %v5858
  %v5860 = vpop.f32.mrb[0].mxu0
  %v5861 = vadd.f32 %v1660, %v5860
  %v5862 = vpop.f32.mrb[0].mxu0
  %v5863 = vadd.f32 %v1665, %v5862
  %v5864 = vpop.f32.mrb[0].mxu0
  %v5865 = vadd.f32 %v1665, %v5864
  %5866 = vmatprep.mubr.bf16.mxu0 0
  %5867 = vmatmul.mubr.bf16.gmra.mrb[0].mxu0 %v1740
  %v5868 = vpop.f32.mrb[0].mxu0
  %v5869 = vadd.f32 %v1670, %v5868
  %v5870 = vpop.f32.mrb[0].mxu0
  %v5871 = vadd.f32 %v1670, %v5870
  %v5872 = vpop.f32.mrb[0].mxu0
  %v5873 = vadd.f32 %v1675, %v5872
  %v5874 = vpop.f32.mrb[0].mxu0
  %v5875 = vadd.f32 %v1675, %v5874
  %5876 = vdwg.mxu0
  %5877 = vmatprep.subr.bf16.mxu0 0
  %5878 = vmatpush1.bf16.xpose.msra.mxu0 %v2847
  %5879 = vmatprep.subr.bf16.mxu0 0
  %5880 = vmatpush1.bf16.xpose.msra.mxu0 %v2850
  %5881 = vmatprep.subr.bf16.mxu0 0
  %5882 = vmatpush1.bf16.xpose.msra.mxu0 %v2853
  %5883 = vmatprep.subr.bf16.mxu0 0
  %5884 = vmatpush1.bf16.xpose.msra.mxu0 %v2856
  %5885 = vmatprep.subr.bf16.mxu0 0
  %5886 = vmatpush1.bf16.xpose.msra.mxu0 %v2859
  %5887 = vmatprep.subr.bf16.mxu0 0
  %5888 = vmatpush1.bf16.xpose.msra.mxu0 %v2862
  %5889 = vmatprep.subr.bf16.mxu0 0
  %5890 = vmatpush1.bf16.xpose.msra.mxu0 %v2865
  %5891 = vmatprep.subr.bf16.mxu0 0
  %5892 = vmatpush1.bf16.xpose.msra.mxu0 %v2868
  %5893 = vmatprep.subr.bf16.mxu0 0
  %5894 = vmatpush1.bf16.xpose.msra.mxu0 %v2871
  %5895 = vmatprep.subr.bf16.mxu0 0
  %5896 = vmatpush1.bf16.xpose.msra.mxu0 %v2874
  %5897 = vmatprep.subr.bf16.mxu0 0
  %5898 = vmatpush1.bf16.xpose.msra.mxu0 %v2877
  %5899 = vmatprep.subr.bf16.mxu0 0
  %5900 = vmatpush1.bf16.xpose.msra.mxu0 %v2880
  %5901 = vmatprep.subr.bf16.mxu0 0
  %5902 = vmatpush1.bf16.xpose.msra.mxu0 %v2883
  %5903 = vmatprep.subr.bf16.mxu0 0
  %5904 = vmatpush1.bf16.xpose.msra.mxu0 %v2886
  %5905 = vmatprep.subr.bf16.mxu0 0
  %5906 = vmatpush1.bf16.xpose.msra.mxu0 %v2889
  %5907 = vmatprep.subr.bf16.mxu0 0
  %5908 = vmatpush1.bf16.xpose.msra.mxu0 %v2892
  %5909 = vmatprep.mubr.bf16.mxu0 0
  %5910 = vmatmul.mubr.bf16.gmra.mrb[0].mxu0 %v1719
  %v5911 = vpop.f32.mrb[0].mxu0
  %v5912 = vadd.f32 %v1600, %v5911
  %v5913 = vpop.f32.mrb[0].mxu0
  %v5914 = vadd.f32 %v1600, %v5913
  %v5915 = vpop.f32.mrb[0].mxu0
  %v5916 = vadd.f32 %v1605, %v5915
  %v5917 = vpop.f32.mrb[0].mxu0
  %v5918 = vadd.f32 %v1605, %v5917
  %5919 = vmatprep.mubr.bf16.mxu0 0
  %5920 = vmatmul.mubr.bf16.gmra.mrb[0].mxu0 %v1722
  %v5921 = vpop.f32.mrb[0].mxu0
  %v5922 = vadd.f32 %v1610, %v5921
  %v5923 = vpop.f32.mrb[0].mxu0
  %v5924 = vadd.f32 %v1610, %v5923
  %v5925 = vpop.f32.mrb[0].mxu0
  %v5926 = vadd.f32 %v1615, %v5925
  %v5927 = vpop.f32.mrb[0].mxu0
  %v5928 = vadd.f32 %v1615, %v5927
  %5929 = vmatprep.mubr.bf16.mxu0 0
  %5930 = vmatmul.mubr.bf16.gmra.mrb[0].mxu0 %v1725
  %v5931 = vpop.f32.mrb[0].mxu0
  %v5932 = vadd.f32 %v1620, %v5931
  %v5933 = vpop.f32.mrb[0].mxu0
  %v5934 = vadd.f32 %v1620, %v5933
  %v5935 = vpop.f32.mrb[0].mxu0
  %v5936 = vadd.f32 %v1625, %v5935
  %v5937 = vpop.f32.mrb[0].mxu0
  %v5938 = vadd.f32 %v1625, %v5937
  %5939 = vmatprep.mubr.bf16.mxu0 0
  %5940 = vmatmul.mubr.bf16.gmra.mrb[0].mxu0 %v1728
  %v5941 = vpop.f32.mrb[0].mxu0
  %v5942 = vadd.f32 %v1630, %v5941
  %v5943 = vpop.f32.mrb[0].mxu0
  %v5944 = vadd.f32 %v1630, %v5943
  %v5945 = vpop.f32.mrb[0].mxu0
  %v5946 = vadd.f32 %v1635, %v5945
  %v5947 = vpop.f32.mrb[0].mxu0
  %v5948 = vadd.f32 %v1635, %v5947
  %5949 = vmatprep.mubr.bf16.mxu0 0
  %5950 = vmatmul.mubr.bf16.gmra.mrb[0].mxu0 %v1731
  %v5951 = vpop.f32.mrb[0].mxu0
  %v5952 = vadd.f32 %v1640, %v5951
  %v5953 = vpop.f32.mrb[0].mxu0
  %v5954 = vadd.f32 %v1640, %v5953
  %v5955 = vpop.f32.mrb[0].mxu0
  %v5956 = vadd.f32 %v1645, %v5955
  %v5957 = vpop.f32.mrb[0].mxu0
  %v5958 = vadd.f32 %v1645, %v5957
  %5959 = vmatprep.mubr.bf16.mxu0 0
  %5960 = vmatmul.mubr.bf16.gmra.mrb[0].mxu0 %v1734
  %v5961 = vpop.f32.mrb[0].mxu0
  %v5962 = vadd.f32 %v1650, %v5961
  %v5963 = vpop.f32.mrb[0].mxu0
  %v5964 = vadd.f32 %v1650, %v5963
  %v5965 = vpop.f32.mrb[0].mxu0
  %v5966 = vadd.f32 %v1655, %v5965
  %v5967 = vpop.f32.mrb[0].mxu0
  %v5968 = vadd.f32 %v1655, %v5967
  %5969 = vmatprep.mubr.bf16.mxu0 0
  %5970 = vmatmul.mubr.bf16.gmra.mrb[0].mxu0 %v1737
  %v5971 = vpop.f32.mrb[0].mxu0
  %v5972 = vadd.f32 %v1660, %v5971
  %v5973 = vpop.f32.mrb[0].mxu0
  %v5974 = vadd.f32 %v1660, %v5973
  %v5975 = vpop.f32.mrb[0].mxu0
  %v5976 = vadd.f32 %v1665, %v5975
  %v5977 = vpop.f32.mrb[0].mxu0
  %v5978 = vadd.f32 %v1665, %v5977
  %5979 = vmatprep.mubr.bf16.mxu0 0
  %5980 = vmatmul.mubr.bf16.gmra.mrb[0].mxu0 %v1740
  %v5981 = vpop.f32.mrb[0].mxu0
  %v5982 = vadd.f32 %v1670, %v5981
  %v5983 = vpop.f32.mrb[0].mxu0
  %v5984 = vadd.f32 %v1670, %v5983
  %v5985 = vpop.f32.mrb[0].mxu0
  %v5986 = vadd.f32 %v1675, %v5985
  %v5987 = vpop.f32.mrb[0].mxu0
  %v5988 = vadd.f32 %v1675, %v5987
  %5989 = vdwg.mxu0
  %5990 = vmatprep.subr.bf16.mxu0 0
  %5991 = vmatpush1.bf16.xpose.msra.mxu0 %v2895
  %5992 = vmatprep.subr.bf16.mxu0 0
  %5993 = vmatpush1.bf16.xpose.msra.mxu0 %v2898
  %5994 = vmatprep.subr.bf16.mxu0 0
  %5995 = vmatpush1.bf16.xpose.msra.mxu0 %v2901
  %5996 = vmatprep.subr.bf16.mxu0 0
  %5997 = vmatpush1.bf16.xpose.msra.mxu0 %v2904
  %5998 = vmatprep.subr.bf16.mxu0 0
  %5999 = vmatpush1.bf16.xpose.msra.mxu0 %v2907
  %6000 = vmatprep.subr.bf16.mxu0 0
  %6001 = vmatpush1.bf16.xpose.msra.mxu0 %v2910
  %6002 = vmatprep.subr.bf16.mxu0 0
  %6003 = vmatpush1.bf16.xpose.msra.mxu0 %v2913
  %6004 = vmatprep.subr.bf16.mxu0 0
  %6005 = vmatpush1.bf16.xpose.msra.mxu0 %v2916
  %6006 = vmatprep.subr.bf16.mxu0 0
  %6007 = vmatpush1.bf16.xpose.msra.mxu0 %v2919
  %6008 = vmatprep.subr.bf16.mxu0 0
  %6009 = vmatpush1.bf16.xpose.msra.mxu0 %v2922
  %6010 = vmatprep.subr.bf16.mxu0 0
  %6011 = vmatpush1.bf16.xpose.msra.mxu0 %v2925
  %6012 = vmatprep.subr.bf16.mxu0 0
  %6013 = vmatpush1.bf16.xpose.msra.mxu0 %v2928
  %6014 = vmatprep.subr.bf16.mxu0 0
  %6015 = vmatpush1.bf16.xpose.msra.mxu0 %v2931
  %6016 = vmatprep.subr.bf16.mxu0 0
  %6017 = vmatpush1.bf16.xpose.msra.mxu0 %v2934
  %6018 = vmatprep.subr.bf16.mxu0 0
  %6019 = vmatpush1.bf16.xpose.msra.mxu0 %v2937
  %6020 = vmatprep.subr.bf16.mxu0 0
  %6021 = vmatpush1.bf16.xpose.msra.mxu0 %v2940
  %6022 = vmatprep.mubr.bf16.mxu0 0
  %6023 = vmatmul.mubr.bf16.gmra.mrb[0].mxu0 %v1719
  %v6024 = vpop.f32.mrb[0].mxu0
  %v6025 = vadd.f32 %v1600, %v6024
  %v6026 = vpop.f32.mrb[0].mxu0
  %v6027 = vadd.f32 %v1600, %v6026
  %v6028 = vpop.f32.mrb[0].mxu0
  %v6029 = vadd.f32 %v1605, %v6028
  %v6030 = vpop.f32.mrb[0].mxu0
  %v6031 = vadd.f32 %v1605, %v6030
  %6032 = vmatprep.mubr.bf16.mxu0 0
  %6033 = vmatmul.mubr.bf16.gmra.mrb[0].mxu0 %v1722
  %v6034 = vpop.f32.mrb[0].mxu0
  %v6035 = vadd.f32 %v1610, %v6034
  %v6036 = vpop.f32.mrb[0].mxu0
  %v6037 = vadd.f32 %v1610, %v6036
  %v6038 = vpop.f32.mrb[0].mxu0
  %v6039 = vadd.f32 %v1615, %v6038
  %v6040 = vpop.f32.mrb[0].mxu0
  %v6041 = vadd.f32 %v1615, %v6040
  %6042 = vmatprep.mubr.bf16.mxu0 0
  %6043 = vmatmul.mubr.bf16.gmra.mrb[0].mxu0 %v1725
  %v6044 = vpop.f32.mrb[0].mxu0
  %v6045 = vadd.f32 %v1620, %v6044
  %v6046 = vpop.f32.mrb[0].mxu0
  %v6047 = vadd.f32 %v1620, %v6046
  %v6048 = vpop.f32.mrb[0].mxu0
  %v6049 = vadd.f32 %v1625, %v6048
  %v6050 = vpop.f32.mrb[0].mxu0
  %v6051 = vadd.f32 %v1625, %v6050
  %6052 = vmatprep.mubr.bf16.mxu0 0
  %6053 = vmatmul.mubr.bf16.gmra.mrb[0].mxu0 %v1728
  %v6054 = vpop.f32.mrb[0].mxu0
  %v6055 = vadd.f32 %v1630, %v6054
  %v6056 = vpop.f32.mrb[0].mxu0
  %v6057 = vadd.f32 %v1630, %v6056
  %v6058 = vpop.f32.mrb[0].mxu0
  %v6059 = vadd.f32 %v1635, %v6058
  %v6060 = vpop.f32.mrb[0].mxu0
  %v6061 = vadd.f32 %v1635, %v6060
  %6062 = vmatprep.mubr.bf16.mxu0 0
  %6063 = vmatmul.mubr.bf16.gmra.mrb[0].mxu0 %v1731
  %v6064 = vpop.f32.mrb[0].mxu0
  %v6065 = vadd.f32 %v1640, %v6064
  %v6066 = vpop.f32.mrb[0].mxu0
  %v6067 = vadd.f32 %v1640, %v6066
  %v6068 = vpop.f32.mrb[0].mxu0
  %v6069 = vadd.f32 %v1645, %v6068
  %v6070 = vpop.f32.mrb[0].mxu0
  %v6071 = vadd.f32 %v1645, %v6070
  %6072 = vmatprep.mubr.bf16.mxu0 0
  %6073 = vmatmul.mubr.bf16.gmra.mrb[0].mxu0 %v1734
  %v6074 = vpop.f32.mrb[0].mxu0
  %v6075 = vadd.f32 %v1650, %v6074
  %v6076 = vpop.f32.mrb[0].mxu0
  %v6077 = vadd.f32 %v1650, %v6076
  %v6078 = vpop.f32.mrb[0].mxu0
  %v6079 = vadd.f32 %v1655, %v6078
  %v6080 = vpop.f32.mrb[0].mxu0
  %v6081 = vadd.f32 %v1655, %v6080
  %6082 = vmatprep.mubr.bf16.mxu0 0
  %6083 = vmatmul.mubr.bf16.gmra.mrb[0].mxu0 %v1737
  %v6084 = vpop.f32.mrb[0].mxu0
  %v6085 = vadd.f32 %v1660, %v6084
  %v6086 = vpop.f32.mrb[0].mxu0
  %v6087 = vadd.f32 %v1660, %v6086
  %v6088 = vpop.f32.mrb[0].mxu0
  %v6089 = vadd.f32 %v1665, %v6088
  %v6090 = vpop.f32.mrb[0].mxu0
  %v6091 = vadd.f32 %v1665, %v6090
  %6092 = vmatprep.mubr.bf16.mxu0 0
  %6093 = vmatmul.mubr.bf16.gmra.mrb[0].mxu0 %v1740
  %v6094 = vpop.f32.mrb[0].mxu0
  %v6095 = vadd.f32 %v1670, %v6094
  %v6096 = vpop.f32.mrb[0].mxu0
  %v6097 = vadd.f32 %v1670, %v6096
  %v6098 = vpop.f32.mrb[0].mxu0
  %v6099 = vadd.f32 %v1675, %v6098
  %v6100 = vpop.f32.mrb[0].mxu0
  %v6101 = vadd.f32 %v1675, %v6100
  %6102 = vdwg.mxu0
  %6103 = vmatprep.subr.bf16.mxu0 0
  %6104 = vmatpush1.bf16.xpose.msra.mxu0 %v2943
  %6105 = vmatprep.subr.bf16.mxu0 0
  %6106 = vmatpush1.bf16.xpose.msra.mxu0 %v2946
  %6107 = vmatprep.subr.bf16.mxu0 0
  %6108 = vmatpush1.bf16.xpose.msra.mxu0 %v2949
  %6109 = vmatprep.subr.bf16.mxu0 0
  %6110 = vmatpush1.bf16.xpose.msra.mxu0 %v2952
  %6111 = vmatprep.subr.bf16.mxu0 0
  %6112 = vmatpush1.bf16.xpose.msra.mxu0 %v2955
  %6113 = vmatprep.subr.bf16.mxu0 0
  %6114 = vmatpush1.bf16.xpose.msra.mxu0 %v2958
  %6115 = vmatprep.subr.bf16.mxu0 0
  %6116 = vmatpush1.bf16.xpose.msra.mxu0 %v2961
  %6117 = vmatprep.subr.bf16.mxu0 0
  %6118 = vmatpush1.bf16.xpose.msra.mxu0 %v2964
  %6119 = vmatprep.subr.bf16.mxu0 0
  %6120 = vmatpush1.bf16.xpose.msra.mxu0 %v2967
  %6121 = vmatprep.subr.bf16.mxu0 0
  %6122 = vmatpush1.bf16.xpose.msra.mxu0 %v2970
  %6123 = vmatprep.subr.bf16.mxu0 0
  %6124 = vmatpush1.bf16.xpose.msra.mxu0 %v2973
  %6125 = vmatprep.subr.bf16.mxu0 0
  %6126 = vmatpush1.bf16.xpose.msra.mxu0 %v2976
  %6127 = vmatprep.subr.bf16.mxu0 0
  %6128 = vmatpush1.bf16.xpose.msra.mxu0 %v2979
  %6129 = vmatprep.subr.bf16.mxu0 0
  %6130 = vmatpush1.bf16.xpose.msra.mxu0 %v2982
  %6131 = vmatprep.subr.bf16.mxu0 0
  %6132 = vmatpush1.bf16.xpose.msra.mxu0 %v2985
  %6133 = vmatprep.subr.bf16.mxu0 0
  %6134 = vmatpush1.bf16.xpose.msra.mxu0 %v2988
  %6135 = vmatprep.mubr.bf16.mxu0 0
  %6136 = vmatmul.mubr.bf16.gmra.mrb[0].mxu0 %v1719
  %v6137 = vpop.f32.mrb[0].mxu0
  %v6138 = vadd.f32 %v1600, %v6137
  %v6139 = vpop.f32.mrb[0].mxu0
  %v6140 = vadd.f32 %v1600, %v6139
  %v6141 = vpop.f32.mrb[0].mxu0
  %v6142 = vadd.f32 %v1605, %v6141
  %v6143 = vpop.f32.mrb[0].mxu0
  %v6144 = vadd.f32 %v1605, %v6143
  %6145 = vmatprep.mubr.bf16.mxu0 0
  %6146 = vmatmul.mubr.bf16.gmra.mrb[0].mxu0 %v1722
  %v6147 = vpop.f32.mrb[0].mxu0
  %v6148 = vadd.f32 %v1610, %v6147
  %v6149 = vpop.f32.mrb[0].mxu0
  %v6150 = vadd.f32 %v1610, %v6149
  %v6151 = vpop.f32.mrb[0].mxu0
  %v6152 = vadd.f32 %v1615, %v6151
  %v6153 = vpop.f32.mrb[0].mxu0
  %v6154 = vadd.f32 %v1615, %v6153
  %6155 = vmatprep.mubr.bf16.mxu0 0
  %6156 = vmatmul.mubr.bf16.gmra.mrb[0].mxu0 %v1725
  %v6157 = vpop.f32.mrb[0].mxu0
  %v6158 = vadd.f32 %v1620, %v6157
  %v6159 = vpop.f32.mrb[0].mxu0
  %v6160 = vadd.f32 %v1620, %v6159
  %v6161 = vpop.f32.mrb[0].mxu0
  %v6162 = vadd.f32 %v1625, %v6161
  %v6163 = vpop.f32.mrb[0].mxu0
  %v6164 = vadd.f32 %v1625, %v6163
  %6165 = vmatprep.mubr.bf16.mxu0 0
  %6166 = vmatmul.mubr.bf16.gmra.mrb[0].mxu0 %v1728
  %v6167 = vpop.f32.mrb[0].mxu0
  %v6168 = vadd.f32 %v1630, %v6167
  %v6169 = vpop.f32.mrb[0].mxu0
  %v6170 = vadd.f32 %v1630, %v6169
  %v6171 = vpop.f32.mrb[0].mxu0
  %v6172 = vadd.f32 %v1635, %v6171
  %v6173 = vpop.f32.mrb[0].mxu0
  %v6174 = vadd.f32 %v1635, %v6173
  %6175 = vmatprep.mubr.bf16.mxu0 0
  %6176 = vmatmul.mubr.bf16.gmra.mrb[0].mxu0 %v1731
  %v6177 = vpop.f32.mrb[0].mxu0
  %v6178 = vadd.f32 %v1640, %v6177
  %v6179 = vpop.f32.mrb[0].mxu0
  %v6180 = vadd.f32 %v1640, %v6179
  %v6181 = vpop.f32.mrb[0].mxu0
  %v6182 = vadd.f32 %v1645, %v6181
  %v6183 = vpop.f32.mrb[0].mxu0
  %v6184 = vadd.f32 %v1645, %v6183
  %6185 = vmatprep.mubr.bf16.mxu0 0
  %6186 = vmatmul.mubr.bf16.gmra.mrb[0].mxu0 %v1734
  %v6187 = vpop.f32.mrb[0].mxu0
  %v6188 = vadd.f32 %v1650, %v6187
  %v6189 = vpop.f32.mrb[0].mxu0
  %v6190 = vadd.f32 %v1650, %v6189
  %v6191 = vpop.f32.mrb[0].mxu0
  %v6192 = vadd.f32 %v1655, %v6191
  %v6193 = vpop.f32.mrb[0].mxu0
  %v6194 = vadd.f32 %v1655, %v6193
  %6195 = vmatprep.mubr.bf16.mxu0 0
  %6196 = vmatmul.mubr.bf16.gmra.mrb[0].mxu0 %v1737
  %v6197 = vpop.f32.mrb[0].mxu0
  %v6198 = vadd.f32 %v1660, %v6197
  %v6199 = vpop.f32.mrb[0].mxu0
  %v6200 = vadd.f32 %v1660, %v6199
  %v6201 = vpop.f32.mrb[0].mxu0
  %v6202 = vadd.f32 %v1665, %v6201
  %v6203 = vpop.f32.mrb[0].mxu0
  %v6204 = vadd.f32 %v1665, %v6203
  %6205 = vmatprep.mubr.bf16.mxu0 0
  %6206 = vmatmul.mubr.bf16.gmra.mrb[0].mxu0 %v1740
  %v6207 = vpop.f32.mrb[0].mxu0
  %v6208 = vadd.f32 %v1670, %v6207
  %v6209 = vpop.f32.mrb[0].mxu0
  %v6210 = vadd.f32 %v1670, %v6209
  %v6211 = vpop.f32.mrb[0].mxu0
  %v6212 = vadd.f32 %v1675, %v6211
  %v6213 = vpop.f32.mrb[0].mxu0
  %v6214 = vadd.f32 %v1675, %v6213
  %6215 = vdwg.mxu0
  %6216 = vmatprep.subr.bf16.mxu0 0
  %6217 = vmatpush1.bf16.xpose.msra.mxu0 %v2991
  %6218 = vmatprep.subr.bf16.mxu0 0
  %6219 = vmatpush1.bf16.xpose.msra.mxu0 %v2994
  %6220 = vmatprep.subr.bf16.mxu0 0
  %6221 = vmatpush1.bf16.xpose.msra.mxu0 %v2997
  %6222 = vmatprep.subr.bf16.mxu0 0
  %6223 = vmatpush1.bf16.xpose.msra.mxu0 %v3000
  %6224 = vmatprep.subr.bf16.mxu0 0
  %6225 = vmatpush1.bf16.xpose.msra.mxu0 %v3003
  %6226 = vmatprep.subr.bf16.mxu0 0
  %6227 = vmatpush1.bf16.xpose.msra.mxu0 %v3006
  %6228 = vmatprep.subr.bf16.mxu0 0
  %6229 = vmatpush1.bf16.xpose.msra.mxu0 %v3009
  %6230 = vmatprep.subr.bf16.mxu0 0
  %6231 = vmatpush1.bf16.xpose.msra.mxu0 %v3012
  %6232 = vmatprep.subr.bf16.mxu0 0
  %6233 = vmatpush1.bf16.xpose.msra.mxu0 %v3015
  %6234 = vmatprep.subr.bf16.mxu0 0
  %6235 = vmatpush1.bf16.xpose.msra.mxu0 %v3018
  %6236 = vmatprep.subr.bf16.mxu0 0
  %6237 = vmatpush1.bf16.xpose.msra.mxu0 %v3021
  %6238 = vmatprep.subr.bf16.mxu0 0
  %6239 = vmatpush1.bf16.xpose.msra.mxu0 %v3024
  %6240 = vmatprep.subr.bf16.mxu0 0
  %6241 = vmatpush1.bf16.xpose.msra.mxu0 %v3027
  %6242 = vmatprep.subr.bf16.mxu0 0
  %6243 = vmatpush1.bf16.xpose.msra.mxu0 %v3030
  %6244 = vmatprep.subr.bf16.mxu0 0
  %6245 = vmatpush1.bf16.xpose.msra.mxu0 %v3033
  %6246 = vmatprep.subr.bf16.mxu0 0
  %6247 = vmatpush1.bf16.xpose.msra.mxu0 %v3036
  %6248 = vmatprep.mubr.bf16.mxu0 0
  %6249 = vmatmul.mubr.bf16.gmra.mrb[0].mxu0 %v1719
  %v6250 = vpop.f32.mrb[0].mxu0
  %v6251 = vadd.f32 %v1600, %v6250
  %v6252 = vpop.f32.mrb[0].mxu0
  %v6253 = vadd.f32 %v1600, %v6252
  %v6254 = vpop.f32.mrb[0].mxu0
  %v6255 = vadd.f32 %v1605, %v6254
  %v6256 = vpop.f32.mrb[0].mxu0
  %v6257 = vadd.f32 %v1605, %v6256
  %6258 = vmatprep.mubr.bf16.mxu0 0
  %6259 = vmatmul.mubr.bf16.gmra.mrb[0].mxu0 %v1722
  %v6260 = vpop.f32.mrb[0].mxu0
  %v6261 = vadd.f32 %v1610, %v6260
  %v6262 = vpop.f32.mrb[0].mxu0
  %v6263 = vadd.f32 %v1610, %v6262
  %v6264 = vpop.f32.mrb[0].mxu0
  %v6265 = vadd.f32 %v1615, %v6264
  %v6266 = vpop.f32.mrb[0].mxu0
  %v6267 = vadd.f32 %v1615, %v6266
  %6268 = vmatprep.mubr.bf16.mxu0 0
  %6269 = vmatmul.mubr.bf16.gmra.mrb[0].mxu0 %v1725
  %v6270 = vpop.f32.mrb[0].mxu0
  %v6271 = vadd.f32 %v1620, %v6270
  %v6272 = vpop.f32.mrb[0].mxu0
  %v6273 = vadd.f32 %v1620, %v6272
  %v6274 = vpop.f32.mrb[0].mxu0
  %v6275 = vadd.f32 %v1625, %v6274
  %v6276 = vpop.f32.mrb[0].mxu0
  %v6277 = vadd.f32 %v1625, %v6276
  %6278 = vmatprep.mubr.bf16.mxu0 0
  %6279 = vmatmul.mubr.bf16.gmra.mrb[0].mxu0 %v1728
  %v6280 = vpop.f32.mrb[0].mxu0
  %v6281 = vadd.f32 %v1630, %v6280
  %v6282 = vpop.f32.mrb[0].mxu0
  %v6283 = vadd.f32 %v1630, %v6282
  %v6284 = vpop.f32.mrb[0].mxu0
  %v6285 = vadd.f32 %v1635, %v6284
  %v6286 = vpop.f32.mrb[0].mxu0
  %v6287 = vadd.f32 %v1635, %v6286
  %6288 = vmatprep.mubr.bf16.mxu0 0
  %6289 = vmatmul.mubr.bf16.gmra.mrb[0].mxu0 %v1731
  %v6290 = vpop.f32.mrb[0].mxu0
  %v6291 = vadd.f32 %v1640, %v6290
  %v6292 = vpop.f32.mrb[0].mxu0
  %v6293 = vadd.f32 %v1640, %v6292
  %v6294 = vpop.f32.mrb[0].mxu0
  %v6295 = vadd.f32 %v1645, %v6294
  %v6296 = vpop.f32.mrb[0].mxu0
  %v6297 = vadd.f32 %v1645, %v6296
  %6298 = vmatprep.mubr.bf16.mxu0 0
  %6299 = vmatmul.mubr.bf16.gmra.mrb[0].mxu0 %v1734
  %v6300 = vpop.f32.mrb[0].mxu0
  %v6301 = vadd.f32 %v1650, %v6300
  %v6302 = vpop.f32.mrb[0].mxu0
  %v6303 = vadd.f32 %v1650, %v6302
  %v6304 = vpop.f32.mrb[0].mxu0
  %v6305 = vadd.f32 %v1655, %v6304
  %v6306 = vpop.f32.mrb[0].mxu0
  %v6307 = vadd.f32 %v1655, %v6306
  %6308 = vmatprep.mubr.bf16.mxu0 0
  %6309 = vmatmul.mubr.bf16.gmra.mrb[0].mxu0 %v1737
  %v6310 = vpop.f32.mrb[0].mxu0
  %v6311 = vadd.f32 %v1660, %v6310
  %v6312 = vpop.f32.mrb[0].mxu0
  %v6313 = vadd.f32 %v1660, %v6312
  %v6314 = vpop.f32.mrb[0].mxu0
  %v6315 = vadd.f32 %v1665, %v6314
  %v6316 = vpop.f32.mrb[0].mxu0
  %v6317 = vadd.f32 %v1665, %v6316
  %6318 = vmatprep.mubr.bf16.mxu0 0
  %6319 = vmatmul.mubr.bf16.gmra.mrb[0].mxu0 %v1740
  %v6320 = vpop.f32.mrb[0].mxu0
  %v6321 = vadd.f32 %v1670, %v6320
  %v6322 = vpop.f32.mrb[0].mxu0
  %v6323 = vadd.f32 %v1670, %v6322
  %v6324 = vpop.f32.mrb[0].mxu0
  %v6325 = vadd.f32 %v1675, %v6324
  %v6326 = vpop.f32.mrb[0].mxu0
  %v6327 = vadd.f32 %v1675, %v6326
  %6328 = vdwg.mxu0
  %6329 = vmatprep.subr.bf16.mxu0 0
  %6330 = vmatpush1.bf16.xpose.msra.mxu0 %v3039
  %6331 = vmatprep.subr.bf16.mxu0 0
  %6332 = vmatpush1.bf16.xpose.msra.mxu0 %v3042
  %6333 = vmatprep.subr.bf16.mxu0 0
  %6334 = vmatpush1.bf16.xpose.msra.mxu0 %v3045
  %6335 = vmatprep.subr.bf16.mxu0 0
  %6336 = vmatpush1.bf16.xpose.msra.mxu0 %v3048
  %6337 = vmatprep.subr.bf16.mxu0 0
  %6338 = vmatpush1.bf16.xpose.msra.mxu0 %v3051
  %6339 = vmatprep.subr.bf16.mxu0 0
  %6340 = vmatpush1.bf16.xpose.msra.mxu0 %v3054
  %6341 = vmatprep.subr.bf16.mxu0 0
  %6342 = vmatpush1.bf16.xpose.msra.mxu0 %v3057
  %6343 = vmatprep.subr.bf16.mxu0 0
  %6344 = vmatpush1.bf16.xpose.msra.mxu0 %v3060
  %6345 = vmatprep.subr.bf16.mxu0 0
  %6346 = vmatpush1.bf16.xpose.msra.mxu0 %v3063
  %6347 = vmatprep.subr.bf16.mxu0 0
  %6348 = vmatpush1.bf16.xpose.msra.mxu0 %v3066
  %6349 = vmatprep.subr.bf16.mxu0 0
  %6350 = vmatpush1.bf16.xpose.msra.mxu0 %v3069
  %6351 = vmatprep.subr.bf16.mxu0 0
  %6352 = vmatpush1.bf16.xpose.msra.mxu0 %v3072
  %6353 = vmatprep.subr.bf16.mxu0 0
  %6354 = vmatpush1.bf16.xpose.msra.mxu0 %v3075
  %6355 = vmatprep.subr.bf16.mxu0 0
  %6356 = vmatpush1.bf16.xpose.msra.mxu0 %v3078
  %6357 = vmatprep.subr.bf16.mxu0 0
  %6358 = vmatpush1.bf16.xpose.msra.mxu0 %v3081
  %6359 = vmatprep.subr.bf16.mxu0 0
  %6360 = vmatpush1.bf16.xpose.msra.mxu0 %v3084
  %6361 = vmatprep.mubr.bf16.mxu0 0
  %6362 = vmatmul.mubr.bf16.gmra.mrb[0].mxu0 %v1719
  %v6363 = vpop.f32.mrb[0].mxu0
  %v6364 = vadd.f32 %v1600, %v6363
  %v6365 = vpop.f32.mrb[0].mxu0
  %v6366 = vadd.f32 %v1600, %v6365
  %v6367 = vpop.f32.mrb[0].mxu0
  %v6368 = vadd.f32 %v1605, %v6367
  %v6369 = vpop.f32.mrb[0].mxu0
  %v6370 = vadd.f32 %v1605, %v6369
  %6371 = vmatprep.mubr.bf16.mxu0 0
  %6372 = vmatmul.mubr.bf16.gmra.mrb[0].mxu0 %v1722
  %v6373 = vpop.f32.mrb[0].mxu0
  %v6374 = vadd.f32 %v1610, %v6373
  %v6375 = vpop.f32.mrb[0].mxu0
  %v6376 = vadd.f32 %v1610, %v6375
  %v6377 = vpop.f32.mrb[0].mxu0
  %v6378 = vadd.f32 %v1615, %v6377
  %v6379 = vpop.f32.mrb[0].mxu0
  %v6380 = vadd.f32 %v1615, %v6379
  %6381 = vmatprep.mubr.bf16.mxu0 0
  %6382 = vmatmul.mubr.bf16.gmra.mrb[0].mxu0 %v1725
  %v6383 = vpop.f32.mrb[0].mxu0
  %v6384 = vadd.f32 %v1620, %v6383
  %v6385 = vpop.f32.mrb[0].mxu0
  %v6386 = vadd.f32 %v1620, %v6385
  %v6387 = vpop.f32.mrb[0].mxu0
  %v6388 = vadd.f32 %v1625, %v6387
  %v6389 = vpop.f32.mrb[0].mxu0
  %v6390 = vadd.f32 %v1625, %v6389
  %6391 = vmatprep.mubr.bf16.mxu0 0
  %6392 = vmatmul.mubr.bf16.gmra.mrb[0].mxu0 %v1728
  %v6393 = vpop.f32.mrb[0].mxu0
  %v6394 = vadd.f32 %v1630, %v6393
  %v6395 = vpop.f32.mrb[0].mxu0
  %v6396 = vadd.f32 %v1630, %v6395
  %v6397 = vpop.f32.mrb[0].mxu0
  %v6398 = vadd.f32 %v1635, %v6397
  %v6399 = vpop.f32.mrb[0].mxu0
  %v6400 = vadd.f32 %v1635, %v6399
  %6401 = vmatprep.mubr.bf16.mxu0 0
  %6402 = vmatmul.mubr.bf16.gmra.mrb[0].mxu0 %v1731
  %v6403 = vpop.f32.mrb[0].mxu0
  %v6404 = vadd.f32 %v1640, %v6403
  %v6405 = vpop.f32.mrb[0].mxu0
  %v6406 = vadd.f32 %v1640, %v6405
  %v6407 = vpop.f32.mrb[0].mxu0
  %v6408 = vadd.f32 %v1645, %v6407
  %v6409 = vpop.f32.mrb[0].mxu0
  %v6410 = vadd.f32 %v1645, %v6409
  %6411 = vmatprep.mubr.bf16.mxu0 0
  %6412 = vmatmul.mubr.bf16.gmra.mrb[0].mxu0 %v1734
  %v6413 = vpop.f32.mrb[0].mxu0
  %v6414 = vadd.f32 %v1650, %v6413
  %v6415 = vpop.f32.mrb[0].mxu0
  %v6416 = vadd.f32 %v1650, %v6415
  %v6417 = vpop.f32.mrb[0].mxu0
  %v6418 = vadd.f32 %v1655, %v6417
  %v6419 = vpop.f32.mrb[0].mxu0
  %v6420 = vadd.f32 %v1655, %v6419
  %6421 = vmatprep.mubr.bf16.mxu0 0
  %6422 = vmatmul.mubr.bf16.gmra.mrb[0].mxu0 %v1737
  %v6423 = vpop.f32.mrb[0].mxu0
  %v6424 = vadd.f32 %v1660, %v6423
  %v6425 = vpop.f32.mrb[0].mxu0
  %v6426 = vadd.f32 %v1660, %v6425
  %v6427 = vpop.f32.mrb[0].mxu0
  %v6428 = vadd.f32 %v1665, %v6427
  %v6429 = vpop.f32.mrb[0].mxu0
  %v6430 = vadd.f32 %v1665, %v6429
  %6431 = vmatprep.mubr.bf16.mxu0 0
  %6432 = vmatmul.mubr.bf16.gmra.mrb[0].mxu0 %v1740
  %v6433 = vpop.f32.mrb[0].mxu0
  %v6434 = vadd.f32 %v1670, %v6433
  %v6435 = vpop.f32.mrb[0].mxu0
  %v6436 = vadd.f32 %v1670, %v6435
  %v6437 = vpop.f32.mrb[0].mxu0
  %v6438 = vadd.f32 %v1675, %v6437
  %v6439 = vpop.f32.mrb[0].mxu0
  %v6440 = vadd.f32 %v1675, %v6439
  %6441 = vdwg.mxu0
  %6442 = vmatprep.subr.bf16.mxu0 0
  %6443 = vmatpush1.bf16.xpose.msra.mxu0 %v3087
  %6444 = vmatprep.subr.bf16.mxu0 0
  %6445 = vmatpush1.bf16.xpose.msra.mxu0 %v3090
  %6446 = vmatprep.subr.bf16.mxu0 0
  %6447 = vmatpush1.bf16.xpose.msra.mxu0 %v3093
  %6448 = vmatprep.subr.bf16.mxu0 0
  %6449 = vmatpush1.bf16.xpose.msra.mxu0 %v3096
  %6450 = vmatprep.subr.bf16.mxu0 0
  %6451 = vmatpush1.bf16.xpose.msra.mxu0 %v3099
  %6452 = vmatprep.subr.bf16.mxu0 0
  %6453 = vmatpush1.bf16.xpose.msra.mxu0 %v3102
  %6454 = vmatprep.subr.bf16.mxu0 0
  %6455 = vmatpush1.bf16.xpose.msra.mxu0 %v3105
  %6456 = vmatprep.subr.bf16.mxu0 0
  %6457 = vmatpush1.bf16.xpose.msra.mxu0 %v3108
  %6458 = vmatprep.subr.bf16.mxu0 0
  %6459 = vmatpush1.bf16.xpose.msra.mxu0 %v3111
  %6460 = vmatprep.subr.bf16.mxu0 0
  %6461 = vmatpush1.bf16.xpose.msra.mxu0 %v3114
  %6462 = vmatprep.subr.bf16.mxu0 0
  %6463 = vmatpush1.bf16.xpose.msra.mxu0 %v3117
  %6464 = vmatprep.subr.bf16.mxu0 0
  %6465 = vmatpush1.bf16.xpose.msra.mxu0 %v3120
  %6466 = vmatprep.subr.bf16.mxu0 0
  %6467 = vmatpush1.bf16.xpose.msra.mxu0 %v3123
  %6468 = vmatprep.subr.bf16.mxu0 0
  %6469 = vmatpush1.bf16.xpose.msra.mxu0 %v3126
  %6470 = vmatprep.subr.bf16.mxu0 0
  %6471 = vmatpush1.bf16.xpose.msra.mxu0 %v3129
  %6472 = vmatprep.subr.bf16.mxu0 0
  %6473 = vmatpush1.bf16.xpose.msra.mxu0 %v3132
  %6474 = vmatprep.mubr.bf16.mxu0 0
  %6475 = vmatmul.mubr.bf16.gmra.mrb[0].mxu0 %v1719
  %v6476 = vpop.f32.mrb[0].mxu0
  %v6477 = vadd.f32 %v1600, %v6476
  %v6478 = vpop.f32.mrb[0].mxu0
  %v6479 = vadd.f32 %v1600, %v6478
  %v6480 = vpop.f32.mrb[0].mxu0
  %v6481 = vadd.f32 %v1605, %v6480
  %v6482 = vpop.f32.mrb[0].mxu0
  %v6483 = vadd.f32 %v1605, %v6482
  %6484 = vmatprep.mubr.bf16.mxu0 0
  %6485 = vmatmul.mubr.bf16.gmra.mrb[0].mxu0 %v1722
  %v6486 = vpop.f32.mrb[0].mxu0
  %v6487 = vadd.f32 %v1610, %v6486
  %v6488 = vpop.f32.mrb[0].mxu0
  %v6489 = vadd.f32 %v1610, %v6488
  %v6490 = vpop.f32.mrb[0].mxu0
  %v6491 = vadd.f32 %v1615, %v6490
  %v6492 = vpop.f32.mrb[0].mxu0
  %v6493 = vadd.f32 %v1615, %v6492
  %6494 = vmatprep.mubr.bf16.mxu0 0
  %6495 = vmatmul.mubr.bf16.gmra.mrb[0].mxu0 %v1725
  %v6496 = vpop.f32.mrb[0].mxu0
  %v6497 = vadd.f32 %v1620, %v6496
  %v6498 = vpop.f32.mrb[0].mxu0
  %v6499 = vadd.f32 %v1620, %v6498
  %v6500 = vpop.f32.mrb[0].mxu0
  %v6501 = vadd.f32 %v1625, %v6500
  %v6502 = vpop.f32.mrb[0].mxu0
  %v6503 = vadd.f32 %v1625, %v6502
  %6504 = vmatprep.mubr.bf16.mxu0 0
  %6505 = vmatmul.mubr.bf16.gmra.mrb[0].mxu0 %v1728
  %v6506 = vpop.f32.mrb[0].mxu0
  %v6507 = vadd.f32 %v1630, %v6506
  %v6508 = vpop.f32.mrb[0].mxu0
  %v6509 = vadd.f32 %v1630, %v6508
  %v6510 = vpop.f32.mrb[0].mxu0
  %v6511 = vadd.f32 %v1635, %v6510
  %v6512 = vpop.f32.mrb[0].mxu0
  %v6513 = vadd.f32 %v1635, %v6512
  %6514 = vmatprep.mubr.bf16.mxu0 0
  %6515 = vmatmul.mubr.bf16.gmra.mrb[0].mxu0 %v1731
  %v6516 = vpop.f32.mrb[0].mxu0
  %v6517 = vadd.f32 %v1640, %v6516
  %v6518 = vpop.f32.mrb[0].mxu0
  %v6519 = vadd.f32 %v1640, %v6518
  %v6520 = vpop.f32.mrb[0].mxu0
  %v6521 = vadd.f32 %v1645, %v6520
  %v6522 = vpop.f32.mrb[0].mxu0
  %v6523 = vadd.f32 %v1645, %v6522
  %6524 = vmatprep.mubr.bf16.mxu0 0
  %6525 = vmatmul.mubr.bf16.gmra.mrb[0].mxu0 %v1734
  %v6526 = vpop.f32.mrb[0].mxu0
  %v6527 = vadd.f32 %v1650, %v6526
  %v6528 = vpop.f32.mrb[0].mxu0
  %v6529 = vadd.f32 %v1650, %v6528
  %v6530 = vpop.f32.mrb[0].mxu0
  %v6531 = vadd.f32 %v1655, %v6530
  %v6532 = vpop.f32.mrb[0].mxu0
  %v6533 = vadd.f32 %v1655, %v6532
  %6534 = vmatprep.mubr.bf16.mxu0 0
  %6535 = vmatmul.mubr.bf16.gmra.mrb[0].mxu0 %v1737
  %v6536 = vpop.f32.mrb[0].mxu0
  %v6537 = vadd.f32 %v1660, %v6536
  %v6538 = vpop.f32.mrb[0].mxu0
  %v6539 = vadd.f32 %v1660, %v6538
  %v6540 = vpop.f32.mrb[0].mxu0
  %v6541 = vadd.f32 %v1665, %v6540
  %v6542 = vpop.f32.mrb[0].mxu0
  %v6543 = vadd.f32 %v1665, %v6542
  %6544 = vmatprep.mubr.bf16.mxu0 0
  %6545 = vmatmul.mubr.bf16.gmra.mrb[0].mxu0 %v1740
  %v6546 = vpop.f32.mrb[0].mxu0
  %v6547 = vadd.f32 %v1670, %v6546
  %v6548 = vpop.f32.mrb[0].mxu0
  %v6549 = vadd.f32 %v1670, %v6548
  %v6550 = vpop.f32.mrb[0].mxu0
  %v6551 = vadd.f32 %v1675, %v6550
  %v6552 = vpop.f32.mrb[0].mxu0
  %v6553 = vadd.f32 %v1675, %v6552
  %6554 = vdwg.mxu0
  %6555 = vmatprep.subr.bf16.mxu0 0
  %6556 = vmatpush1.bf16.xpose.msra.mxu0 %v3135
  %6557 = vmatprep.subr.bf16.mxu0 0
  %6558 = vmatpush1.bf16.xpose.msra.mxu0 %v3138
  %6559 = vmatprep.subr.bf16.mxu0 0
  %6560 = vmatpush1.bf16.xpose.msra.mxu0 %v3141
  %6561 = vmatprep.subr.bf16.mxu0 0
  %6562 = vmatpush1.bf16.xpose.msra.mxu0 %v3144
  %6563 = vmatprep.subr.bf16.mxu0 0
  %6564 = vmatpush1.bf16.xpose.msra.mxu0 %v3147
  %6565 = vmatprep.subr.bf16.mxu0 0
  %6566 = vmatpush1.bf16.xpose.msra.mxu0 %v3150
  %6567 = vmatprep.subr.bf16.mxu0 0
  %6568 = vmatpush1.bf16.xpose.msra.mxu0 %v3153
  %6569 = vmatprep.subr.bf16.mxu0 0
  %6570 = vmatpush1.bf16.xpose.msra.mxu0 %v3156
  %6571 = vmatprep.subr.bf16.mxu0 0
  %6572 = vmatpush1.bf16.xpose.msra.mxu0 %v3159
  %6573 = vmatprep.subr.bf16.mxu0 0
  %6574 = vmatpush1.bf16.xpose.msra.mxu0 %v3162
  %6575 = vmatprep.subr.bf16.mxu0 0
  %6576 = vmatpush1.bf16.xpose.msra.mxu0 %v3165
  %6577 = vmatprep.subr.bf16.mxu0 0
  %6578 = vmatpush1.bf16.xpose.msra.mxu0 %v3168
  %6579 = vmatprep.subr.bf16.mxu0 0
  %6580 = vmatpush1.bf16.xpose.msra.mxu0 %v3171
  %6581 = vmatprep.subr.bf16.mxu0 0
  %6582 = vmatpush1.bf16.xpose.msra.mxu0 %v3174
  %6583 = vmatprep.subr.bf16.mxu0 0
  %6584 = vmatpush1.bf16.xpose.msra.mxu0 %v3177
  %6585 = vmatprep.subr.bf16.mxu0 0
  %6586 = vmatpush1.bf16.xpose.msra.mxu0 %v3180
  %6587 = vmatprep.mubr.bf16.mxu0 0
  %6588 = vmatmul.mubr.bf16.gmra.mrb[0].mxu0 %v1719
  %v6589 = vpop.f32.mrb[0].mxu0
  %v6590 = vadd.f32 %v1600, %v6589
  %v6591 = vpop.f32.mrb[0].mxu0
  %v6592 = vadd.f32 %v1600, %v6591
  %v6593 = vpop.f32.mrb[0].mxu0
  %v6594 = vadd.f32 %v1605, %v6593
  %v6595 = vpop.f32.mrb[0].mxu0
  %v6596 = vadd.f32 %v1605, %v6595
  %6597 = vmatprep.mubr.bf16.mxu0 0
  %6598 = vmatmul.mubr.bf16.gmra.mrb[0].mxu0 %v1722
  %v6599 = vpop.f32.mrb[0].mxu0
  %v6600 = vadd.f32 %v1610, %v6599
  %v6601 = vpop.f32.mrb[0].mxu0
  %v6602 = vadd.f32 %v1610, %v6601
  %v6603 = vpop.f32.mrb[0].mxu0
  %v6604 = vadd.f32 %v1615, %v6603
  %v6605 = vpop.f32.mrb[0].mxu0
  %v6606 = vadd.f32 %v1615, %v6605
  %6607 = vmatprep.mubr.bf16.mxu0 0
  %6608 = vmatmul.mubr.bf16.gmra.mrb[0].mxu0 %v1725
  %v6609 = vpop.f32.mrb[0].mxu0
  %v6610 = vadd.f32 %v1620, %v6609
  %v6611 = vpop.f32.mrb[0].mxu0
  %v6612 = vadd.f32 %v1620, %v6611
  %v6613 = vpop.f32.mrb[0].mxu0
  %v6614 = vadd.f32 %v1625, %v6613
  %v6615 = vpop.f32.mrb[0].mxu0
  %v6616 = vadd.f32 %v1625, %v6615
  %6617 = vmatprep.mubr.bf16.mxu0 0
  %6618 = vmatmul.mubr.bf16.gmra.mrb[0].mxu0 %v1728
  %v6619 = vpop.f32.mrb[0].mxu0
  %v6620 = vadd.f32 %v1630, %v6619
  %v6621 = vpop.f32.mrb[0].mxu0
  %v6622 = vadd.f32 %v1630, %v6621
  %v6623 = vpop.f32.mrb[0].mxu0
  %v6624 = vadd.f32 %v1635, %v6623
  %v6625 = vpop.f32.mrb[0].mxu0
  %v6626 = vadd.f32 %v1635, %v6625
  %6627 = vmatprep.mubr.bf16.mxu0 0
  %6628 = vmatmul.mubr.bf16.gmra.mrb[0].mxu0 %v1731
  %v6629 = vpop.f32.mrb[0].mxu0
  %v6630 = vadd.f32 %v1640, %v6629
  %v6631 = vpop.f32.mrb[0].mxu0
  %v6632 = vadd.f32 %v1640, %v6631
  %v6633 = vpop.f32.mrb[0].mxu0
  %v6634 = vadd.f32 %v1645, %v6633
  %v6635 = vpop.f32.mrb[0].mxu0
  %v6636 = vadd.f32 %v1645, %v6635
  %6637 = vmatprep.mubr.bf16.mxu0 0
  %6638 = vmatmul.mubr.bf16.gmra.mrb[0].mxu0 %v1734
  %v6639 = vpop.f32.mrb[0].mxu0
  %v6640 = vadd.f32 %v1650, %v6639
  %v6641 = vpop.f32.mrb[0].mxu0
  %v6642 = vadd.f32 %v1650, %v6641
  %v6643 = vpop.f32.mrb[0].mxu0
  %v6644 = vadd.f32 %v1655, %v6643
  %v6645 = vpop.f32.mrb[0].mxu0
  %v6646 = vadd.f32 %v1655, %v6645
  %6647 = vmatprep.mubr.bf16.mxu0 0
  %6648 = vmatmul.mubr.bf16.gmra.mrb[0].mxu0 %v1737
  %v6649 = vpop.f32.mrb[0].mxu0
  %v6650 = vadd.f32 %v1660, %v6649
  %v6651 = vpop.f32.mrb[0].mxu0
  %v6652 = vadd.f32 %v1660, %v6651
  %v6653 = vpop.f32.mrb[0].mxu0
  %v6654 = vadd.f32 %v1665, %v6653
  %v6655 = vpop.f32.mrb[0].mxu0
  %v6656 = vadd.f32 %v1665, %v6655
  %6657 = vmatprep.mubr.bf16.mxu0 0
  %6658 = vmatmul.mubr.bf16.gmra.mrb[0].mxu0 %v1740
  %v6659 = vpop.f32.mrb[0].mxu0
  %v6660 = vadd.f32 %v1670, %v6659
  %v6661 = vpop.f32.mrb[0].mxu0
  %v6662 = vadd.f32 %v1670, %v6661
  %v6663 = vpop.f32.mrb[0].mxu0
  %v6664 = vadd.f32 %v1675, %v6663
  %v6665 = vpop.f32.mrb[0].mxu0
  %v6666 = vadd.f32 %v1675, %v6665
  %6667 = vdwg.mxu0
  %6668 = vmatprep.subr.bf16.mxu0 0
  %6669 = vmatpush1.bf16.xpose.msra.mxu0 %v3183
  %6670 = vmatprep.subr.bf16.mxu0 0
  %6671 = vmatpush1.bf16.xpose.msra.mxu0 %v3186
  %6672 = vmatprep.subr.bf16.mxu0 0
  %6673 = vmatpush1.bf16.xpose.msra.mxu0 %v3189
  %6674 = vmatprep.subr.bf16.mxu0 0
  %6675 = vmatpush1.bf16.xpose.msra.mxu0 %v3192
  %6676 = vmatprep.subr.bf16.mxu0 0
  %6677 = vmatpush1.bf16.xpose.msra.mxu0 %v3195
  %6678 = vmatprep.subr.bf16.mxu0 0
  %6679 = vmatpush1.bf16.xpose.msra.mxu0 %v3198
  %6680 = vmatprep.subr.bf16.mxu0 0
  %6681 = vmatpush1.bf16.xpose.msra.mxu0 %v3201
  %6682 = vmatprep.subr.bf16.mxu0 0
  %6683 = vmatpush1.bf16.xpose.msra.mxu0 %v3204
  %6684 = vmatprep.subr.bf16.mxu0 0
  %6685 = vmatpush1.bf16.xpose.msra.mxu0 %v3207
  %6686 = vmatprep.subr.bf16.mxu0 0
  %6687 = vmatpush1.bf16.xpose.msra.mxu0 %v3210
  %6688 = vmatprep.subr.bf16.mxu0 0
  %6689 = vmatpush1.bf16.xpose.msra.mxu0 %v3213
  %6690 = vmatprep.subr.bf16.mxu0 0
  %6691 = vmatpush1.bf16.xpose.msra.mxu0 %v3216
  %6692 = vmatprep.subr.bf16.mxu0 0
  %6693 = vmatpush1.bf16.xpose.msra.mxu0 %v3219
  %6694 = vmatprep.subr.bf16.mxu0 0
  %6695 = vmatpush1.bf16.xpose.msra.mxu0 %v3222
  %6696 = vmatprep.subr.bf16.mxu0 0
  %6697 = vmatpush1.bf16.xpose.msra.mxu0 %v3225
  %6698 = vmatprep.subr.bf16.mxu0 0
  %6699 = vmatpush1.bf16.xpose.msra.mxu0 %v3228
  %6700 = vmatprep.mubr.bf16.mxu0 0
  %6701 = vmatmul.mubr.bf16.gmra.mrb[0].mxu0 %v1719
  %v6702 = vpop.f32.mrb[0].mxu0
  %v6703 = vadd.f32 %v1600, %v6702
  %v6704 = vpop.f32.mrb[0].mxu0
  %v6705 = vadd.f32 %v1600, %v6704
  %v6706 = vpop.f32.mrb[0].mxu0
  %v6707 = vadd.f32 %v1605, %v6706
  %v6708 = vpop.f32.mrb[0].mxu0
  %v6709 = vadd.f32 %v1605, %v6708
  %6710 = vmatprep.mubr.bf16.mxu0 0
  %6711 = vmatmul.mubr.bf16.gmra.mrb[0].mxu0 %v1722
  %v6712 = vpop.f32.mrb[0].mxu0
  %v6713 = vadd.f32 %v1610, %v6712
  %v6714 = vpop.f32.mrb[0].mxu0
  %v6715 = vadd.f32 %v1610, %v6714
  %v6716 = vpop.f32.mrb[0].mxu0
  %v6717 = vadd.f32 %v1615, %v6716
  %v6718 = vpop.f32.mrb[0].mxu0
  %v6719 = vadd.f32 %v1615, %v6718
  %6720 = vmatprep.mubr.bf16.mxu0 0
  %6721 = vmatmul.mubr.bf16.gmra.mrb[0].mxu0 %v1725
  %v6722 = vpop.f32.mrb[0].mxu0
  %v6723 = vadd.f32 %v1620, %v6722
  %v6724 = vpop.f32.mrb[0].mxu0
  %v6725 = vadd.f32 %v1620, %v6724
  %v6726 = vpop.f32.mrb[0].mxu0
  %v6727 = vadd.f32 %v1625, %v6726
  %v6728 = vpop.f32.mrb[0].mxu0
  %v6729 = vadd.f32 %v1625, %v6728
  %6730 = vmatprep.mubr.bf16.mxu0 0
  %6731 = vmatmul.mubr.bf16.gmra.mrb[0].mxu0 %v1728
  %v6732 = vpop.f32.mrb[0].mxu0
  %v6733 = vadd.f32 %v1630, %v6732
  %v6734 = vpop.f32.mrb[0].mxu0
  %v6735 = vadd.f32 %v1630, %v6734
  %v6736 = vpop.f32.mrb[0].mxu0
  %v6737 = vadd.f32 %v1635, %v6736
  %v6738 = vpop.f32.mrb[0].mxu0
  %v6739 = vadd.f32 %v1635, %v6738
  %6740 = vmatprep.mubr.bf16.mxu0 0
  %6741 = vmatmul.mubr.bf16.gmra.mrb[0].mxu0 %v1731
  %v6742 = vpop.f32.mrb[0].mxu0
  %v6743 = vadd.f32 %v1640, %v6742
  %v6744 = vpop.f32.mrb[0].mxu0
  %v6745 = vadd.f32 %v1640, %v6744
  %v6746 = vpop.f32.mrb[0].mxu0
  %v6747 = vadd.f32 %v1645, %v6746
  %v6748 = vpop.f32.mrb[0].mxu0
  %v6749 = vadd.f32 %v1645, %v6748
  %6750 = vmatprep.mubr.bf16.mxu0 0
  %6751 = vmatmul.mubr.bf16.gmra.mrb[0].mxu0 %v1734
  %v6752 = vpop.f32.mrb[0].mxu0
  %v6753 = vadd.f32 %v1650, %v6752
  %v6754 = vpop.f32.mrb[0].mxu0
  %v6755 = vadd.f32 %v1650, %v6754
  %v6756 = vpop.f32.mrb[0].mxu0
  %v6757 = vadd.f32 %v1655, %v6756
  %v6758 = vpop.f32.mrb[0].mxu0
  %v6759 = vadd.f32 %v1655, %v6758
  %6760 = vmatprep.mubr.bf16.mxu0 0
  %6761 = vmatmul.mubr.bf16.gmra.mrb[0].mxu0 %v1737
  %v6762 = vpop.f32.mrb[0].mxu0
  %v6763 = vadd.f32 %v1660, %v6762
  %v6764 = vpop.f32.mrb[0].mxu0
  %v6765 = vadd.f32 %v1660, %v6764
  %v6766 = vpop.f32.mrb[0].mxu0
  %v6767 = vadd.f32 %v1665, %v6766
  %v6768 = vpop.f32.mrb[0].mxu0
  %v6769 = vadd.f32 %v1665, %v6768
  %6770 = vmatprep.mubr.bf16.mxu0 0
  %6771 = vmatmul.mubr.bf16.gmra.mrb[0].mxu0 %v1740
  %v6772 = vpop.f32.mrb[0].mxu0
  %v6773 = vadd.f32 %v1670, %v6772
  %v6774 = vpop.f32.mrb[0].mxu0
  %v6775 = vadd.f32 %v1670, %v6774
  %v6776 = vpop.f32.mrb[0].mxu0
  %v6777 = vadd.f32 %v1675, %v6776
  %v6778 = vpop.f32.mrb[0].mxu0
  %v6779 = vadd.f32 %v1675, %v6778
  %6780 = vdwg.mxu0
  %6781 = vmatprep.subr.bf16.mxu0 0
  %6782 = vmatpush1.bf16.xpose.msra.mxu0 %v3231
  %6783 = vmatprep.subr.bf16.mxu0 0
  %6784 = vmatpush1.bf16.xpose.msra.mxu0 %v3234
  %6785 = vmatprep.subr.bf16.mxu0 0
  %6786 = vmatpush1.bf16.xpose.msra.mxu0 %v3237
  %6787 = vmatprep.subr.bf16.mxu0 0
  %6788 = vmatpush1.bf16.xpose.msra.mxu0 %v3240
  %6789 = vmatprep.subr.bf16.mxu0 0
  %6790 = vmatpush1.bf16.xpose.msra.mxu0 %v3243
  %6791 = vmatprep.subr.bf16.mxu0 0
  %6792 = vmatpush1.bf16.xpose.msra.mxu0 %v3246
  %6793 = vmatprep.subr.bf16.mxu0 0
  %6794 = vmatpush1.bf16.xpose.msra.mxu0 %v3249
  %6795 = vmatprep.subr.bf16.mxu0 0
  %6796 = vmatpush1.bf16.xpose.msra.mxu0 %v3252
  %6797 = vmatprep.subr.bf16.mxu0 0
  %6798 = vmatpush1.bf16.xpose.msra.mxu0 %v3255
  %6799 = vmatprep.subr.bf16.mxu0 0
  %6800 = vmatpush1.bf16.xpose.msra.mxu0 %v3258
  %6801 = vmatprep.subr.bf16.mxu0 0
  %6802 = vmatpush1.bf16.xpose.msra.mxu0 %v3261
  %6803 = vmatprep.subr.bf16.mxu0 0
  %6804 = vmatpush1.bf16.xpose.msra.mxu0 %v3264
  %6805 = vmatprep.subr.bf16.mxu0 0
  %6806 = vmatpush1.bf16.xpose.msra.mxu0 %v3267
  %6807 = vmatprep.subr.bf16.mxu0 0
  %6808 = vmatpush1.bf16.xpose.msra.mxu0 %v3270
  %6809 = vmatprep.subr.bf16.mxu0 0
  %6810 = vmatpush1.bf16.xpose.msra.mxu0 %v3273
  %6811 = vmatprep.subr.bf16.mxu0 0
  %6812 = vmatpush1.bf16.xpose.msra.mxu0 %v3276
  %6813 = vmatprep.mubr.bf16.mxu0 0
  %6814 = vmatmul.mubr.bf16.gmra.mrb[0].mxu0 %v1719
  %v6815 = vpop.f32.mrb[0].mxu0
  %v6816 = vadd.f32 %v1600, %v6815
  %v6817 = vpop.f32.mrb[0].mxu0
  %v6818 = vadd.f32 %v1600, %v6817
  %v6819 = vpop.f32.mrb[0].mxu0
  %v6820 = vadd.f32 %v1605, %v6819
  %v6821 = vpop.f32.mrb[0].mxu0
  %v6822 = vadd.f32 %v1605, %v6821
  %6823 = vmatprep.mubr.bf16.mxu0 0
  %6824 = vmatmul.mubr.bf16.gmra.mrb[0].mxu0 %v1722
  %v6825 = vpop.f32.mrb[0].mxu0
  %v6826 = vadd.f32 %v1610, %v6825
  %v6827 = vpop.f32.mrb[0].mxu0
  %v6828 = vadd.f32 %v1610, %v6827
  %v6829 = vpop.f32.mrb[0].mxu0
  %v6830 = vadd.f32 %v1615, %v6829
  %v6831 = vpop.f32.mrb[0].mxu0
  %v6832 = vadd.f32 %v1615, %v6831
  %6833 = vmatprep.mubr.bf16.mxu0 0
  %6834 = vmatmul.mubr.bf16.gmra.mrb[0].mxu0 %v1725
  %v6835 = vpop.f32.mrb[0].mxu0
  %v6836 = vadd.f32 %v1620, %v6835
  %v6837 = vpop.f32.mrb[0].mxu0
  %v6838 = vadd.f32 %v1620, %v6837
  %v6839 = vpop.f32.mrb[0].mxu0
  %v6840 = vadd.f32 %v1625, %v6839
  %v6841 = vpop.f32.mrb[0].mxu0
  %v6842 = vadd.f32 %v1625, %v6841
  %6843 = vmatprep.mubr.bf16.mxu0 0
  %6844 = vmatmul.mubr.bf16.gmra.mrb[0].mxu0 %v1728
  %v6845 = vpop.f32.mrb[0].mxu0
  %v6846 = vadd.f32 %v1630, %v6845
  %v6847 = vpop.f32.mrb[0].mxu0
  %v6848 = vadd.f32 %v1630, %v6847
  %v6849 = vpop.f32.mrb[0].mxu0
  %v6850 = vadd.f32 %v1635, %v6849
  %v6851 = vpop.f32.mrb[0].mxu0
  %v6852 = vadd.f32 %v1635, %v6851
  %6853 = vmatprep.mubr.bf16.mxu0 0
  %6854 = vmatmul.mubr.bf16.gmra.mrb[0].mxu0 %v1731
  %v6855 = vpop.f32.mrb[0].mxu0
  %v6856 = vadd.f32 %v1640, %v6855
  %v6857 = vpop.f32.mrb[0].mxu0
  %v6858 = vadd.f32 %v1640, %v6857
  %v6859 = vpop.f32.mrb[0].mxu0
  %v6860 = vadd.f32 %v1645, %v6859
  %v6861 = vpop.f32.mrb[0].mxu0
  %v6862 = vadd.f32 %v1645, %v6861
  %6863 = vmatprep.mubr.bf16.mxu0 0
  %6864 = vmatmul.mubr.bf16.gmra.mrb[0].mxu0 %v1734
  %v6865 = vpop.f32.mrb[0].mxu0
  %v6866 = vadd.f32 %v1650, %v6865
  %v6867 = vpop.f32.mrb[0].mxu0
  %v6868 = vadd.f32 %v1650, %v6867
  %v6869 = vpop.f32.mrb[0].mxu0
  %v6870 = vadd.f32 %v1655, %v6869
  %v6871 = vpop.f32.mrb[0].mxu0
  %v6872 = vadd.f32 %v1655, %v6871
  %6873 = vmatprep.mubr.bf16.mxu0 0
  %6874 = vmatmul.mubr.bf16.gmra.mrb[0].mxu0 %v1737
  %v6875 = vpop.f32.mrb[0].mxu0
  %v6876 = vadd.f32 %v1660, %v6875
  %v6877 = vpop.f32.mrb[0].mxu0
  %v6878 = vadd.f32 %v1660, %v6877
  %v6879 = vpop.f32.mrb[0].mxu0
  %v6880 = vadd.f32 %v1665, %v6879
  %v6881 = vpop.f32.mrb[0].mxu0
  %v6882 = vadd.f32 %v1665, %v6881
  %6883 = vmatprep.mubr.bf16.mxu0 0
  %6884 = vmatmul.mubr.bf16.gmra.mrb[0].mxu0 %v1740
  %v6885 = vpop.f32.mrb[0].mxu0
  %v6886 = vadd.f32 %v1670, %v6885
  %v6887 = vpop.f32.mrb[0].mxu0
  %v6888 = vadd.f32 %v1670, %v6887
  %v6889 = vpop.f32.mrb[0].mxu0
  %v6890 = vadd.f32 %v1675, %v6889
  %v6891 = vpop.f32.mrb[0].mxu0
  %v6892 = vadd.f32 %v1675, %v6891
  %6893 = vdwg.mxu0
  %v6894 = vmax.f32 %v3313, 0.0
  %v6895 = vmax.f32 %v3315, 0.0
  %v6896 = vmax.f32 %v3426, 0.0
  %v6897 = vmax.f32 %v3428, 0.0
  %v6898 = vmax.f32 %v3539, 0.0
  %v6899 = vmax.f32 %v3541, 0.0
  %v6900 = vmax.f32 %v3652, 0.0
  %v6901 = vmax.f32 %v3654, 0.0
  %v6902 = vmax.f32 %v3765, 0.0
  %v6903 = vmax.f32 %v3767, 0.0
  %v6904 = vmax.f32 %v3878, 0.0
  %v6905 = vmax.f32 %v3880, 0.0
  %v6906 = vmax.f32 %v3991, 0.0
  %v6907 = vmax.f32 %v3993, 0.0
  %v6908 = vmax.f32 %v4104, 0.0
  %v6909 = vmax.f32 %v4106, 0.0
  %v6910 = vmax.f32 %v4217, 0.0
  %v6911 = vmax.f32 %v4219, 0.0
  %v6912 = vmax.f32 %v4330, 0.0
  %v6913 = vmax.f32 %v4332, 0.0
  %v6914 = vmax.f32 %v4443, 0.0
  %v6915 = vmax.f32 %v4445, 0.0
  %v6916 = vmax.f32 %v4556, 0.0
  %v6917 = vmax.f32 %v4558, 0.0
  %v6918 = vmax.f32 %v4669, 0.0
  %v6919 = vmax.f32 %v4671, 0.0
  %v6920 = vmax.f32 %v4782, 0.0
  %v6921 = vmax.f32 %v4784, 0.0
  %v6922 = vmax.f32 %v4895, 0.0
  %v6923 = vmax.f32 %v4897, 0.0
  %v6924 = vmax.f32 %v5008, 0.0
  %v6925 = vmax.f32 %v5010, 0.0
  %v6926 = vmax.f32 %v5121, 0.0
  %v6927 = vmax.f32 %v5123, 0.0
  %v6928 = vmax.f32 %v5234, 0.0
  %v6929 = vmax.f32 %v5236, 0.0
  %v6930 = vmax.f32 %v5347, 0.0
  %v6931 = vmax.f32 %v5349, 0.0
  %v6932 = vmax.f32 %v5460, 0.0
  %v6933 = vmax.f32 %v5462, 0.0
  %v6934 = vmax.f32 %v5573, 0.0
  %v6935 = vmax.f32 %v5575, 0.0
  %v6936 = vmax.f32 %v5686, 0.0
  %v6937 = vmax.f32 %v5688, 0.0
  %v6938 = vmax.f32 %v5799, 0.0
  %v6939 = vmax.f32 %v5801, 0.0
  %v6940 = vmax.f32 %v5912, 0.0
  %v6941 = vmax.f32 %v5914, 0.0
  %v6942 = vmax.f32 %v6025, 0.0
  %v6943 = vmax.f32 %v6027, 0.0
  %v6944 = vmax.f32 %v6138, 0.0
  %v6945 = vmax.f32 %v6140, 0.0
  %v6946 = vmax.f32 %v6251, 0.0
  %v6947 = vmax.f32 %v6253, 0.0
  %v6948 = vmax.f32 %v6364, 0.0
  %v6949 = vmax.f32 %v6366, 0.0
  %v6950 = vmax.f32 %v6477, 0.0
  %v6951 = vmax.f32 %v6479, 0.0
  %v6952 = vmax.f32 %v6590, 0.0
  %v6953 = vmax.f32 %v6592, 0.0
  %v6954 = vmax.f32 %v6703, 0.0
  %v6955 = vmax.f32 %v6705, 0.0
  %v6956 = vmax.f32 %v6816, 0.0
  %v6957 = vmax.f32 %v6818, 0.0
  %v6958 = vmax.f32 %v3317, 0.0
  %v6959 = vmax.f32 %v3319, 0.0
  %v6960 = vmax.f32 %v3430, 0.0
  %v6961 = vmax.f32 %v3432, 0.0
  %v6962 = vmax.f32 %v3543, 0.0
  %v6963 = vmax.f32 %v3545, 0.0
  %v6964 = vmax.f32 %v3656, 0.0
  %v6965 = vmax.f32 %v3658, 0.0
  %v6966 = vmax.f32 %v3769, 0.0
  %v6967 = vmax.f32 %v3771, 0.0
  %v6968 = vmax.f32 %v3882, 0.0
  %v6969 = vmax.f32 %v3884, 0.0
  %v6970 = vmax.f32 %v3995, 0.0
  %v6971 = vmax.f32 %v3997, 0.0
  %v6972 = vmax.f32 %v4108, 0.0
  %v6973 = vmax.f32 %v4110, 0.0
  %v6974 = vmax.f32 %v4221, 0.0
  %v6975 = vmax.f32 %v4223, 0.0
  %v6976 = vmax.f32 %v4334, 0.0
  %v6977 = vmax.f32 %v4336, 0.0
  %v6978 = vmax.f32 %v4447, 0.0
  %v6979 = vmax.f32 %v4449, 0.0
  %v6980 = vmax.f32 %v4560, 0.0
  %v6981 = vmax.f32 %v4562, 0.0
  %v6982 = vmax.f32 %v4673, 0.0
  %v6983 = vmax.f32 %v4675, 0.0
  %v6984 = vmax.f32 %v4786, 0.0
  %v6985 = vmax.f32 %v4788, 0.0
  %v6986 = vmax.f32 %v4899, 0.0
  %v6987 = vmax.f32 %v4901, 0.0
  %v6988 = vmax.f32 %v5012, 0.0
  %v6989 = vmax.f32 %v5014, 0.0
  %v6990 = vmax.f32 %v5125, 0.0
  %v6991 = vmax.f32 %v5127, 0.0
  %v6992 = vmax.f32 %v5238, 0.0
  %v6993 = vmax.f32 %v5240, 0.0
  %v6994 = vmax.f32 %v5351, 0.0
  %v6995 = vmax.f32 %v5353, 0.0
  %v6996 = vmax.f32 %v5464, 0.0
  %v6997 = vmax.f32 %v5466, 0.0
  %v6998 = vmax.f32 %v5577, 0.0
  %v6999 = vmax.f32 %v5579, 0.0
  %v7000 = vmax.f32 %v5690, 0.0
  %v7001 = vmax.f32 %v5692, 0.0
  %v7002 = vmax.f32 %v5803, 0.0
  %v7003 = vmax.f32 %v5805, 0.0
  %v7004 = vmax.f32 %v5916, 0.0
  %v7005 = vmax.f32 %v5918, 0.0
  %v7006 = vmax.f32 %v6029, 0.0
  %v7007 = vmax.f32 %v6031, 0.0
  %v7008 = vmax.f32 %v6142, 0.0
  %v7009 = vmax.f32 %v6144, 0.0
  %v7010 = vmax.f32 %v6255, 0.0
  %v7011 = vmax.f32 %v6257, 0.0
  %v7012 = vmax.f32 %v6368, 0.0
  %v7013 = vmax.f32 %v6370, 0.0
  %v7014 = vmax.f32 %v6481, 0.0
  %v7015 = vmax.f32 %v6483, 0.0
  %v7016 = vmax.f32 %v6594, 0.0
  %v7017 = vmax.f32 %v6596, 0.0
  %v7018 = vmax.f32 %v6707, 0.0
  %v7019 = vmax.f32 %v6709, 0.0
  %v7020 = vmax.f32 %v6820, 0.0
  %v7021 = vmax.f32 %v6822, 0.0
  %v7022 = vmax.f32 %v3323, 0.0
  %v7023 = vmax.f32 %v3325, 0.0
  %v7024 = vmax.f32 %v3436, 0.0
  %v7025 = vmax.f32 %v3438, 0.0
  %v7026 = vmax.f32 %v3549, 0.0
  %v7027 = vmax.f32 %v3551, 0.0
  %v7028 = vmax.f32 %v3662, 0.0
  %v7029 = vmax.f32 %v3664, 0.0
  %v7030 = vmax.f32 %v3775, 0.0
  %v7031 = vmax.f32 %v3777, 0.0
  %v7032 = vmax.f32 %v3888, 0.0
  %v7033 = vmax.f32 %v3890, 0.0
  %v7034 = vmax.f32 %v4001, 0.0
  %v7035 = vmax.f32 %v4003, 0.0
  %v7036 = vmax.f32 %v4114, 0.0
  %v7037 = vmax.f32 %v4116, 0.0
  %v7038 = vmax.f32 %v4227, 0.0
  %v7039 = vmax.f32 %v4229, 0.0
  %v7040 = vmax.f32 %v4340, 0.0
  %v7041 = vmax.f32 %v4342, 0.0
  %v7042 = vmax.f32 %v4453, 0.0
  %v7043 = vmax.f32 %v4455, 0.0
  %v7044 = vmax.f32 %v4566, 0.0
  %v7045 = vmax.f32 %v4568, 0.0
  %v7046 = vmax.f32 %v4679, 0.0
  %v7047 = vmax.f32 %v4681, 0.0
  %v7048 = vmax.f32 %v4792, 0.0
  %v7049 = vmax.f32 %v4794, 0.0
  %v7050 = vmax.f32 %v4905, 0.0
  %v7051 = vmax.f32 %v4907, 0.0
  %v7052 = vmax.f32 %v5018, 0.0
  %v7053 = vmax.f32 %v5020, 0.0
  %v7054 = vmax.f32 %v5131, 0.0
  %v7055 = vmax.f32 %v5133, 0.0
  %v7056 = vmax.f32 %v5244, 0.0
  %v7057 = vmax.f32 %v5246, 0.0
  %v7058 = vmax.f32 %v5357, 0.0
  %v7059 = vmax.f32 %v5359, 0.0
  %v7060 = vmax.f32 %v5470, 0.0
  %v7061 = vmax.f32 %v5472, 0.0
  %v7062 = vmax.f32 %v5583, 0.0
  %v7063 = vmax.f32 %v5585, 0.0
  %v7064 = vmax.f32 %v5696, 0.0
  %v7065 = vmax.f32 %v5698, 0.0
  %v7066 = vmax.f32 %v5809, 0.0
  %v7067 = vmax.f32 %v5811, 0.0
  %v7068 = vmax.f32 %v5922, 0.0
  %v7069 = vmax.f32 %v5924, 0.0
  %v7070 = vmax.f32 %v6035, 0.0
  %v7071 = vmax.f32 %v6037, 0.0
  %v7072 = vmax.f32 %v6148, 0.0
  %v7073 = vmax.f32 %v6150, 0.0
  %v7074 = vmax.f32 %v6261, 0.0
  %v7075 = vmax.f32 %v6263, 0.0
  %v7076 = vmax.f32 %v6374, 0.0
  %v7077 = vmax.f32 %v6376, 0.0
  %v7078 = vmax.f32 %v6487, 0.0
  %v7079 = vmax.f32 %v6489, 0.0
  %v7080 = vmax.f32 %v6600, 0.0
  %v7081 = vmax.f32 %v6602, 0.0
  %v7082 = vmax.f32 %v6713, 0.0
  %v7083 = vmax.f32 %v6715, 0.0
  %v7084 = vmax.f32 %v6826, 0.0
  %v7085 = vmax.f32 %v6828, 0.0
  %v7086 = vmax.f32 %v3327, 0.0
  %v7087 = vmax.f32 %v3329, 0.0
  %v7088 = vmax.f32 %v3440, 0.0
  %v7089 = vmax.f32 %v3442, 0.0
  %v7090 = vmax.f32 %v3553, 0.0
  %v7091 = vmax.f32 %v3555, 0.0
  %v7092 = vmax.f32 %v3666, 0.0
  %v7093 = vmax.f32 %v3668, 0.0
  %v7094 = vmax.f32 %v3779, 0.0
  %v7095 = vmax.f32 %v3781, 0.0
  %v7096 = vmax.f32 %v3892, 0.0
  %v7097 = vmax.f32 %v3894, 0.0
  %v7098 = vmax.f32 %v4005, 0.0
  %v7099 = vmax.f32 %v4007, 0.0
  %v7100 = vmax.f32 %v4118, 0.0
  %v7101 = vmax.f32 %v4120, 0.0
  %v7102 = vmax.f32 %v4231, 0.0
  %v7103 = vmax.f32 %v4233, 0.0
  %v7104 = vmax.f32 %v4344, 0.0
  %v7105 = vmax.f32 %v4346, 0.0
  %v7106 = vmax.f32 %v4457, 0.0
  %v7107 = vmax.f32 %v4459, 0.0
  %v7108 = vmax.f32 %v4570, 0.0
  %v7109 = vmax.f32 %v4572, 0.0
  %v7110 = vmax.f32 %v4683, 0.0
  %v7111 = vmax.f32 %v4685, 0.0
  %v7112 = vmax.f32 %v4796, 0.0
  %v7113 = vmax.f32 %v4798, 0.0
  %v7114 = vmax.f32 %v4909, 0.0
  %v7115 = vmax.f32 %v4911, 0.0
  %v7116 = vmax.f32 %v5022, 0.0
  %v7117 = vmax.f32 %v5024, 0.0
  %v7118 = vmax.f32 %v5135, 0.0
  %v7119 = vmax.f32 %v5137, 0.0
  %v7120 = vmax.f32 %v5248, 0.0
  %v7121 = vmax.f32 %v5250, 0.0
  %v7122 = vmax.f32 %v5361, 0.0
  %v7123 = vmax.f32 %v5363, 0.0
  %v7124 = vmax.f32 %v5474, 0.0
  %v7125 = vmax.f32 %v5476, 0.0
  %v7126 = vmax.f32 %v5587, 0.0
  %v7127 = vmax.f32 %v5589, 0.0
  %v7128 = vmax.f32 %v5700, 0.0
  %v7129 = vmax.f32 %v5702, 0.0
  %v7130 = vmax.f32 %v5813, 0.0
  %v7131 = vmax.f32 %v5815, 0.0
  %v7132 = vmax.f32 %v5926, 0.0
  %v7133 = vmax.f32 %v5928, 0.0
  %v7134 = vmax.f32 %v6039, 0.0
  %v7135 = vmax.f32 %v6041, 0.0
  %v7136 = vmax.f32 %v6152, 0.0
  %v7137 = vmax.f32 %v6154, 0.0
  %v7138 = vmax.f32 %v6265, 0.0
  %v7139 = vmax.f32 %v6267, 0.0
  %v7140 = vmax.f32 %v6378, 0.0
  %v7141 = vmax.f32 %v6380, 0.0
  %v7142 = vmax.f32 %v6491, 0.0
  %v7143 = vmax.f32 %v6493, 0.0
  %v7144 = vmax.f32 %v6604, 0.0
  %v7145 = vmax.f32 %v6606, 0.0
  %v7146 = vmax.f32 %v6717, 0.0
  %v7147 = vmax.f32 %v6719, 0.0
  %v7148 = vmax.f32 %v6830, 0.0
  %v7149 = vmax.f32 %v6832, 0.0
  %v7150 = vmax.f32 %v3333, 0.0
  %v7151 = vmax.f32 %v3335, 0.0
  %v7152 = vmax.f32 %v3446, 0.0
  %v7153 = vmax.f32 %v3448, 0.0
  %v7154 = vmax.f32 %v3559, 0.0
  %v7155 = vmax.f32 %v3561, 0.0
  %v7156 = vmax.f32 %v3672, 0.0
  %v7157 = vmax.f32 %v3674, 0.0
  %v7158 = vmax.f32 %v3785, 0.0
  %v7159 = vmax.f32 %v3787, 0.0
  %v7160 = vmax.f32 %v3898, 0.0
  %v7161 = vmax.f32 %v3900, 0.0
  %v7162 = vmax.f32 %v4011, 0.0
  %v7163 = vmax.f32 %v4013, 0.0
  %v7164 = vmax.f32 %v4124, 0.0
  %v7165 = vmax.f32 %v4126, 0.0
  %v7166 = vmax.f32 %v4237, 0.0
  %v7167 = vmax.f32 %v4239, 0.0
  %v7168 = vmax.f32 %v4350, 0.0
  %v7169 = vmax.f32 %v4352, 0.0
  %v7170 = vmax.f32 %v4463, 0.0
  %v7171 = vmax.f32 %v4465, 0.0
  %v7172 = vmax.f32 %v4576, 0.0
  %v7173 = vmax.f32 %v4578, 0.0
  %v7174 = vmax.f32 %v4689, 0.0
  %v7175 = vmax.f32 %v4691, 0.0
  %v7176 = vmax.f32 %v4802, 0.0
  %v7177 = vmax.f32 %v4804, 0.0
  %v7178 = vmax.f32 %v4915, 0.0
  %v7179 = vmax.f32 %v4917, 0.0
  %v7180 = vmax.f32 %v5028, 0.0
  %v7181 = vmax.f32 %v5030, 0.0
  %v7182 = vmax.f32 %v5141, 0.0
  %v7183 = vmax.f32 %v5143, 0.0
  %v7184 = vmax.f32 %v5254, 0.0
  %v7185 = vmax.f32 %v5256, 0.0
  %v7186 = vmax.f32 %v5367, 0.0
  %v7187 = vmax.f32 %v5369, 0.0
  %v7188 = vmax.f32 %v5480, 0.0
  %v7189 = vmax.f32 %v5482, 0.0
  %v7190 = vmax.f32 %v5593, 0.0
  %v7191 = vmax.f32 %v5595, 0.0
  %v7192 = vmax.f32 %v5706, 0.0
  %v7193 = vmax.f32 %v5708, 0.0
  %v7194 = vmax.f32 %v5819, 0.0
  %v7195 = vmax.f32 %v5821, 0.0
  %v7196 = vmax.f32 %v5932, 0.0
  %v7197 = vmax.f32 %v5934, 0.0
  %v7198 = vmax.f32 %v6045, 0.0
  %v7199 = vmax.f32 %v6047, 0.0
  %v7200 = vmax.f32 %v6158, 0.0
  %v7201 = vmax.f32 %v6160, 0.0
  %v7202 = vmax.f32 %v6271, 0.0
  %v7203 = vmax.f32 %v6273, 0.0
  %v7204 = vmax.f32 %v6384, 0.0
  %v7205 = vmax.f32 %v6386, 0.0
  %v7206 = vmax.f32 %v6497, 0.0
  %v7207 = vmax.f32 %v6499, 0.0
  %v7208 = vmax.f32 %v6610, 0.0
  %v7209 = vmax.f32 %v6612, 0.0
  %v7210 = vmax.f32 %v6723, 0.0
  %v7211 = vmax.f32 %v6725, 0.0
  %v7212 = vmax.f32 %v6836, 0.0
  %v7213 = vmax.f32 %v6838, 0.0
  %v7214 = vmax.f32 %v3337, 0.0
  %v7215 = vmax.f32 %v3339, 0.0
  %v7216 = vmax.f32 %v3450, 0.0
  %v7217 = vmax.f32 %v3452, 0.0
  %v7218 = vmax.f32 %v3563, 0.0
  %v7219 = vmax.f32 %v3565, 0.0
  %v7220 = vmax.f32 %v3676, 0.0
  %v7221 = vmax.f32 %v3678, 0.0
  %v7222 = vmax.f32 %v3789, 0.0
  %v7223 = vmax.f32 %v3791, 0.0
  %v7224 = vmax.f32 %v3902, 0.0
  %v7225 = vmax.f32 %v3904, 0.0
  %v7226 = vmax.f32 %v4015, 0.0
  %v7227 = vmax.f32 %v4017, 0.0
  %v7228 = vmax.f32 %v4128, 0.0
  %v7229 = vmax.f32 %v4130, 0.0
  %v7230 = vmax.f32 %v4241, 0.0
  %v7231 = vmax.f32 %v4243, 0.0
  %v7232 = vmax.f32 %v4354, 0.0
  %v7233 = vmax.f32 %v4356, 0.0
  %v7234 = vmax.f32 %v4467, 0.0
  %v7235 = vmax.f32 %v4469, 0.0
  %v7236 = vmax.f32 %v4580, 0.0
  %v7237 = vmax.f32 %v4582, 0.0
  %v7238 = vmax.f32 %v4693, 0.0
  %v7239 = vmax.f32 %v4695, 0.0
  %v7240 = vmax.f32 %v4806, 0.0
  %v7241 = vmax.f32 %v4808, 0.0
  %v7242 = vmax.f32 %v4919, 0.0
  %v7243 = vmax.f32 %v4921, 0.0
  %v7244 = vmax.f32 %v5032, 0.0
  %v7245 = vmax.f32 %v5034, 0.0
  %v7246 = vmax.f32 %v5145, 0.0
  %v7247 = vmax.f32 %v5147, 0.0
  %v7248 = vmax.f32 %v5258, 0.0
  %v7249 = vmax.f32 %v5260, 0.0
  %v7250 = vmax.f32 %v5371, 0.0
  %v7251 = vmax.f32 %v5373, 0.0
  %v7252 = vmax.f32 %v5484, 0.0
  %v7253 = vmax.f32 %v5486, 0.0
  %v7254 = vmax.f32 %v5597, 0.0
  %v7255 = vmax.f32 %v5599, 0.0
  %v7256 = vmax.f32 %v5710, 0.0
  %v7257 = vmax.f32 %v5712, 0.0
  %v7258 = vmax.f32 %v5823, 0.0
  %v7259 = vmax.f32 %v5825, 0.0
  %v7260 = vmax.f32 %v5936, 0.0
  %v7261 = vmax.f32 %v5938, 0.0
  %v7262 = vmax.f32 %v6049, 0.0
  %v7263 = vmax.f32 %v6051, 0.0
  %v7264 = vmax.f32 %v6162, 0.0
  %v7265 = vmax.f32 %v6164, 0.0
  %v7266 = vmax.f32 %v6275, 0.0
  %v7267 = vmax.f32 %v6277, 0.0
  %v7268 = vmax.f32 %v6388, 0.0
  %v7269 = vmax.f32 %v6390, 0.0
  %v7270 = vmax.f32 %v6501, 0.0
  %v7271 = vmax.f32 %v6503, 0.0
  %v7272 = vmax.f32 %v6614, 0.0
  %v7273 = vmax.f32 %v6616, 0.0
  %v7274 = vmax.f32 %v6727, 0.0
  %v7275 = vmax.f32 %v6729, 0.0
  %v7276 = vmax.f32 %v6840, 0.0
  %v7277 = vmax.f32 %v6842, 0.0
  %v7278 = vmax.f32 %v3343, 0.0
  %v7279 = vmax.f32 %v3345, 0.0
  %v7280 = vmax.f32 %v3456, 0.0
  %v7281 = vmax.f32 %v3458, 0.0
  %v7282 = vmax.f32 %v3569, 0.0
  %v7283 = vmax.f32 %v3571, 0.0
  %v7284 = vmax.f32 %v3682, 0.0
  %v7285 = vmax.f32 %v3684, 0.0
  %v7286 = vmax.f32 %v3795, 0.0
  %v7287 = vmax.f32 %v3797, 0.0
  %v7288 = vmax.f32 %v3908, 0.0
  %v7289 = vmax.f32 %v3910, 0.0
  %v7290 = vmax.f32 %v4021, 0.0
  %v7291 = vmax.f32 %v4023, 0.0
  %v7292 = vmax.f32 %v4134, 0.0
  %v7293 = vmax.f32 %v4136, 0.0
  %v7294 = vmax.f32 %v4247, 0.0
  %v7295 = vmax.f32 %v4249, 0.0
  %v7296 = vmax.f32 %v4360, 0.0
  %v7297 = vmax.f32 %v4362, 0.0
  %v7298 = vmax.f32 %v4473, 0.0
  %v7299 = vmax.f32 %v4475, 0.0
  %v7300 = vmax.f32 %v4586, 0.0
  %v7301 = vmax.f32 %v4588, 0.0
  %v7302 = vmax.f32 %v4699, 0.0
  %v7303 = vmax.f32 %v4701, 0.0
  %v7304 = vmax.f32 %v4812, 0.0
  %v7305 = vmax.f32 %v4814, 0.0
  %v7306 = vmax.f32 %v4925, 0.0
  %v7307 = vmax.f32 %v4927, 0.0
  %v7308 = vmax.f32 %v5038, 0.0
  %v7309 = vmax.f32 %v5040, 0.0
  %v7310 = vmax.f32 %v5151, 0.0
  %v7311 = vmax.f32 %v5153, 0.0
  %v7312 = vmax.f32 %v5264, 0.0
  %v7313 = vmax.f32 %v5266, 0.0
  %v7314 = vmax.f32 %v5377, 0.0
  %v7315 = vmax.f32 %v5379, 0.0
  %v7316 = vmax.f32 %v5490, 0.0
  %v7317 = vmax.f32 %v5492, 0.0
  %v7318 = vmax.f32 %v5603, 0.0
  %v7319 = vmax.f32 %v5605, 0.0
  %v7320 = vmax.f32 %v5716, 0.0
  %v7321 = vmax.f32 %v5718, 0.0
  %v7322 = vmax.f32 %v5829, 0.0
  %v7323 = vmax.f32 %v5831, 0.0
  %v7324 = vmax.f32 %v5942, 0.0
  %v7325 = vmax.f32 %v5944, 0.0
  %v7326 = vmax.f32 %v6055, 0.0
  %v7327 = vmax.f32 %v6057, 0.0
  %v7328 = vmax.f32 %v6168, 0.0
  %v7329 = vmax.f32 %v6170, 0.0
  %v7330 = vmax.f32 %v6281, 0.0
  %v7331 = vmax.f32 %v6283, 0.0
  %v7332 = vmax.f32 %v6394, 0.0
  %v7333 = vmax.f32 %v6396, 0.0
  %v7334 = vmax.f32 %v6507, 0.0
  %v7335 = vmax.f32 %v6509, 0.0
  %v7336 = vmax.f32 %v6620, 0.0
  %v7337 = vmax.f32 %v6622, 0.0
  %v7338 = vmax.f32 %v6733, 0.0
  %v7339 = vmax.f32 %v6735, 0.0
  %v7340 = vmax.f32 %v6846, 0.0
  %v7341 = vmax.f32 %v6848, 0.0
  %v7342 = vmax.f32 %v3347, 0.0
  %v7343 = vmax.f32 %v3349, 0.0
  %v7344 = vmax.f32 %v3460, 0.0
  %v7345 = vmax.f32 %v3462, 0.0
  %v7346 = vmax.f32 %v3573, 0.0
  %v7347 = vmax.f32 %v3575, 0.0
  %v7348 = vmax.f32 %v3686, 0.0
  %v7349 = vmax.f32 %v3688, 0.0
  %v7350 = vmax.f32 %v3799, 0.0
  %v7351 = vmax.f32 %v3801, 0.0
  %v7352 = vmax.f32 %v3912, 0.0
  %v7353 = vmax.f32 %v3914, 0.0
  %v7354 = vmax.f32 %v4025, 0.0
  %v7355 = vmax.f32 %v4027, 0.0
  %v7356 = vmax.f32 %v4138, 0.0
  %v7357 = vmax.f32 %v4140, 0.0
  %v7358 = vmax.f32 %v4251, 0.0
  %v7359 = vmax.f32 %v4253, 0.0
  %v7360 = vmax.f32 %v4364, 0.0
  %v7361 = vmax.f32 %v4366, 0.0
  %v7362 = vmax.f32 %v4477, 0.0
  %v7363 = vmax.f32 %v4479, 0.0
  %v7364 = vmax.f32 %v4590, 0.0
  %v7365 = vmax.f32 %v4592, 0.0
  %v7366 = vmax.f32 %v4703, 0.0
  %v7367 = vmax.f32 %v4705, 0.0
  %v7368 = vmax.f32 %v4816, 0.0
  %v7369 = vmax.f32 %v4818, 0.0
  %v7370 = vmax.f32 %v4929, 0.0
  %v7371 = vmax.f32 %v4931, 0.0
  %v7372 = vmax.f32 %v5042, 0.0
  %v7373 = vmax.f32 %v5044, 0.0
  %v7374 = vmax.f32 %v5155, 0.0
  %v7375 = vmax.f32 %v5157, 0.0
  %v7376 = vmax.f32 %v5268, 0.0
  %v7377 = vmax.f32 %v5270, 0.0
  %v7378 = vmax.f32 %v5381, 0.0
  %v7379 = vmax.f32 %v5383, 0.0
  %v7380 = vmax.f32 %v5494, 0.0
  %v7381 = vmax.f32 %v5496, 0.0
  %v7382 = vmax.f32 %v5607, 0.0
  %v7383 = vmax.f32 %v5609, 0.0
  %v7384 = vmax.f32 %v5720, 0.0
  %v7385 = vmax.f32 %v5722, 0.0
  %v7386 = vmax.f32 %v5833, 0.0
  %v7387 = vmax.f32 %v5835, 0.0
  %v7388 = vmax.f32 %v5946, 0.0
  %v7389 = vmax.f32 %v5948, 0.0
  %v7390 = vmax.f32 %v6059, 0.0
  %v7391 = vmax.f32 %v6061, 0.0
  %v7392 = vmax.f32 %v6172, 0.0
  %v7393 = vmax.f32 %v6174, 0.0
  %v7394 = vmax.f32 %v6285, 0.0
  %v7395 = vmax.f32 %v6287, 0.0
  %v7396 = vmax.f32 %v6398, 0.0
  %v7397 = vmax.f32 %v6400, 0.0
  %v7398 = vmax.f32 %v6511, 0.0
  %v7399 = vmax.f32 %v6513, 0.0
  %v7400 = vmax.f32 %v6624, 0.0
  %v7401 = vmax.f32 %v6626, 0.0
  %v7402 = vmax.f32 %v6737, 0.0
  %v7403 = vmax.f32 %v6739, 0.0
  %v7404 = vmax.f32 %v6850, 0.0
  %v7405 = vmax.f32 %v6852, 0.0
  %v7406 = vmax.f32 %v3353, 0.0
  %v7407 = vmax.f32 %v3355, 0.0
  %v7408 = vmax.f32 %v3466, 0.0
  %v7409 = vmax.f32 %v3468, 0.0
  %v7410 = vmax.f32 %v3579, 0.0
  %v7411 = vmax.f32 %v3581, 0.0
  %v7412 = vmax.f32 %v3692, 0.0
  %v7413 = vmax.f32 %v3694, 0.0
  %v7414 = vmax.f32 %v3805, 0.0
  %v7415 = vmax.f32 %v3807, 0.0
  %v7416 = vmax.f32 %v3918, 0.0
  %v7417 = vmax.f32 %v3920, 0.0
  %v7418 = vmax.f32 %v4031, 0.0
  %v7419 = vmax.f32 %v4033, 0.0
  %v7420 = vmax.f32 %v4144, 0.0
  %v7421 = vmax.f32 %v4146, 0.0
  %v7422 = vmax.f32 %v4257, 0.0
  %v7423 = vmax.f32 %v4259, 0.0
  %v7424 = vmax.f32 %v4370, 0.0
  %v7425 = vmax.f32 %v4372, 0.0
  %v7426 = vmax.f32 %v4483, 0.0
  %v7427 = vmax.f32 %v4485, 0.0
  %v7428 = vmax.f32 %v4596, 0.0
  %v7429 = vmax.f32 %v4598, 0.0
  %v7430 = vmax.f32 %v4709, 0.0
  %v7431 = vmax.f32 %v4711, 0.0
  %v7432 = vmax.f32 %v4822, 0.0
  %v7433 = vmax.f32 %v4824, 0.0
  %v7434 = vmax.f32 %v4935, 0.0
  %v7435 = vmax.f32 %v4937, 0.0
  %v7436 = vmax.f32 %v5048, 0.0
  %v7437 = vmax.f32 %v5050, 0.0
  %v7438 = vmax.f32 %v5161, 0.0
  %v7439 = vmax.f32 %v5163, 0.0
  %v7440 = vmax.f32 %v5274, 0.0
  %v7441 = vmax.f32 %v5276, 0.0
  %v7442 = vmax.f32 %v5387, 0.0
  %v7443 = vmax.f32 %v5389, 0.0
  %v7444 = vmax.f32 %v5500, 0.0
  %v7445 = vmax.f32 %v5502, 0.0
  %v7446 = vmax.f32 %v5613, 0.0
  %v7447 = vmax.f32 %v5615, 0.0
  %v7448 = vmax.f32 %v5726, 0.0
  %v7449 = vmax.f32 %v5728, 0.0
  %v7450 = vmax.f32 %v5839, 0.0
  %v7451 = vmax.f32 %v5841, 0.0
  %v7452 = vmax.f32 %v5952, 0.0
  %v7453 = vmax.f32 %v5954, 0.0
  %v7454 = vmax.f32 %v6065, 0.0
  %v7455 = vmax.f32 %v6067, 0.0
  %v7456 = vmax.f32 %v6178, 0.0
  %v7457 = vmax.f32 %v6180, 0.0
  %v7458 = vmax.f32 %v6291, 0.0
  %v7459 = vmax.f32 %v6293, 0.0
  %v7460 = vmax.f32 %v6404, 0.0
  %v7461 = vmax.f32 %v6406, 0.0
  %v7462 = vmax.f32 %v6517, 0.0
  %v7463 = vmax.f32 %v6519, 0.0
  %v7464 = vmax.f32 %v6630, 0.0
  %v7465 = vmax.f32 %v6632, 0.0
  %v7466 = vmax.f32 %v6743, 0.0
  %v7467 = vmax.f32 %v6745, 0.0
  %v7468 = vmax.f32 %v6856, 0.0
  %v7469 = vmax.f32 %v6858, 0.0
  %v7470 = vmax.f32 %v3357, 0.0
  %v7471 = vmax.f32 %v3359, 0.0
  %v7472 = vmax.f32 %v3470, 0.0
  %v7473 = vmax.f32 %v3472, 0.0
  %v7474 = vmax.f32 %v3583, 0.0
  %v7475 = vmax.f32 %v3585, 0.0
  %v7476 = vmax.f32 %v3696, 0.0
  %v7477 = vmax.f32 %v3698, 0.0
  %v7478 = vmax.f32 %v3809, 0.0
  %v7479 = vmax.f32 %v3811, 0.0
  %v7480 = vmax.f32 %v3922, 0.0
  %v7481 = vmax.f32 %v3924, 0.0
  %v7482 = vmax.f32 %v4035, 0.0
  %v7483 = vmax.f32 %v4037, 0.0
  %v7484 = vmax.f32 %v4148, 0.0
  %v7485 = vmax.f32 %v4150, 0.0
  %v7486 = vmax.f32 %v4261, 0.0
  %v7487 = vmax.f32 %v4263, 0.0
  %v7488 = vmax.f32 %v4374, 0.0
  %v7489 = vmax.f32 %v4376, 0.0
  %v7490 = vmax.f32 %v4487, 0.0
  %v7491 = vmax.f32 %v4489, 0.0
  %v7492 = vmax.f32 %v4600, 0.0
  %v7493 = vmax.f32 %v4602, 0.0
  %v7494 = vmax.f32 %v4713, 0.0
  %v7495 = vmax.f32 %v4715, 0.0
  %v7496 = vmax.f32 %v4826, 0.0
  %v7497 = vmax.f32 %v4828, 0.0
  %v7498 = vmax.f32 %v4939, 0.0
  %v7499 = vmax.f32 %v4941, 0.0
  %v7500 = vmax.f32 %v5052, 0.0
  %v7501 = vmax.f32 %v5054, 0.0
  %v7502 = vmax.f32 %v5165, 0.0
  %v7503 = vmax.f32 %v5167, 0.0
  %v7504 = vmax.f32 %v5278, 0.0
  %v7505 = vmax.f32 %v5280, 0.0
  %v7506 = vmax.f32 %v5391, 0.0
  %v7507 = vmax.f32 %v5393, 0.0
  %v7508 = vmax.f32 %v5504, 0.0
  %v7509 = vmax.f32 %v5506, 0.0
  %v7510 = vmax.f32 %v5617, 0.0
  %v7511 = vmax.f32 %v5619, 0.0
  %v7512 = vmax.f32 %v5730, 0.0
  %v7513 = vmax.f32 %v5732, 0.0
  %v7514 = vmax.f32 %v5843, 0.0
  %v7515 = vmax.f32 %v5845, 0.0
  %v7516 = vmax.f32 %v5956, 0.0
  %v7517 = vmax.f32 %v5958, 0.0
  %v7518 = vmax.f32 %v6069, 0.0
  %v7519 = vmax.f32 %v6071, 0.0
  %v7520 = vmax.f32 %v6182, 0.0
  %v7521 = vmax.f32 %v6184, 0.0
  %v7522 = vmax.f32 %v6295, 0.0
  %v7523 = vmax.f32 %v6297, 0.0
  %v7524 = vmax.f32 %v6408, 0.0
  %v7525 = vmax.f32 %v6410, 0.0
  %v7526 = vmax.f32 %v6521, 0.0
  %v7527 = vmax.f32 %v6523, 0.0
  %v7528 = vmax.f32 %v6634, 0.0
  %v7529 = vmax.f32 %v6636, 0.0
  %v7530 = vmax.f32 %v6747, 0.0
  %v7531 = vmax.f32 %v6749, 0.0
  %v7532 = vmax.f32 %v6860, 0.0
  %v7533 = vmax.f32 %v6862, 0.0
  %v7534 = vmax.f32 %v3363, 0.0
  %v7535 = vmax.f32 %v3365, 0.0
  %v7536 = vmax.f32 %v3476, 0.0
  %v7537 = vmax.f32 %v3478, 0.0
  %v7538 = vmax.f32 %v3589, 0.0
  %v7539 = vmax.f32 %v3591, 0.0
  %v7540 = vmax.f32 %v3702, 0.0
  %v7541 = vmax.f32 %v3704, 0.0
  %v7542 = vmax.f32 %v3815, 0.0
  %v7543 = vmax.f32 %v3817, 0.0
  %v7544 = vmax.f32 %v3928, 0.0
  %v7545 = vmax.f32 %v3930, 0.0
  %v7546 = vmax.f32 %v4041, 0.0
  %v7547 = vmax.f32 %v4043, 0.0
  %v7548 = vmax.f32 %v4154, 0.0
  %v7549 = vmax.f32 %v4156, 0.0
  %v7550 = vmax.f32 %v4267, 0.0
  %v7551 = vmax.f32 %v4269, 0.0
  %v7552 = vmax.f32 %v4380, 0.0
  %v7553 = vmax.f32 %v4382, 0.0
  %v7554 = vmax.f32 %v4493, 0.0
  %v7555 = vmax.f32 %v4495, 0.0
  %v7556 = vmax.f32 %v4606, 0.0
  %v7557 = vmax.f32 %v4608, 0.0
  %v7558 = vmax.f32 %v4719, 0.0
  %v7559 = vmax.f32 %v4721, 0.0
  %v7560 = vmax.f32 %v4832, 0.0
  %v7561 = vmax.f32 %v4834, 0.0
  %v7562 = vmax.f32 %v4945, 0.0
  %v7563 = vmax.f32 %v4947, 0.0
  %v7564 = vmax.f32 %v5058, 0.0
  %v7565 = vmax.f32 %v5060, 0.0
  %v7566 = vmax.f32 %v5171, 0.0
  %v7567 = vmax.f32 %v5173, 0.0
  %v7568 = vmax.f32 %v5284, 0.0
  %v7569 = vmax.f32 %v5286, 0.0
  %v7570 = vmax.f32 %v5397, 0.0
  %v7571 = vmax.f32 %v5399, 0.0
  %v7572 = vmax.f32 %v5510, 0.0
  %v7573 = vmax.f32 %v5512, 0.0
  %v7574 = vmax.f32 %v5623, 0.0
  %v7575 = vmax.f32 %v5625, 0.0
  %v7576 = vmax.f32 %v5736, 0.0
  %v7577 = vmax.f32 %v5738, 0.0
  %v7578 = vmax.f32 %v5849, 0.0
  %v7579 = vmax.f32 %v5851, 0.0
  %v7580 = vmax.f32 %v5962, 0.0
  %v7581 = vmax.f32 %v5964, 0.0
  %v7582 = vmax.f32 %v6075, 0.0
  %v7583 = vmax.f32 %v6077, 0.0
  %v7584 = vmax.f32 %v6188, 0.0
  %v7585 = vmax.f32 %v6190, 0.0
  %v7586 = vmax.f32 %v6301, 0.0
  %v7587 = vmax.f32 %v6303, 0.0
  %v7588 = vmax.f32 %v6414, 0.0
  %v7589 = vmax.f32 %v6416, 0.0
  %v7590 = vmax.f32 %v6527, 0.0
  %v7591 = vmax.f32 %v6529, 0.0
  %v7592 = vmax.f32 %v6640, 0.0
  %v7593 = vmax.f32 %v6642, 0.0
  %v7594 = vmax.f32 %v6753, 0.0
  %v7595 = vmax.f32 %v6755, 0.0
  %v7596 = vmax.f32 %v6866, 0.0
  %v7597 = vmax.f32 %v6868, 0.0
  %v7598 = vmax.f32 %v3367, 0.0
  %v7599 = vmax.f32 %v3369, 0.0
  %v7600 = vmax.f32 %v3480, 0.0
  %v7601 = vmax.f32 %v3482, 0.0
  %v7602 = vmax.f32 %v3593, 0.0
  %v7603 = vmax.f32 %v3595, 0.0
  %v7604 = vmax.f32 %v3706, 0.0
  %v7605 = vmax.f32 %v3708, 0.0
  %v7606 = vmax.f32 %v3819, 0.0
  %v7607 = vmax.f32 %v3821, 0.0
  %v7608 = vmax.f32 %v3932, 0.0
  %v7609 = vmax.f32 %v3934, 0.0
  %v7610 = vmax.f32 %v4045, 0.0
  %v7611 = vmax.f32 %v4047, 0.0
  %v7612 = vmax.f32 %v4158, 0.0
  %v7613 = vmax.f32 %v4160, 0.0
  %v7614 = vmax.f32 %v4271, 0.0
  %v7615 = vmax.f32 %v4273, 0.0
  %v7616 = vmax.f32 %v4384, 0.0
  %v7617 = vmax.f32 %v4386, 0.0
  %v7618 = vmax.f32 %v4497, 0.0
  %v7619 = vmax.f32 %v4499, 0.0
  %v7620 = vmax.f32 %v4610, 0.0
  %v7621 = vmax.f32 %v4612, 0.0
  %v7622 = vmax.f32 %v4723, 0.0
  %v7623 = vmax.f32 %v4725, 0.0
  %v7624 = vmax.f32 %v4836, 0.0
  %v7625 = vmax.f32 %v4838, 0.0
  %v7626 = vmax.f32 %v4949, 0.0
  %v7627 = vmax.f32 %v4951, 0.0
  %v7628 = vmax.f32 %v5062, 0.0
  %v7629 = vmax.f32 %v5064, 0.0
  %v7630 = vmax.f32 %v5175, 0.0
  %v7631 = vmax.f32 %v5177, 0.0
  %v7632 = vmax.f32 %v5288, 0.0
  %v7633 = vmax.f32 %v5290, 0.0
  %v7634 = vmax.f32 %v5401, 0.0
  %v7635 = vmax.f32 %v5403, 0.0
  %v7636 = vmax.f32 %v5514, 0.0
  %v7637 = vmax.f32 %v5516, 0.0
  %v7638 = vmax.f32 %v5627, 0.0
  %v7639 = vmax.f32 %v5629, 0.0
  %v7640 = vmax.f32 %v5740, 0.0
  %v7641 = vmax.f32 %v5742, 0.0
  %v7642 = vmax.f32 %v5853, 0.0
  %v7643 = vmax.f32 %v5855, 0.0
  %v7644 = vmax.f32 %v5966, 0.0
  %v7645 = vmax.f32 %v5968, 0.0
  %v7646 = vmax.f32 %v6079, 0.0
  %v7647 = vmax.f32 %v6081, 0.0
  %v7648 = vmax.f32 %v6192, 0.0
  %v7649 = vmax.f32 %v6194, 0.0
  %v7650 = vmax.f32 %v6305, 0.0
  %v7651 = vmax.f32 %v6307, 0.0
  %v7652 = vmax.f32 %v6418, 0.0
  %v7653 = vmax.f32 %v6420, 0.0
  %v7654 = vmax.f32 %v6531, 0.0
  %v7655 = vmax.f32 %v6533, 0.0
  %v7656 = vmax.f32 %v6644, 0.0
  %v7657 = vmax.f32 %v6646, 0.0
  %v7658 = vmax.f32 %v6757, 0.0
  %v7659 = vmax.f32 %v6759, 0.0
  %v7660 = vmax.f32 %v6870, 0.0
  %v7661 = vmax.f32 %v6872, 0.0
  %v7662 = vmax.f32 %v3373, 0.0
  %v7663 = vmax.f32 %v3375, 0.0
  %v7664 = vmax.f32 %v3486, 0.0
  %v7665 = vmax.f32 %v3488, 0.0
  %v7666 = vmax.f32 %v3599, 0.0
  %v7667 = vmax.f32 %v3601, 0.0
  %v7668 = vmax.f32 %v3712, 0.0
  %v7669 = vmax.f32 %v3714, 0.0
  %v7670 = vmax.f32 %v3825, 0.0
  %v7671 = vmax.f32 %v3827, 0.0
  %v7672 = vmax.f32 %v3938, 0.0
  %v7673 = vmax.f32 %v3940, 0.0
  %v7674 = vmax.f32 %v4051, 0.0
  %v7675 = vmax.f32 %v4053, 0.0
  %v7676 = vmax.f32 %v4164, 0.0
  %v7677 = vmax.f32 %v4166, 0.0
  %v7678 = vmax.f32 %v4277, 0.0
  %v7679 = vmax.f32 %v4279, 0.0
  %v7680 = vmax.f32 %v4390, 0.0
  %v7681 = vmax.f32 %v4392, 0.0
  %v7682 = vmax.f32 %v4503, 0.0
  %v7683 = vmax.f32 %v4505, 0.0
  %v7684 = vmax.f32 %v4616, 0.0
  %v7685 = vmax.f32 %v4618, 0.0
  %v7686 = vmax.f32 %v4729, 0.0
  %v7687 = vmax.f32 %v4731, 0.0
  %v7688 = vmax.f32 %v4842, 0.0
  %v7689 = vmax.f32 %v4844, 0.0
  %v7690 = vmax.f32 %v4955, 0.0
  %v7691 = vmax.f32 %v4957, 0.0
  %v7692 = vmax.f32 %v5068, 0.0
  %v7693 = vmax.f32 %v5070, 0.0
  %v7694 = vmax.f32 %v5181, 0.0
  %v7695 = vmax.f32 %v5183, 0.0
  %v7696 = vmax.f32 %v5294, 0.0
  %v7697 = vmax.f32 %v5296, 0.0
  %v7698 = vmax.f32 %v5407, 0.0
  %v7699 = vmax.f32 %v5409, 0.0
  %v7700 = vmax.f32 %v5520, 0.0
  %v7701 = vmax.f32 %v5522, 0.0
  %v7702 = vmax.f32 %v5633, 0.0
  %v7703 = vmax.f32 %v5635, 0.0
  %v7704 = vmax.f32 %v5746, 0.0
  %v7705 = vmax.f32 %v5748, 0.0
  %v7706 = vmax.f32 %v5859, 0.0
  %v7707 = vmax.f32 %v5861, 0.0
  %v7708 = vmax.f32 %v5972, 0.0
  %v7709 = vmax.f32 %v5974, 0.0
  %v7710 = vmax.f32 %v6085, 0.0
  %v7711 = vmax.f32 %v6087, 0.0
  %v7712 = vmax.f32 %v6198, 0.0
  %v7713 = vmax.f32 %v6200, 0.0
  %v7714 = vmax.f32 %v6311, 0.0
  %v7715 = vmax.f32 %v6313, 0.0
  %v7716 = vmax.f32 %v6424, 0.0
  %v7717 = vmax.f32 %v6426, 0.0
  %v7718 = vmax.f32 %v6537, 0.0
  %v7719 = vmax.f32 %v6539, 0.0
  %v7720 = vmax.f32 %v6650, 0.0
  %v7721 = vmax.f32 %v6652, 0.0
  %v7722 = vmax.f32 %v6763, 0.0
  %v7723 = vmax.f32 %v6765, 0.0
  %v7724 = vmax.f32 %v6876, 0.0
  %v7725 = vmax.f32 %v6878, 0.0
  %v7726 = vmax.f32 %v3377, 0.0
  %v7727 = vmax.f32 %v3379, 0.0
  %v7728 = vmax.f32 %v3490, 0.0
  %v7729 = vmax.f32 %v3492, 0.0
  %v7730 = vmax.f32 %v3603, 0.0
  %v7731 = vmax.f32 %v3605, 0.0
  %v7732 = vmax.f32 %v3716, 0.0
  %v7733 = vmax.f32 %v3718, 0.0
  %v7734 = vmax.f32 %v3829, 0.0
  %v7735 = vmax.f32 %v3831, 0.0
  %v7736 = vmax.f32 %v3942, 0.0
  %v7737 = vmax.f32 %v3944, 0.0
  %v7738 = vmax.f32 %v4055, 0.0
  %v7739 = vmax.f32 %v4057, 0.0
  %v7740 = vmax.f32 %v4168, 0.0
  %v7741 = vmax.f32 %v4170, 0.0
  %v7742 = vmax.f32 %v4281, 0.0
  %v7743 = vmax.f32 %v4283, 0.0
  %v7744 = vmax.f32 %v4394, 0.0
  %v7745 = vmax.f32 %v4396, 0.0
  %v7746 = vmax.f32 %v4507, 0.0
  %v7747 = vmax.f32 %v4509, 0.0
  %v7748 = vmax.f32 %v4620, 0.0
  %v7749 = vmax.f32 %v4622, 0.0
  %v7750 = vmax.f32 %v4733, 0.0
  %v7751 = vmax.f32 %v4735, 0.0
  %v7752 = vmax.f32 %v4846, 0.0
  %v7753 = vmax.f32 %v4848, 0.0
  %v7754 = vmax.f32 %v4959, 0.0
  %v7755 = vmax.f32 %v4961, 0.0
  %v7756 = vmax.f32 %v5072, 0.0
  %v7757 = vmax.f32 %v5074, 0.0
  %v7758 = vmax.f32 %v5185, 0.0
  %v7759 = vmax.f32 %v5187, 0.0
  %v7760 = vmax.f32 %v5298, 0.0
  %v7761 = vmax.f32 %v5300, 0.0
  %v7762 = vmax.f32 %v5411, 0.0
  %v7763 = vmax.f32 %v5413, 0.0
  %v7764 = vmax.f32 %v5524, 0.0
  %v7765 = vmax.f32 %v5526, 0.0
  %v7766 = vmax.f32 %v5637, 0.0
  %v7767 = vmax.f32 %v5639, 0.0
  %v7768 = vmax.f32 %v5750, 0.0
  %v7769 = vmax.f32 %v5752, 0.0
  %v7770 = vmax.f32 %v5863, 0.0
  %v7771 = vmax.f32 %v5865, 0.0
  %v7772 = vmax.f32 %v5976, 0.0
  %v7773 = vmax.f32 %v5978, 0.0
  %v7774 = vmax.f32 %v6089, 0.0
  %v7775 = vmax.f32 %v6091, 0.0
  %v7776 = vmax.f32 %v6202, 0.0
  %v7777 = vmax.f32 %v6204, 0.0
  %v7778 = vmax.f32 %v6315, 0.0
  %v7779 = vmax.f32 %v6317, 0.0
  %v7780 = vmax.f32 %v6428, 0.0
  %v7781 = vmax.f32 %v6430, 0.0
  %v7782 = vmax.f32 %v6541, 0.0
  %v7783 = vmax.f32 %v6543, 0.0
  %v7784 = vmax.f32 %v6654, 0.0
  %v7785 = vmax.f32 %v6656, 0.0
  %v7786 = vmax.f32 %v6767, 0.0
  %v7787 = vmax.f32 %v6769, 0.0
  %v7788 = vmax.f32 %v6880, 0.0
  %v7789 = vmax.f32 %v6882, 0.0
  %v7790 = vmax.f32 %v3383, 0.0
  %v7791 = vmax.f32 %v3385, 0.0
  %v7792 = vmax.f32 %v3496, 0.0
  %v7793 = vmax.f32 %v3498, 0.0
  %v7794 = vmax.f32 %v3609, 0.0
  %v7795 = vmax.f32 %v3611, 0.0
  %v7796 = vmax.f32 %v3722, 0.0
  %v7797 = vmax.f32 %v3724, 0.0
  %v7798 = vmax.f32 %v3835, 0.0
  %v7799 = vmax.f32 %v3837, 0.0
  %v7800 = vmax.f32 %v3948, 0.0
  %v7801 = vmax.f32 %v3950, 0.0
  %v7802 = vmax.f32 %v4061, 0.0
  %v7803 = vmax.f32 %v4063, 0.0
  %v7804 = vmax.f32 %v4174, 0.0
  %v7805 = vmax.f32 %v4176, 0.0
  %v7806 = vmax.f32 %v4287, 0.0
  %v7807 = vmax.f32 %v4289, 0.0
  %v7808 = vmax.f32 %v4400, 0.0
  %v7809 = vmax.f32 %v4402, 0.0
  %v7810 = vmax.f32 %v4513, 0.0
  %v7811 = vmax.f32 %v4515, 0.0
  %v7812 = vmax.f32 %v4626, 0.0
  %v7813 = vmax.f32 %v4628, 0.0
  %v7814 = vmax.f32 %v4739, 0.0
  %v7815 = vmax.f32 %v4741, 0.0
  %v7816 = vmax.f32 %v4852, 0.0
  %v7817 = vmax.f32 %v4854, 0.0
  %v7818 = vmax.f32 %v4965, 0.0
  %v7819 = vmax.f32 %v4967, 0.0
  %v7820 = vmax.f32 %v5078, 0.0
  %v7821 = vmax.f32 %v5080, 0.0
  %v7822 = vmax.f32 %v5191, 0.0
  %v7823 = vmax.f32 %v5193, 0.0
  %v7824 = vmax.f32 %v5304, 0.0
  %v7825 = vmax.f32 %v5306, 0.0
  %v7826 = vmax.f32 %v5417, 0.0
  %v7827 = vmax.f32 %v5419, 0.0
  %v7828 = vmax.f32 %v5530, 0.0
  %v7829 = vmax.f32 %v5532, 0.0
  %v7830 = vmax.f32 %v5643, 0.0
  %v7831 = vmax.f32 %v5645, 0.0
  %v7832 = vmax.f32 %v5756, 0.0
  %v7833 = vmax.f32 %v5758, 0.0
  %v7834 = vmax.f32 %v5869, 0.0
  %v7835 = vmax.f32 %v5871, 0.0
  %v7836 = vmax.f32 %v5982, 0.0
  %v7837 = vmax.f32 %v5984, 0.0
  %v7838 = vmax.f32 %v6095, 0.0
  %v7839 = vmax.f32 %v6097, 0.0
  %v7840 = vmax.f32 %v6208, 0.0
  %v7841 = vmax.f32 %v6210, 0.0
  %v7842 = vmax.f32 %v6321, 0.0
  %v7843 = vmax.f32 %v6323, 0.0
  %v7844 = vmax.f32 %v6434, 0.0
  %v7845 = vmax.f32 %v6436, 0.0
  %v7846 = vmax.f32 %v6547, 0.0
  %v7847 = vmax.f32 %v6549, 0.0
  %v7848 = vmax.f32 %v6660, 0.0
  %v7849 = vmax.f32 %v6662, 0.0
  %v7850 = vmax.f32 %v6773, 0.0
  %v7851 = vmax.f32 %v6775, 0.0
  %v7852 = vmax.f32 %v6886, 0.0
  %v7853 = vmax.f32 %v6888, 0.0
  %v7854 = vmax.f32 %v3387, 0.0
  %v7855 = vmax.f32 %v3389, 0.0
  %v7856 = vmax.f32 %v3500, 0.0
  %v7857 = vmax.f32 %v3502, 0.0
  %v7858 = vmax.f32 %v3613, 0.0
  %v7859 = vmax.f32 %v3615, 0.0
  %v7860 = vmax.f32 %v3726, 0.0
  %v7861 = vmax.f32 %v3728, 0.0
  %v7862 = vmax.f32 %v3839, 0.0
  %v7863 = vmax.f32 %v3841, 0.0
  %v7864 = vmax.f32 %v3952, 0.0
  %v7865 = vmax.f32 %v3954, 0.0
  %v7866 = vmax.f32 %v4065, 0.0
  %v7867 = vmax.f32 %v4067, 0.0
  %v7868 = vmax.f32 %v4178, 0.0
  %v7869 = vmax.f32 %v4180, 0.0
  %v7870 = vmax.f32 %v4291, 0.0
  %v7871 = vmax.f32 %v4293, 0.0
  %v7872 = vmax.f32 %v4404, 0.0
  %v7873 = vmax.f32 %v4406, 0.0
  %v7874 = vmax.f32 %v4517, 0.0
  %v7875 = vmax.f32 %v4519, 0.0
  %v7876 = vmax.f32 %v4630, 0.0
  %v7877 = vmax.f32 %v4632, 0.0
  %v7878 = vmax.f32 %v4743, 0.0
  %v7879 = vmax.f32 %v4745, 0.0
  %v7880 = vmax.f32 %v4856, 0.0
  %v7881 = vmax.f32 %v4858, 0.0
  %v7882 = vmax.f32 %v4969, 0.0
  %v7883 = vmax.f32 %v4971, 0.0
  %v7884 = vmax.f32 %v5082, 0.0
  %v7885 = vmax.f32 %v5084, 0.0
  %v7886 = vmax.f32 %v5195, 0.0
  %v7887 = vmax.f32 %v5197, 0.0
  %v7888 = vmax.f32 %v5308, 0.0
  %v7889 = vmax.f32 %v5310, 0.0
  %v7890 = vmax.f32 %v5421, 0.0
  %v7891 = vmax.f32 %v5423, 0.0
  %v7892 = vmax.f32 %v5534, 0.0
  %v7893 = vmax.f32 %v5536, 0.0
  %v7894 = vmax.f32 %v5647, 0.0
  %v7895 = vmax.f32 %v5649, 0.0
  %v7896 = vmax.f32 %v5760, 0.0
  %v7897 = vmax.f32 %v5762, 0.0
  %v7898 = vmax.f32 %v5873, 0.0
  %v7899 = vmax.f32 %v5875, 0.0
  %v7900 = vmax.f32 %v5986, 0.0
  %v7901 = vmax.f32 %v5988, 0.0
  %v7902 = vmax.f32 %v6099, 0.0
  %v7903 = vmax.f32 %v6101, 0.0
  %v7904 = vmax.f32 %v6212, 0.0
  %v7905 = vmax.f32 %v6214, 0.0
  %v7906 = vmax.f32 %v6325, 0.0
  %v7907 = vmax.f32 %v6327, 0.0
  %v7908 = vmax.f32 %v6438, 0.0
  %v7909 = vmax.f32 %v6440, 0.0
  %v7910 = vmax.f32 %v6551, 0.0
  %v7911 = vmax.f32 %v6553, 0.0
  %v7912 = vmax.f32 %v6664, 0.0
  %v7913 = vmax.f32 %v6666, 0.0
  %v7914 = vmax.f32 %v6777, 0.0
  %v7915 = vmax.f32 %v6779, 0.0
  %v7916 = vmax.f32 %v6890, 0.0
  %v7917 = vmax.f32 %v6892, 0.0
  %v7918 = vld [vmem:[%s3] sm:$0xf]
  %v7919 = vld [vmem:[%s3 + $0x4] sm:$0xf]
  %v7920 = vld [vmem:[%s3 + $0x8] sm:$0xf]
  %v7921 = vld [vmem:[%s3 + $0xc] sm:$0xf]
  %v7922 = vld [vmem:[%s3 + $0x10] sm:$0xf]
  %v7923 = vld [vmem:[%s3 + $0x14] sm:$0xf]
  %v7924 = vld [vmem:[%s3 + $0x18] sm:$0xf]
  %v7925 = vld [vmem:[%s3 + $0x1c] sm:$0xf]
  %v7926 = vpack.c.bf16 %v6958, %v6894
  %v7927 = vpack.c.bf16 %v6959, %v6895
  %v7928 = vpack.c.bf16 %v6960, %v6896
  %v7929 = vpack.c.bf16 %v6961, %v6897
  %v7930 = vpack.c.bf16 %v6962, %v6898
  %v7931 = vpack.c.bf16 %v6963, %v6899
  %v7932 = vpack.c.bf16 %v6964, %v6900
  %v7933 = vpack.c.bf16 %v6965, %v6901
  %v7934 = vpack.c.bf16 %v6966, %v6902
  %v7935 = vpack.c.bf16 %v6967, %v6903
  %v7936 = vpack.c.bf16 %v6968, %v6904
  %v7937 = vpack.c.bf16 %v6969, %v6905
  %v7938 = vpack.c.bf16 %v6970, %v6906
  %v7939 = vpack.c.bf16 %v6971, %v6907
  %v7940 = vpack.c.bf16 %v6972, %v6908
  %v7941 = vpack.c.bf16 %v6973, %v6909
  %v7942 = vpack.c.bf16 %v6974, %v6910
  %v7943 = vpack.c.bf16 %v6975, %v6911
  %v7944 = vpack.c.bf16 %v6976, %v6912
  %v7945 = vpack.c.bf16 %v6977, %v6913
  %v7946 = vpack.c.bf16 %v6978, %v6914
  %v7947 = vpack.c.bf16 %v6979, %v6915
  %v7948 = vpack.c.bf16 %v6980, %v6916
  %v7949 = vpack.c.bf16 %v6981, %v6917
  %v7950 = vpack.c.bf16 %v6982, %v6918
  %v7951 = vpack.c.bf16 %v6983, %v6919
  %v7952 = vpack.c.bf16 %v6984, %v6920
  %v7953 = vpack.c.bf16 %v6985, %v6921
  %v7954 = vpack.c.bf16 %v6986, %v6922
  %v7955 = vpack.c.bf16 %v6987, %v6923
  %v7956 = vpack.c.bf16 %v6988, %v6924
  %v7957 = vpack.c.bf16 %v6989, %v6925
  %v7958 = vpack.c.bf16 %v6990, %v6926
  %v7959 = vpack.c.bf16 %v6991, %v6927
  %v7960 = vpack.c.bf16 %v6992, %v6928
  %v7961 = vpack.c.bf16 %v6993, %v6929
  %v7962 = vpack.c.bf16 %v6994, %v6930
  %v7963 = vpack.c.bf16 %v6995, %v6931
  %v7964 = vpack.c.bf16 %v6996, %v6932
  %v7965 = vpack.c.bf16 %v6997, %v6933
  %v7966 = vpack.c.bf16 %v6998, %v6934
  %v7967 = vpack.c.bf16 %v6999, %v6935
  %v7968 = vpack.c.bf16 %v7000, %v6936
  %v7969 = vpack.c.bf16 %v7001, %v6937
  %v7970 = vpack.c.bf16 %v7002, %v6938
  %v7971 = vpack.c.bf16 %v7003, %v6939
  %v7972 = vpack.c.bf16 %v7004, %v6940
  %v7973 = vpack.c.bf16 %v7005, %v6941
  %v7974 = vpack.c.bf16 %v7006, %v6942
  %v7975 = vpack.c.bf16 %v7007, %v6943
  %v7976 = vpack.c.bf16 %v7008, %v6944
  %v7977 = vpack.c.bf16 %v7009, %v6945
  %v7978 = vpack.c.bf16 %v7010, %v6946
  %v7979 = vpack.c.bf16 %v7011, %v6947
  %v7980 = vpack.c.bf16 %v7012, %v6948
  %v7981 = vpack.c.bf16 %v7013, %v6949
  %v7982 = vpack.c.bf16 %v7014, %v6950
  %v7983 = vpack.c.bf16 %v7015, %v6951
  %v7984 = vpack.c.bf16 %v7016, %v6952
  %v7985 = vpack.c.bf16 %v7017, %v6953
  %v7986 = vpack.c.bf16 %v7018, %v6954
  %v7987 = vpack.c.bf16 %v7019, %v6955
  %v7988 = vpack.c.bf16 %v7020, %v6956
  %v7989 = vpack.c.bf16 %v7021, %v6957
  %v7990 = vpack.c.bf16 %v7086, %v7022
  %v7991 = vpack.c.bf16 %v7087, %v7023
  %v7992 = vpack.c.bf16 %v7088, %v7024
  %v7993 = vpack.c.bf16 %v7089, %v7025
  %v7994 = vpack.c.bf16 %v7090, %v7026
  %v7995 = vpack.c.bf16 %v7091, %v7027
  %v7996 = vpack.c.bf16 %v7092, %v7028
  %v7997 = vpack.c.bf16 %v7093, %v7029
  %v7998 = vpack.c.bf16 %v7094, %v7030
  %v7999 = vpack.c.bf16 %v7095, %v7031
  %v8000 = vpack.c.bf16 %v7096, %v7032
  %v8001 = vpack.c.bf16 %v7097, %v7033
  %v8002 = vpack.c.bf16 %v7098, %v7034
  %v8003 = vpack.c.bf16 %v7099, %v7035
  %v8004 = vpack.c.bf16 %v7100, %v7036
  %v8005 = vpack.c.bf16 %v7101, %v7037
  %v8006 = vpack.c.bf16 %v7102, %v7038
  %v8007 = vpack.c.bf16 %v7103, %v7039
  %v8008 = vpack.c.bf16 %v7104, %v7040
  %v8009 = vpack.c.bf16 %v7105, %v7041
  %v8010 = vpack.c.bf16 %v7106, %v7042
  %v8011 = vpack.c.bf16 %v7107, %v7043
  %v8012 = vpack.c.bf16 %v7108, %v7044
  %v8013 = vpack.c.bf16 %v7109, %v7045
  %v8014 = vpack.c.bf16 %v7110, %v7046
  %v8015 = vpack.c.bf16 %v7111, %v7047
  %v8016 = vpack.c.bf16 %v7112, %v7048
  %v8017 = vpack.c.bf16 %v7113, %v7049
  %v8018 = vpack.c.bf16 %v7114, %v7050
  %v8019 = vpack.c.bf16 %v7115, %v7051
  %v8020 = vpack.c.bf16 %v7116, %v7052
  %v8021 = vpack.c.bf16 %v7117, %v7053
  %v8022 = vpack.c.bf16 %v7118, %v7054
  %v8023 = vpack.c.bf16 %v7119, %v7055
  %v8024 = vpack.c.bf16 %v7120, %v7056
  %v8025 = vpack.c.bf16 %v7121, %v7057
  %v8026 = vpack.c.bf16 %v7122, %v7058
  %v8027 = vpack.c.bf16 %v7123, %v7059
  %v8028 = vpack.c.bf16 %v7124, %v7060
  %v8029 = vpack.c.bf16 %v7125, %v7061
  %v8030 = vpack.c.bf16 %v7126, %v7062
  %v8031 = vpack.c.bf16 %v7127, %v7063
  %v8032 = vpack.c.bf16 %v7128, %v7064
  %v8033 = vpack.c.bf16 %v7129, %v7065
  %v8034 = vpack.c.bf16 %v7130, %v7066
  %v8035 = vpack.c.bf16 %v7131, %v7067
  %v8036 = vpack.c.bf16 %v7132, %v7068
  %v8037 = vpack.c.bf16 %v7133, %v7069
  %v8038 = vpack.c.bf16 %v7134, %v7070
  %v8039 = vpack.c.bf16 %v7135, %v7071
  %v8040 = vpack.c.bf16 %v7136, %v7072
  %v8041 = vpack.c.bf16 %v7137, %v7073
  %v8042 = vpack.c.bf16 %v7138, %v7074
  %v8043 = vpack.c.bf16 %v7139, %v7075
  %v8044 = vpack.c.bf16 %v7140, %v7076
  %v8045 = vpack.c.bf16 %v7141, %v7077
  %v8046 = vpack.c.bf16 %v7142, %v7078
  %v8047 = vpack.c.bf16 %v7143, %v7079
  %v8048 = vpack.c.bf16 %v7144, %v7080
  %v8049 = vpack.c.bf16 %v7145, %v7081
  %v8050 = vpack.c.bf16 %v7146, %v7082
  %v8051 = vpack.c.bf16 %v7147, %v7083
  %v8052 = vpack.c.bf16 %v7148, %v7084
  %v8053 = vpack.c.bf16 %v7149, %v7085
  %v8054 = vpack.c.bf16 %v7214, %v7150
  %v8055 = vpack.c.bf16 %v7215, %v7151
  %v8056 = vpack.c.bf16 %v7216, %v7152
  %v8057 = vpack.c.bf16 %v7217, %v7153
  %v8058 = vpack.c.bf16 %v7218, %v7154
  %v8059 = vpack.c.bf16 %v7219, %v7155
  %v8060 = vpack.c.bf16 %v7220, %v7156
  %v8061 = vpack.c.bf16 %v7221, %v7157
  %v8062 = vpack.c.bf16 %v7222, %v7158
  %v8063 = vpack.c.bf16 %v7223, %v7159
  %v8064 = vpack.c.bf16 %v7224, %v7160
  %v8065 = vpack.c.bf16 %v7225, %v7161
  %v8066 = vpack.c.bf16 %v7226, %v7162
  %v8067 = vpack.c.bf16 %v7227, %v7163
  %v8068 = vpack.c.bf16 %v7228, %v7164
  %v8069 = vpack.c.bf16 %v7229, %v7165
  %v8070 = vpack.c.bf16 %v7230, %v7166
  %v8071 = vpack.c.bf16 %v7231, %v7167
  %v8072 = vpack.c.bf16 %v7232, %v7168
  %v8073 = vpack.c.bf16 %v7233, %v7169
  %v8074 = vpack.c.bf16 %v7234, %v7170
  %v8075 = vpack.c.bf16 %v7235, %v7171
  %v8076 = vpack.c.bf16 %v7236, %v7172
  %v8077 = vpack.c.bf16 %v7237, %v7173
  %v8078 = vpack.c.bf16 %v7238, %v7174
  %v8079 = vpack.c.bf16 %v7239, %v7175
  %v8080 = vpack.c.bf16 %v7240, %v7176
  %v8081 = vpack.c.bf16 %v7241, %v7177
  %v8082 = vpack.c.bf16 %v7242, %v7178
  %v8083 = vpack.c.bf16 %v7243, %v7179
  %v8084 = vpack.c.bf16 %v7244, %v7180
  %v8085 = vpack.c.bf16 %v7245, %v7181
  %v8086 = vpack.c.bf16 %v7246, %v7182
  %v8087 = vpack.c.bf16 %v7247, %v7183
  %v8088 = vpack.c.bf16 %v7248, %v7184
  %v8089 = vpack.c.bf16 %v7249, %v7185
  %v8090 = vpack.c.bf16 %v7250, %v7186
  %v8091 = vpack.c.bf16 %v7251, %v7187
  %v8092 = vpack.c.bf16 %v7252, %v7188
  %v8093 = vpack.c.bf16 %v7253, %v7189
  %v8094 = vpack.c.bf16 %v7254, %v7190
  %v8095 = vpack.c.bf16 %v7255, %v7191
  %v8096 = vpack.c.bf16 %v7256, %v7192
  %v8097 = vpack.c.bf16 %v7257, %v7193
  %v8098 = vpack.c.bf16 %v7258, %v7194
  %v8099 = vpack.c.bf16 %v7259, %v7195
  %v8100 = vpack.c.bf16 %v7260, %v7196
  %v8101 = vpack.c.bf16 %v7261, %v7197
  %v8102 = vpack.c.bf16 %v7262, %v7198
  %v8103 = vpack.c.bf16 %v7263, %v7199
  %v8104 = vpack.c.bf16 %v7264, %v7200
  %v8105 = vpack.c.bf16 %v7265, %v7201
  %v8106 = vpack.c.bf16 %v7266, %v7202
  %v8107 = vpack.c.bf16 %v7267, %v7203
  %v8108 = vpack.c.bf16 %v7268, %v7204
  %v8109 = vpack.c.bf16 %v7269, %v7205
  %v8110 = vpack.c.bf16 %v7270, %v7206
  %v8111 = vpack.c.bf16 %v7271, %v7207
  %v8112 = vpack.c.bf16 %v7272, %v7208
  %v8113 = vpack.c.bf16 %v7273, %v7209
  %v8114 = vpack.c.bf16 %v7274, %v7210
  %v8115 = vpack.c.bf16 %v7275, %v7211
  %v8116 = vpack.c.bf16 %v7276, %v7212
  %v8117 = vpack.c.bf16 %v7277, %v7213
  %v8118 = vpack.c.bf16 %v7342, %v7278
  %v8119 = vpack.c.bf16 %v7343, %v7279
  %v8120 = vpack.c.bf16 %v7344, %v7280
  %v8121 = vpack.c.bf16 %v7345, %v7281
  %v8122 = vpack.c.bf16 %v7346, %v7282
  %v8123 = vpack.c.bf16 %v7347, %v7283
  %v8124 = vpack.c.bf16 %v7348, %v7284
  %v8125 = vpack.c.bf16 %v7349, %v7285
  %v8126 = vpack.c.bf16 %v7350, %v7286
  %v8127 = vpack.c.bf16 %v7351, %v7287
  %v8128 = vpack.c.bf16 %v7352, %v7288
  %v8129 = vpack.c.bf16 %v7353, %v7289
  %v8130 = vpack.c.bf16 %v7354, %v7290
  %v8131 = vpack.c.bf16 %v7355, %v7291
  %v8132 = vpack.c.bf16 %v7356, %v7292
  %v8133 = vpack.c.bf16 %v7357, %v7293
  %v8134 = vpack.c.bf16 %v7358, %v7294
  %v8135 = vpack.c.bf16 %v7359, %v7295
  %v8136 = vpack.c.bf16 %v7360, %v7296
  %v8137 = vpack.c.bf16 %v7361, %v7297
  %v8138 = vpack.c.bf16 %v7362, %v7298
  %v8139 = vpack.c.bf16 %v7363, %v7299
  %v8140 = vpack.c.bf16 %v7364, %v7300
  %v8141 = vpack.c.bf16 %v7365, %v7301
  %v8142 = vpack.c.bf16 %v7366, %v7302
  %v8143 = vpack.c.bf16 %v7367, %v7303
  %v8144 = vpack.c.bf16 %v7368, %v7304
  %v8145 = vpack.c.bf16 %v7369, %v7305
  %v8146 = vpack.c.bf16 %v7370, %v7306
  %v8147 = vpack.c.bf16 %v7371, %v7307
  %v8148 = vpack.c.bf16 %v7372, %v7308
  %v8149 = vpack.c.bf16 %v7373, %v7309
  %v8150 = vpack.c.bf16 %v7374, %v7310
  %v8151 = vpack.c.bf16 %v7375, %v7311
  %v8152 = vpack.c.bf16 %v7376, %v7312
  %v8153 = vpack.c.bf16 %v7377, %v7313
  %v8154 = vpack.c.bf16 %v7378, %v7314
  %v8155 = vpack.c.bf16 %v7379, %v7315
  %v8156 = vpack.c.bf16 %v7380, %v7316
  %v8157 = vpack.c.bf16 %v7381, %v7317
  %v8158 = vpack.c.bf16 %v7382, %v7318
  %v8159 = vpack.c.bf16 %v7383, %v7319
  %v8160 = vpack.c.bf16 %v7384, %v7320
  %v8161 = vpack.c.bf16 %v7385, %v7321
  %v8162 = vpack.c.bf16 %v7386, %v7322
  %v8163 = vpack.c.bf16 %v7387, %v7323
  %v8164 = vpack.c.bf16 %v7388, %v7324
  %v8165 = vpack.c.bf16 %v7389, %v7325
  %v8166 = vpack.c.bf16 %v7390, %v7326
  %v8167 = vpack.c.bf16 %v7391, %v7327
  %v8168 = vpack.c.bf16 %v7392, %v7328
  %v8169 = vpack.c.bf16 %v7393, %v7329
  %v8170 = vpack.c.bf16 %v7394, %v7330
  %v8171 = vpack.c.bf16 %v7395, %v7331
  %v8172 = vpack.c.bf16 %v7396, %v7332
  %v8173 = vpack.c.bf16 %v7397, %v7333
  %v8174 = vpack.c.bf16 %v7398, %v7334
  %v8175 = vpack.c.bf16 %v7399, %v7335
  %v8176 = vpack.c.bf16 %v7400, %v7336
  %v8177 = vpack.c.bf16 %v7401, %v7337
  %v8178 = vpack.c.bf16 %v7402, %v7338
  %v8179 = vpack.c.bf16 %v7403, %v7339
  %v8180 = vpack.c.bf16 %v7404, %v7340
  %v8181 = vpack.c.bf16 %v7405, %v7341
  %v8182 = vpack.c.bf16 %v7470, %v7406
  %v8183 = vpack.c.bf16 %v7471, %v7407
  %v8184 = vpack.c.bf16 %v7472, %v7408
  %v8185 = vpack.c.bf16 %v7473, %v7409
  %v8186 = vpack.c.bf16 %v7474, %v7410
  %v8187 = vpack.c.bf16 %v7475, %v7411
  %v8188 = vpack.c.bf16 %v7476, %v7412
  %v8189 = vpack.c.bf16 %v7477, %v7413
  %v8190 = vpack.c.bf16 %v7478, %v7414
  %v8191 = vpack.c.bf16 %v7479, %v7415
  %v8192 = vpack.c.bf16 %v7480, %v7416
  %v8193 = vpack.c.bf16 %v7481, %v7417
  %v8194 = vpack.c.bf16 %v7482, %v7418
  %v8195 = vpack.c.bf16 %v7483, %v7419
  %v8196 = vpack.c.bf16 %v7484, %v7420
  %v8197 = vpack.c.bf16 %v7485, %v7421
  %v8198 = vpack.c.bf16 %v7486, %v7422
  %v8199 = vpack.c.bf16 %v7487, %v7423
  %v8200 = vpack.c.bf16 %v7488, %v7424
  %v8201 = vpack.c.bf16 %v7489, %v7425
  %v8202 = vpack.c.bf16 %v7490, %v7426
  %v8203 = vpack.c.bf16 %v7491, %v7427
  %v8204 = vpack.c.bf16 %v7492, %v7428
  %v8205 = vpack.c.bf16 %v7493, %v7429
  %v8206 = vpack.c.bf16 %v7494, %v7430
  %v8207 = vpack.c.bf16 %v7495, %v7431
  %v8208 = vpack.c.bf16 %v7496, %v7432
  %v8209 = vpack.c.bf16 %v7497, %v7433
  %v8210 = vpack.c.bf16 %v7498, %v7434
  %v8211 = vpack.c.bf16 %v7499, %v7435
  %v8212 = vpack.c.bf16 %v7500, %v7436
  %v8213 = vpack.c.bf16 %v7501, %v7437
  %v8214 = vpack.c.bf16 %v7502, %v7438
  %v8215 = vpack.c.bf16 %v7503, %v7439
  %v8216 = vpack.c.bf16 %v7504, %v7440
  %v8217 = vpack.c.bf16 %v7505, %v7441
  %v8218 = vpack.c.bf16 %v7506, %v7442
  %v8219 = vpack.c.bf16 %v7507, %v7443
  %v8220 = vpack.c.bf16 %v7508, %v7444
  %v8221 = vpack.c.bf16 %v7509, %v7445
  %v8222 = vpack.c.bf16 %v7510, %v7446
  %v8223 = vpack.c.bf16 %v7511, %v7447
  %v8224 = vpack.c.bf16 %v7512, %v7448
  %v8225 = vpack.c.bf16 %v7513, %v7449
  %v8226 = vpack.c.bf16 %v7514, %v7450
  %v8227 = vpack.c.bf16 %v7515, %v7451
  %v8228 = vpack.c.bf16 %v7516, %v7452
  %v8229 = vpack.c.bf16 %v7517, %v7453
  %v8230 = vpack.c.bf16 %v7518, %v7454
  %v8231 = vpack.c.bf16 %v7519, %v7455
  %v8232 = vpack.c.bf16 %v7520, %v7456
  %v8233 = vpack.c.bf16 %v7521, %v7457
  %v8234 = vpack.c.bf16 %v7522, %v7458
  %v8235 = vpack.c.bf16 %v7523, %v7459
  %v8236 = vpack.c.bf16 %v7524, %v7460
  %v8237 = vpack.c.bf16 %v7525, %v7461
  %v8238 = vpack.c.bf16 %v7526, %v7462
  %v8239 = vpack.c.bf16 %v7527, %v7463
  %v8240 = vpack.c.bf16 %v7528, %v7464
  %v8241 = vpack.c.bf16 %v7529, %v7465
  %v8242 = vpack.c.bf16 %v7530, %v7466
  %v8243 = vpack.c.bf16 %v7531, %v7467
  %v8244 = vpack.c.bf16 %v7532, %v7468
  %v8245 = vpack.c.bf16 %v7533, %v7469
  %v8246 = vpack.c.bf16 %v7598, %v7534
  %v8247 = vpack.c.bf16 %v7599, %v7535
  %v8248 = vpack.c.bf16 %v7600, %v7536
  %v8249 = vpack.c.bf16 %v7601, %v7537
  %v8250 = vpack.c.bf16 %v7602, %v7538
  %v8251 = vpack.c.bf16 %v7603, %v7539
  %v8252 = vpack.c.bf16 %v7604, %v7540
  %v8253 = vpack.c.bf16 %v7605, %v7541
  %v8254 = vpack.c.bf16 %v7606, %v7542
  %v8255 = vpack.c.bf16 %v7607, %v7543
  %v8256 = vpack.c.bf16 %v7608, %v7544
  %v8257 = vpack.c.bf16 %v7609, %v7545
  %v8258 = vpack.c.bf16 %v7610, %v7546
  %v8259 = vpack.c.bf16 %v7611, %v7547
  %v8260 = vpack.c.bf16 %v7612, %v7548
  %v8261 = vpack.c.bf16 %v7613, %v7549
  %v8262 = vpack.c.bf16 %v7614, %v7550
  %v8263 = vpack.c.bf16 %v7615, %v7551
  %v8264 = vpack.c.bf16 %v7616, %v7552
  %v8265 = vpack.c.bf16 %v7617, %v7553
  %v8266 = vpack.c.bf16 %v7618, %v7554
  %v8267 = vpack.c.bf16 %v7619, %v7555
  %v8268 = vpack.c.bf16 %v7620, %v7556
  %v8269 = vpack.c.bf16 %v7621, %v7557
  %v8270 = vpack.c.bf16 %v7622, %v7558
  %v8271 = vpack.c.bf16 %v7623, %v7559
  %v8272 = vpack.c.bf16 %v7624, %v7560
  %v8273 = vpack.c.bf16 %v7625, %v7561
  %v8274 = vpack.c.bf16 %v7626, %v7562
  %v8275 = vpack.c.bf16 %v7627, %v7563
  %v8276 = vpack.c.bf16 %v7628, %v7564
  %v8277 = vpack.c.bf16 %v7629, %v7565
  %v8278 = vpack.c.bf16 %v7630, %v7566
  %v8279 = vpack.c.bf16 %v7631, %v7567
  %v8280 = vpack.c.bf16 %v7632, %v7568
  %v8281 = vpack.c.bf16 %v7633, %v7569
  %v8282 = vpack.c.bf16 %v7634, %v7570
  %v8283 = vpack.c.bf16 %v7635, %v7571
  %v8284 = vpack.c.bf16 %v7636, %v7572
  %v8285 = vpack.c.bf16 %v7637, %v7573
  %v8286 = vpack.c.bf16 %v7638, %v7574
  %v8287 = vpack.c.bf16 %v7639, %v7575
  %v8288 = vpack.c.bf16 %v7640, %v7576
  %v8289 = vpack.c.bf16 %v7641, %v7577
  %v8290 = vpack.c.bf16 %v7642, %v7578
  %v8291 = vpack.c.bf16 %v7643, %v7579
  %v8292 = vpack.c.bf16 %v7644, %v7580
  %v8293 = vpack.c.bf16 %v7645, %v7581
  %v8294 = vpack.c.bf16 %v7646, %v7582
  %v8295 = vpack.c.bf16 %v7647, %v7583
  %v8296 = vpack.c.bf16 %v7648, %v7584
  %v8297 = vpack.c.bf16 %v7649, %v7585
  %v8298 = vpack.c.bf16 %v7650, %v7586
  %v8299 = vpack.c.bf16 %v7651, %v7587
  %v8300 = vpack.c.bf16 %v7652, %v7588
  %v8301 = vpack.c.bf16 %v7653, %v7589
  %v8302 = vpack.c.bf16 %v7654, %v7590
  %v8303 = vpack.c.bf16 %v7655, %v7591
  %v8304 = vpack.c.bf16 %v7656, %v7592
  %v8305 = vpack.c.bf16 %v7657, %v7593
  %v8306 = vpack.c.bf16 %v7658, %v7594
  %v8307 = vpack.c.bf16 %v7659, %v7595
  %v8308 = vpack.c.bf16 %v7660, %v7596
  %v8309 = vpack.c.bf16 %v7661, %v7597
  %v8310 = vpack.c.bf16 %v7726, %v7662
  %v8311 = vpack.c.bf16 %v7727, %v7663
  %v8312 = vpack.c.bf16 %v7728, %v7664
  %v8313 = vpack.c.bf16 %v7729, %v7665
  %v8314 = vpack.c.bf16 %v7730, %v7666
  %v8315 = vpack.c.bf16 %v7731, %v7667
  %v8316 = vpack.c.bf16 %v7732, %v7668
  %v8317 = vpack.c.bf16 %v7733, %v7669
  %v8318 = vpack.c.bf16 %v7734, %v7670
  %v8319 = vpack.c.bf16 %v7735, %v7671
  %v8320 = vpack.c.bf16 %v7736, %v7672
  %v8321 = vpack.c.bf16 %v7737, %v7673
  %v8322 = vpack.c.bf16 %v7738, %v7674
  %v8323 = vpack.c.bf16 %v7739, %v7675
  %v8324 = vpack.c.bf16 %v7740, %v7676
  %v8325 = vpack.c.bf16 %v7741, %v7677
  %v8326 = vpack.c.bf16 %v7742, %v7678
  %v8327 = vpack.c.bf16 %v7743, %v7679
  %v8328 = vpack.c.bf16 %v7744, %v7680
  %v8329 = vpack.c.bf16 %v7745, %v7681
  %v8330 = vpack.c.bf16 %v7746, %v7682
  %v8331 = vpack.c.bf16 %v7747, %v7683
  %v8332 = vpack.c.bf16 %v7748, %v7684
  %v8333 = vpack.c.bf16 %v7749, %v7685
  %v8334 = vpack.c.bf16 %v7750, %v7686
  %v8335 = vpack.c.bf16 %v7751, %v7687
  %v8336 = vpack.c.bf16 %v7752, %v7688
  %v8337 = vpack.c.bf16 %v7753, %v7689
  %v8338 = vpack.c.bf16 %v7754, %v7690
  %v8339 = vpack.c.bf16 %v7755, %v7691
  %v8340 = vpack.c.bf16 %v7756, %v7692
  %v8341 = vpack.c.bf16 %v7757, %v7693
  %v8342 = vpack.c.bf16 %v7758, %v7694
  %v8343 = vpack.c.bf16 %v7759, %v7695
  %v8344 = vpack.c.bf16 %v7760, %v7696
  %v8345 = vpack.c.bf16 %v7761, %v7697
  %v8346 = vpack.c.bf16 %v7762, %v7698
  %v8347 = vpack.c.bf16 %v7763, %v7699
  %v8348 = vpack.c.bf16 %v7764, %v7700
  %v8349 = vpack.c.bf16 %v7765, %v7701
  %v8350 = vpack.c.bf16 %v7766, %v7702
  %v8351 = vpack.c.bf16 %v7767, %v7703
  %v8352 = vpack.c.bf16 %v7768, %v7704
  %v8353 = vpack.c.bf16 %v7769, %v7705
  %v8354 = vpack.c.bf16 %v7770, %v7706
  %v8355 = vpack.c.bf16 %v7771, %v7707
  %v8356 = vpack.c.bf16 %v7772, %v7708
  %v8357 = vpack.c.bf16 %v7773, %v7709
  %v8358 = vpack.c.bf16 %v7774, %v7710
  %v8359 = vpack.c.bf16 %v7775, %v7711
  %v8360 = vpack.c.bf16 %v7776, %v7712
  %v8361 = vpack.c.bf16 %v7777, %v7713
  %v8362 = vpack.c.bf16 %v7778, %v7714
  %v8363 = vpack.c.bf16 %v7779, %v7715
  %v8364 = vpack.c.bf16 %v7780, %v7716
  %v8365 = vpack.c.bf16 %v7781, %v7717
  %v8366 = vpack.c.bf16 %v7782, %v7718
  %v8367 = vpack.c.bf16 %v7783, %v7719
  %v8368 = vpack.c.bf16 %v7784, %v7720
  %v8369 = vpack.c.bf16 %v7785, %v7721
  %v8370 = vpack.c.bf16 %v7786, %v7722
  %v8371 = vpack.c.bf16 %v7787, %v7723
  %v8372 = vpack.c.bf16 %v7788, %v7724
  %v8373 = vpack.c.bf16 %v7789, %v7725
  %v8374 = vpack.c.bf16 %v7854, %v7790
  %v8375 = vpack.c.bf16 %v7855, %v7791
  %v8376 = vpack.c.bf16 %v7856, %v7792
  %v8377 = vpack.c.bf16 %v7857, %v7793
  %v8378 = vpack.c.bf16 %v7858, %v7794
  %v8379 = vpack.c.bf16 %v7859, %v7795
  %v8380 = vpack.c.bf16 %v7860, %v7796
  %v8381 = vpack.c.bf16 %v7861, %v7797
  %v8382 = vpack.c.bf16 %v7862, %v7798
  %v8383 = vpack.c.bf16 %v7863, %v7799
  %v8384 = vpack.c.bf16 %v7864, %v7800
  %v8385 = vpack.c.bf16 %v7865, %v7801
  %v8386 = vpack.c.bf16 %v7866, %v7802
  %v8387 = vpack.c.bf16 %v7867, %v7803
  %v8388 = vpack.c.bf16 %v7868, %v7804
  %v8389 = vpack.c.bf16 %v7869, %v7805
  %v8390 = vpack.c.bf16 %v7870, %v7806
  %v8391 = vpack.c.bf16 %v7871, %v7807
  %v8392 = vpack.c.bf16 %v7872, %v7808
  %v8393 = vpack.c.bf16 %v7873, %v7809
  %v8394 = vpack.c.bf16 %v7874, %v7810
  %v8395 = vpack.c.bf16 %v7875, %v7811
  %v8396 = vpack.c.bf16 %v7876, %v7812
  %v8397 = vpack.c.bf16 %v7877, %v7813
  %v8398 = vpack.c.bf16 %v7878, %v7814
  %v8399 = vpack.c.bf16 %v7879, %v7815
  %v8400 = vpack.c.bf16 %v7880, %v7816
  %v8401 = vpack.c.bf16 %v7881, %v7817
  %v8402 = vpack.c.bf16 %v7882, %v7818
  %v8403 = vpack.c.bf16 %v7883, %v7819
  %v8404 = vpack.c.bf16 %v7884, %v7820
  %v8405 = vpack.c.bf16 %v7885, %v7821
  %v8406 = vpack.c.bf16 %v7886, %v7822
  %v8407 = vpack.c.bf16 %v7887, %v7823
  %v8408 = vpack.c.bf16 %v7888, %v7824
  %v8409 = vpack.c.bf16 %v7889, %v7825
  %v8410 = vpack.c.bf16 %v7890, %v7826
  %v8411 = vpack.c.bf16 %v7891, %v7827
  %v8412 = vpack.c.bf16 %v7892, %v7828
  %v8413 = vpack.c.bf16 %v7893, %v7829
  %v8414 = vpack.c.bf16 %v7894, %v7830
  %v8415 = vpack.c.bf16 %v7895, %v7831
  %v8416 = vpack.c.bf16 %v7896, %v7832
  %v8417 = vpack.c.bf16 %v7897, %v7833
  %v8418 = vpack.c.bf16 %v7898, %v7834
  %v8419 = vpack.c.bf16 %v7899, %v7835
  %v8420 = vpack.c.bf16 %v7900, %v7836
  %v8421 = vpack.c.bf16 %v7901, %v7837
  %v8422 = vpack.c.bf16 %v7902, %v7838
  %v8423 = vpack.c.bf16 %v7903, %v7839
  %v8424 = vpack.c.bf16 %v7904, %v7840
  %v8425 = vpack.c.bf16 %v7905, %v7841
  %v8426 = vpack.c.bf16 %v7906, %v7842
  %v8427 = vpack.c.bf16 %v7907, %v7843
  %v8428 = vpack.c.bf16 %v7908, %v7844
  %v8429 = vpack.c.bf16 %v7909, %v7845
  %v8430 = vpack.c.bf16 %v7910, %v7846
  %v8431 = vpack.c.bf16 %v7911, %v7847
  %v8432 = vpack.c.bf16 %v7912, %v7848
  %v8433 = vpack.c.bf16 %v7913, %v7849
  %v8434 = vpack.c.bf16 %v7914, %v7850
  %v8435 = vpack.c.bf16 %v7915, %v7851
  %v8436 = vpack.c.bf16 %v7916, %v7852
  %v8437 = vpack.c.bf16 %v7917, %v7853
  %v8438 = vld [vmem:[%s4] sm:$0xff]
  %v8439 = vld [vmem:[%s4 + $0x8] sm:$0xff]
  %v8440 = vld [vmem:[%s4 + $0x10] sm:$0xff]
  %v8441 = vld [vmem:[%s4 + $0x18] sm:$0xff]
  %v8442 = vld [vmem:[%s4 + $0x20] sm:$0xff]
  %v8443 = vld [vmem:[%s4 + $0x28] sm:$0xff]
  %v8444 = vld [vmem:[%s4 + $0x30] sm:$0xff]
  %v8445 = vld [vmem:[%s4 + $0x38] sm:$0xff]
  %8447 = vset.pattern.permute.xlu0 0
  %8448 = vperm.xlu0 %8447, %v8438
  %v8449 = vpop.permute.xlu0 %8448
  %8452 = vset.pattern.permute.xlu0 0
  %8453 = vperm.xlu0 %8452, %v8439
  %v8454 = vpop.permute.xlu0 %8453
  %8457 = vset.pattern.permute.xlu0 0
  %8458 = vperm.xlu0 %8457, %v8440
  %v8459 = vpop.permute.xlu0 %8458
  %8462 = vset.pattern.permute.xlu0 0
  %8463 = vperm.xlu0 %8462, %v8441
  %v8464 = vpop.permute.xlu0 %8463
  %8467 = vset.pattern.permute.xlu0 0
  %8468 = vperm.xlu0 %8467, %v8442
  %v8469 = vpop.permute.xlu0 %8468
  %8472 = vset.pattern.permute.xlu0 0
  %8473 = vperm.xlu0 %8472, %v8443
  %v8474 = vpop.permute.xlu0 %8473
  %8477 = vset.pattern.permute.xlu0 0
  %8478 = vperm.xlu0 %8477, %v8444
  %v8479 = vpop.permute.xlu0 %8478
  %8482 = vset.pattern.permute.xlu0 0
  %8483 = vperm.xlu0 %8482, %v8445
  %v8484 = vpop.permute.xlu0 %8483
  %v8494 = vunpack.c.l.b16 %v7918
  %v8495 = vunpack.c.l.b16 %v7919
  %v8496 = vunpack.c.l.b16 %v7920
  %v8497 = vunpack.c.l.b16 %v7921
  %v8498 = vunpack.c.l.b16 %v7922
  %v8499 = vunpack.c.l.b16 %v7923
  %v8500 = vunpack.c.l.b16 %v7924
  %v8501 = vunpack.c.l.b16 %v7925
  %v8502 = vpack.c.b16 %v8495, %v8494
  %v8503 = vpack.c.b16 %v8497, %v8496
  %v8504 = vpack.c.b16 %v8499, %v8498
  %v8505 = vpack.c.b16 %v8501, %v8500
  %8510 = vmatprep.subr.bf16.mxu0 %v7927
  %8511 = vmatpush1.bf16.msra.mxu0 %v7926
  %8512 = vmatprep.subr.bf16.mxu0 %v7991
  %8513 = vmatpush1.bf16.msra.mxu0 %v7990
  %8514 = vmatprep.subr.bf16.mxu0 %v8055
  %8515 = vmatpush1.bf16.msra.mxu0 %v8054
  %8516 = vmatprep.subr.bf16.mxu0 %v8119
  %8517 = vmatpush1.bf16.msra.mxu0 %v8118
  %8518 = vmatprep.subr.bf16.mxu0 %v8183
  %8519 = vmatpush1.bf16.msra.mxu0 %v8182
  %8520 = vmatprep.subr.bf16.mxu0 %v8247
  %8521 = vmatpush1.bf16.msra.mxu0 %v8246
  %8522 = vmatprep.subr.bf16.mxu0 %v8311
  %8523 = vmatpush1.bf16.msra.mxu0 %v8310
  %8524 = vmatprep.subr.bf16.mxu0 %v8375
  %8525 = vmatpush1.bf16.msra.mxu0 %v8374
  %8526 = vmatprep.subr.bf16.mxu0 0
  %8527 = vmatpush1.bf16.msra.mxu0 0
  %8528 = vmatprep.subr.bf16.mxu0 0
  %8529 = vmatpush1.bf16.msra.mxu0 0
  %8530 = vmatprep.subr.bf16.mxu0 0
  %8531 = vmatpush1.bf16.msra.mxu0 0
  %8532 = vmatprep.subr.bf16.mxu0 0
  %8533 = vmatpush1.bf16.msra.mxu0 0
  %8534 = vmatprep.subr.bf16.mxu0 0
  %8535 = vmatpush1.bf16.msra.mxu0 0
  %8536 = vmatprep.subr.bf16.mxu0 0
  %8537 = vmatpush1.bf16.msra.mxu0 0
  %8538 = vmatprep.subr.bf16.mxu0 0
  %8539 = vmatpush1.bf16.msra.mxu0 0
  %8540 = vmatprep.subr.bf16.mxu0 0
  %8541 = vmatpush1.bf16.msra.mxu0 0
  %8542 = vmatprep.mubr.bf16.mxu0 0
  %8543 = vmatmul.mubr.bf16.gmra.mrb[0].mxu0 %v8502
  %v8544 = vpop.f32.mrb[0].mxu0
  %v8545 = vadd.f32 %v8449, %v8544
  %v8546 = vpop.f32.mrb[0].mxu0
  %v8547 = vadd.f32 %v8449, %v8546
  %v8548 = vpop.f32.mrb[0].mxu0
  %v8549 = vadd.f32 %v8454, %v8548
  %v8550 = vpop.f32.mrb[0].mxu0
  %v8551 = vadd.f32 %v8454, %v8550
  %8552 = vmatprep.mubr.bf16.mxu0 0
  %8553 = vmatmul.mubr.bf16.gmra.mrb[0].mxu0 %v8503
  %v8554 = vpop.f32.mrb[0].mxu0
  %v8555 = vadd.f32 %v8459, %v8554
  %v8556 = vpop.f32.mrb[0].mxu0
  %v8557 = vadd.f32 %v8459, %v8556
  %v8558 = vpop.f32.mrb[0].mxu0
  %v8559 = vadd.f32 %v8464, %v8558
  %v8560 = vpop.f32.mrb[0].mxu0
  %v8561 = vadd.f32 %v8464, %v8560
  %8562 = vmatprep.mubr.bf16.mxu0 0
  %8563 = vmatmul.mubr.bf16.gmra.mrb[0].mxu0 %v8504
  %v8564 = vpop.f32.mrb[0].mxu0
  %v8565 = vadd.f32 %v8469, %v8564
  %v8566 = vpop.f32.mrb[0].mxu0
  %v8567 = vadd.f32 %v8469, %v8566
  %v8568 = vpop.f32.mrb[0].mxu0
  %v8569 = vadd.f32 %v8474, %v8568
  %v8570 = vpop.f32.mrb[0].mxu0
  %v8571 = vadd.f32 %v8474, %v8570
  %8572 = vmatprep.mubr.bf16.mxu0 0
  %8573 = vmatmul.mubr.bf16.gmra.mrb[0].mxu0 %v8505
  %v8574 = vpop.f32.mrb[0].mxu0
  %v8575 = vadd.f32 %v8479, %v8574
  %v8576 = vpop.f32.mrb[0].mxu0
  %v8577 = vadd.f32 %v8479, %v8576
  %v8578 = vpop.f32.mrb[0].mxu0
  %v8579 = vadd.f32 %v8484, %v8578
  %v8580 = vpop.f32.mrb[0].mxu0
  %v8581 = vadd.f32 %v8484, %v8580
  %8582 = vdwg.mxu0
  %8583 = vmatprep.subr.bf16.mxu0 %v7929
  %8584 = vmatpush1.bf16.msra.mxu0 %v7928
  %8585 = vmatprep.subr.bf16.mxu0 %v7993
  %8586 = vmatpush1.bf16.msra.mxu0 %v7992
  %8587 = vmatprep.subr.bf16.mxu0 %v8057
  %8588 = vmatpush1.bf16.msra.mxu0 %v8056
  %8589 = vmatprep.subr.bf16.mxu0 %v8121
  %8590 = vmatpush1.bf16.msra.mxu0 %v8120
  %8591 = vmatprep.subr.bf16.mxu0 %v8185
  %8592 = vmatpush1.bf16.msra.mxu0 %v8184
  %8593 = vmatprep.subr.bf16.mxu0 %v8249
  %8594 = vmatpush1.bf16.msra.mxu0 %v8248
  %8595 = vmatprep.subr.bf16.mxu0 %v8313
  %8596 = vmatpush1.bf16.msra.mxu0 %v8312
  %8597 = vmatprep.subr.bf16.mxu0 %v8377
  %8598 = vmatpush1.bf16.msra.mxu0 %v8376
  %8599 = vmatprep.subr.bf16.mxu0 0
  %8600 = vmatpush1.bf16.msra.mxu0 0
  %8601 = vmatprep.subr.bf16.mxu0 0
  %8602 = vmatpush1.bf16.msra.mxu0 0
  %8603 = vmatprep.subr.bf16.mxu0 0
  %8604 = vmatpush1.bf16.msra.mxu0 0
  %8605 = vmatprep.subr.bf16.mxu0 0
  %8606 = vmatpush1.bf16.msra.mxu0 0
  %8607 = vmatprep.subr.bf16.mxu0 0
  %8608 = vmatpush1.bf16.msra.mxu0 0
  %8609 = vmatprep.subr.bf16.mxu0 0
  %8610 = vmatpush1.bf16.msra.mxu0 0
  %8611 = vmatprep.subr.bf16.mxu0 0
  %8612 = vmatpush1.bf16.msra.mxu0 0
  %8613 = vmatprep.subr.bf16.mxu0 0
  %8614 = vmatpush1.bf16.msra.mxu0 0
  %8615 = vmatprep.mubr.bf16.mxu0 0
  %8616 = vmatmul.mubr.bf16.gmra.mrb[0].mxu0 %v8502
  %v8617 = vpop.f32.mrb[0].mxu0
  %v8618 = vadd.f32 %v8449, %v8617
  %v8619 = vpop.f32.mrb[0].mxu0
  %v8620 = vadd.f32 %v8449, %v8619
  %v8621 = vpop.f32.mrb[0].mxu0
  %v8622 = vadd.f32 %v8454, %v8621
  %v8623 = vpop.f32.mrb[0].mxu0
  %v8624 = vadd.f32 %v8454, %v8623
  %8625 = vmatprep.mubr.bf16.mxu0 0
  %8626 = vmatmul.mubr.bf16.gmra.mrb[0].mxu0 %v8503
  %v8627 = vpop.f32.mrb[0].mxu0
  %v8628 = vadd.f32 %v8459, %v8627
  %v8629 = vpop.f32.mrb[0].mxu0
  %v8630 = vadd.f32 %v8459, %v8629
  %v8631 = vpop.f32.mrb[0].mxu0
  %v8632 = vadd.f32 %v8464, %v8631
  %v8633 = vpop.f32.mrb[0].mxu0
  %v8634 = vadd.f32 %v8464, %v8633
  %8635 = vmatprep.mubr.bf16.mxu0 0
  %8636 = vmatmul.mubr.bf16.gmra.mrb[0].mxu0 %v8504
  %v8637 = vpop.f32.mrb[0].mxu0
  %v8638 = vadd.f32 %v8469, %v8637
  %v8639 = vpop.f32.mrb[0].mxu0
  %v8640 = vadd.f32 %v8469, %v8639
  %v8641 = vpop.f32.mrb[0].mxu0
  %v8642 = vadd.f32 %v8474, %v8641
  %v8643 = vpop.f32.mrb[0].mxu0
  %v8644 = vadd.f32 %v8474, %v8643
  %8645 = vmatprep.mubr.bf16.mxu0 0
  %8646 = vmatmul.mubr.bf16.gmra.mrb[0].mxu0 %v8505
  %v8647 = vpop.f32.mrb[0].mxu0
  %v8648 = vadd.f32 %v8479, %v8647
  %v8649 = vpop.f32.mrb[0].mxu0
  %v8650 = vadd.f32 %v8479, %v8649
  %v8651 = vpop.f32.mrb[0].mxu0
  %v8652 = vadd.f32 %v8484, %v8651
  %v8653 = vpop.f32.mrb[0].mxu0
  %v8654 = vadd.f32 %v8484, %v8653
  %8655 = vdwg.mxu0
  %8656 = vmatprep.subr.bf16.mxu0 %v7931
  %8657 = vmatpush1.bf16.msra.mxu0 %v7930
  %8658 = vmatprep.subr.bf16.mxu0 %v7995
  %8659 = vmatpush1.bf16.msra.mxu0 %v7994
  %8660 = vmatprep.subr.bf16.mxu0 %v8059
  %8661 = vmatpush1.bf16.msra.mxu0 %v8058
  %8662 = vmatprep.subr.bf16.mxu0 %v8123
  %8663 = vmatpush1.bf16.msra.mxu0 %v8122
  %8664 = vmatprep.subr.bf16.mxu0 %v8187
  %8665 = vmatpush1.bf16.msra.mxu0 %v8186
  %8666 = vmatprep.subr.bf16.mxu0 %v8251
  %8667 = vmatpush1.bf16.msra.mxu0 %v8250
  %8668 = vmatprep.subr.bf16.mxu0 %v8315
  %8669 = vmatpush1.bf16.msra.mxu0 %v8314
  %8670 = vmatprep.subr.bf16.mxu0 %v8379
  %8671 = vmatpush1.bf16.msra.mxu0 %v8378
  %8672 = vmatprep.subr.bf16.mxu0 0
  %8673 = vmatpush1.bf16.msra.mxu0 0
  %8674 = vmatprep.subr.bf16.mxu0 0
  %8675 = vmatpush1.bf16.msra.mxu0 0
  %8676 = vmatprep.subr.bf16.mxu0 0
  %8677 = vmatpush1.bf16.msra.mxu0 0
  %8678 = vmatprep.subr.bf16.mxu0 0
  %8679 = vmatpush1.bf16.msra.mxu0 0
  %8680 = vmatprep.subr.bf16.mxu0 0
  %8681 = vmatpush1.bf16.msra.mxu0 0
  %8682 = vmatprep.subr.bf16.mxu0 0
  %8683 = vmatpush1.bf16.msra.mxu0 0
  %8684 = vmatprep.subr.bf16.mxu0 0
  %8685 = vmatpush1.bf16.msra.mxu0 0
  %8686 = vmatprep.subr.bf16.mxu0 0
  %8687 = vmatpush1.bf16.msra.mxu0 0
  %8688 = vmatprep.mubr.bf16.mxu0 0
  %8689 = vmatmul.mubr.bf16.gmra.mrb[0].mxu0 %v8502
  %v8690 = vpop.f32.mrb[0].mxu0
  %v8691 = vadd.f32 %v8449, %v8690
  %v8692 = vpop.f32.mrb[0].mxu0
  %v8693 = vadd.f32 %v8449, %v8692
  %v8694 = vpop.f32.mrb[0].mxu0
  %v8695 = vadd.f32 %v8454, %v8694
  %v8696 = vpop.f32.mrb[0].mxu0
  %v8697 = vadd.f32 %v8454, %v8696
  %8698 = vmatprep.mubr.bf16.mxu0 0
  %8699 = vmatmul.mubr.bf16.gmra.mrb[0].mxu0 %v8503
  %v8700 = vpop.f32.mrb[0].mxu0
  %v8701 = vadd.f32 %v8459, %v8700
  %v8702 = vpop.f32.mrb[0].mxu0
  %v8703 = vadd.f32 %v8459, %v8702
  %v8704 = vpop.f32.mrb[0].mxu0
  %v8705 = vadd.f32 %v8464, %v8704
  %v8706 = vpop.f32.mrb[0].mxu0
  %v8707 = vadd.f32 %v8464, %v8706
  %8708 = vmatprep.mubr.bf16.mxu0 0
  %8709 = vmatmul.mubr.bf16.gmra.mrb[0].mxu0 %v8504
  %v8710 = vpop.f32.mrb[0].mxu0
  %v8711 = vadd.f32 %v8469, %v8710
  %v8712 = vpop.f32.mrb[0].mxu0
  %v8713 = vadd.f32 %v8469, %v8712
  %v8714 = vpop.f32.mrb[0].mxu0
  %v8715 = vadd.f32 %v8474, %v8714
  %v8716 = vpop.f32.mrb[0].mxu0
  %v8717 = vadd.f32 %v8474, %v8716
  %8718 = vmatprep.mubr.bf16.mxu0 0
  %8719 = vmatmul.mubr.bf16.gmra.mrb[0].mxu0 %v8505
  %v8720 = vpop.f32.mrb[0].mxu0
  %v8721 = vadd.f32 %v8479, %v8720
  %v8722 = vpop.f32.mrb[0].mxu0
  %v8723 = vadd.f32 %v8479, %v8722
  %v8724 = vpop.f32.mrb[0].mxu0
  %v8725 = vadd.f32 %v8484, %v8724
  %v8726 = vpop.f32.mrb[0].mxu0
  %v8727 = vadd.f32 %v8484, %v8726
  %8728 = vdwg.mxu0
  %8729 = vmatprep.subr.bf16.mxu0 %v7933
  %8730 = vmatpush1.bf16.msra.mxu0 %v7932
  %8731 = vmatprep.subr.bf16.mxu0 %v7997
  %8732 = vmatpush1.bf16.msra.mxu0 %v7996
  %8733 = vmatprep.subr.bf16.mxu0 %v8061
  %8734 = vmatpush1.bf16.msra.mxu0 %v8060
  %8735 = vmatprep.subr.bf16.mxu0 %v8125
  %8736 = vmatpush1.bf16.msra.mxu0 %v8124
  %8737 = vmatprep.subr.bf16.mxu0 %v8189
  %8738 = vmatpush1.bf16.msra.mxu0 %v8188
  %8739 = vmatprep.subr.bf16.mxu0 %v8253
  %8740 = vmatpush1.bf16.msra.mxu0 %v8252
  %8741 = vmatprep.subr.bf16.mxu0 %v8317
  %8742 = vmatpush1.bf16.msra.mxu0 %v8316
  %8743 = vmatprep.subr.bf16.mxu0 %v8381
  %8744 = vmatpush1.bf16.msra.mxu0 %v8380
  %8745 = vmatprep.subr.bf16.mxu0 0
  %8746 = vmatpush1.bf16.msra.mxu0 0
  %8747 = vmatprep.subr.bf16.mxu0 0
  %8748 = vmatpush1.bf16.msra.mxu0 0
  %8749 = vmatprep.subr.bf16.mxu0 0
  %8750 = vmatpush1.bf16.msra.mxu0 0
  %8751 = vmatprep.subr.bf16.mxu0 0
  %8752 = vmatpush1.bf16.msra.mxu0 0
  %8753 = vmatprep.subr.bf16.mxu0 0
  %8754 = vmatpush1.bf16.msra.mxu0 0
  %8755 = vmatprep.subr.bf16.mxu0 0
  %8756 = vmatpush1.bf16.msra.mxu0 0
  %8757 = vmatprep.subr.bf16.mxu0 0
  %8758 = vmatpush1.bf16.msra.mxu0 0
  %8759 = vmatprep.subr.bf16.mxu0 0
  %8760 = vmatpush1.bf16.msra.mxu0 0
  %8761 = vmatprep.mubr.bf16.mxu0 0
  %8762 = vmatmul.mubr.bf16.gmra.mrb[0].mxu0 %v8502
  %v8763 = vpop.f32.mrb[0].mxu0
  %v8764 = vadd.f32 %v8449, %v8763
  %v8765 = vpop.f32.mrb[0].mxu0
  %v8766 = vadd.f32 %v8449, %v8765
  %v8767 = vpop.f32.mrb[0].mxu0
  %v8768 = vadd.f32 %v8454, %v8767
  %v8769 = vpop.f32.mrb[0].mxu0
  %v8770 = vadd.f32 %v8454, %v8769
  %8771 = vmatprep.mubr.bf16.mxu0 0
  %8772 = vmatmul.mubr.bf16.gmra.mrb[0].mxu0 %v8503
  %v8773 = vpop.f32.mrb[0].mxu0
  %v8774 = vadd.f32 %v8459, %v8773
  %v8775 = vpop.f32.mrb[0].mxu0
  %v8776 = vadd.f32 %v8459, %v8775
  %v8777 = vpop.f32.mrb[0].mxu0
  %v8778 = vadd.f32 %v8464, %v8777
  %v8779 = vpop.f32.mrb[0].mxu0
  %v8780 = vadd.f32 %v8464, %v8779
  %8781 = vmatprep.mubr.bf16.mxu0 0
  %8782 = vmatmul.mubr.bf16.gmra.mrb[0].mxu0 %v8504
  %v8783 = vpop.f32.mrb[0].mxu0
  %v8784 = vadd.f32 %v8469, %v8783
  %v8785 = vpop.f32.mrb[0].mxu0
  %v8786 = vadd.f32 %v8469, %v8785
  %v8787 = vpop.f32.mrb[0].mxu0
  %v8788 = vadd.f32 %v8474, %v8787
  %v8789 = vpop.f32.mrb[0].mxu0
  %v8790 = vadd.f32 %v8474, %v8789
  %8791 = vmatprep.mubr.bf16.mxu0 0
  %8792 = vmatmul.mubr.bf16.gmra.mrb[0].mxu0 %v8505
  %v8793 = vpop.f32.mrb[0].mxu0
  %v8794 = vadd.f32 %v8479, %v8793
  %v8795 = vpop.f32.mrb[0].mxu0
  %v8796 = vadd.f32 %v8479, %v8795
  %v8797 = vpop.f32.mrb[0].mxu0
  %v8798 = vadd.f32 %v8484, %v8797
  %v8799 = vpop.f32.mrb[0].mxu0
  %v8800 = vadd.f32 %v8484, %v8799
  %8801 = vdwg.mxu0
  %8802 = vmatprep.subr.bf16.mxu0 %v7935
  %8803 = vmatpush1.bf16.msra.mxu0 %v7934
  %8804 = vmatprep.subr.bf16.mxu0 %v7999
  %8805 = vmatpush1.bf16.msra.mxu0 %v7998
  %8806 = vmatprep.subr.bf16.mxu0 %v8063
  %8807 = vmatpush1.bf16.msra.mxu0 %v8062
  %8808 = vmatprep.subr.bf16.mxu0 %v8127
  %8809 = vmatpush1.bf16.msra.mxu0 %v8126
  %8810 = vmatprep.subr.bf16.mxu0 %v8191
  %8811 = vmatpush1.bf16.msra.mxu0 %v8190
  %8812 = vmatprep.subr.bf16.mxu0 %v8255
  %8813 = vmatpush1.bf16.msra.mxu0 %v8254
  %8814 = vmatprep.subr.bf16.mxu0 %v8319
  %8815 = vmatpush1.bf16.msra.mxu0 %v8318
  %8816 = vmatprep.subr.bf16.mxu0 %v8383
  %8817 = vmatpush1.bf16.msra.mxu0 %v8382
  %8818 = vmatprep.subr.bf16.mxu0 0
  %8819 = vmatpush1.bf16.msra.mxu0 0
  %8820 = vmatprep.subr.bf16.mxu0 0
  %8821 = vmatpush1.bf16.msra.mxu0 0
  %8822 = vmatprep.subr.bf16.mxu0 0
  %8823 = vmatpush1.bf16.msra.mxu0 0
  %8824 = vmatprep.subr.bf16.mxu0 0
  %8825 = vmatpush1.bf16.msra.mxu0 0
  %8826 = vmatprep.subr.bf16.mxu0 0
  %8827 = vmatpush1.bf16.msra.mxu0 0
  %8828 = vmatprep.subr.bf16.mxu0 0
  %8829 = vmatpush1.bf16.msra.mxu0 0
  %8830 = vmatprep.subr.bf16.mxu0 0
  %8831 = vmatpush1.bf16.msra.mxu0 0
  %8832 = vmatprep.subr.bf16.mxu0 0
  %8833 = vmatpush1.bf16.msra.mxu0 0
  %8834 = vmatprep.mubr.bf16.mxu0 0
  %8835 = vmatmul.mubr.bf16.gmra.mrb[0].mxu0 %v8502
  %v8836 = vpop.f32.mrb[0].mxu0
  %v8837 = vadd.f32 %v8449, %v8836
  %v8838 = vpop.f32.mrb[0].mxu0
  %v8839 = vadd.f32 %v8449, %v8838
  %v8840 = vpop.f32.mrb[0].mxu0
  %v8841 = vadd.f32 %v8454, %v8840
  %v8842 = vpop.f32.mrb[0].mxu0
  %v8843 = vadd.f32 %v8454, %v8842
  %8844 = vmatprep.mubr.bf16.mxu0 0
  %8845 = vmatmul.mubr.bf16.gmra.mrb[0].mxu0 %v8503
  %v8846 = vpop.f32.mrb[0].mxu0
  %v8847 = vadd.f32 %v8459, %v8846
  %v8848 = vpop.f32.mrb[0].mxu0
  %v8849 = vadd.f32 %v8459, %v8848
  %v8850 = vpop.f32.mrb[0].mxu0
  %v8851 = vadd.f32 %v8464, %v8850
  %v8852 = vpop.f32.mrb[0].mxu0
  %v8853 = vadd.f32 %v8464, %v8852
  %8854 = vmatprep.mubr.bf16.mxu0 0
  %8855 = vmatmul.mubr.bf16.gmra.mrb[0].mxu0 %v8504
  %v8856 = vpop.f32.mrb[0].mxu0
  %v8857 = vadd.f32 %v8469, %v8856
  %v8858 = vpop.f32.mrb[0].mxu0
  %v8859 = vadd.f32 %v8469, %v8858
  %v8860 = vpop.f32.mrb[0].mxu0
  %v8861 = vadd.f32 %v8474, %v8860
  %v8862 = vpop.f32.mrb[0].mxu0
  %v8863 = vadd.f32 %v8474, %v8862
  %8864 = vmatprep.mubr.bf16.mxu0 0
  %8865 = vmatmul.mubr.bf16.gmra.mrb[0].mxu0 %v8505
  %v8866 = vpop.f32.mrb[0].mxu0
  %v8867 = vadd.f32 %v8479, %v8866
  %v8868 = vpop.f32.mrb[0].mxu0
  %v8869 = vadd.f32 %v8479, %v8868
  %v8870 = vpop.f32.mrb[0].mxu0
  %v8871 = vadd.f32 %v8484, %v8870
  %v8872 = vpop.f32.mrb[0].mxu0
  %v8873 = vadd.f32 %v8484, %v8872
  %8874 = vdwg.mxu0
  %8875 = vmatprep.subr.bf16.mxu0 %v7937
  %8876 = vmatpush1.bf16.msra.mxu0 %v7936
  %8877 = vmatprep.subr.bf16.mxu0 %v8001
  %8878 = vmatpush1.bf16.msra.mxu0 %v8000
  %8879 = vmatprep.subr.bf16.mxu0 %v8065
  %8880 = vmatpush1.bf16.msra.mxu0 %v8064
  %8881 = vmatprep.subr.bf16.mxu0 %v8129
  %8882 = vmatpush1.bf16.msra.mxu0 %v8128
  %8883 = vmatprep.subr.bf16.mxu0 %v8193
  %8884 = vmatpush1.bf16.msra.mxu0 %v8192
  %8885 = vmatprep.subr.bf16.mxu0 %v8257
  %8886 = vmatpush1.bf16.msra.mxu0 %v8256
  %8887 = vmatprep.subr.bf16.mxu0 %v8321
  %8888 = vmatpush1.bf16.msra.mxu0 %v8320
  %8889 = vmatprep.subr.bf16.mxu0 %v8385
  %8890 = vmatpush1.bf16.msra.mxu0 %v8384
  %8891 = vmatprep.subr.bf16.mxu0 0
  %8892 = vmatpush1.bf16.msra.mxu0 0
  %8893 = vmatprep.subr.bf16.mxu0 0
  %8894 = vmatpush1.bf16.msra.mxu0 0
  %8895 = vmatprep.subr.bf16.mxu0 0
  %8896 = vmatpush1.bf16.msra.mxu0 0
  %8897 = vmatprep.subr.bf16.mxu0 0
  %8898 = vmatpush1.bf16.msra.mxu0 0
  %8899 = vmatprep.subr.bf16.mxu0 0
  %8900 = vmatpush1.bf16.msra.mxu0 0
  %8901 = vmatprep.subr.bf16.mxu0 0
  %8902 = vmatpush1.bf16.msra.mxu0 0
  %8903 = vmatprep.subr.bf16.mxu0 0
  %8904 = vmatpush1.bf16.msra.mxu0 0
  %8905 = vmatprep.subr.bf16.mxu0 0
  %8906 = vmatpush1.bf16.msra.mxu0 0
  %8907 = vmatprep.mubr.bf16.mxu0 0
  %8908 = vmatmul.mubr.bf16.gmra.mrb[0].mxu0 %v8502
  %v8909 = vpop.f32.mrb[0].mxu0
  %v8910 = vadd.f32 %v8449, %v8909
  %v8911 = vpop.f32.mrb[0].mxu0
  %v8912 = vadd.f32 %v8449, %v8911
  %v8913 = vpop.f32.mrb[0].mxu0
  %v8914 = vadd.f32 %v8454, %v8913
  %v8915 = vpop.f32.mrb[0].mxu0
  %v8916 = vadd.f32 %v8454, %v8915
  %8917 = vmatprep.mubr.bf16.mxu0 0
  %8918 = vmatmul.mubr.bf16.gmra.mrb[0].mxu0 %v8503
  %v8919 = vpop.f32.mrb[0].mxu0
  %v8920 = vadd.f32 %v8459, %v8919
  %v8921 = vpop.f32.mrb[0].mxu0
  %v8922 = vadd.f32 %v8459, %v8921
  %v8923 = vpop.f32.mrb[0].mxu0
  %v8924 = vadd.f32 %v8464, %v8923
  %v8925 = vpop.f32.mrb[0].mxu0
  %v8926 = vadd.f32 %v8464, %v8925
  %8927 = vmatprep.mubr.bf16.mxu0 0
  %8928 = vmatmul.mubr.bf16.gmra.mrb[0].mxu0 %v8504
  %v8929 = vpop.f32.mrb[0].mxu0
  %v8930 = vadd.f32 %v8469, %v8929
  %v8931 = vpop.f32.mrb[0].mxu0
  %v8932 = vadd.f32 %v8469, %v8931
  %v8933 = vpop.f32.mrb[0].mxu0
  %v8934 = vadd.f32 %v8474, %v8933
  %v8935 = vpop.f32.mrb[0].mxu0
  %v8936 = vadd.f32 %v8474, %v8935
  %8937 = vmatprep.mubr.bf16.mxu0 0
  %8938 = vmatmul.mubr.bf16.gmra.mrb[0].mxu0 %v8505
  %v8939 = vpop.f32.mrb[0].mxu0
  %v8940 = vadd.f32 %v8479, %v8939
  %v8941 = vpop.f32.mrb[0].mxu0
  %v8942 = vadd.f32 %v8479, %v8941
  %v8943 = vpop.f32.mrb[0].mxu0
  %v8944 = vadd.f32 %v8484, %v8943
  %v8945 = vpop.f32.mrb[0].mxu0
  %v8946 = vadd.f32 %v8484, %v8945
  %8947 = vdwg.mxu0
  %8948 = vmatprep.subr.bf16.mxu0 %v7939
  %8949 = vmatpush1.bf16.msra.mxu0 %v7938
  %8950 = vmatprep.subr.bf16.mxu0 %v8003
  %8951 = vmatpush1.bf16.msra.mxu0 %v8002
  %8952 = vmatprep.subr.bf16.mxu0 %v8067
  %8953 = vmatpush1.bf16.msra.mxu0 %v8066
  %8954 = vmatprep.subr.bf16.mxu0 %v8131
  %8955 = vmatpush1.bf16.msra.mxu0 %v8130
  %8956 = vmatprep.subr.bf16.mxu0 %v8195
  %8957 = vmatpush1.bf16.msra.mxu0 %v8194
  %8958 = vmatprep.subr.bf16.mxu0 %v8259
  %8959 = vmatpush1.bf16.msra.mxu0 %v8258
  %8960 = vmatprep.subr.bf16.mxu0 %v8323
  %8961 = vmatpush1.bf16.msra.mxu0 %v8322
  %8962 = vmatprep.subr.bf16.mxu0 %v8387
  %8963 = vmatpush1.bf16.msra.mxu0 %v8386
  %8964 = vmatprep.subr.bf16.mxu0 0
  %8965 = vmatpush1.bf16.msra.mxu0 0
  %8966 = vmatprep.subr.bf16.mxu0 0
  %8967 = vmatpush1.bf16.msra.mxu0 0
  %8968 = vmatprep.subr.bf16.mxu0 0
  %8969 = vmatpush1.bf16.msra.mxu0 0
  %8970 = vmatprep.subr.bf16.mxu0 0
  %8971 = vmatpush1.bf16.msra.mxu0 0
  %8972 = vmatprep.subr.bf16.mxu0 0
  %8973 = vmatpush1.bf16.msra.mxu0 0
  %8974 = vmatprep.subr.bf16.mxu0 0
  %8975 = vmatpush1.bf16.msra.mxu0 0
  %8976 = vmatprep.subr.bf16.mxu0 0
  %8977 = vmatpush1.bf16.msra.mxu0 0
  %8978 = vmatprep.subr.bf16.mxu0 0
  %8979 = vmatpush1.bf16.msra.mxu0 0
  %8980 = vmatprep.mubr.bf16.mxu0 0
  %8981 = vmatmul.mubr.bf16.gmra.mrb[0].mxu0 %v8502
  %v8982 = vpop.f32.mrb[0].mxu0
  %v8983 = vadd.f32 %v8449, %v8982
  %v8984 = vpop.f32.mrb[0].mxu0
  %v8985 = vadd.f32 %v8449, %v8984
  %v8986 = vpop.f32.mrb[0].mxu0
  %v8987 = vadd.f32 %v8454, %v8986
  %v8988 = vpop.f32.mrb[0].mxu0
  %v8989 = vadd.f32 %v8454, %v8988
  %8990 = vmatprep.mubr.bf16.mxu0 0
  %8991 = vmatmul.mubr.bf16.gmra.mrb[0].mxu0 %v8503
  %v8992 = vpop.f32.mrb[0].mxu0
  %v8993 = vadd.f32 %v8459, %v8992
  %v8994 = vpop.f32.mrb[0].mxu0
  %v8995 = vadd.f32 %v8459, %v8994
  %v8996 = vpop.f32.mrb[0].mxu0
  %v8997 = vadd.f32 %v8464, %v8996
  %v8998 = vpop.f32.mrb[0].mxu0
  %v8999 = vadd.f32 %v8464, %v8998
  %9000 = vmatprep.mubr.bf16.mxu0 0
  %9001 = vmatmul.mubr.bf16.gmra.mrb[0].mxu0 %v8504
  %v9002 = vpop.f32.mrb[0].mxu0
  %v9003 = vadd.f32 %v8469, %v9002
  %v9004 = vpop.f32.mrb[0].mxu0
  %v9005 = vadd.f32 %v8469, %v9004
  %v9006 = vpop.f32.mrb[0].mxu0
  %v9007 = vadd.f32 %v8474, %v9006
  %v9008 = vpop.f32.mrb[0].mxu0
  %v9009 = vadd.f32 %v8474, %v9008
  %9010 = vmatprep.mubr.bf16.mxu0 0
  %9011 = vmatmul.mubr.bf16.gmra.mrb[0].mxu0 %v8505
  %v9012 = vpop.f32.mrb[0].mxu0
  %v9013 = vadd.f32 %v8479, %v9012
  %v9014 = vpop.f32.mrb[0].mxu0
  %v9015 = vadd.f32 %v8479, %v9014
  %v9016 = vpop.f32.mrb[0].mxu0
  %v9017 = vadd.f32 %v8484, %v9016
  %v9018 = vpop.f32.mrb[0].mxu0
  %v9019 = vadd.f32 %v8484, %v9018
  %9020 = vdwg.mxu0
  %9021 = vmatprep.subr.bf16.mxu0 %v7941
  %9022 = vmatpush1.bf16.msra.mxu0 %v7940
  %9023 = vmatprep.subr.bf16.mxu0 %v8005
  %9024 = vmatpush1.bf16.msra.mxu0 %v8004
  %9025 = vmatprep.subr.bf16.mxu0 %v8069
  %9026 = vmatpush1.bf16.msra.mxu0 %v8068
  %9027 = vmatprep.subr.bf16.mxu0 %v8133
  %9028 = vmatpush1.bf16.msra.mxu0 %v8132
  %9029 = vmatprep.subr.bf16.mxu0 %v8197
  %9030 = vmatpush1.bf16.msra.mxu0 %v8196
  %9031 = vmatprep.subr.bf16.mxu0 %v8261
  %9032 = vmatpush1.bf16.msra.mxu0 %v8260
  %9033 = vmatprep.subr.bf16.mxu0 %v8325
  %9034 = vmatpush1.bf16.msra.mxu0 %v8324
  %9035 = vmatprep.subr.bf16.mxu0 %v8389
  %9036 = vmatpush1.bf16.msra.mxu0 %v8388
  %9037 = vmatprep.subr.bf16.mxu0 0
  %9038 = vmatpush1.bf16.msra.mxu0 0
  %9039 = vmatprep.subr.bf16.mxu0 0
  %9040 = vmatpush1.bf16.msra.mxu0 0
  %9041 = vmatprep.subr.bf16.mxu0 0
  %9042 = vmatpush1.bf16.msra.mxu0 0
  %9043 = vmatprep.subr.bf16.mxu0 0
  %9044 = vmatpush1.bf16.msra.mxu0 0
  %9045 = vmatprep.subr.bf16.mxu0 0
  %9046 = vmatpush1.bf16.msra.mxu0 0
  %9047 = vmatprep.subr.bf16.mxu0 0
  %9048 = vmatpush1.bf16.msra.mxu0 0
  %9049 = vmatprep.subr.bf16.mxu0 0
  %9050 = vmatpush1.bf16.msra.mxu0 0
  %9051 = vmatprep.subr.bf16.mxu0 0
  %9052 = vmatpush1.bf16.msra.mxu0 0
  %9053 = vmatprep.mubr.bf16.mxu0 0
  %9054 = vmatmul.mubr.bf16.gmra.mrb[0].mxu0 %v8502
  %v9055 = vpop.f32.mrb[0].mxu0
  %v9056 = vadd.f32 %v8449, %v9055
  %v9057 = vpop.f32.mrb[0].mxu0
  %v9058 = vadd.f32 %v8449, %v9057
  %v9059 = vpop.f32.mrb[0].mxu0
  %v9060 = vadd.f32 %v8454, %v9059
  %v9061 = vpop.f32.mrb[0].mxu0
  %v9062 = vadd.f32 %v8454, %v9061
  %9063 = vmatprep.mubr.bf16.mxu0 0
  %9064 = vmatmul.mubr.bf16.gmra.mrb[0].mxu0 %v8503
  %v9065 = vpop.f32.mrb[0].mxu0
  %v9066 = vadd.f32 %v8459, %v9065
  %v9067 = vpop.f32.mrb[0].mxu0
  %v9068 = vadd.f32 %v8459, %v9067
  %v9069 = vpop.f32.mrb[0].mxu0
  %v9070 = vadd.f32 %v8464, %v9069
  %v9071 = vpop.f32.mrb[0].mxu0
  %v9072 = vadd.f32 %v8464, %v9071
  %9073 = vmatprep.mubr.bf16.mxu0 0
  %9074 = vmatmul.mubr.bf16.gmra.mrb[0].mxu0 %v8504
  %v9075 = vpop.f32.mrb[0].mxu0
  %v9076 = vadd.f32 %v8469, %v9075
  %v9077 = vpop.f32.mrb[0].mxu0
  %v9078 = vadd.f32 %v8469, %v9077
  %v9079 = vpop.f32.mrb[0].mxu0
  %v9080 = vadd.f32 %v8474, %v9079
  %v9081 = vpop.f32.mrb[0].mxu0
  %v9082 = vadd.f32 %v8474, %v9081
  %9083 = vmatprep.mubr.bf16.mxu0 0
  %9084 = vmatmul.mubr.bf16.gmra.mrb[0].mxu0 %v8505
  %v9085 = vpop.f32.mrb[0].mxu0
  %v9086 = vadd.f32 %v8479, %v9085
  %v9087 = vpop.f32.mrb[0].mxu0
  %v9088 = vadd.f32 %v8479, %v9087
  %v9089 = vpop.f32.mrb[0].mxu0
  %v9090 = vadd.f32 %v8484, %v9089
  %v9091 = vpop.f32.mrb[0].mxu0
  %v9092 = vadd.f32 %v8484, %v9091
  %9093 = vdwg.mxu0
  %9094 = vmatprep.subr.bf16.mxu0 %v7943
  %9095 = vmatpush1.bf16.msra.mxu0 %v7942
  %9096 = vmatprep.subr.bf16.mxu0 %v8007
  %9097 = vmatpush1.bf16.msra.mxu0 %v8006
  %9098 = vmatprep.subr.bf16.mxu0 %v8071
  %9099 = vmatpush1.bf16.msra.mxu0 %v8070
  %9100 = vmatprep.subr.bf16.mxu0 %v8135
  %9101 = vmatpush1.bf16.msra.mxu0 %v8134
  %9102 = vmatprep.subr.bf16.mxu0 %v8199
  %9103 = vmatpush1.bf16.msra.mxu0 %v8198
  %9104 = vmatprep.subr.bf16.mxu0 %v8263
  %9105 = vmatpush1.bf16.msra.mxu0 %v8262
  %9106 = vmatprep.subr.bf16.mxu0 %v8327
  %9107 = vmatpush1.bf16.msra.mxu0 %v8326
  %9108 = vmatprep.subr.bf16.mxu0 %v8391
  %9109 = vmatpush1.bf16.msra.mxu0 %v8390
  %9110 = vmatprep.subr.bf16.mxu0 0
  %9111 = vmatpush1.bf16.msra.mxu0 0
  %9112 = vmatprep.subr.bf16.mxu0 0
  %9113 = vmatpush1.bf16.msra.mxu0 0
  %9114 = vmatprep.subr.bf16.mxu0 0
  %9115 = vmatpush1.bf16.msra.mxu0 0
  %9116 = vmatprep.subr.bf16.mxu0 0
  %9117 = vmatpush1.bf16.msra.mxu0 0
  %9118 = vmatprep.subr.bf16.mxu0 0
  %9119 = vmatpush1.bf16.msra.mxu0 0
  %9120 = vmatprep.subr.bf16.mxu0 0
  %9121 = vmatpush1.bf16.msra.mxu0 0
  %9122 = vmatprep.subr.bf16.mxu0 0
  %9123 = vmatpush1.bf16.msra.mxu0 0
  %9124 = vmatprep.subr.bf16.mxu0 0
  %9125 = vmatpush1.bf16.msra.mxu0 0
  %9126 = vmatprep.mubr.bf16.mxu0 0
  %9127 = vmatmul.mubr.bf16.gmra.mrb[0].mxu0 %v8502
  %v9128 = vpop.f32.mrb[0].mxu0
  %v9129 = vadd.f32 %v8449, %v9128
  %v9130 = vpop.f32.mrb[0].mxu0
  %v9131 = vadd.f32 %v8449, %v9130
  %v9132 = vpop.f32.mrb[0].mxu0
  %v9133 = vadd.f32 %v8454, %v9132
  %v9134 = vpop.f32.mrb[0].mxu0
  %v9135 = vadd.f32 %v8454, %v9134
  %9136 = vmatprep.mubr.bf16.mxu0 0
  %9137 = vmatmul.mubr.bf16.gmra.mrb[0].mxu0 %v8503
  %v9138 = vpop.f32.mrb[0].mxu0
  %v9139 = vadd.f32 %v8459, %v9138
  %v9140 = vpop.f32.mrb[0].mxu0
  %v9141 = vadd.f32 %v8459, %v9140
  %v9142 = vpop.f32.mrb[0].mxu0
  %v9143 = vadd.f32 %v8464, %v9142
  %v9144 = vpop.f32.mrb[0].mxu0
  %v9145 = vadd.f32 %v8464, %v9144
  %9146 = vmatprep.mubr.bf16.mxu0 0
  %9147 = vmatmul.mubr.bf16.gmra.mrb[0].mxu0 %v8504
  %v9148 = vpop.f32.mrb[0].mxu0
  %v9149 = vadd.f32 %v8469, %v9148
  %v9150 = vpop.f32.mrb[0].mxu0
  %v9151 = vadd.f32 %v8469, %v9150
  %v9152 = vpop.f32.mrb[0].mxu0
  %v9153 = vadd.f32 %v8474, %v9152
  %v9154 = vpop.f32.mrb[0].mxu0
  %v9155 = vadd.f32 %v8474, %v9154
  %9156 = vmatprep.mubr.bf16.mxu0 0
  %9157 = vmatmul.mubr.bf16.gmra.mrb[0].mxu0 %v8505
  %v9158 = vpop.f32.mrb[0].mxu0
  %v9159 = vadd.f32 %v8479, %v9158
  %v9160 = vpop.f32.mrb[0].mxu0
  %v9161 = vadd.f32 %v8479, %v9160
  %v9162 = vpop.f32.mrb[0].mxu0
  %v9163 = vadd.f32 %v8484, %v9162
  %v9164 = vpop.f32.mrb[0].mxu0
  %v9165 = vadd.f32 %v8484, %v9164
  %9166 = vdwg.mxu0
  %9167 = vmatprep.subr.bf16.mxu0 %v7945
  %9168 = vmatpush1.bf16.msra.mxu0 %v7944
  %9169 = vmatprep.subr.bf16.mxu0 %v8009
  %9170 = vmatpush1.bf16.msra.mxu0 %v8008
  %9171 = vmatprep.subr.bf16.mxu0 %v8073
  %9172 = vmatpush1.bf16.msra.mxu0 %v8072
  %9173 = vmatprep.subr.bf16.mxu0 %v8137
  %9174 = vmatpush1.bf16.msra.mxu0 %v8136
  %9175 = vmatprep.subr.bf16.mxu0 %v8201
  %9176 = vmatpush1.bf16.msra.mxu0 %v8200
  %9177 = vmatprep.subr.bf16.mxu0 %v8265
  %9178 = vmatpush1.bf16.msra.mxu0 %v8264
  %9179 = vmatprep.subr.bf16.mxu0 %v8329
  %9180 = vmatpush1.bf16.msra.mxu0 %v8328
  %9181 = vmatprep.subr.bf16.mxu0 %v8393
  %9182 = vmatpush1.bf16.msra.mxu0 %v8392
  %9183 = vmatprep.subr.bf16.mxu0 0
  %9184 = vmatpush1.bf16.msra.mxu0 0
  %9185 = vmatprep.subr.bf16.mxu0 0
  %9186 = vmatpush1.bf16.msra.mxu0 0
  %9187 = vmatprep.subr.bf16.mxu0 0
  %9188 = vmatpush1.bf16.msra.mxu0 0
  %9189 = vmatprep.subr.bf16.mxu0 0
  %9190 = vmatpush1.bf16.msra.mxu0 0
  %9191 = vmatprep.subr.bf16.mxu0 0
  %9192 = vmatpush1.bf16.msra.mxu0 0
  %9193 = vmatprep.subr.bf16.mxu0 0
  %9194 = vmatpush1.bf16.msra.mxu0 0
  %9195 = vmatprep.subr.bf16.mxu0 0
  %9196 = vmatpush1.bf16.msra.mxu0 0
  %9197 = vmatprep.subr.bf16.mxu0 0
  %9198 = vmatpush1.bf16.msra.mxu0 0
  %9199 = vmatprep.mubr.bf16.mxu0 0
  %9200 = vmatmul.mubr.bf16.gmra.mrb[0].mxu0 %v8502
  %v9201 = vpop.f32.mrb[0].mxu0
  %v9202 = vadd.f32 %v8449, %v9201
  %v9203 = vpop.f32.mrb[0].mxu0
  %v9204 = vadd.f32 %v8449, %v9203
  %v9205 = vpop.f32.mrb[0].mxu0
  %v9206 = vadd.f32 %v8454, %v9205
  %v9207 = vpop.f32.mrb[0].mxu0
  %v9208 = vadd.f32 %v8454, %v9207
  %9209 = vmatprep.mubr.bf16.mxu0 0
  %9210 = vmatmul.mubr.bf16.gmra.mrb[0].mxu0 %v8503
  %v9211 = vpop.f32.mrb[0].mxu0
  %v9212 = vadd.f32 %v8459, %v9211
  %v9213 = vpop.f32.mrb[0].mxu0
  %v9214 = vadd.f32 %v8459, %v9213
  %v9215 = vpop.f32.mrb[0].mxu0
  %v9216 = vadd.f32 %v8464, %v9215
  %v9217 = vpop.f32.mrb[0].mxu0
  %v9218 = vadd.f32 %v8464, %v9217
  %9219 = vmatprep.mubr.bf16.mxu0 0
  %9220 = vmatmul.mubr.bf16.gmra.mrb[0].mxu0 %v8504
  %v9221 = vpop.f32.mrb[0].mxu0
  %v9222 = vadd.f32 %v8469, %v9221
  %v9223 = vpop.f32.mrb[0].mxu0
  %v9224 = vadd.f32 %v8469, %v9223
  %v9225 = vpop.f32.mrb[0].mxu0
  %v9226 = vadd.f32 %v8474, %v9225
  %v9227 = vpop.f32.mrb[0].mxu0
  %v9228 = vadd.f32 %v8474, %v9227
  %9229 = vmatprep.mubr.bf16.mxu0 0
  %9230 = vmatmul.mubr.bf16.gmra.mrb[0].mxu0 %v8505
  %v9231 = vpop.f32.mrb[0].mxu0
  %v9232 = vadd.f32 %v8479, %v9231
  %v9233 = vpop.f32.mrb[0].mxu0
  %v9234 = vadd.f32 %v8479, %v9233
  %v9235 = vpop.f32.mrb[0].mxu0
  %v9236 = vadd.f32 %v8484, %v9235
  %v9237 = vpop.f32.mrb[0].mxu0
  %v9238 = vadd.f32 %v8484, %v9237
  %9239 = vdwg.mxu0
  %9240 = vmatprep.subr.bf16.mxu0 %v7947
  %9241 = vmatpush1.bf16.msra.mxu0 %v7946
  %9242 = vmatprep.subr.bf16.mxu0 %v8011
  %9243 = vmatpush1.bf16.msra.mxu0 %v8010
  %9244 = vmatprep.subr.bf16.mxu0 %v8075
  %9245 = vmatpush1.bf16.msra.mxu0 %v8074
  %9246 = vmatprep.subr.bf16.mxu0 %v8139
  %9247 = vmatpush1.bf16.msra.mxu0 %v8138
  %9248 = vmatprep.subr.bf16.mxu0 %v8203
  %9249 = vmatpush1.bf16.msra.mxu0 %v8202
  %9250 = vmatprep.subr.bf16.mxu0 %v8267
  %9251 = vmatpush1.bf16.msra.mxu0 %v8266
  %9252 = vmatprep.subr.bf16.mxu0 %v8331
  %9253 = vmatpush1.bf16.msra.mxu0 %v8330
  %9254 = vmatprep.subr.bf16.mxu0 %v8395
  %9255 = vmatpush1.bf16.msra.mxu0 %v8394
  %9256 = vmatprep.subr.bf16.mxu0 0
  %9257 = vmatpush1.bf16.msra.mxu0 0
  %9258 = vmatprep.subr.bf16.mxu0 0
  %9259 = vmatpush1.bf16.msra.mxu0 0
  %9260 = vmatprep.subr.bf16.mxu0 0
  %9261 = vmatpush1.bf16.msra.mxu0 0
  %9262 = vmatprep.subr.bf16.mxu0 0
  %9263 = vmatpush1.bf16.msra.mxu0 0
  %9264 = vmatprep.subr.bf16.mxu0 0
  %9265 = vmatpush1.bf16.msra.mxu0 0
  %9266 = vmatprep.subr.bf16.mxu0 0
  %9267 = vmatpush1.bf16.msra.mxu0 0
  %9268 = vmatprep.subr.bf16.mxu0 0
  %9269 = vmatpush1.bf16.msra.mxu0 0
  %9270 = vmatprep.subr.bf16.mxu0 0
  %9271 = vmatpush1.bf16.msra.mxu0 0
  %9272 = vmatprep.mubr.bf16.mxu0 0
  %9273 = vmatmul.mubr.bf16.gmra.mrb[0].mxu0 %v8502
  %v9274 = vpop.f32.mrb[0].mxu0
  %v9275 = vadd.f32 %v8449, %v9274
  %v9276 = vpop.f32.mrb[0].mxu0
  %v9277 = vadd.f32 %v8449, %v9276
  %v9278 = vpop.f32.mrb[0].mxu0
  %v9279 = vadd.f32 %v8454, %v9278
  %v9280 = vpop.f32.mrb[0].mxu0
  %v9281 = vadd.f32 %v8454, %v9280
  %9282 = vmatprep.mubr.bf16.mxu0 0
  %9283 = vmatmul.mubr.bf16.gmra.mrb[0].mxu0 %v8503
  %v9284 = vpop.f32.mrb[0].mxu0
  %v9285 = vadd.f32 %v8459, %v9284
  %v9286 = vpop.f32.mrb[0].mxu0
  %v9287 = vadd.f32 %v8459, %v9286
  %v9288 = vpop.f32.mrb[0].mxu0
  %v9289 = vadd.f32 %v8464, %v9288
  %v9290 = vpop.f32.mrb[0].mxu0
  %v9291 = vadd.f32 %v8464, %v9290
  %9292 = vmatprep.mubr.bf16.mxu0 0
  %9293 = vmatmul.mubr.bf16.gmra.mrb[0].mxu0 %v8504
  %v9294 = vpop.f32.mrb[0].mxu0
  %v9295 = vadd.f32 %v8469, %v9294
  %v9296 = vpop.f32.mrb[0].mxu0
  %v9297 = vadd.f32 %v8469, %v9296
  %v9298 = vpop.f32.mrb[0].mxu0
  %v9299 = vadd.f32 %v8474, %v9298
  %v9300 = vpop.f32.mrb[0].mxu0
  %v9301 = vadd.f32 %v8474, %v9300
  %9302 = vmatprep.mubr.bf16.mxu0 0
  %9303 = vmatmul.mubr.bf16.gmra.mrb[0].mxu0 %v8505
  %v9304 = vpop.f32.mrb[0].mxu0
  %v9305 = vadd.f32 %v8479, %v9304
  %v9306 = vpop.f32.mrb[0].mxu0
  %v9307 = vadd.f32 %v8479, %v9306
  %v9308 = vpop.f32.mrb[0].mxu0
  %v9309 = vadd.f32 %v8484, %v9308
  %v9310 = vpop.f32.mrb[0].mxu0
  %v9311 = vadd.f32 %v8484, %v9310
  %9312 = vdwg.mxu0
  %9313 = vmatprep.subr.bf16.mxu0 %v7949
  %9314 = vmatpush1.bf16.msra.mxu0 %v7948
  %9315 = vmatprep.subr.bf16.mxu0 %v8013
  %9316 = vmatpush1.bf16.msra.mxu0 %v8012
  %9317 = vmatprep.subr.bf16.mxu0 %v8077
  %9318 = vmatpush1.bf16.msra.mxu0 %v8076
  %9319 = vmatprep.subr.bf16.mxu0 %v8141
  %9320 = vmatpush1.bf16.msra.mxu0 %v8140
  %9321 = vmatprep.subr.bf16.mxu0 %v8205
  %9322 = vmatpush1.bf16.msra.mxu0 %v8204
  %9323 = vmatprep.subr.bf16.mxu0 %v8269
  %9324 = vmatpush1.bf16.msra.mxu0 %v8268
  %9325 = vmatprep.subr.bf16.mxu0 %v8333
  %9326 = vmatpush1.bf16.msra.mxu0 %v8332
  %9327 = vmatprep.subr.bf16.mxu0 %v8397
  %9328 = vmatpush1.bf16.msra.mxu0 %v8396
  %9329 = vmatprep.subr.bf16.mxu0 0
  %9330 = vmatpush1.bf16.msra.mxu0 0
  %9331 = vmatprep.subr.bf16.mxu0 0
  %9332 = vmatpush1.bf16.msra.mxu0 0
  %9333 = vmatprep.subr.bf16.mxu0 0
  %9334 = vmatpush1.bf16.msra.mxu0 0
  %9335 = vmatprep.subr.bf16.mxu0 0
  %9336 = vmatpush1.bf16.msra.mxu0 0
  %9337 = vmatprep.subr.bf16.mxu0 0
  %9338 = vmatpush1.bf16.msra.mxu0 0
  %9339 = vmatprep.subr.bf16.mxu0 0
  %9340 = vmatpush1.bf16.msra.mxu0 0
  %9341 = vmatprep.subr.bf16.mxu0 0
  %9342 = vmatpush1.bf16.msra.mxu0 0
  %9343 = vmatprep.subr.bf16.mxu0 0
  %9344 = vmatpush1.bf16.msra.mxu0 0
  %9345 = vmatprep.mubr.bf16.mxu0 0
  %9346 = vmatmul.mubr.bf16.gmra.mrb[0].mxu0 %v8502
  %v9347 = vpop.f32.mrb[0].mxu0
  %v9348 = vadd.f32 %v8449, %v9347
  %v9349 = vpop.f32.mrb[0].mxu0
  %v9350 = vadd.f32 %v8449, %v9349
  %v9351 = vpop.f32.mrb[0].mxu0
  %v9352 = vadd.f32 %v8454, %v9351
  %v9353 = vpop.f32.mrb[0].mxu0
  %v9354 = vadd.f32 %v8454, %v9353
  %9355 = vmatprep.mubr.bf16.mxu0 0
  %9356 = vmatmul.mubr.bf16.gmra.mrb[0].mxu0 %v8503
  %v9357 = vpop.f32.mrb[0].mxu0
  %v9358 = vadd.f32 %v8459, %v9357
  %v9359 = vpop.f32.mrb[0].mxu0
  %v9360 = vadd.f32 %v8459, %v9359
  %v9361 = vpop.f32.mrb[0].mxu0
  %v9362 = vadd.f32 %v8464, %v9361
  %v9363 = vpop.f32.mrb[0].mxu0
  %v9364 = vadd.f32 %v8464, %v9363
  %9365 = vmatprep.mubr.bf16.mxu0 0
  %9366 = vmatmul.mubr.bf16.gmra.mrb[0].mxu0 %v8504
  %v9367 = vpop.f32.mrb[0].mxu0
  %v9368 = vadd.f32 %v8469, %v9367
  %v9369 = vpop.f32.mrb[0].mxu0
  %v9370 = vadd.f32 %v8469, %v9369
  %v9371 = vpop.f32.mrb[0].mxu0
  %v9372 = vadd.f32 %v8474, %v9371
  %v9373 = vpop.f32.mrb[0].mxu0
  %v9374 = vadd.f32 %v8474, %v9373
  %9375 = vmatprep.mubr.bf16.mxu0 0
  %9376 = vmatmul.mubr.bf16.gmra.mrb[0].mxu0 %v8505
  %v9377 = vpop.f32.mrb[0].mxu0
  %v9378 = vadd.f32 %v8479, %v9377
  %v9379 = vpop.f32.mrb[0].mxu0
  %v9380 = vadd.f32 %v8479, %v9379
  %v9381 = vpop.f32.mrb[0].mxu0
  %v9382 = vadd.f32 %v8484, %v9381
  %v9383 = vpop.f32.mrb[0].mxu0
  %v9384 = vadd.f32 %v8484, %v9383
  %9385 = vdwg.mxu0
  %9386 = vmatprep.subr.bf16.mxu0 %v7951
  %9387 = vmatpush1.bf16.msra.mxu0 %v7950
  %9388 = vmatprep.subr.bf16.mxu0 %v8015
  %9389 = vmatpush1.bf16.msra.mxu0 %v8014
  %9390 = vmatprep.subr.bf16.mxu0 %v8079
  %9391 = vmatpush1.bf16.msra.mxu0 %v8078
  %9392 = vmatprep.subr.bf16.mxu0 %v8143
  %9393 = vmatpush1.bf16.msra.mxu0 %v8142
  %9394 = vmatprep.subr.bf16.mxu0 %v8207
  %9395 = vmatpush1.bf16.msra.mxu0 %v8206
  %9396 = vmatprep.subr.bf16.mxu0 %v8271
  %9397 = vmatpush1.bf16.msra.mxu0 %v8270
  %9398 = vmatprep.subr.bf16.mxu0 %v8335
  %9399 = vmatpush1.bf16.msra.mxu0 %v8334
  %9400 = vmatprep.subr.bf16.mxu0 %v8399
  %9401 = vmatpush1.bf16.msra.mxu0 %v8398
  %9402 = vmatprep.subr.bf16.mxu0 0
  %9403 = vmatpush1.bf16.msra.mxu0 0
  %9404 = vmatprep.subr.bf16.mxu0 0
  %9405 = vmatpush1.bf16.msra.mxu0 0
  %9406 = vmatprep.subr.bf16.mxu0 0
  %9407 = vmatpush1.bf16.msra.mxu0 0
  %9408 = vmatprep.subr.bf16.mxu0 0
  %9409 = vmatpush1.bf16.msra.mxu0 0
  %9410 = vmatprep.subr.bf16.mxu0 0
  %9411 = vmatpush1.bf16.msra.mxu0 0
  %9412 = vmatprep.subr.bf16.mxu0 0
  %9413 = vmatpush1.bf16.msra.mxu0 0
  %9414 = vmatprep.subr.bf16.mxu0 0
  %9415 = vmatpush1.bf16.msra.mxu0 0
  %9416 = vmatprep.subr.bf16.mxu0 0
  %9417 = vmatpush1.bf16.msra.mxu0 0
  %9418 = vmatprep.mubr.bf16.mxu0 0
  %9419 = vmatmul.mubr.bf16.gmra.mrb[0].mxu0 %v8502
  %v9420 = vpop.f32.mrb[0].mxu0
  %v9421 = vadd.f32 %v8449, %v9420
  %v9422 = vpop.f32.mrb[0].mxu0
  %v9423 = vadd.f32 %v8449, %v9422
  %v9424 = vpop.f32.mrb[0].mxu0
  %v9425 = vadd.f32 %v8454, %v9424
  %v9426 = vpop.f32.mrb[0].mxu0
  %v9427 = vadd.f32 %v8454, %v9426
  %9428 = vmatprep.mubr.bf16.mxu0 0
  %9429 = vmatmul.mubr.bf16.gmra.mrb[0].mxu0 %v8503
  %v9430 = vpop.f32.mrb[0].mxu0
  %v9431 = vadd.f32 %v8459, %v9430
  %v9432 = vpop.f32.mrb[0].mxu0
  %v9433 = vadd.f32 %v8459, %v9432
  %v9434 = vpop.f32.mrb[0].mxu0
  %v9435 = vadd.f32 %v8464, %v9434
  %v9436 = vpop.f32.mrb[0].mxu0
  %v9437 = vadd.f32 %v8464, %v9436
  %9438 = vmatprep.mubr.bf16.mxu0 0
  %9439 = vmatmul.mubr.bf16.gmra.mrb[0].mxu0 %v8504
  %v9440 = vpop.f32.mrb[0].mxu0
  %v9441 = vadd.f32 %v8469, %v9440
  %v9442 = vpop.f32.mrb[0].mxu0
  %v9443 = vadd.f32 %v8469, %v9442
  %v9444 = vpop.f32.mrb[0].mxu0
  %v9445 = vadd.f32 %v8474, %v9444
  %v9446 = vpop.f32.mrb[0].mxu0
  %v9447 = vadd.f32 %v8474, %v9446
  %9448 = vmatprep.mubr.bf16.mxu0 0
  %9449 = vmatmul.mubr.bf16.gmra.mrb[0].mxu0 %v8505
  %v9450 = vpop.f32.mrb[0].mxu0
  %v9451 = vadd.f32 %v8479, %v9450
  %v9452 = vpop.f32.mrb[0].mxu0
  %v9453 = vadd.f32 %v8479, %v9452
  %v9454 = vpop.f32.mrb[0].mxu0
  %v9455 = vadd.f32 %v8484, %v9454
  %v9456 = vpop.f32.mrb[0].mxu0
  %v9457 = vadd.f32 %v8484, %v9456
  %9458 = vdwg.mxu0
  %9459 = vmatprep.subr.bf16.mxu0 %v7953
  %9460 = vmatpush1.bf16.msra.mxu0 %v7952
  %9461 = vmatprep.subr.bf16.mxu0 %v8017
  %9462 = vmatpush1.bf16.msra.mxu0 %v8016
  %9463 = vmatprep.subr.bf16.mxu0 %v8081
  %9464 = vmatpush1.bf16.msra.mxu0 %v8080
  %9465 = vmatprep.subr.bf16.mxu0 %v8145
  %9466 = vmatpush1.bf16.msra.mxu0 %v8144
  %9467 = vmatprep.subr.bf16.mxu0 %v8209
  %9468 = vmatpush1.bf16.msra.mxu0 %v8208
  %9469 = vmatprep.subr.bf16.mxu0 %v8273
  %9470 = vmatpush1.bf16.msra.mxu0 %v8272
  %9471 = vmatprep.subr.bf16.mxu0 %v8337
  %9472 = vmatpush1.bf16.msra.mxu0 %v8336
  %9473 = vmatprep.subr.bf16.mxu0 %v8401
  %9474 = vmatpush1.bf16.msra.mxu0 %v8400
  %9475 = vmatprep.subr.bf16.mxu0 0
  %9476 = vmatpush1.bf16.msra.mxu0 0
  %9477 = vmatprep.subr.bf16.mxu0 0
  %9478 = vmatpush1.bf16.msra.mxu0 0
  %9479 = vmatprep.subr.bf16.mxu0 0
  %9480 = vmatpush1.bf16.msra.mxu0 0
  %9481 = vmatprep.subr.bf16.mxu0 0
  %9482 = vmatpush1.bf16.msra.mxu0 0
  %9483 = vmatprep.subr.bf16.mxu0 0
  %9484 = vmatpush1.bf16.msra.mxu0 0
  %9485 = vmatprep.subr.bf16.mxu0 0
  %9486 = vmatpush1.bf16.msra.mxu0 0
  %9487 = vmatprep.subr.bf16.mxu0 0
  %9488 = vmatpush1.bf16.msra.mxu0 0
  %9489 = vmatprep.subr.bf16.mxu0 0
  %9490 = vmatpush1.bf16.msra.mxu0 0
  %9491 = vmatprep.mubr.bf16.mxu0 0
  %9492 = vmatmul.mubr.bf16.gmra.mrb[0].mxu0 %v8502
  %v9493 = vpop.f32.mrb[0].mxu0
  %v9494 = vadd.f32 %v8449, %v9493
  %v9495 = vpop.f32.mrb[0].mxu0
  %v9496 = vadd.f32 %v8449, %v9495
  %v9497 = vpop.f32.mrb[0].mxu0
  %v9498 = vadd.f32 %v8454, %v9497
  %v9499 = vpop.f32.mrb[0].mxu0
  %v9500 = vadd.f32 %v8454, %v9499
  %9501 = vmatprep.mubr.bf16.mxu0 0
  %9502 = vmatmul.mubr.bf16.gmra.mrb[0].mxu0 %v8503
  %v9503 = vpop.f32.mrb[0].mxu0
  %v9504 = vadd.f32 %v8459, %v9503
  %v9505 = vpop.f32.mrb[0].mxu0
  %v9506 = vadd.f32 %v8459, %v9505
  %v9507 = vpop.f32.mrb[0].mxu0
  %v9508 = vadd.f32 %v8464, %v9507
  %v9509 = vpop.f32.mrb[0].mxu0
  %v9510 = vadd.f32 %v8464, %v9509
  %9511 = vmatprep.mubr.bf16.mxu0 0
  %9512 = vmatmul.mubr.bf16.gmra.mrb[0].mxu0 %v8504
  %v9513 = vpop.f32.mrb[0].mxu0
  %v9514 = vadd.f32 %v8469, %v9513
  %v9515 = vpop.f32.mrb[0].mxu0
  %v9516 = vadd.f32 %v8469, %v9515
  %v9517 = vpop.f32.mrb[0].mxu0
  %v9518 = vadd.f32 %v8474, %v9517
  %v9519 = vpop.f32.mrb[0].mxu0
  %v9520 = vadd.f32 %v8474, %v9519
  %9521 = vmatprep.mubr.bf16.mxu0 0
  %9522 = vmatmul.mubr.bf16.gmra.mrb[0].mxu0 %v8505
  %v9523 = vpop.f32.mrb[0].mxu0
  %v9524 = vadd.f32 %v8479, %v9523
  %v9525 = vpop.f32.mrb[0].mxu0
  %v9526 = vadd.f32 %v8479, %v9525
  %v9527 = vpop.f32.mrb[0].mxu0
  %v9528 = vadd.f32 %v8484, %v9527
  %v9529 = vpop.f32.mrb[0].mxu0
  %v9530 = vadd.f32 %v8484, %v9529
  %9531 = vdwg.mxu0
  %9532 = vmatprep.subr.bf16.mxu0 %v7955
  %9533 = vmatpush1.bf16.msra.mxu0 %v7954
  %9534 = vmatprep.subr.bf16.mxu0 %v8019
  %9535 = vmatpush1.bf16.msra.mxu0 %v8018
  %9536 = vmatprep.subr.bf16.mxu0 %v8083
  %9537 = vmatpush1.bf16.msra.mxu0 %v8082
  %9538 = vmatprep.subr.bf16.mxu0 %v8147
  %9539 = vmatpush1.bf16.msra.mxu0 %v8146
  %9540 = vmatprep.subr.bf16.mxu0 %v8211
  %9541 = vmatpush1.bf16.msra.mxu0 %v8210
  %9542 = vmatprep.subr.bf16.mxu0 %v8275
  %9543 = vmatpush1.bf16.msra.mxu0 %v8274
  %9544 = vmatprep.subr.bf16.mxu0 %v8339
  %9545 = vmatpush1.bf16.msra.mxu0 %v8338
  %9546 = vmatprep.subr.bf16.mxu0 %v8403
  %9547 = vmatpush1.bf16.msra.mxu0 %v8402
  %9548 = vmatprep.subr.bf16.mxu0 0
  %9549 = vmatpush1.bf16.msra.mxu0 0
  %9550 = vmatprep.subr.bf16.mxu0 0
  %9551 = vmatpush1.bf16.msra.mxu0 0
  %9552 = vmatprep.subr.bf16.mxu0 0
  %9553 = vmatpush1.bf16.msra.mxu0 0
  %9554 = vmatprep.subr.bf16.mxu0 0
  %9555 = vmatpush1.bf16.msra.mxu0 0
  %9556 = vmatprep.subr.bf16.mxu0 0
  %9557 = vmatpush1.bf16.msra.mxu0 0
  %9558 = vmatprep.subr.bf16.mxu0 0
  %9559 = vmatpush1.bf16.msra.mxu0 0
  %9560 = vmatprep.subr.bf16.mxu0 0
  %9561 = vmatpush1.bf16.msra.mxu0 0
  %9562 = vmatprep.subr.bf16.mxu0 0
  %9563 = vmatpush1.bf16.msra.mxu0 0
  %9564 = vmatprep.mubr.bf16.mxu0 0
  %9565 = vmatmul.mubr.bf16.gmra.mrb[0].mxu0 %v8502
  %v9566 = vpop.f32.mrb[0].mxu0
  %v9567 = vadd.f32 %v8449, %v9566
  %v9568 = vpop.f32.mrb[0].mxu0
  %v9569 = vadd.f32 %v8449, %v9568
  %v9570 = vpop.f32.mrb[0].mxu0
  %v9571 = vadd.f32 %v8454, %v9570
  %v9572 = vpop.f32.mrb[0].mxu0
  %v9573 = vadd.f32 %v8454, %v9572
  %9574 = vmatprep.mubr.bf16.mxu0 0
  %9575 = vmatmul.mubr.bf16.gmra.mrb[0].mxu0 %v8503
  %v9576 = vpop.f32.mrb[0].mxu0
  %v9577 = vadd.f32 %v8459, %v9576
  %v9578 = vpop.f32.mrb[0].mxu0
  %v9579 = vadd.f32 %v8459, %v9578
  %v9580 = vpop.f32.mrb[0].mxu0
  %v9581 = vadd.f32 %v8464, %v9580
  %v9582 = vpop.f32.mrb[0].mxu0
  %v9583 = vadd.f32 %v8464, %v9582
  %9584 = vmatprep.mubr.bf16.mxu0 0
  %9585 = vmatmul.mubr.bf16.gmra.mrb[0].mxu0 %v8504
  %v9586 = vpop.f32.mrb[0].mxu0
  %v9587 = vadd.f32 %v8469, %v9586
  %v9588 = vpop.f32.mrb[0].mxu0
  %v9589 = vadd.f32 %v8469, %v9588
  %v9590 = vpop.f32.mrb[0].mxu0
  %v9591 = vadd.f32 %v8474, %v9590
  %v9592 = vpop.f32.mrb[0].mxu0
  %v9593 = vadd.f32 %v8474, %v9592
  %9594 = vmatprep.mubr.bf16.mxu0 0
  %9595 = vmatmul.mubr.bf16.gmra.mrb[0].mxu0 %v8505
  %v9596 = vpop.f32.mrb[0].mxu0
  %v9597 = vadd.f32 %v8479, %v9596
  %v9598 = vpop.f32.mrb[0].mxu0
  %v9599 = vadd.f32 %v8479, %v9598
  %v9600 = vpop.f32.mrb[0].mxu0
  %v9601 = vadd.f32 %v8484, %v9600
  %v9602 = vpop.f32.mrb[0].mxu0
  %v9603 = vadd.f32 %v8484, %v9602
  %9604 = vdwg.mxu0
  %9605 = vmatprep.subr.bf16.mxu0 %v7957
  %9606 = vmatpush1.bf16.msra.mxu0 %v7956
  %9607 = vmatprep.subr.bf16.mxu0 %v8021
  %9608 = vmatpush1.bf16.msra.mxu0 %v8020
  %9609 = vmatprep.subr.bf16.mxu0 %v8085
  %9610 = vmatpush1.bf16.msra.mxu0 %v8084
  %9611 = vmatprep.subr.bf16.mxu0 %v8149
  %9612 = vmatpush1.bf16.msra.mxu0 %v8148
  %9613 = vmatprep.subr.bf16.mxu0 %v8213
  %9614 = vmatpush1.bf16.msra.mxu0 %v8212
  %9615 = vmatprep.subr.bf16.mxu0 %v8277
  %9616 = vmatpush1.bf16.msra.mxu0 %v8276
  %9617 = vmatprep.subr.bf16.mxu0 %v8341
  %9618 = vmatpush1.bf16.msra.mxu0 %v8340
  %9619 = vmatprep.subr.bf16.mxu0 %v8405
  %9620 = vmatpush1.bf16.msra.mxu0 %v8404
  %9621 = vmatprep.subr.bf16.mxu0 0
  %9622 = vmatpush1.bf16.msra.mxu0 0
  %9623 = vmatprep.subr.bf16.mxu0 0
  %9624 = vmatpush1.bf16.msra.mxu0 0
  %9625 = vmatprep.subr.bf16.mxu0 0
  %9626 = vmatpush1.bf16.msra.mxu0 0
  %9627 = vmatprep.subr.bf16.mxu0 0
  %9628 = vmatpush1.bf16.msra.mxu0 0
  %9629 = vmatprep.subr.bf16.mxu0 0
  %9630 = vmatpush1.bf16.msra.mxu0 0
  %9631 = vmatprep.subr.bf16.mxu0 0
  %9632 = vmatpush1.bf16.msra.mxu0 0
  %9633 = vmatprep.subr.bf16.mxu0 0
  %9634 = vmatpush1.bf16.msra.mxu0 0
  %9635 = vmatprep.subr.bf16.mxu0 0
  %9636 = vmatpush1.bf16.msra.mxu0 0
  %9637 = vmatprep.mubr.bf16.mxu0 0
  %9638 = vmatmul.mubr.bf16.gmra.mrb[0].mxu0 %v8502
  %v9639 = vpop.f32.mrb[0].mxu0
  %v9640 = vadd.f32 %v8449, %v9639
  %v9641 = vpop.f32.mrb[0].mxu0
  %v9642 = vadd.f32 %v8449, %v9641
  %v9643 = vpop.f32.mrb[0].mxu0
  %v9644 = vadd.f32 %v8454, %v9643
  %v9645 = vpop.f32.mrb[0].mxu0
  %v9646 = vadd.f32 %v8454, %v9645
  %9647 = vmatprep.mubr.bf16.mxu0 0
  %9648 = vmatmul.mubr.bf16.gmra.mrb[0].mxu0 %v8503
  %v9649 = vpop.f32.mrb[0].mxu0
  %v9650 = vadd.f32 %v8459, %v9649
  %v9651 = vpop.f32.mrb[0].mxu0
  %v9652 = vadd.f32 %v8459, %v9651
  %v9653 = vpop.f32.mrb[0].mxu0
  %v9654 = vadd.f32 %v8464, %v9653
  %v9655 = vpop.f32.mrb[0].mxu0
  %v9656 = vadd.f32 %v8464, %v9655
  %9657 = vmatprep.mubr.bf16.mxu0 0
  %9658 = vmatmul.mubr.bf16.gmra.mrb[0].mxu0 %v8504
  %v9659 = vpop.f32.mrb[0].mxu0
  %v9660 = vadd.f32 %v8469, %v9659
  %v9661 = vpop.f32.mrb[0].mxu0
  %v9662 = vadd.f32 %v8469, %v9661
  %v9663 = vpop.f32.mrb[0].mxu0
  %v9664 = vadd.f32 %v8474, %v9663
  %v9665 = vpop.f32.mrb[0].mxu0
  %v9666 = vadd.f32 %v8474, %v9665
  %9667 = vmatprep.mubr.bf16.mxu0 0
  %9668 = vmatmul.mubr.bf16.gmra.mrb[0].mxu0 %v8505
  %v9669 = vpop.f32.mrb[0].mxu0
  %v9670 = vadd.f32 %v8479, %v9669
  %v9671 = vpop.f32.mrb[0].mxu0
  %v9672 = vadd.f32 %v8479, %v9671
  %v9673 = vpop.f32.mrb[0].mxu0
  %v9674 = vadd.f32 %v8484, %v9673
  %v9675 = vpop.f32.mrb[0].mxu0
  %v9676 = vadd.f32 %v8484, %v9675
  %9677 = vdwg.mxu0
  %9678 = vmatprep.subr.bf16.mxu0 %v7959
  %9679 = vmatpush1.bf16.msra.mxu0 %v7958
  %9680 = vmatprep.subr.bf16.mxu0 %v8023
  %9681 = vmatpush1.bf16.msra.mxu0 %v8022
  %9682 = vmatprep.subr.bf16.mxu0 %v8087
  %9683 = vmatpush1.bf16.msra.mxu0 %v8086
  %9684 = vmatprep.subr.bf16.mxu0 %v8151
  %9685 = vmatpush1.bf16.msra.mxu0 %v8150
  %9686 = vmatprep.subr.bf16.mxu0 %v8215
  %9687 = vmatpush1.bf16.msra.mxu0 %v8214
  %9688 = vmatprep.subr.bf16.mxu0 %v8279
  %9689 = vmatpush1.bf16.msra.mxu0 %v8278
  %9690 = vmatprep.subr.bf16.mxu0 %v8343
  %9691 = vmatpush1.bf16.msra.mxu0 %v8342
  %9692 = vmatprep.subr.bf16.mxu0 %v8407
  %9693 = vmatpush1.bf16.msra.mxu0 %v8406
  %9694 = vmatprep.subr.bf16.mxu0 0
  %9695 = vmatpush1.bf16.msra.mxu0 0
  %9696 = vmatprep.subr.bf16.mxu0 0
  %9697 = vmatpush1.bf16.msra.mxu0 0
  %9698 = vmatprep.subr.bf16.mxu0 0
  %9699 = vmatpush1.bf16.msra.mxu0 0
  %9700 = vmatprep.subr.bf16.mxu0 0
  %9701 = vmatpush1.bf16.msra.mxu0 0
  %9702 = vmatprep.subr.bf16.mxu0 0
  %9703 = vmatpush1.bf16.msra.mxu0 0
  %9704 = vmatprep.subr.bf16.mxu0 0
  %9705 = vmatpush1.bf16.msra.mxu0 0
  %9706 = vmatprep.subr.bf16.mxu0 0
  %9707 = vmatpush1.bf16.msra.mxu0 0
  %9708 = vmatprep.subr.bf16.mxu0 0
  %9709 = vmatpush1.bf16.msra.mxu0 0
  %9710 = vmatprep.mubr.bf16.mxu0 0
  %9711 = vmatmul.mubr.bf16.gmra.mrb[0].mxu0 %v8502
  %v9712 = vpop.f32.mrb[0].mxu0
  %v9713 = vadd.f32 %v8449, %v9712
  %v9714 = vpop.f32.mrb[0].mxu0
  %v9715 = vadd.f32 %v8449, %v9714
  %v9716 = vpop.f32.mrb[0].mxu0
  %v9717 = vadd.f32 %v8454, %v9716
  %v9718 = vpop.f32.mrb[0].mxu0
  %v9719 = vadd.f32 %v8454, %v9718
  %9720 = vmatprep.mubr.bf16.mxu0 0
  %9721 = vmatmul.mubr.bf16.gmra.mrb[0].mxu0 %v8503
  %v9722 = vpop.f32.mrb[0].mxu0
  %v9723 = vadd.f32 %v8459, %v9722
  %v9724 = vpop.f32.mrb[0].mxu0
  %v9725 = vadd.f32 %v8459, %v9724
  %v9726 = vpop.f32.mrb[0].mxu0
  %v9727 = vadd.f32 %v8464, %v9726
  %v9728 = vpop.f32.mrb[0].mxu0
  %v9729 = vadd.f32 %v8464, %v9728
  %9730 = vmatprep.mubr.bf16.mxu0 0
  %9731 = vmatmul.mubr.bf16.gmra.mrb[0].mxu0 %v8504
  %v9732 = vpop.f32.mrb[0].mxu0
  %v9733 = vadd.f32 %v8469, %v9732
  %v9734 = vpop.f32.mrb[0].mxu0
  %v9735 = vadd.f32 %v8469, %v9734
  %v9736 = vpop.f32.mrb[0].mxu0
  %v9737 = vadd.f32 %v8474, %v9736
  %v9738 = vpop.f32.mrb[0].mxu0
  %v9739 = vadd.f32 %v8474, %v9738
  %9740 = vmatprep.mubr.bf16.mxu0 0
  %9741 = vmatmul.mubr.bf16.gmra.mrb[0].mxu0 %v8505
  %v9742 = vpop.f32.mrb[0].mxu0
  %v9743 = vadd.f32 %v8479, %v9742
  %v9744 = vpop.f32.mrb[0].mxu0
  %v9745 = vadd.f32 %v8479, %v9744
  %v9746 = vpop.f32.mrb[0].mxu0
  %v9747 = vadd.f32 %v8484, %v9746
  %v9748 = vpop.f32.mrb[0].mxu0
  %v9749 = vadd.f32 %v8484, %v9748
  %9750 = vdwg.mxu0
  %9751 = vmatprep.subr.bf16.mxu0 %v7961
  %9752 = vmatpush1.bf16.msra.mxu0 %v7960
  %9753 = vmatprep.subr.bf16.mxu0 %v8025
  %9754 = vmatpush1.bf16.msra.mxu0 %v8024
  %9755 = vmatprep.subr.bf16.mxu0 %v8089
  %9756 = vmatpush1.bf16.msra.mxu0 %v8088
  %9757 = vmatprep.subr.bf16.mxu0 %v8153
  %9758 = vmatpush1.bf16.msra.mxu0 %v8152
  %9759 = vmatprep.subr.bf16.mxu0 %v8217
  %9760 = vmatpush1.bf16.msra.mxu0 %v8216
  %9761 = vmatprep.subr.bf16.mxu0 %v8281
  %9762 = vmatpush1.bf16.msra.mxu0 %v8280
  %9763 = vmatprep.subr.bf16.mxu0 %v8345
  %9764 = vmatpush1.bf16.msra.mxu0 %v8344
  %9765 = vmatprep.subr.bf16.mxu0 %v8409
  %9766 = vmatpush1.bf16.msra.mxu0 %v8408
  %9767 = vmatprep.subr.bf16.mxu0 0
  %9768 = vmatpush1.bf16.msra.mxu0 0
  %9769 = vmatprep.subr.bf16.mxu0 0
  %9770 = vmatpush1.bf16.msra.mxu0 0
  %9771 = vmatprep.subr.bf16.mxu0 0
  %9772 = vmatpush1.bf16.msra.mxu0 0
  %9773 = vmatprep.subr.bf16.mxu0 0
  %9774 = vmatpush1.bf16.msra.mxu0 0
  %9775 = vmatprep.subr.bf16.mxu0 0
  %9776 = vmatpush1.bf16.msra.mxu0 0
  %9777 = vmatprep.subr.bf16.mxu0 0
  %9778 = vmatpush1.bf16.msra.mxu0 0
  %9779 = vmatprep.subr.bf16.mxu0 0
  %9780 = vmatpush1.bf16.msra.mxu0 0
  %9781 = vmatprep.subr.bf16.mxu0 0
  %9782 = vmatpush1.bf16.msra.mxu0 0
  %9783 = vmatprep.mubr.bf16.mxu0 0
  %9784 = vmatmul.mubr.bf16.gmra.mrb[0].mxu0 %v8502
  %v9785 = vpop.f32.mrb[0].mxu0
  %v9786 = vadd.f32 %v8449, %v9785
  %v9787 = vpop.f32.mrb[0].mxu0
  %v9788 = vadd.f32 %v8449, %v9787
  %v9789 = vpop.f32.mrb[0].mxu0
  %v9790 = vadd.f32 %v8454, %v9789
  %v9791 = vpop.f32.mrb[0].mxu0
  %v9792 = vadd.f32 %v8454, %v9791
  %9793 = vmatprep.mubr.bf16.mxu0 0
  %9794 = vmatmul.mubr.bf16.gmra.mrb[0].mxu0 %v8503
  %v9795 = vpop.f32.mrb[0].mxu0
  %v9796 = vadd.f32 %v8459, %v9795
  %v9797 = vpop.f32.mrb[0].mxu0
  %v9798 = vadd.f32 %v8459, %v9797
  %v9799 = vpop.f32.mrb[0].mxu0
  %v9800 = vadd.f32 %v8464, %v9799
  %v9801 = vpop.f32.mrb[0].mxu0
  %v9802 = vadd.f32 %v8464, %v9801
  %9803 = vmatprep.mubr.bf16.mxu0 0
  %9804 = vmatmul.mubr.bf16.gmra.mrb[0].mxu0 %v8504
  %v9805 = vpop.f32.mrb[0].mxu0
  %v9806 = vadd.f32 %v8469, %v9805
  %v9807 = vpop.f32.mrb[0].mxu0
  %v9808 = vadd.f32 %v8469, %v9807
  %v9809 = vpop.f32.mrb[0].mxu0
  %v9810 = vadd.f32 %v8474, %v9809
  %v9811 = vpop.f32.mrb[0].mxu0
  %v9812 = vadd.f32 %v8474, %v9811
  %9813 = vmatprep.mubr.bf16.mxu0 0
  %9814 = vmatmul.mubr.bf16.gmra.mrb[0].mxu0 %v8505
  %v9815 = vpop.f32.mrb[0].mxu0
  %v9816 = vadd.f32 %v8479, %v9815
  %v9817 = vpop.f32.mrb[0].mxu0
  %v9818 = vadd.f32 %v8479, %v9817
  %v9819 = vpop.f32.mrb[0].mxu0
  %v9820 = vadd.f32 %v8484, %v9819
  %v9821 = vpop.f32.mrb[0].mxu0
  %v9822 = vadd.f32 %v8484, %v9821
  %9823 = vdwg.mxu0
  %9824 = vmatprep.subr.bf16.mxu0 %v7963
  %9825 = vmatpush1.bf16.msra.mxu0 %v7962
  %9826 = vmatprep.subr.bf16.mxu0 %v8027
  %9827 = vmatpush1.bf16.msra.mxu0 %v8026
  %9828 = vmatprep.subr.bf16.mxu0 %v8091
  %9829 = vmatpush1.bf16.msra.mxu0 %v8090
  %9830 = vmatprep.subr.bf16.mxu0 %v8155
  %9831 = vmatpush1.bf16.msra.mxu0 %v8154
  %9832 = vmatprep.subr.bf16.mxu0 %v8219
  %9833 = vmatpush1.bf16.msra.mxu0 %v8218
  %9834 = vmatprep.subr.bf16.mxu0 %v8283
  %9835 = vmatpush1.bf16.msra.mxu0 %v8282
  %9836 = vmatprep.subr.bf16.mxu0 %v8347
  %9837 = vmatpush1.bf16.msra.mxu0 %v8346
  %9838 = vmatprep.subr.bf16.mxu0 %v8411
  %9839 = vmatpush1.bf16.msra.mxu0 %v8410
  %9840 = vmatprep.subr.bf16.mxu0 0
  %9841 = vmatpush1.bf16.msra.mxu0 0
  %9842 = vmatprep.subr.bf16.mxu0 0
  %9843 = vmatpush1.bf16.msra.mxu0 0
  %9844 = vmatprep.subr.bf16.mxu0 0
  %9845 = vmatpush1.bf16.msra.mxu0 0
  %9846 = vmatprep.subr.bf16.mxu0 0
  %9847 = vmatpush1.bf16.msra.mxu0 0
  %9848 = vmatprep.subr.bf16.mxu0 0
  %9849 = vmatpush1.bf16.msra.mxu0 0
  %9850 = vmatprep.subr.bf16.mxu0 0
  %9851 = vmatpush1.bf16.msra.mxu0 0
  %9852 = vmatprep.subr.bf16.mxu0 0
  %9853 = vmatpush1.bf16.msra.mxu0 0
  %9854 = vmatprep.subr.bf16.mxu0 0
  %9855 = vmatpush1.bf16.msra.mxu0 0
  %9856 = vmatprep.mubr.bf16.mxu0 0
  %9857 = vmatmul.mubr.bf16.gmra.mrb[0].mxu0 %v8502
  %v9858 = vpop.f32.mrb[0].mxu0
  %v9859 = vadd.f32 %v8449, %v9858
  %v9860 = vpop.f32.mrb[0].mxu0
  %v9861 = vadd.f32 %v8449, %v9860
  %v9862 = vpop.f32.mrb[0].mxu0
  %v9863 = vadd.f32 %v8454, %v9862
  %v9864 = vpop.f32.mrb[0].mxu0
  %v9865 = vadd.f32 %v8454, %v9864
  %9866 = vmatprep.mubr.bf16.mxu0 0
  %9867 = vmatmul.mubr.bf16.gmra.mrb[0].mxu0 %v8503
  %v9868 = vpop.f32.mrb[0].mxu0
  %v9869 = vadd.f32 %v8459, %v9868
  %v9870 = vpop.f32.mrb[0].mxu0
  %v9871 = vadd.f32 %v8459, %v9870
  %v9872 = vpop.f32.mrb[0].mxu0
  %v9873 = vadd.f32 %v8464, %v9872
  %v9874 = vpop.f32.mrb[0].mxu0
  %v9875 = vadd.f32 %v8464, %v9874
  %9876 = vmatprep.mubr.bf16.mxu0 0
  %9877 = vmatmul.mubr.bf16.gmra.mrb[0].mxu0 %v8504
  %v9878 = vpop.f32.mrb[0].mxu0
  %v9879 = vadd.f32 %v8469, %v9878
  %v9880 = vpop.f32.mrb[0].mxu0
  %v9881 = vadd.f32 %v8469, %v9880
  %v9882 = vpop.f32.mrb[0].mxu0
  %v9883 = vadd.f32 %v8474, %v9882
  %v9884 = vpop.f32.mrb[0].mxu0
  %v9885 = vadd.f32 %v8474, %v9884
  %9886 = vmatprep.mubr.bf16.mxu0 0
  %9887 = vmatmul.mubr.bf16.gmra.mrb[0].mxu0 %v8505
  %v9888 = vpop.f32.mrb[0].mxu0
  %v9889 = vadd.f32 %v8479, %v9888
  %v9890 = vpop.f32.mrb[0].mxu0
  %v9891 = vadd.f32 %v8479, %v9890
  %v9892 = vpop.f32.mrb[0].mxu0
  %v9893 = vadd.f32 %v8484, %v9892
  %v9894 = vpop.f32.mrb[0].mxu0
  %v9895 = vadd.f32 %v8484, %v9894
  %9896 = vdwg.mxu0
  %9897 = vmatprep.subr.bf16.mxu0 %v7965
  %9898 = vmatpush1.bf16.msra.mxu0 %v7964
  %9899 = vmatprep.subr.bf16.mxu0 %v8029
  %9900 = vmatpush1.bf16.msra.mxu0 %v8028
  %9901 = vmatprep.subr.bf16.mxu0 %v8093
  %9902 = vmatpush1.bf16.msra.mxu0 %v8092
  %9903 = vmatprep.subr.bf16.mxu0 %v8157
  %9904 = vmatpush1.bf16.msra.mxu0 %v8156
  %9905 = vmatprep.subr.bf16.mxu0 %v8221
  %9906 = vmatpush1.bf16.msra.mxu0 %v8220
  %9907 = vmatprep.subr.bf16.mxu0 %v8285
  %9908 = vmatpush1.bf16.msra.mxu0 %v8284
  %9909 = vmatprep.subr.bf16.mxu0 %v8349
  %9910 = vmatpush1.bf16.msra.mxu0 %v8348
  %9911 = vmatprep.subr.bf16.mxu0 %v8413
  %9912 = vmatpush1.bf16.msra.mxu0 %v8412
  %9913 = vmatprep.subr.bf16.mxu0 0
  %9914 = vmatpush1.bf16.msra.mxu0 0
  %9915 = vmatprep.subr.bf16.mxu0 0
  %9916 = vmatpush1.bf16.msra.mxu0 0
  %9917 = vmatprep.subr.bf16.mxu0 0
  %9918 = vmatpush1.bf16.msra.mxu0 0
  %9919 = vmatprep.subr.bf16.mxu0 0
  %9920 = vmatpush1.bf16.msra.mxu0 0
  %9921 = vmatprep.subr.bf16.mxu0 0
  %9922 = vmatpush1.bf16.msra.mxu0 0
  %9923 = vmatprep.subr.bf16.mxu0 0
  %9924 = vmatpush1.bf16.msra.mxu0 0
  %9925 = vmatprep.subr.bf16.mxu0 0
  %9926 = vmatpush1.bf16.msra.mxu0 0
  %9927 = vmatprep.subr.bf16.mxu0 0
  %9928 = vmatpush1.bf16.msra.mxu0 0
  %9929 = vmatprep.mubr.bf16.mxu0 0
  %9930 = vmatmul.mubr.bf16.gmra.mrb[0].mxu0 %v8502
  %v9931 = vpop.f32.mrb[0].mxu0
  %v9932 = vadd.f32 %v8449, %v9931
  %v9933 = vpop.f32.mrb[0].mxu0
  %v9934 = vadd.f32 %v8449, %v9933
  %v9935 = vpop.f32.mrb[0].mxu0
  %v9936 = vadd.f32 %v8454, %v9935
  %v9937 = vpop.f32.mrb[0].mxu0
  %v9938 = vadd.f32 %v8454, %v9937
  %9939 = vmatprep.mubr.bf16.mxu0 0
  %9940 = vmatmul.mubr.bf16.gmra.mrb[0].mxu0 %v8503
  %v9941 = vpop.f32.mrb[0].mxu0
  %v9942 = vadd.f32 %v8459, %v9941
  %v9943 = vpop.f32.mrb[0].mxu0
  %v9944 = vadd.f32 %v8459, %v9943
  %v9945 = vpop.f32.mrb[0].mxu0
  %v9946 = vadd.f32 %v8464, %v9945
  %v9947 = vpop.f32.mrb[0].mxu0
  %v9948 = vadd.f32 %v8464, %v9947
  %9949 = vmatprep.mubr.bf16.mxu0 0
  %9950 = vmatmul.mubr.bf16.gmra.mrb[0].mxu0 %v8504
  %v9951 = vpop.f32.mrb[0].mxu0
  %v9952 = vadd.f32 %v8469, %v9951
  %v9953 = vpop.f32.mrb[0].mxu0
  %v9954 = vadd.f32 %v8469, %v9953
  %v9955 = vpop.f32.mrb[0].mxu0
  %v9956 = vadd.f32 %v8474, %v9955
  %v9957 = vpop.f32.mrb[0].mxu0
  %v9958 = vadd.f32 %v8474, %v9957
  %9959 = vmatprep.mubr.bf16.mxu0 0
  %9960 = vmatmul.mubr.bf16.gmra.mrb[0].mxu0 %v8505
  %v9961 = vpop.f32.mrb[0].mxu0
  %v9962 = vadd.f32 %v8479, %v9961
  %v9963 = vpop.f32.mrb[0].mxu0
  %v9964 = vadd.f32 %v8479, %v9963
  %v9965 = vpop.f32.mrb[0].mxu0
  %v9966 = vadd.f32 %v8484, %v9965
  %v9967 = vpop.f32.mrb[0].mxu0
  %v9968 = vadd.f32 %v8484, %v9967
  %9969 = vdwg.mxu0
  %9970 = vmatprep.subr.bf16.mxu0 %v7967
  %9971 = vmatpush1.bf16.msra.mxu0 %v7966
  %9972 = vmatprep.subr.bf16.mxu0 %v8031
  %9973 = vmatpush1.bf16.msra.mxu0 %v8030
  %9974 = vmatprep.subr.bf16.mxu0 %v8095
  %9975 = vmatpush1.bf16.msra.mxu0 %v8094
  %9976 = vmatprep.subr.bf16.mxu0 %v8159
  %9977 = vmatpush1.bf16.msra.mxu0 %v8158
  %9978 = vmatprep.subr.bf16.mxu0 %v8223
  %9979 = vmatpush1.bf16.msra.mxu0 %v8222
  %9980 = vmatprep.subr.bf16.mxu0 %v8287
  %9981 = vmatpush1.bf16.msra.mxu0 %v8286
  %9982 = vmatprep.subr.bf16.mxu0 %v8351
  %9983 = vmatpush1.bf16.msra.mxu0 %v8350
  %9984 = vmatprep.subr.bf16.mxu0 %v8415
  %9985 = vmatpush1.bf16.msra.mxu0 %v8414
  %9986 = vmatprep.subr.bf16.mxu0 0
  %9987 = vmatpush1.bf16.msra.mxu0 0
  %9988 = vmatprep.subr.bf16.mxu0 0
  %9989 = vmatpush1.bf16.msra.mxu0 0
  %9990 = vmatprep.subr.bf16.mxu0 0
  %9991 = vmatpush1.bf16.msra.mxu0 0
  %9992 = vmatprep.subr.bf16.mxu0 0
  %9993 = vmatpush1.bf16.msra.mxu0 0
  %9994 = vmatprep.subr.bf16.mxu0 0
  %9995 = vmatpush1.bf16.msra.mxu0 0
  %9996 = vmatprep.subr.bf16.mxu0 0
  %9997 = vmatpush1.bf16.msra.mxu0 0
  %9998 = vmatprep.subr.bf16.mxu0 0
  %9999 = vmatpush1.bf16.msra.mxu0 0
  %10000 = vmatprep.subr.bf16.mxu0 0
  %10001 = vmatpush1.bf16.msra.mxu0 0
  %10002 = vmatprep.mubr.bf16.mxu0 0
  %10003 = vmatmul.mubr.bf16.gmra.mrb[0].mxu0 %v8502
  %v10004 = vpop.f32.mrb[0].mxu0
  %v10005 = vadd.f32 %v8449, %v10004
  %v10006 = vpop.f32.mrb[0].mxu0
  %v10007 = vadd.f32 %v8449, %v10006
  %v10008 = vpop.f32.mrb[0].mxu0
  %v10009 = vadd.f32 %v8454, %v10008
  %v10010 = vpop.f32.mrb[0].mxu0
  %v10011 = vadd.f32 %v8454, %v10010
  %10012 = vmatprep.mubr.bf16.mxu0 0
  %10013 = vmatmul.mubr.bf16.gmra.mrb[0].mxu0 %v8503
  %v10014 = vpop.f32.mrb[0].mxu0
  %v10015 = vadd.f32 %v8459, %v10014
  %v10016 = vpop.f32.mrb[0].mxu0
  %v10017 = vadd.f32 %v8459, %v10016
  %v10018 = vpop.f32.mrb[0].mxu0
  %v10019 = vadd.f32 %v8464, %v10018
  %v10020 = vpop.f32.mrb[0].mxu0
  %v10021 = vadd.f32 %v8464, %v10020
  %10022 = vmatprep.mubr.bf16.mxu0 0
  %10023 = vmatmul.mubr.bf16.gmra.mrb[0].mxu0 %v8504
  %v10024 = vpop.f32.mrb[0].mxu0
  %v10025 = vadd.f32 %v8469, %v10024
  %v10026 = vpop.f32.mrb[0].mxu0
  %v10027 = vadd.f32 %v8469, %v10026
  %v10028 = vpop.f32.mrb[0].mxu0
  %v10029 = vadd.f32 %v8474, %v10028
  %v10030 = vpop.f32.mrb[0].mxu0
  %v10031 = vadd.f32 %v8474, %v10030
  %10032 = vmatprep.mubr.bf16.mxu0 0
  %10033 = vmatmul.mubr.bf16.gmra.mrb[0].mxu0 %v8505
  %v10034 = vpop.f32.mrb[0].mxu0
  %v10035 = vadd.f32 %v8479, %v10034
  %v10036 = vpop.f32.mrb[0].mxu0
  %v10037 = vadd.f32 %v8479, %v10036
  %v10038 = vpop.f32.mrb[0].mxu0
  %v10039 = vadd.f32 %v8484, %v10038
  %v10040 = vpop.f32.mrb[0].mxu0
  %v10041 = vadd.f32 %v8484, %v10040
  %10042 = vdwg.mxu0
  %10043 = vmatprep.subr.bf16.mxu0 %v7969
  %10044 = vmatpush1.bf16.msra.mxu0 %v7968
  %10045 = vmatprep.subr.bf16.mxu0 %v8033
  %10046 = vmatpush1.bf16.msra.mxu0 %v8032
  %10047 = vmatprep.subr.bf16.mxu0 %v8097
  %10048 = vmatpush1.bf16.msra.mxu0 %v8096
  %10049 = vmatprep.subr.bf16.mxu0 %v8161
  %10050 = vmatpush1.bf16.msra.mxu0 %v8160
  %10051 = vmatprep.subr.bf16.mxu0 %v8225
  %10052 = vmatpush1.bf16.msra.mxu0 %v8224
  %10053 = vmatprep.subr.bf16.mxu0 %v8289
  %10054 = vmatpush1.bf16.msra.mxu0 %v8288
  %10055 = vmatprep.subr.bf16.mxu0 %v8353
  %10056 = vmatpush1.bf16.msra.mxu0 %v8352
  %10057 = vmatprep.subr.bf16.mxu0 %v8417
  %10058 = vmatpush1.bf16.msra.mxu0 %v8416
  %10059 = vmatprep.subr.bf16.mxu0 0
  %10060 = vmatpush1.bf16.msra.mxu0 0
  %10061 = vmatprep.subr.bf16.mxu0 0
  %10062 = vmatpush1.bf16.msra.mxu0 0
  %10063 = vmatprep.subr.bf16.mxu0 0
  %10064 = vmatpush1.bf16.msra.mxu0 0
  %10065 = vmatprep.subr.bf16.mxu0 0
  %10066 = vmatpush1.bf16.msra.mxu0 0
  %10067 = vmatprep.subr.bf16.mxu0 0
  %10068 = vmatpush1.bf16.msra.mxu0 0
  %10069 = vmatprep.subr.bf16.mxu0 0
  %10070 = vmatpush1.bf16.msra.mxu0 0
  %10071 = vmatprep.subr.bf16.mxu0 0
  %10072 = vmatpush1.bf16.msra.mxu0 0
  %10073 = vmatprep.subr.bf16.mxu0 0
  %10074 = vmatpush1.bf16.msra.mxu0 0
  %10075 = vmatprep.mubr.bf16.mxu0 0
  %10076 = vmatmul.mubr.bf16.gmra.mrb[0].mxu0 %v8502
  %v10077 = vpop.f32.mrb[0].mxu0
  %v10078 = vadd.f32 %v8449, %v10077
  %v10079 = vpop.f32.mrb[0].mxu0
  %v10080 = vadd.f32 %v8449, %v10079
  %v10081 = vpop.f32.mrb[0].mxu0
  %v10082 = vadd.f32 %v8454, %v10081
  %v10083 = vpop.f32.mrb[0].mxu0
  %v10084 = vadd.f32 %v8454, %v10083
  %10085 = vmatprep.mubr.bf16.mxu0 0
  %10086 = vmatmul.mubr.bf16.gmra.mrb[0].mxu0 %v8503
  %v10087 = vpop.f32.mrb[0].mxu0
  %v10088 = vadd.f32 %v8459, %v10087
  %v10089 = vpop.f32.mrb[0].mxu0
  %v10090 = vadd.f32 %v8459, %v10089
  %v10091 = vpop.f32.mrb[0].mxu0
  %v10092 = vadd.f32 %v8464, %v10091
  %v10093 = vpop.f32.mrb[0].mxu0
  %v10094 = vadd.f32 %v8464, %v10093
  %10095 = vmatprep.mubr.bf16.mxu0 0
  %10096 = vmatmul.mubr.bf16.gmra.mrb[0].mxu0 %v8504
  %v10097 = vpop.f32.mrb[0].mxu0
  %v10098 = vadd.f32 %v8469, %v10097
  %v10099 = vpop.f32.mrb[0].mxu0
  %v10100 = vadd.f32 %v8469, %v10099
  %v10101 = vpop.f32.mrb[0].mxu0
  %v10102 = vadd.f32 %v8474, %v10101
  %v10103 = vpop.f32.mrb[0].mxu0
  %v10104 = vadd.f32 %v8474, %v10103
  %10105 = vmatprep.mubr.bf16.mxu0 0
  %10106 = vmatmul.mubr.bf16.gmra.mrb[0].mxu0 %v8505
  %v10107 = vpop.f32.mrb[0].mxu0
  %v10108 = vadd.f32 %v8479, %v10107
  %v10109 = vpop.f32.mrb[0].mxu0
  %v10110 = vadd.f32 %v8479, %v10109
  %v10111 = vpop.f32.mrb[0].mxu0
  %v10112 = vadd.f32 %v8484, %v10111
  %v10113 = vpop.f32.mrb[0].mxu0
  %v10114 = vadd.f32 %v8484, %v10113
  %10115 = vdwg.mxu0
  %10116 = vmatprep.subr.bf16.mxu0 %v7971
  %10117 = vmatpush1.bf16.msra.mxu0 %v7970
  %10118 = vmatprep.subr.bf16.mxu0 %v8035
  %10119 = vmatpush1.bf16.msra.mxu0 %v8034
  %10120 = vmatprep.subr.bf16.mxu0 %v8099
  %10121 = vmatpush1.bf16.msra.mxu0 %v8098
  %10122 = vmatprep.subr.bf16.mxu0 %v8163
  %10123 = vmatpush1.bf16.msra.mxu0 %v8162
  %10124 = vmatprep.subr.bf16.mxu0 %v8227
  %10125 = vmatpush1.bf16.msra.mxu0 %v8226
  %10126 = vmatprep.subr.bf16.mxu0 %v8291
  %10127 = vmatpush1.bf16.msra.mxu0 %v8290
  %10128 = vmatprep.subr.bf16.mxu0 %v8355
  %10129 = vmatpush1.bf16.msra.mxu0 %v8354
  %10130 = vmatprep.subr.bf16.mxu0 %v8419
  %10131 = vmatpush1.bf16.msra.mxu0 %v8418
  %10132 = vmatprep.subr.bf16.mxu0 0
  %10133 = vmatpush1.bf16.msra.mxu0 0
  %10134 = vmatprep.subr.bf16.mxu0 0
  %10135 = vmatpush1.bf16.msra.mxu0 0
  %10136 = vmatprep.subr.bf16.mxu0 0
  %10137 = vmatpush1.bf16.msra.mxu0 0
  %10138 = vmatprep.subr.bf16.mxu0 0
  %10139 = vmatpush1.bf16.msra.mxu0 0
  %10140 = vmatprep.subr.bf16.mxu0 0
  %10141 = vmatpush1.bf16.msra.mxu0 0
  %10142 = vmatprep.subr.bf16.mxu0 0
  %10143 = vmatpush1.bf16.msra.mxu0 0
  %10144 = vmatprep.subr.bf16.mxu0 0
  %10145 = vmatpush1.bf16.msra.mxu0 0
  %10146 = vmatprep.subr.bf16.mxu0 0
  %10147 = vmatpush1.bf16.msra.mxu0 0
  %10148 = vmatprep.mubr.bf16.mxu0 0
  %10149 = vmatmul.mubr.bf16.gmra.mrb[0].mxu0 %v8502
  %v10150 = vpop.f32.mrb[0].mxu0
  %v10151 = vadd.f32 %v8449, %v10150
  %v10152 = vpop.f32.mrb[0].mxu0
  %v10153 = vadd.f32 %v8449, %v10152
  %v10154 = vpop.f32.mrb[0].mxu0
  %v10155 = vadd.f32 %v8454, %v10154
  %v10156 = vpop.f32.mrb[0].mxu0
  %v10157 = vadd.f32 %v8454, %v10156
  %10158 = vmatprep.mubr.bf16.mxu0 0
  %10159 = vmatmul.mubr.bf16.gmra.mrb[0].mxu0 %v8503
  %v10160 = vpop.f32.mrb[0].mxu0
  %v10161 = vadd.f32 %v8459, %v10160
  %v10162 = vpop.f32.mrb[0].mxu0
  %v10163 = vadd.f32 %v8459, %v10162
  %v10164 = vpop.f32.mrb[0].mxu0
  %v10165 = vadd.f32 %v8464, %v10164
  %v10166 = vpop.f32.mrb[0].mxu0
  %v10167 = vadd.f32 %v8464, %v10166
  %10168 = vmatprep.mubr.bf16.mxu0 0
  %10169 = vmatmul.mubr.bf16.gmra.mrb[0].mxu0 %v8504
  %v10170 = vpop.f32.mrb[0].mxu0
  %v10171 = vadd.f32 %v8469, %v10170
  %v10172 = vpop.f32.mrb[0].mxu0
  %v10173 = vadd.f32 %v8469, %v10172
  %v10174 = vpop.f32.mrb[0].mxu0
  %v10175 = vadd.f32 %v8474, %v10174
  %v10176 = vpop.f32.mrb[0].mxu0
  %v10177 = vadd.f32 %v8474, %v10176
  %10178 = vmatprep.mubr.bf16.mxu0 0
  %10179 = vmatmul.mubr.bf16.gmra.mrb[0].mxu0 %v8505
  %v10180 = vpop.f32.mrb[0].mxu0
  %v10181 = vadd.f32 %v8479, %v10180
  %v10182 = vpop.f32.mrb[0].mxu0
  %v10183 = vadd.f32 %v8479, %v10182
  %v10184 = vpop.f32.mrb[0].mxu0
  %v10185 = vadd.f32 %v8484, %v10184
  %v10186 = vpop.f32.mrb[0].mxu0
  %v10187 = vadd.f32 %v8484, %v10186
  %10188 = vdwg.mxu0
  %10189 = vmatprep.subr.bf16.mxu0 %v7973
  %10190 = vmatpush1.bf16.msra.mxu0 %v7972
  %10191 = vmatprep.subr.bf16.mxu0 %v8037
  %10192 = vmatpush1.bf16.msra.mxu0 %v8036
  %10193 = vmatprep.subr.bf16.mxu0 %v8101
  %10194 = vmatpush1.bf16.msra.mxu0 %v8100
  %10195 = vmatprep.subr.bf16.mxu0 %v8165
  %10196 = vmatpush1.bf16.msra.mxu0 %v8164
  %10197 = vmatprep.subr.bf16.mxu0 %v8229
  %10198 = vmatpush1.bf16.msra.mxu0 %v8228
  %10199 = vmatprep.subr.bf16.mxu0 %v8293
  %10200 = vmatpush1.bf16.msra.mxu0 %v8292
  %10201 = vmatprep.subr.bf16.mxu0 %v8357
  %10202 = vmatpush1.bf16.msra.mxu0 %v8356
  %10203 = vmatprep.subr.bf16.mxu0 %v8421
  %10204 = vmatpush1.bf16.msra.mxu0 %v8420
  %10205 = vmatprep.subr.bf16.mxu0 0
  %10206 = vmatpush1.bf16.msra.mxu0 0
  %10207 = vmatprep.subr.bf16.mxu0 0
  %10208 = vmatpush1.bf16.msra.mxu0 0
  %10209 = vmatprep.subr.bf16.mxu0 0
  %10210 = vmatpush1.bf16.msra.mxu0 0
  %10211 = vmatprep.subr.bf16.mxu0 0
  %10212 = vmatpush1.bf16.msra.mxu0 0
  %10213 = vmatprep.subr.bf16.mxu0 0
  %10214 = vmatpush1.bf16.msra.mxu0 0
  %10215 = vmatprep.subr.bf16.mxu0 0
  %10216 = vmatpush1.bf16.msra.mxu0 0
  %10217 = vmatprep.subr.bf16.mxu0 0
  %10218 = vmatpush1.bf16.msra.mxu0 0
  %10219 = vmatprep.subr.bf16.mxu0 0
  %10220 = vmatpush1.bf16.msra.mxu0 0
  %10221 = vmatprep.mubr.bf16.mxu0 0
  %10222 = vmatmul.mubr.bf16.gmra.mrb[0].mxu0 %v8502
  %v10223 = vpop.f32.mrb[0].mxu0
  %v10224 = vadd.f32 %v8449, %v10223
  %v10225 = vpop.f32.mrb[0].mxu0
  %v10226 = vadd.f32 %v8449, %v10225
  %v10227 = vpop.f32.mrb[0].mxu0
  %v10228 = vadd.f32 %v8454, %v10227
  %v10229 = vpop.f32.mrb[0].mxu0
  %v10230 = vadd.f32 %v8454, %v10229
  %10231 = vmatprep.mubr.bf16.mxu0 0
  %10232 = vmatmul.mubr.bf16.gmra.mrb[0].mxu0 %v8503
  %v10233 = vpop.f32.mrb[0].mxu0
  %v10234 = vadd.f32 %v8459, %v10233
  %v10235 = vpop.f32.mrb[0].mxu0
  %v10236 = vadd.f32 %v8459, %v10235
  %v10237 = vpop.f32.mrb[0].mxu0
  %v10238 = vadd.f32 %v8464, %v10237
  %v10239 = vpop.f32.mrb[0].mxu0
  %v10240 = vadd.f32 %v8464, %v10239
  %10241 = vmatprep.mubr.bf16.mxu0 0
  %10242 = vmatmul.mubr.bf16.gmra.mrb[0].mxu0 %v8504
  %v10243 = vpop.f32.mrb[0].mxu0
  %v10244 = vadd.f32 %v8469, %v10243
  %v10245 = vpop.f32.mrb[0].mxu0
  %v10246 = vadd.f32 %v8469, %v10245
  %v10247 = vpop.f32.mrb[0].mxu0
  %v10248 = vadd.f32 %v8474, %v10247
  %v10249 = vpop.f32.mrb[0].mxu0
  %v10250 = vadd.f32 %v8474, %v10249
  %10251 = vmatprep.mubr.bf16.mxu0 0
  %10252 = vmatmul.mubr.bf16.gmra.mrb[0].mxu0 %v8505
  %v10253 = vpop.f32.mrb[0].mxu0
  %v10254 = vadd.f32 %v8479, %v10253
  %v10255 = vpop.f32.mrb[0].mxu0
  %v10256 = vadd.f32 %v8479, %v10255
  %v10257 = vpop.f32.mrb[0].mxu0
  %v10258 = vadd.f32 %v8484, %v10257
  %v10259 = vpop.f32.mrb[0].mxu0
  %v10260 = vadd.f32 %v8484, %v10259
  %10261 = vdwg.mxu0
  %10262 = vmatprep.subr.bf16.mxu0 %v7975
  %10263 = vmatpush1.bf16.msra.mxu0 %v7974
  %10264 = vmatprep.subr.bf16.mxu0 %v8039
  %10265 = vmatpush1.bf16.msra.mxu0 %v8038
  %10266 = vmatprep.subr.bf16.mxu0 %v8103
  %10267 = vmatpush1.bf16.msra.mxu0 %v8102
  %10268 = vmatprep.subr.bf16.mxu0 %v8167
  %10269 = vmatpush1.bf16.msra.mxu0 %v8166
  %10270 = vmatprep.subr.bf16.mxu0 %v8231
  %10271 = vmatpush1.bf16.msra.mxu0 %v8230
  %10272 = vmatprep.subr.bf16.mxu0 %v8295
  %10273 = vmatpush1.bf16.msra.mxu0 %v8294
  %10274 = vmatprep.subr.bf16.mxu0 %v8359
  %10275 = vmatpush1.bf16.msra.mxu0 %v8358
  %10276 = vmatprep.subr.bf16.mxu0 %v8423
  %10277 = vmatpush1.bf16.msra.mxu0 %v8422
  %10278 = vmatprep.subr.bf16.mxu0 0
  %10279 = vmatpush1.bf16.msra.mxu0 0
  %10280 = vmatprep.subr.bf16.mxu0 0
  %10281 = vmatpush1.bf16.msra.mxu0 0
  %10282 = vmatprep.subr.bf16.mxu0 0
  %10283 = vmatpush1.bf16.msra.mxu0 0
  %10284 = vmatprep.subr.bf16.mxu0 0
  %10285 = vmatpush1.bf16.msra.mxu0 0
  %10286 = vmatprep.subr.bf16.mxu0 0
  %10287 = vmatpush1.bf16.msra.mxu0 0
  %10288 = vmatprep.subr.bf16.mxu0 0
  %10289 = vmatpush1.bf16.msra.mxu0 0
  %10290 = vmatprep.subr.bf16.mxu0 0
  %10291 = vmatpush1.bf16.msra.mxu0 0
  %10292 = vmatprep.subr.bf16.mxu0 0
  %10293 = vmatpush1.bf16.msra.mxu0 0
  %10294 = vmatprep.mubr.bf16.mxu0 0
  %10295 = vmatmul.mubr.bf16.gmra.mrb[0].mxu0 %v8502
  %v10296 = vpop.f32.mrb[0].mxu0
  %v10297 = vadd.f32 %v8449, %v10296
  %v10298 = vpop.f32.mrb[0].mxu0
  %v10299 = vadd.f32 %v8449, %v10298
  %v10300 = vpop.f32.mrb[0].mxu0
  %v10301 = vadd.f32 %v8454, %v10300
  %v10302 = vpop.f32.mrb[0].mxu0
  %v10303 = vadd.f32 %v8454, %v10302
  %10304 = vmatprep.mubr.bf16.mxu0 0
  %10305 = vmatmul.mubr.bf16.gmra.mrb[0].mxu0 %v8503
  %v10306 = vpop.f32.mrb[0].mxu0
  %v10307 = vadd.f32 %v8459, %v10306
  %v10308 = vpop.f32.mrb[0].mxu0
  %v10309 = vadd.f32 %v8459, %v10308
  %v10310 = vpop.f32.mrb[0].mxu0
  %v10311 = vadd.f32 %v8464, %v10310
  %v10312 = vpop.f32.mrb[0].mxu0
  %v10313 = vadd.f32 %v8464, %v10312
  %10314 = vmatprep.mubr.bf16.mxu0 0
  %10315 = vmatmul.mubr.bf16.gmra.mrb[0].mxu0 %v8504
  %v10316 = vpop.f32.mrb[0].mxu0
  %v10317 = vadd.f32 %v8469, %v10316
  %v10318 = vpop.f32.mrb[0].mxu0
  %v10319 = vadd.f32 %v8469, %v10318
  %v10320 = vpop.f32.mrb[0].mxu0
  %v10321 = vadd.f32 %v8474, %v10320
  %v10322 = vpop.f32.mrb[0].mxu0
  %v10323 = vadd.f32 %v8474, %v10322
  %10324 = vmatprep.mubr.bf16.mxu0 0
  %10325 = vmatmul.mubr.bf16.gmra.mrb[0].mxu0 %v8505
  %v10326 = vpop.f32.mrb[0].mxu0
  %v10327 = vadd.f32 %v8479, %v10326
  %v10328 = vpop.f32.mrb[0].mxu0
  %v10329 = vadd.f32 %v8479, %v10328
  %v10330 = vpop.f32.mrb[0].mxu0
  %v10331 = vadd.f32 %v8484, %v10330
  %v10332 = vpop.f32.mrb[0].mxu0
  %v10333 = vadd.f32 %v8484, %v10332
  %10334 = vdwg.mxu0
  %10335 = vmatprep.subr.bf16.mxu0 %v7977
  %10336 = vmatpush1.bf16.msra.mxu0 %v7976
  %10337 = vmatprep.subr.bf16.mxu0 %v8041
  %10338 = vmatpush1.bf16.msra.mxu0 %v8040
  %10339 = vmatprep.subr.bf16.mxu0 %v8105
  %10340 = vmatpush1.bf16.msra.mxu0 %v8104
  %10341 = vmatprep.subr.bf16.mxu0 %v8169
  %10342 = vmatpush1.bf16.msra.mxu0 %v8168
  %10343 = vmatprep.subr.bf16.mxu0 %v8233
  %10344 = vmatpush1.bf16.msra.mxu0 %v8232
  %10345 = vmatprep.subr.bf16.mxu0 %v8297
  %10346 = vmatpush1.bf16.msra.mxu0 %v8296
  %10347 = vmatprep.subr.bf16.mxu0 %v8361
  %10348 = vmatpush1.bf16.msra.mxu0 %v8360
  %10349 = vmatprep.subr.bf16.mxu0 %v8425
  %10350 = vmatpush1.bf16.msra.mxu0 %v8424
  %10351 = vmatprep.subr.bf16.mxu0 0
  %10352 = vmatpush1.bf16.msra.mxu0 0
  %10353 = vmatprep.subr.bf16.mxu0 0
  %10354 = vmatpush1.bf16.msra.mxu0 0
  %10355 = vmatprep.subr.bf16.mxu0 0
  %10356 = vmatpush1.bf16.msra.mxu0 0
  %10357 = vmatprep.subr.bf16.mxu0 0
  %10358 = vmatpush1.bf16.msra.mxu0 0
  %10359 = vmatprep.subr.bf16.mxu0 0
  %10360 = vmatpush1.bf16.msra.mxu0 0
  %10361 = vmatprep.subr.bf16.mxu0 0
  %10362 = vmatpush1.bf16.msra.mxu0 0
  %10363 = vmatprep.subr.bf16.mxu0 0
  %10364 = vmatpush1.bf16.msra.mxu0 0
  %10365 = vmatprep.subr.bf16.mxu0 0
  %10366 = vmatpush1.bf16.msra.mxu0 0
  %10367 = vmatprep.mubr.bf16.mxu0 0
  %10368 = vmatmul.mubr.bf16.gmra.mrb[0].mxu0 %v8502
  %v10369 = vpop.f32.mrb[0].mxu0
  %v10370 = vadd.f32 %v8449, %v10369
  %v10371 = vpop.f32.mrb[0].mxu0
  %v10372 = vadd.f32 %v8449, %v10371
  %v10373 = vpop.f32.mrb[0].mxu0
  %v10374 = vadd.f32 %v8454, %v10373
  %v10375 = vpop.f32.mrb[0].mxu0
  %v10376 = vadd.f32 %v8454, %v10375
  %10377 = vmatprep.mubr.bf16.mxu0 0
  %10378 = vmatmul.mubr.bf16.gmra.mrb[0].mxu0 %v8503
  %v10379 = vpop.f32.mrb[0].mxu0
  %v10380 = vadd.f32 %v8459, %v10379
  %v10381 = vpop.f32.mrb[0].mxu0
  %v10382 = vadd.f32 %v8459, %v10381
  %v10383 = vpop.f32.mrb[0].mxu0
  %v10384 = vadd.f32 %v8464, %v10383
  %v10385 = vpop.f32.mrb[0].mxu0
  %v10386 = vadd.f32 %v8464, %v10385
  %10387 = vmatprep.mubr.bf16.mxu0 0
  %10388 = vmatmul.mubr.bf16.gmra.mrb[0].mxu0 %v8504
  %v10389 = vpop.f32.mrb[0].mxu0
  %v10390 = vadd.f32 %v8469, %v10389
  %v10391 = vpop.f32.mrb[0].mxu0
  %v10392 = vadd.f32 %v8469, %v10391
  %v10393 = vpop.f32.mrb[0].mxu0
  %v10394 = vadd.f32 %v8474, %v10393
  %v10395 = vpop.f32.mrb[0].mxu0
  %v10396 = vadd.f32 %v8474, %v10395
  %10397 = vmatprep.mubr.bf16.mxu0 0
  %10398 = vmatmul.mubr.bf16.gmra.mrb[0].mxu0 %v8505
  %v10399 = vpop.f32.mrb[0].mxu0
  %v10400 = vadd.f32 %v8479, %v10399
  %v10401 = vpop.f32.mrb[0].mxu0
  %v10402 = vadd.f32 %v8479, %v10401
  %v10403 = vpop.f32.mrb[0].mxu0
  %v10404 = vadd.f32 %v8484, %v10403
  %v10405 = vpop.f32.mrb[0].mxu0
  %v10406 = vadd.f32 %v8484, %v10405
  %10407 = vdwg.mxu0
  %10408 = vmatprep.subr.bf16.mxu0 %v7979
  %10409 = vmatpush1.bf16.msra.mxu0 %v7978
  %10410 = vmatprep.subr.bf16.mxu0 %v8043
  %10411 = vmatpush1.bf16.msra.mxu0 %v8042
  %10412 = vmatprep.subr.bf16.mxu0 %v8107
  %10413 = vmatpush1.bf16.msra.mxu0 %v8106
  %10414 = vmatprep.subr.bf16.mxu0 %v8171
  %10415 = vmatpush1.bf16.msra.mxu0 %v8170
  %10416 = vmatprep.subr.bf16.mxu0 %v8235
  %10417 = vmatpush1.bf16.msra.mxu0 %v8234
  %10418 = vmatprep.subr.bf16.mxu0 %v8299
  %10419 = vmatpush1.bf16.msra.mxu0 %v8298
  %10420 = vmatprep.subr.bf16.mxu0 %v8363
  %10421 = vmatpush1.bf16.msra.mxu0 %v8362
  %10422 = vmatprep.subr.bf16.mxu0 %v8427
  %10423 = vmatpush1.bf16.msra.mxu0 %v8426
  %10424 = vmatprep.subr.bf16.mxu0 0
  %10425 = vmatpush1.bf16.msra.mxu0 0
  %10426 = vmatprep.subr.bf16.mxu0 0
  %10427 = vmatpush1.bf16.msra.mxu0 0
  %10428 = vmatprep.subr.bf16.mxu0 0
  %10429 = vmatpush1.bf16.msra.mxu0 0
  %10430 = vmatprep.subr.bf16.mxu0 0
  %10431 = vmatpush1.bf16.msra.mxu0 0
  %10432 = vmatprep.subr.bf16.mxu0 0
  %10433 = vmatpush1.bf16.msra.mxu0 0
  %10434 = vmatprep.subr.bf16.mxu0 0
  %10435 = vmatpush1.bf16.msra.mxu0 0
  %10436 = vmatprep.subr.bf16.mxu0 0
  %10437 = vmatpush1.bf16.msra.mxu0 0
  %10438 = vmatprep.subr.bf16.mxu0 0
  %10439 = vmatpush1.bf16.msra.mxu0 0
  %10440 = vmatprep.mubr.bf16.mxu0 0
  %10441 = vmatmul.mubr.bf16.gmra.mrb[0].mxu0 %v8502
  %v10442 = vpop.f32.mrb[0].mxu0
  %v10443 = vadd.f32 %v8449, %v10442
  %v10444 = vpop.f32.mrb[0].mxu0
  %v10445 = vadd.f32 %v8449, %v10444
  %v10446 = vpop.f32.mrb[0].mxu0
  %v10447 = vadd.f32 %v8454, %v10446
  %v10448 = vpop.f32.mrb[0].mxu0
  %v10449 = vadd.f32 %v8454, %v10448
  %10450 = vmatprep.mubr.bf16.mxu0 0
  %10451 = vmatmul.mubr.bf16.gmra.mrb[0].mxu0 %v8503
  %v10452 = vpop.f32.mrb[0].mxu0
  %v10453 = vadd.f32 %v8459, %v10452
  %v10454 = vpop.f32.mrb[0].mxu0
  %v10455 = vadd.f32 %v8459, %v10454
  %v10456 = vpop.f32.mrb[0].mxu0
  %v10457 = vadd.f32 %v8464, %v10456
  %v10458 = vpop.f32.mrb[0].mxu0
  %v10459 = vadd.f32 %v8464, %v10458
  %10460 = vmatprep.mubr.bf16.mxu0 0
  %10461 = vmatmul.mubr.bf16.gmra.mrb[0].mxu0 %v8504
  %v10462 = vpop.f32.mrb[0].mxu0
  %v10463 = vadd.f32 %v8469, %v10462
  %v10464 = vpop.f32.mrb[0].mxu0
  %v10465 = vadd.f32 %v8469, %v10464
  %v10466 = vpop.f32.mrb[0].mxu0
  %v10467 = vadd.f32 %v8474, %v10466
  %v10468 = vpop.f32.mrb[0].mxu0
  %v10469 = vadd.f32 %v8474, %v10468
  %10470 = vmatprep.mubr.bf16.mxu0 0
  %10471 = vmatmul.mubr.bf16.gmra.mrb[0].mxu0 %v8505
  %v10472 = vpop.f32.mrb[0].mxu0
  %v10473 = vadd.f32 %v8479, %v10472
  %v10474 = vpop.f32.mrb[0].mxu0
  %v10475 = vadd.f32 %v8479, %v10474
  %v10476 = vpop.f32.mrb[0].mxu0
  %v10477 = vadd.f32 %v8484, %v10476
  %v10478 = vpop.f32.mrb[0].mxu0
  %v10479 = vadd.f32 %v8484, %v10478
  %10480 = vdwg.mxu0
  %10481 = vmatprep.subr.bf16.mxu0 %v7981
  %10482 = vmatpush1.bf16.msra.mxu0 %v7980
  %10483 = vmatprep.subr.bf16.mxu0 %v8045
  %10484 = vmatpush1.bf16.msra.mxu0 %v8044
  %10485 = vmatprep.subr.bf16.mxu0 %v8109
  %10486 = vmatpush1.bf16.msra.mxu0 %v8108
  %10487 = vmatprep.subr.bf16.mxu0 %v8173
  %10488 = vmatpush1.bf16.msra.mxu0 %v8172
  %10489 = vmatprep.subr.bf16.mxu0 %v8237
  %10490 = vmatpush1.bf16.msra.mxu0 %v8236
  %10491 = vmatprep.subr.bf16.mxu0 %v8301
  %10492 = vmatpush1.bf16.msra.mxu0 %v8300
  %10493 = vmatprep.subr.bf16.mxu0 %v8365
  %10494 = vmatpush1.bf16.msra.mxu0 %v8364
  %10495 = vmatprep.subr.bf16.mxu0 %v8429
  %10496 = vmatpush1.bf16.msra.mxu0 %v8428
  %10497 = vmatprep.subr.bf16.mxu0 0
  %10498 = vmatpush1.bf16.msra.mxu0 0
  %10499 = vmatprep.subr.bf16.mxu0 0
  %10500 = vmatpush1.bf16.msra.mxu0 0
  %10501 = vmatprep.subr.bf16.mxu0 0
  %10502 = vmatpush1.bf16.msra.mxu0 0
  %10503 = vmatprep.subr.bf16.mxu0 0
  %10504 = vmatpush1.bf16.msra.mxu0 0
  %10505 = vmatprep.subr.bf16.mxu0 0
  %10506 = vmatpush1.bf16.msra.mxu0 0
  %10507 = vmatprep.subr.bf16.mxu0 0
  %10508 = vmatpush1.bf16.msra.mxu0 0
  %10509 = vmatprep.subr.bf16.mxu0 0
  %10510 = vmatpush1.bf16.msra.mxu0 0
  %10511 = vmatprep.subr.bf16.mxu0 0
  %10512 = vmatpush1.bf16.msra.mxu0 0
  %10513 = vmatprep.mubr.bf16.mxu0 0
  %10514 = vmatmul.mubr.bf16.gmra.mrb[0].mxu0 %v8502
  %v10515 = vpop.f32.mrb[0].mxu0
  %v10516 = vadd.f32 %v8449, %v10515
  %v10517 = vpop.f32.mrb[0].mxu0
  %v10518 = vadd.f32 %v8449, %v10517
  %v10519 = vpop.f32.mrb[0].mxu0
  %v10520 = vadd.f32 %v8454, %v10519
  %v10521 = vpop.f32.mrb[0].mxu0
  %v10522 = vadd.f32 %v8454, %v10521
  %10523 = vmatprep.mubr.bf16.mxu0 0
  %10524 = vmatmul.mubr.bf16.gmra.mrb[0].mxu0 %v8503
  %v10525 = vpop.f32.mrb[0].mxu0
  %v10526 = vadd.f32 %v8459, %v10525
  %v10527 = vpop.f32.mrb[0].mxu0
  %v10528 = vadd.f32 %v8459, %v10527
  %v10529 = vpop.f32.mrb[0].mxu0
  %v10530 = vadd.f32 %v8464, %v10529
  %v10531 = vpop.f32.mrb[0].mxu0
  %v10532 = vadd.f32 %v8464, %v10531
  %10533 = vmatprep.mubr.bf16.mxu0 0
  %10534 = vmatmul.mubr.bf16.gmra.mrb[0].mxu0 %v8504
  %v10535 = vpop.f32.mrb[0].mxu0
  %v10536 = vadd.f32 %v8469, %v10535
  %v10537 = vpop.f32.mrb[0].mxu0
  %v10538 = vadd.f32 %v8469, %v10537
  %v10539 = vpop.f32.mrb[0].mxu0
  %v10540 = vadd.f32 %v8474, %v10539
  %v10541 = vpop.f32.mrb[0].mxu0
  %v10542 = vadd.f32 %v8474, %v10541
  %10543 = vmatprep.mubr.bf16.mxu0 0
  %10544 = vmatmul.mubr.bf16.gmra.mrb[0].mxu0 %v8505
  %v10545 = vpop.f32.mrb[0].mxu0
  %v10546 = vadd.f32 %v8479, %v10545
  %v10547 = vpop.f32.mrb[0].mxu0
  %v10548 = vadd.f32 %v8479, %v10547
  %v10549 = vpop.f32.mrb[0].mxu0
  %v10550 = vadd.f32 %v8484, %v10549
  %v10551 = vpop.f32.mrb[0].mxu0
  %v10552 = vadd.f32 %v8484, %v10551
  %10553 = vdwg.mxu0
  %10554 = vmatprep.subr.bf16.mxu0 %v7983
  %10555 = vmatpush1.bf16.msra.mxu0 %v7982
  %10556 = vmatprep.subr.bf16.mxu0 %v8047
  %10557 = vmatpush1.bf16.msra.mxu0 %v8046
  %10558 = vmatprep.subr.bf16.mxu0 %v8111
  %10559 = vmatpush1.bf16.msra.mxu0 %v8110
  %10560 = vmatprep.subr.bf16.mxu0 %v8175
  %10561 = vmatpush1.bf16.msra.mxu0 %v8174
  %10562 = vmatprep.subr.bf16.mxu0 %v8239
  %10563 = vmatpush1.bf16.msra.mxu0 %v8238
  %10564 = vmatprep.subr.bf16.mxu0 %v8303
  %10565 = vmatpush1.bf16.msra.mxu0 %v8302
  %10566 = vmatprep.subr.bf16.mxu0 %v8367
  %10567 = vmatpush1.bf16.msra.mxu0 %v8366
  %10568 = vmatprep.subr.bf16.mxu0 %v8431
  %10569 = vmatpush1.bf16.msra.mxu0 %v8430
  %10570 = vmatprep.subr.bf16.mxu0 0
  %10571 = vmatpush1.bf16.msra.mxu0 0
  %10572 = vmatprep.subr.bf16.mxu0 0
  %10573 = vmatpush1.bf16.msra.mxu0 0
  %10574 = vmatprep.subr.bf16.mxu0 0
  %10575 = vmatpush1.bf16.msra.mxu0 0
  %10576 = vmatprep.subr.bf16.mxu0 0
  %10577 = vmatpush1.bf16.msra.mxu0 0
  %10578 = vmatprep.subr.bf16.mxu0 0
  %10579 = vmatpush1.bf16.msra.mxu0 0
  %10580 = vmatprep.subr.bf16.mxu0 0
  %10581 = vmatpush1.bf16.msra.mxu0 0
  %10582 = vmatprep.subr.bf16.mxu0 0
  %10583 = vmatpush1.bf16.msra.mxu0 0
  %10584 = vmatprep.subr.bf16.mxu0 0
  %10585 = vmatpush1.bf16.msra.mxu0 0
  %10586 = vmatprep.mubr.bf16.mxu0 0
  %10587 = vmatmul.mubr.bf16.gmra.mrb[0].mxu0 %v8502
  %v10588 = vpop.f32.mrb[0].mxu0
  %v10589 = vadd.f32 %v8449, %v10588
  %v10590 = vpop.f32.mrb[0].mxu0
  %v10591 = vadd.f32 %v8449, %v10590
  %v10592 = vpop.f32.mrb[0].mxu0
  %v10593 = vadd.f32 %v8454, %v10592
  %v10594 = vpop.f32.mrb[0].mxu0
  %v10595 = vadd.f32 %v8454, %v10594
  %10596 = vmatprep.mubr.bf16.mxu0 0
  %10597 = vmatmul.mubr.bf16.gmra.mrb[0].mxu0 %v8503
  %v10598 = vpop.f32.mrb[0].mxu0
  %v10599 = vadd.f32 %v8459, %v10598
  %v10600 = vpop.f32.mrb[0].mxu0
  %v10601 = vadd.f32 %v8459, %v10600
  %v10602 = vpop.f32.mrb[0].mxu0
  %v10603 = vadd.f32 %v8464, %v10602
  %v10604 = vpop.f32.mrb[0].mxu0
  %v10605 = vadd.f32 %v8464, %v10604
  %10606 = vmatprep.mubr.bf16.mxu0 0
  %10607 = vmatmul.mubr.bf16.gmra.mrb[0].mxu0 %v8504
  %v10608 = vpop.f32.mrb[0].mxu0
  %v10609 = vadd.f32 %v8469, %v10608
  %v10610 = vpop.f32.mrb[0].mxu0
  %v10611 = vadd.f32 %v8469, %v10610
  %v10612 = vpop.f32.mrb[0].mxu0
  %v10613 = vadd.f32 %v8474, %v10612
  %v10614 = vpop.f32.mrb[0].mxu0
  %v10615 = vadd.f32 %v8474, %v10614
  %10616 = vmatprep.mubr.bf16.mxu0 0
  %10617 = vmatmul.mubr.bf16.gmra.mrb[0].mxu0 %v8505
  %v10618 = vpop.f32.mrb[0].mxu0
  %v10619 = vadd.f32 %v8479, %v10618
  %v10620 = vpop.f32.mrb[0].mxu0
  %v10621 = vadd.f32 %v8479, %v10620
  %v10622 = vpop.f32.mrb[0].mxu0
  %v10623 = vadd.f32 %v8484, %v10622
  %v10624 = vpop.f32.mrb[0].mxu0
  %v10625 = vadd.f32 %v8484, %v10624
  %10626 = vdwg.mxu0
  %10627 = vmatprep.subr.bf16.mxu0 %v7985
  %10628 = vmatpush1.bf16.msra.mxu0 %v7984
  %10629 = vmatprep.subr.bf16.mxu0 %v8049
  %10630 = vmatpush1.bf16.msra.mxu0 %v8048
  %10631 = vmatprep.subr.bf16.mxu0 %v8113
  %10632 = vmatpush1.bf16.msra.mxu0 %v8112
  %10633 = vmatprep.subr.bf16.mxu0 %v8177
  %10634 = vmatpush1.bf16.msra.mxu0 %v8176
  %10635 = vmatprep.subr.bf16.mxu0 %v8241
  %10636 = vmatpush1.bf16.msra.mxu0 %v8240
  %10637 = vmatprep.subr.bf16.mxu0 %v8305
  %10638 = vmatpush1.bf16.msra.mxu0 %v8304
  %10639 = vmatprep.subr.bf16.mxu0 %v8369
  %10640 = vmatpush1.bf16.msra.mxu0 %v8368
  %10641 = vmatprep.subr.bf16.mxu0 %v8433
  %10642 = vmatpush1.bf16.msra.mxu0 %v8432
  %10643 = vmatprep.subr.bf16.mxu0 0
  %10644 = vmatpush1.bf16.msra.mxu0 0
  %10645 = vmatprep.subr.bf16.mxu0 0
  %10646 = vmatpush1.bf16.msra.mxu0 0
  %10647 = vmatprep.subr.bf16.mxu0 0
  %10648 = vmatpush1.bf16.msra.mxu0 0
  %10649 = vmatprep.subr.bf16.mxu0 0
  %10650 = vmatpush1.bf16.msra.mxu0 0
  %10651 = vmatprep.subr.bf16.mxu0 0
  %10652 = vmatpush1.bf16.msra.mxu0 0
  %10653 = vmatprep.subr.bf16.mxu0 0
  %10654 = vmatpush1.bf16.msra.mxu0 0
  %10655 = vmatprep.subr.bf16.mxu0 0
  %10656 = vmatpush1.bf16.msra.mxu0 0
  %10657 = vmatprep.subr.bf16.mxu0 0
  %10658 = vmatpush1.bf16.msra.mxu0 0
  %10659 = vmatprep.mubr.bf16.mxu0 0
  %10660 = vmatmul.mubr.bf16.gmra.mrb[0].mxu0 %v8502
  %v10661 = vpop.f32.mrb[0].mxu0
  %v10662 = vadd.f32 %v8449, %v10661
  %v10663 = vpop.f32.mrb[0].mxu0
  %v10664 = vadd.f32 %v8449, %v10663
  %v10665 = vpop.f32.mrb[0].mxu0
  %v10666 = vadd.f32 %v8454, %v10665
  %v10667 = vpop.f32.mrb[0].mxu0
  %v10668 = vadd.f32 %v8454, %v10667
  %10669 = vmatprep.mubr.bf16.mxu0 0
  %10670 = vmatmul.mubr.bf16.gmra.mrb[0].mxu0 %v8503
  %v10671 = vpop.f32.mrb[0].mxu0
  %v10672 = vadd.f32 %v8459, %v10671
  %v10673 = vpop.f32.mrb[0].mxu0
  %v10674 = vadd.f32 %v8459, %v10673
  %v10675 = vpop.f32.mrb[0].mxu0
  %v10676 = vadd.f32 %v8464, %v10675
  %v10677 = vpop.f32.mrb[0].mxu0
  %v10678 = vadd.f32 %v8464, %v10677
  %10679 = vmatprep.mubr.bf16.mxu0 0
  %10680 = vmatmul.mubr.bf16.gmra.mrb[0].mxu0 %v8504
  %v10681 = vpop.f32.mrb[0].mxu0
  %v10682 = vadd.f32 %v8469, %v10681
  %v10683 = vpop.f32.mrb[0].mxu0
  %v10684 = vadd.f32 %v8469, %v10683
  %v10685 = vpop.f32.mrb[0].mxu0
  %v10686 = vadd.f32 %v8474, %v10685
  %v10687 = vpop.f32.mrb[0].mxu0
  %v10688 = vadd.f32 %v8474, %v10687
  %10689 = vmatprep.mubr.bf16.mxu0 0
  %10690 = vmatmul.mubr.bf16.gmra.mrb[0].mxu0 %v8505
  %v10691 = vpop.f32.mrb[0].mxu0
  %v10692 = vadd.f32 %v8479, %v10691
  %v10693 = vpop.f32.mrb[0].mxu0
  %v10694 = vadd.f32 %v8479, %v10693
  %v10695 = vpop.f32.mrb[0].mxu0
  %v10696 = vadd.f32 %v8484, %v10695
  %v10697 = vpop.f32.mrb[0].mxu0
  %v10698 = vadd.f32 %v8484, %v10697
  %10699 = vdwg.mxu0
  %10700 = vmatprep.subr.bf16.mxu0 %v7987
  %10701 = vmatpush1.bf16.msra.mxu0 %v7986
  %10702 = vmatprep.subr.bf16.mxu0 %v8051
  %10703 = vmatpush1.bf16.msra.mxu0 %v8050
  %10704 = vmatprep.subr.bf16.mxu0 %v8115
  %10705 = vmatpush1.bf16.msra.mxu0 %v8114
  %10706 = vmatprep.subr.bf16.mxu0 %v8179
  %10707 = vmatpush1.bf16.msra.mxu0 %v8178
  %10708 = vmatprep.subr.bf16.mxu0 %v8243
  %10709 = vmatpush1.bf16.msra.mxu0 %v8242
  %10710 = vmatprep.subr.bf16.mxu0 %v8307
  %10711 = vmatpush1.bf16.msra.mxu0 %v8306
  %10712 = vmatprep.subr.bf16.mxu0 %v8371
  %10713 = vmatpush1.bf16.msra.mxu0 %v8370
  %10714 = vmatprep.subr.bf16.mxu0 %v8435
  %10715 = vmatpush1.bf16.msra.mxu0 %v8434
  %10716 = vmatprep.subr.bf16.mxu0 0
  %10717 = vmatpush1.bf16.msra.mxu0 0
  %10718 = vmatprep.subr.bf16.mxu0 0
  %10719 = vmatpush1.bf16.msra.mxu0 0
  %10720 = vmatprep.subr.bf16.mxu0 0
  %10721 = vmatpush1.bf16.msra.mxu0 0
  %10722 = vmatprep.subr.bf16.mxu0 0
  %10723 = vmatpush1.bf16.msra.mxu0 0
  %10724 = vmatprep.subr.bf16.mxu0 0
  %10725 = vmatpush1.bf16.msra.mxu0 0
  %10726 = vmatprep.subr.bf16.mxu0 0
  %10727 = vmatpush1.bf16.msra.mxu0 0
  %10728 = vmatprep.subr.bf16.mxu0 0
  %10729 = vmatpush1.bf16.msra.mxu0 0
  %10730 = vmatprep.subr.bf16.mxu0 0
  %10731 = vmatpush1.bf16.msra.mxu0 0
  %10732 = vmatprep.mubr.bf16.mxu0 0
  %10733 = vmatmul.mubr.bf16.gmra.mrb[0].mxu0 %v8502
  %v10734 = vpop.f32.mrb[0].mxu0
  %v10735 = vadd.f32 %v8449, %v10734
  %v10736 = vpop.f32.mrb[0].mxu0
  %v10737 = vadd.f32 %v8449, %v10736
  %v10738 = vpop.f32.mrb[0].mxu0
  %v10739 = vadd.f32 %v8454, %v10738
  %v10740 = vpop.f32.mrb[0].mxu0
  %v10741 = vadd.f32 %v8454, %v10740
  %10742 = vmatprep.mubr.bf16.mxu0 0
  %10743 = vmatmul.mubr.bf16.gmra.mrb[0].mxu0 %v8503
  %v10744 = vpop.f32.mrb[0].mxu0
  %v10745 = vadd.f32 %v8459, %v10744
  %v10746 = vpop.f32.mrb[0].mxu0
  %v10747 = vadd.f32 %v8459, %v10746
  %v10748 = vpop.f32.mrb[0].mxu0
  %v10749 = vadd.f32 %v8464, %v10748
  %v10750 = vpop.f32.mrb[0].mxu0
  %v10751 = vadd.f32 %v8464, %v10750
  %10752 = vmatprep.mubr.bf16.mxu0 0
  %10753 = vmatmul.mubr.bf16.gmra.mrb[0].mxu0 %v8504
  %v10754 = vpop.f32.mrb[0].mxu0
  %v10755 = vadd.f32 %v8469, %v10754
  %v10756 = vpop.f32.mrb[0].mxu0
  %v10757 = vadd.f32 %v8469, %v10756
  %v10758 = vpop.f32.mrb[0].mxu0
  %v10759 = vadd.f32 %v8474, %v10758
  %v10760 = vpop.f32.mrb[0].mxu0
  %v10761 = vadd.f32 %v8474, %v10760
  %10762 = vmatprep.mubr.bf16.mxu0 0
  %10763 = vmatmul.mubr.bf16.gmra.mrb[0].mxu0 %v8505
  %v10764 = vpop.f32.mrb[0].mxu0
  %v10765 = vadd.f32 %v8479, %v10764
  %v10766 = vpop.f32.mrb[0].mxu0
  %v10767 = vadd.f32 %v8479, %v10766
  %v10768 = vpop.f32.mrb[0].mxu0
  %v10769 = vadd.f32 %v8484, %v10768
  %v10770 = vpop.f32.mrb[0].mxu0
  %v10771 = vadd.f32 %v8484, %v10770
  %10772 = vdwg.mxu0
  %10773 = vmatprep.subr.bf16.mxu0 %v7989
  %10774 = vmatpush1.bf16.msra.mxu0 %v7988
  %10775 = vmatprep.subr.bf16.mxu0 %v8053
  %10776 = vmatpush1.bf16.msra.mxu0 %v8052
  %10777 = vmatprep.subr.bf16.mxu0 %v8117
  %10778 = vmatpush1.bf16.msra.mxu0 %v8116
  %10779 = vmatprep.subr.bf16.mxu0 %v8181
  %10780 = vmatpush1.bf16.msra.mxu0 %v8180
  %10781 = vmatprep.subr.bf16.mxu0 %v8245
  %10782 = vmatpush1.bf16.msra.mxu0 %v8244
  %10783 = vmatprep.subr.bf16.mxu0 %v8309
  %10784 = vmatpush1.bf16.msra.mxu0 %v8308
  %10785 = vmatprep.subr.bf16.mxu0 %v8373
  %10786 = vmatpush1.bf16.msra.mxu0 %v8372
  %10787 = vmatprep.subr.bf16.mxu0 %v8437
  %10788 = vmatpush1.bf16.msra.mxu0 %v8436
  %10789 = vmatprep.subr.bf16.mxu0 0
  %10790 = vmatpush1.bf16.msra.mxu0 0
  %10791 = vmatprep.subr.bf16.mxu0 0
  %10792 = vmatpush1.bf16.msra.mxu0 0
  %10793 = vmatprep.subr.bf16.mxu0 0
  %10794 = vmatpush1.bf16.msra.mxu0 0
  %10795 = vmatprep.subr.bf16.mxu0 0
  %10796 = vmatpush1.bf16.msra.mxu0 0
  %10797 = vmatprep.subr.bf16.mxu0 0
  %10798 = vmatpush1.bf16.msra.mxu0 0
  %10799 = vmatprep.subr.bf16.mxu0 0
  %10800 = vmatpush1.bf16.msra.mxu0 0
  %10801 = vmatprep.subr.bf16.mxu0 0
  %10802 = vmatpush1.bf16.msra.mxu0 0
  %10803 = vmatprep.subr.bf16.mxu0 0
  %10804 = vmatpush1.bf16.msra.mxu0 0
  %10805 = vmatprep.mubr.bf16.mxu0 0
  %10806 = vmatmul.mubr.bf16.gmra.mrb[0].mxu0 %v8502
  %v10807 = vpop.f32.mrb[0].mxu0
  %v10808 = vadd.f32 %v8449, %v10807
  %v10809 = vpop.f32.mrb[0].mxu0
  %v10810 = vadd.f32 %v8449, %v10809
  %v10811 = vpop.f32.mrb[0].mxu0
  %v10812 = vadd.f32 %v8454, %v10811
  %v10813 = vpop.f32.mrb[0].mxu0
  %v10814 = vadd.f32 %v8454, %v10813
  %10815 = vmatprep.mubr.bf16.mxu0 0
  %10816 = vmatmul.mubr.bf16.gmra.mrb[0].mxu0 %v8503
  %v10817 = vpop.f32.mrb[0].mxu0
  %v10818 = vadd.f32 %v8459, %v10817
  %v10819 = vpop.f32.mrb[0].mxu0
  %v10820 = vadd.f32 %v8459, %v10819
  %v10821 = vpop.f32.mrb[0].mxu0
  %v10822 = vadd.f32 %v8464, %v10821
  %v10823 = vpop.f32.mrb[0].mxu0
  %v10824 = vadd.f32 %v8464, %v10823
  %10825 = vmatprep.mubr.bf16.mxu0 0
  %10826 = vmatmul.mubr.bf16.gmra.mrb[0].mxu0 %v8504
  %v10827 = vpop.f32.mrb[0].mxu0
  %v10828 = vadd.f32 %v8469, %v10827
  %v10829 = vpop.f32.mrb[0].mxu0
  %v10830 = vadd.f32 %v8469, %v10829
  %v10831 = vpop.f32.mrb[0].mxu0
  %v10832 = vadd.f32 %v8474, %v10831
  %v10833 = vpop.f32.mrb[0].mxu0
  %v10834 = vadd.f32 %v8474, %v10833
  %10835 = vmatprep.mubr.bf16.mxu0 0
  %10836 = vmatmul.mubr.bf16.gmra.mrb[0].mxu0 %v8505
  %v10837 = vpop.f32.mrb[0].mxu0
  %v10838 = vadd.f32 %v8479, %v10837
  %v10839 = vpop.f32.mrb[0].mxu0
  %v10840 = vadd.f32 %v8479, %v10839
  %v10841 = vpop.f32.mrb[0].mxu0
  %v10842 = vadd.f32 %v8484, %v10841
  %v10843 = vpop.f32.mrb[0].mxu0
  %v10844 = vadd.f32 %v8484, %v10843
  %10845 = vdwg.mxu0
  %v10846 = vmax.f32 %v8545, 0.0
  %v10847 = vmax.f32 %v8547, 0.0
  %v10848 = vmax.f32 %v8618, 0.0
  %v10849 = vmax.f32 %v8620, 0.0
  %v10850 = vmax.f32 %v8691, 0.0
  %v10851 = vmax.f32 %v8693, 0.0
  %v10852 = vmax.f32 %v8764, 0.0
  %v10853 = vmax.f32 %v8766, 0.0
  %v10854 = vmax.f32 %v8837, 0.0
  %v10855 = vmax.f32 %v8839, 0.0
  %v10856 = vmax.f32 %v8910, 0.0
  %v10857 = vmax.f32 %v8912, 0.0
  %v10858 = vmax.f32 %v8983, 0.0
  %v10859 = vmax.f32 %v8985, 0.0
  %v10860 = vmax.f32 %v9056, 0.0
  %v10861 = vmax.f32 %v9058, 0.0
  %v10862 = vmax.f32 %v9129, 0.0
  %v10863 = vmax.f32 %v9131, 0.0
  %v10864 = vmax.f32 %v9202, 0.0
  %v10865 = vmax.f32 %v9204, 0.0
  %v10866 = vmax.f32 %v9275, 0.0
  %v10867 = vmax.f32 %v9277, 0.0
  %v10868 = vmax.f32 %v9348, 0.0
  %v10869 = vmax.f32 %v9350, 0.0
  %v10870 = vmax.f32 %v9421, 0.0
  %v10871 = vmax.f32 %v9423, 0.0
  %v10872 = vmax.f32 %v9494, 0.0
  %v10873 = vmax.f32 %v9496, 0.0
  %v10874 = vmax.f32 %v9567, 0.0
  %v10875 = vmax.f32 %v9569, 0.0
  %v10876 = vmax.f32 %v9640, 0.0
  %v10877 = vmax.f32 %v9642, 0.0
  %v10878 = vmax.f32 %v9713, 0.0
  %v10879 = vmax.f32 %v9715, 0.0
  %v10880 = vmax.f32 %v9786, 0.0
  %v10881 = vmax.f32 %v9788, 0.0
  %v10882 = vmax.f32 %v9859, 0.0
  %v10883 = vmax.f32 %v9861, 0.0
  %v10884 = vmax.f32 %v9932, 0.0
  %v10885 = vmax.f32 %v9934, 0.0
  %v10886 = vmax.f32 %v10005, 0.0
  %v10887 = vmax.f32 %v10007, 0.0
  %v10888 = vmax.f32 %v10078, 0.0
  %v10889 = vmax.f32 %v10080, 0.0
  %v10890 = vmax.f32 %v10151, 0.0
  %v10891 = vmax.f32 %v10153, 0.0
  %v10892 = vmax.f32 %v10224, 0.0
  %v10893 = vmax.f32 %v10226, 0.0
  %v10894 = vmax.f32 %v10297, 0.0
  %v10895 = vmax.f32 %v10299, 0.0
  %v10896 = vmax.f32 %v10370, 0.0
  %v10897 = vmax.f32 %v10372, 0.0
  %v10898 = vmax.f32 %v10443, 0.0
  %v10899 = vmax.f32 %v10445, 0.0
  %v10900 = vmax.f32 %v10516, 0.0
  %v10901 = vmax.f32 %v10518, 0.0
  %v10902 = vmax.f32 %v10589, 0.0
  %v10903 = vmax.f32 %v10591, 0.0
  %v10904 = vmax.f32 %v10662, 0.0
  %v10905 = vmax.f32 %v10664, 0.0
  %v10906 = vmax.f32 %v10735, 0.0
  %v10907 = vmax.f32 %v10737, 0.0
  %v10908 = vmax.f32 %v10808, 0.0
  %v10909 = vmax.f32 %v10810, 0.0
  %v10910 = vmax.f32 %v8549, 0.0
  %v10911 = vmax.f32 %v8551, 0.0
  %v10912 = vmax.f32 %v8622, 0.0
  %v10913 = vmax.f32 %v8624, 0.0
  %v10914 = vmax.f32 %v8695, 0.0
  %v10915 = vmax.f32 %v8697, 0.0
  %v10916 = vmax.f32 %v8768, 0.0
  %v10917 = vmax.f32 %v8770, 0.0
  %v10918 = vmax.f32 %v8841, 0.0
  %v10919 = vmax.f32 %v8843, 0.0
  %v10920 = vmax.f32 %v8914, 0.0
  %v10921 = vmax.f32 %v8916, 0.0
  %v10922 = vmax.f32 %v8987, 0.0
  %v10923 = vmax.f32 %v8989, 0.0
  %v10924 = vmax.f32 %v9060, 0.0
  %v10925 = vmax.f32 %v9062, 0.0
  %v10926 = vmax.f32 %v9133, 0.0
  %v10927 = vmax.f32 %v9135, 0.0
  %v10928 = vmax.f32 %v9206, 0.0
  %v10929 = vmax.f32 %v9208, 0.0
  %v10930 = vmax.f32 %v9279, 0.0
  %v10931 = vmax.f32 %v9281, 0.0
  %v10932 = vmax.f32 %v9352, 0.0
  %v10933 = vmax.f32 %v9354, 0.0
  %v10934 = vmax.f32 %v9425, 0.0
  %v10935 = vmax.f32 %v9427, 0.0
  %v10936 = vmax.f32 %v9498, 0.0
  %v10937 = vmax.f32 %v9500, 0.0
  %v10938 = vmax.f32 %v9571, 0.0
  %v10939 = vmax.f32 %v9573, 0.0
  %v10940 = vmax.f32 %v9644, 0.0
  %v10941 = vmax.f32 %v9646, 0.0
  %v10942 = vmax.f32 %v9717, 0.0
  %v10943 = vmax.f32 %v9719, 0.0
  %v10944 = vmax.f32 %v9790, 0.0
  %v10945 = vmax.f32 %v9792, 0.0
  %v10946 = vmax.f32 %v9863, 0.0
  %v10947 = vmax.f32 %v9865, 0.0
  %v10948 = vmax.f32 %v9936, 0.0
  %v10949 = vmax.f32 %v9938, 0.0
  %v10950 = vmax.f32 %v10009, 0.0
  %v10951 = vmax.f32 %v10011, 0.0
  %v10952 = vmax.f32 %v10082, 0.0
  %v10953 = vmax.f32 %v10084, 0.0
  %v10954 = vmax.f32 %v10155, 0.0
  %v10955 = vmax.f32 %v10157, 0.0
  %v10956 = vmax.f32 %v10228, 0.0
  %v10957 = vmax.f32 %v10230, 0.0
  %v10958 = vmax.f32 %v10301, 0.0
  %v10959 = vmax.f32 %v10303, 0.0
  %v10960 = vmax.f32 %v10374, 0.0
  %v10961 = vmax.f32 %v10376, 0.0
  %v10962 = vmax.f32 %v10447, 0.0
  %v10963 = vmax.f32 %v10449, 0.0
  %v10964 = vmax.f32 %v10520, 0.0
  %v10965 = vmax.f32 %v10522, 0.0
  %v10966 = vmax.f32 %v10593, 0.0
  %v10967 = vmax.f32 %v10595, 0.0
  %v10968 = vmax.f32 %v10666, 0.0
  %v10969 = vmax.f32 %v10668, 0.0
  %v10970 = vmax.f32 %v10739, 0.0
  %v10971 = vmax.f32 %v10741, 0.0
  %v10972 = vmax.f32 %v10812, 0.0
  %v10973 = vmax.f32 %v10814, 0.0
  %v10974 = vmax.f32 %v8555, 0.0
  %v10975 = vmax.f32 %v8557, 0.0
  %v10976 = vmax.f32 %v8628, 0.0
  %v10977 = vmax.f32 %v8630, 0.0
  %v10978 = vmax.f32 %v8701, 0.0
  %v10979 = vmax.f32 %v8703, 0.0
  %v10980 = vmax.f32 %v8774, 0.0
  %v10981 = vmax.f32 %v8776, 0.0
  %v10982 = vmax.f32 %v8847, 0.0
  %v10983 = vmax.f32 %v8849, 0.0
  %v10984 = vmax.f32 %v8920, 0.0
  %v10985 = vmax.f32 %v8922, 0.0
  %v10986 = vmax.f32 %v8993, 0.0
  %v10987 = vmax.f32 %v8995, 0.0
  %v10988 = vmax.f32 %v9066, 0.0
  %v10989 = vmax.f32 %v9068, 0.0
  %v10990 = vmax.f32 %v9139, 0.0
  %v10991 = vmax.f32 %v9141, 0.0
  %v10992 = vmax.f32 %v9212, 0.0
  %v10993 = vmax.f32 %v9214, 0.0
  %v10994 = vmax.f32 %v9285, 0.0
  %v10995 = vmax.f32 %v9287, 0.0
  %v10996 = vmax.f32 %v9358, 0.0
  %v10997 = vmax.f32 %v9360, 0.0
  %v10998 = vmax.f32 %v9431, 0.0
  %v10999 = vmax.f32 %v9433, 0.0
  %v11000 = vmax.f32 %v9504, 0.0
  %v11001 = vmax.f32 %v9506, 0.0
  %v11002 = vmax.f32 %v9577, 0.0
  %v11003 = vmax.f32 %v9579, 0.0
  %v11004 = vmax.f32 %v9650, 0.0
  %v11005 = vmax.f32 %v9652, 0.0
  %v11006 = vmax.f32 %v9723, 0.0
  %v11007 = vmax.f32 %v9725, 0.0
  %v11008 = vmax.f32 %v9796, 0.0
  %v11009 = vmax.f32 %v9798, 0.0
  %v11010 = vmax.f32 %v9869, 0.0
  %v11011 = vmax.f32 %v9871, 0.0
  %v11012 = vmax.f32 %v9942, 0.0
  %v11013 = vmax.f32 %v9944, 0.0
  %v11014 = vmax.f32 %v10015, 0.0
  %v11015 = vmax.f32 %v10017, 0.0
  %v11016 = vmax.f32 %v10088, 0.0
  %v11017 = vmax.f32 %v10090, 0.0
  %v11018 = vmax.f32 %v10161, 0.0
  %v11019 = vmax.f32 %v10163, 0.0
  %v11020 = vmax.f32 %v10234, 0.0
  %v11021 = vmax.f32 %v10236, 0.0
  %v11022 = vmax.f32 %v10307, 0.0
  %v11023 = vmax.f32 %v10309, 0.0
  %v11024 = vmax.f32 %v10380, 0.0
  %v11025 = vmax.f32 %v10382, 0.0
  %v11026 = vmax.f32 %v10453, 0.0
  %v11027 = vmax.f32 %v10455, 0.0
  %v11028 = vmax.f32 %v10526, 0.0
  %v11029 = vmax.f32 %v10528, 0.0
  %v11030 = vmax.f32 %v10599, 0.0
  %v11031 = vmax.f32 %v10601, 0.0
  %v11032 = vmax.f32 %v10672, 0.0
  %v11033 = vmax.f32 %v10674, 0.0
  %v11034 = vmax.f32 %v10745, 0.0
  %v11035 = vmax.f32 %v10747, 0.0
  %v11036 = vmax.f32 %v10818, 0.0
  %v11037 = vmax.f32 %v10820, 0.0
  %v11038 = vmax.f32 %v8559, 0.0
  %v11039 = vmax.f32 %v8561, 0.0
  %v11040 = vmax.f32 %v8632, 0.0
  %v11041 = vmax.f32 %v8634, 0.0
  %v11042 = vmax.f32 %v8705, 0.0
  %v11043 = vmax.f32 %v8707, 0.0
  %v11044 = vmax.f32 %v8778, 0.0
  %v11045 = vmax.f32 %v8780, 0.0
  %v11046 = vmax.f32 %v8851, 0.0
  %v11047 = vmax.f32 %v8853, 0.0
  %v11048 = vmax.f32 %v8924, 0.0
  %v11049 = vmax.f32 %v8926, 0.0
  %v11050 = vmax.f32 %v8997, 0.0
  %v11051 = vmax.f32 %v8999, 0.0
  %v11052 = vmax.f32 %v9070, 0.0
  %v11053 = vmax.f32 %v9072, 0.0
  %v11054 = vmax.f32 %v9143, 0.0
  %v11055 = vmax.f32 %v9145, 0.0
  %v11056 = vmax.f32 %v9216, 0.0
  %v11057 = vmax.f32 %v9218, 0.0
  %v11058 = vmax.f32 %v9289, 0.0
  %v11059 = vmax.f32 %v9291, 0.0
  %v11060 = vmax.f32 %v9362, 0.0
  %v11061 = vmax.f32 %v9364, 0.0
  %v11062 = vmax.f32 %v9435, 0.0
  %v11063 = vmax.f32 %v9437, 0.0
  %v11064 = vmax.f32 %v9508, 0.0
  %v11065 = vmax.f32 %v9510, 0.0
  %v11066 = vmax.f32 %v9581, 0.0
  %v11067 = vmax.f32 %v9583, 0.0
  %v11068 = vmax.f32 %v9654, 0.0
  %v11069 = vmax.f32 %v9656, 0.0
  %v11070 = vmax.f32 %v9727, 0.0
  %v11071 = vmax.f32 %v9729, 0.0
  %v11072 = vmax.f32 %v9800, 0.0
  %v11073 = vmax.f32 %v9802, 0.0
  %v11074 = vmax.f32 %v9873, 0.0
  %v11075 = vmax.f32 %v9875, 0.0
  %v11076 = vmax.f32 %v9946, 0.0
  %v11077 = vmax.f32 %v9948, 0.0
  %v11078 = vmax.f32 %v10019, 0.0
  %v11079 = vmax.f32 %v10021, 0.0
  %v11080 = vmax.f32 %v10092, 0.0
  %v11081 = vmax.f32 %v10094, 0.0
  %v11082 = vmax.f32 %v10165, 0.0
  %v11083 = vmax.f32 %v10167, 0.0
  %v11084 = vmax.f32 %v10238, 0.0
  %v11085 = vmax.f32 %v10240, 0.0
  %v11086 = vmax.f32 %v10311, 0.0
  %v11087 = vmax.f32 %v10313, 0.0
  %v11088 = vmax.f32 %v10384, 0.0
  %v11089 = vmax.f32 %v10386, 0.0
  %v11090 = vmax.f32 %v10457, 0.0
  %v11091 = vmax.f32 %v10459, 0.0
  %v11092 = vmax.f32 %v10530, 0.0
  %v11093 = vmax.f32 %v10532, 0.0
  %v11094 = vmax.f32 %v10603, 0.0
  %v11095 = vmax.f32 %v10605, 0.0
  %v11096 = vmax.f32 %v10676, 0.0
  %v11097 = vmax.f32 %v10678, 0.0
  %v11098 = vmax.f32 %v10749, 0.0
  %v11099 = vmax.f32 %v10751, 0.0
  %v11100 = vmax.f32 %v10822, 0.0
  %v11101 = vmax.f32 %v10824, 0.0
  %v11102 = vmax.f32 %v8565, 0.0
  %v11103 = vmax.f32 %v8567, 0.0
  %v11104 = vmax.f32 %v8638, 0.0
  %v11105 = vmax.f32 %v8640, 0.0
  %v11106 = vmax.f32 %v8711, 0.0
  %v11107 = vmax.f32 %v8713, 0.0
  %v11108 = vmax.f32 %v8784, 0.0
  %v11109 = vmax.f32 %v8786, 0.0
  %v11110 = vmax.f32 %v8857, 0.0
  %v11111 = vmax.f32 %v8859, 0.0
  %v11112 = vmax.f32 %v8930, 0.0
  %v11113 = vmax.f32 %v8932, 0.0
  %v11114 = vmax.f32 %v9003, 0.0
  %v11115 = vmax.f32 %v9005, 0.0
  %v11116 = vmax.f32 %v9076, 0.0
  %v11117 = vmax.f32 %v9078, 0.0
  %v11118 = vmax.f32 %v9149, 0.0
  %v11119 = vmax.f32 %v9151, 0.0
  %v11120 = vmax.f32 %v9222, 0.0
  %v11121 = vmax.f32 %v9224, 0.0
  %v11122 = vmax.f32 %v9295, 0.0
  %v11123 = vmax.f32 %v9297, 0.0
  %v11124 = vmax.f32 %v9368, 0.0
  %v11125 = vmax.f32 %v9370, 0.0
  %v11126 = vmax.f32 %v9441, 0.0
  %v11127 = vmax.f32 %v9443, 0.0
  %v11128 = vmax.f32 %v9514, 0.0
  %v11129 = vmax.f32 %v9516, 0.0
  %v11130 = vmax.f32 %v9587, 0.0
  %v11131 = vmax.f32 %v9589, 0.0
  %v11132 = vmax.f32 %v9660, 0.0
  %v11133 = vmax.f32 %v9662, 0.0
  %v11134 = vmax.f32 %v9733, 0.0
  %v11135 = vmax.f32 %v9735, 0.0
  %v11136 = vmax.f32 %v9806, 0.0
  %v11137 = vmax.f32 %v9808, 0.0
  %v11138 = vmax.f32 %v9879, 0.0
  %v11139 = vmax.f32 %v9881, 0.0
  %v11140 = vmax.f32 %v9952, 0.0
  %v11141 = vmax.f32 %v9954, 0.0
  %v11142 = vmax.f32 %v10025, 0.0
  %v11143 = vmax.f32 %v10027, 0.0
  %v11144 = vmax.f32 %v10098, 0.0
  %v11145 = vmax.f32 %v10100, 0.0
  %v11146 = vmax.f32 %v10171, 0.0
  %v11147 = vmax.f32 %v10173, 0.0
  %v11148 = vmax.f32 %v10244, 0.0
  %v11149 = vmax.f32 %v10246, 0.0
  %v11150 = vmax.f32 %v10317, 0.0
  %v11151 = vmax.f32 %v10319, 0.0
  %v11152 = vmax.f32 %v10390, 0.0
  %v11153 = vmax.f32 %v10392, 0.0
  %v11154 = vmax.f32 %v10463, 0.0
  %v11155 = vmax.f32 %v10465, 0.0
  %v11156 = vmax.f32 %v10536, 0.0
  %v11157 = vmax.f32 %v10538, 0.0
  %v11158 = vmax.f32 %v10609, 0.0
  %v11159 = vmax.f32 %v10611, 0.0
  %v11160 = vmax.f32 %v10682, 0.0
  %v11161 = vmax.f32 %v10684, 0.0
  %v11162 = vmax.f32 %v10755, 0.0
  %v11163 = vmax.f32 %v10757, 0.0
  %v11164 = vmax.f32 %v10828, 0.0
  %v11165 = vmax.f32 %v10830, 0.0
  %v11166 = vmax.f32 %v8569, 0.0
  %v11167 = vmax.f32 %v8571, 0.0
  %v11168 = vmax.f32 %v8642, 0.0
  %v11169 = vmax.f32 %v8644, 0.0
  %v11170 = vmax.f32 %v8715, 0.0
  %v11171 = vmax.f32 %v8717, 0.0
  %v11172 = vmax.f32 %v8788, 0.0
  %v11173 = vmax.f32 %v8790, 0.0
  %v11174 = vmax.f32 %v8861, 0.0
  %v11175 = vmax.f32 %v8863, 0.0
  %v11176 = vmax.f32 %v8934, 0.0
  %v11177 = vmax.f32 %v8936, 0.0
  %v11178 = vmax.f32 %v9007, 0.0
  %v11179 = vmax.f32 %v9009, 0.0
  %v11180 = vmax.f32 %v9080, 0.0
  %v11181 = vmax.f32 %v9082, 0.0
  %v11182 = vmax.f32 %v9153, 0.0
  %v11183 = vmax.f32 %v9155, 0.0
  %v11184 = vmax.f32 %v9226, 0.0
  %v11185 = vmax.f32 %v9228, 0.0
  %v11186 = vmax.f32 %v9299, 0.0
  %v11187 = vmax.f32 %v9301, 0.0
  %v11188 = vmax.f32 %v9372, 0.0
  %v11189 = vmax.f32 %v9374, 0.0
  %v11190 = vmax.f32 %v9445, 0.0
  %v11191 = vmax.f32 %v9447, 0.0
  %v11192 = vmax.f32 %v9518, 0.0
  %v11193 = vmax.f32 %v9520, 0.0
  %v11194 = vmax.f32 %v9591, 0.0
  %v11195 = vmax.f32 %v9593, 0.0
  %v11196 = vmax.f32 %v9664, 0.0
  %v11197 = vmax.f32 %v9666, 0.0
  %v11198 = vmax.f32 %v9737, 0.0
  %v11199 = vmax.f32 %v9739, 0.0
  %v11200 = vmax.f32 %v9810, 0.0
  %v11201 = vmax.f32 %v9812, 0.0
  %v11202 = vmax.f32 %v9883, 0.0
  %v11203 = vmax.f32 %v9885, 0.0
  %v11204 = vmax.f32 %v9956, 0.0
  %v11205 = vmax.f32 %v9958, 0.0
  %v11206 = vmax.f32 %v10029, 0.0
  %v11207 = vmax.f32 %v10031, 0.0
  %v11208 = vmax.f32 %v10102, 0.0
  %v11209 = vmax.f32 %v10104, 0.0
  %v11210 = vmax.f32 %v10175, 0.0
  %v11211 = vmax.f32 %v10177, 0.0
  %v11212 = vmax.f32 %v10248, 0.0
  %v11213 = vmax.f32 %v10250, 0.0
  %v11214 = vmax.f32 %v10321, 0.0
  %v11215 = vmax.f32 %v10323, 0.0
  %v11216 = vmax.f32 %v10394, 0.0
  %v11217 = vmax.f32 %v10396, 0.0
  %v11218 = vmax.f32 %v10467, 0.0
  %v11219 = vmax.f32 %v10469, 0.0
  %v11220 = vmax.f32 %v10540, 0.0
  %v11221 = vmax.f32 %v10542, 0.0
  %v11222 = vmax.f32 %v10613, 0.0
  %v11223 = vmax.f32 %v10615, 0.0
  %v11224 = vmax.f32 %v10686, 0.0
  %v11225 = vmax.f32 %v10688, 0.0
  %v11226 = vmax.f32 %v10759, 0.0
  %v11227 = vmax.f32 %v10761, 0.0
  %v11228 = vmax.f32 %v10832, 0.0
  %v11229 = vmax.f32 %v10834, 0.0
  %v11230 = vmax.f32 %v8575, 0.0
  %v11231 = vmax.f32 %v8577, 0.0
  %v11232 = vmax.f32 %v8648, 0.0
  %v11233 = vmax.f32 %v8650, 0.0
  %v11234 = vmax.f32 %v8721, 0.0
  %v11235 = vmax.f32 %v8723, 0.0
  %v11236 = vmax.f32 %v8794, 0.0
  %v11237 = vmax.f32 %v8796, 0.0
  %v11238 = vmax.f32 %v8867, 0.0
  %v11239 = vmax.f32 %v8869, 0.0
  %v11240 = vmax.f32 %v8940, 0.0
  %v11241 = vmax.f32 %v8942, 0.0
  %v11242 = vmax.f32 %v9013, 0.0
  %v11243 = vmax.f32 %v9015, 0.0
  %v11244 = vmax.f32 %v9086, 0.0
  %v11245 = vmax.f32 %v9088, 0.0
  %v11246 = vmax.f32 %v9159, 0.0
  %v11247 = vmax.f32 %v9161, 0.0
  %v11248 = vmax.f32 %v9232, 0.0
  %v11249 = vmax.f32 %v9234, 0.0
  %v11250 = vmax.f32 %v9305, 0.0
  %v11251 = vmax.f32 %v9307, 0.0
  %v11252 = vmax.f32 %v9378, 0.0
  %v11253 = vmax.f32 %v9380, 0.0
  %v11254 = vmax.f32 %v9451, 0.0
  %v11255 = vmax.f32 %v9453, 0.0
  %v11256 = vmax.f32 %v9524, 0.0
  %v11257 = vmax.f32 %v9526, 0.0
  %v11258 = vmax.f32 %v9597, 0.0
  %v11259 = vmax.f32 %v9599, 0.0
  %v11260 = vmax.f32 %v9670, 0.0
  %v11261 = vmax.f32 %v9672, 0.0
  %v11262 = vmax.f32 %v9743, 0.0
  %v11263 = vmax.f32 %v9745, 0.0
  %v11264 = vmax.f32 %v9816, 0.0
  %v11265 = vmax.f32 %v9818, 0.0
  %v11266 = vmax.f32 %v9889, 0.0
  %v11267 = vmax.f32 %v9891, 0.0
  %v11268 = vmax.f32 %v9962, 0.0
  %v11269 = vmax.f32 %v9964, 0.0
  %v11270 = vmax.f32 %v10035, 0.0
  %v11271 = vmax.f32 %v10037, 0.0
  %v11272 = vmax.f32 %v10108, 0.0
  %v11273 = vmax.f32 %v10110, 0.0
  %v11274 = vmax.f32 %v10181, 0.0
  %v11275 = vmax.f32 %v10183, 0.0
  %v11276 = vmax.f32 %v10254, 0.0
  %v11277 = vmax.f32 %v10256, 0.0
  %v11278 = vmax.f32 %v10327, 0.0
  %v11279 = vmax.f32 %v10329, 0.0
  %v11280 = vmax.f32 %v10400, 0.0
  %v11281 = vmax.f32 %v10402, 0.0
  %v11282 = vmax.f32 %v10473, 0.0
  %v11283 = vmax.f32 %v10475, 0.0
  %v11284 = vmax.f32 %v10546, 0.0
  %v11285 = vmax.f32 %v10548, 0.0
  %v11286 = vmax.f32 %v10619, 0.0
  %v11287 = vmax.f32 %v10621, 0.0
  %v11288 = vmax.f32 %v10692, 0.0
  %v11289 = vmax.f32 %v10694, 0.0
  %v11290 = vmax.f32 %v10765, 0.0
  %v11291 = vmax.f32 %v10767, 0.0
  %v11292 = vmax.f32 %v10838, 0.0
  %v11293 = vmax.f32 %v10840, 0.0
  %v11294 = vmax.f32 %v8579, 0.0
  %v11295 = vmax.f32 %v8581, 0.0
  %v11296 = vmax.f32 %v8652, 0.0
  %v11297 = vmax.f32 %v8654, 0.0
  %v11298 = vmax.f32 %v8725, 0.0
  %v11299 = vmax.f32 %v8727, 0.0
  %v11300 = vmax.f32 %v8798, 0.0
  %v11301 = vmax.f32 %v8800, 0.0
  %v11302 = vmax.f32 %v8871, 0.0
  %v11303 = vmax.f32 %v8873, 0.0
  %v11304 = vmax.f32 %v8944, 0.0
  %v11305 = vmax.f32 %v8946, 0.0
  %v11306 = vmax.f32 %v9017, 0.0
  %v11307 = vmax.f32 %v9019, 0.0
  %v11308 = vmax.f32 %v9090, 0.0
  %v11309 = vmax.f32 %v9092, 0.0
  %v11310 = vmax.f32 %v9163, 0.0
  %v11311 = vmax.f32 %v9165, 0.0
  %v11312 = vmax.f32 %v9236, 0.0
  %v11313 = vmax.f32 %v9238, 0.0
  %v11314 = vmax.f32 %v9309, 0.0
  %v11315 = vmax.f32 %v9311, 0.0
  %v11316 = vmax.f32 %v9382, 0.0
  %v11317 = vmax.f32 %v9384, 0.0
  %v11318 = vmax.f32 %v9455, 0.0
  %v11319 = vmax.f32 %v9457, 0.0
  %v11320 = vmax.f32 %v9528, 0.0
  %v11321 = vmax.f32 %v9530, 0.0
  %v11322 = vmax.f32 %v9601, 0.0
  %v11323 = vmax.f32 %v9603, 0.0
  %v11324 = vmax.f32 %v9674, 0.0
  %v11325 = vmax.f32 %v9676, 0.0
  %v11326 = vmax.f32 %v9747, 0.0
  %v11327 = vmax.f32 %v9749, 0.0
  %v11328 = vmax.f32 %v9820, 0.0
  %v11329 = vmax.f32 %v9822, 0.0
  %v11330 = vmax.f32 %v9893, 0.0
  %v11331 = vmax.f32 %v9895, 0.0
  %v11332 = vmax.f32 %v9966, 0.0
  %v11333 = vmax.f32 %v9968, 0.0
  %v11334 = vmax.f32 %v10039, 0.0
  %v11335 = vmax.f32 %v10041, 0.0
  %v11336 = vmax.f32 %v10112, 0.0
  %v11337 = vmax.f32 %v10114, 0.0
  %v11338 = vmax.f32 %v10185, 0.0
  %v11339 = vmax.f32 %v10187, 0.0
  %v11340 = vmax.f32 %v10258, 0.0
  %v11341 = vmax.f32 %v10260, 0.0
  %v11342 = vmax.f32 %v10331, 0.0
  %v11343 = vmax.f32 %v10333, 0.0
  %v11344 = vmax.f32 %v10404, 0.0
  %v11345 = vmax.f32 %v10406, 0.0
  %v11346 = vmax.f32 %v10477, 0.0
  %v11347 = vmax.f32 %v10479, 0.0
  %v11348 = vmax.f32 %v10550, 0.0
  %v11349 = vmax.f32 %v10552, 0.0
  %v11350 = vmax.f32 %v10623, 0.0
  %v11351 = vmax.f32 %v10625, 0.0
  %v11352 = vmax.f32 %v10696, 0.0
  %v11353 = vmax.f32 %v10698, 0.0
  %v11354 = vmax.f32 %v10769, 0.0
  %v11355 = vmax.f32 %v10771, 0.0
  %v11356 = vmax.f32 %v10842, 0.0
  %v11357 = vmax.f32 %v10844, 0.0
  %v11358 = vld [vmem:[%s5] sm:$0xff]
  %v11359 = vld [vmem:[%s5 + $0x8] sm:$0xff]
  %v11360 = vld [vmem:[%s5 + $0x10] sm:$0xff]
  %v11361 = vld [vmem:[%s5 + $0x18] sm:$0xff]
  %v11362 = vld [vmem:[%s5 + $0x20] sm:$0xff]
  %v11363 = vld [vmem:[%s5 + $0x28] sm:$0xff]
  %v11364 = vld [vmem:[%s5 + $0x30] sm:$0xff]
  %v11365 = vld [vmem:[%s5 + $0x38] sm:$0xff]
  %11367 = vset.pattern.permute.xlu0 0
  %11368 = vperm.xlu0 %11367, %v11358
  %v11369 = vpop.permute.xlu0 %11368
  %11372 = vset.pattern.permute.xlu0 0
  %11373 = vperm.xlu0 %11372, %v11359
  %v11374 = vpop.permute.xlu0 %11373
  %11377 = vset.pattern.permute.xlu0 0
  %11378 = vperm.xlu0 %11377, %v11360
  %v11379 = vpop.permute.xlu0 %11378
  %11382 = vset.pattern.permute.xlu0 0
  %11383 = vperm.xlu0 %11382, %v11361
  %v11384 = vpop.permute.xlu0 %11383
  %11387 = vset.pattern.permute.xlu0 0
  %11388 = vperm.xlu0 %11387, %v11362
  %v11389 = vpop.permute.xlu0 %11388
  %11392 = vset.pattern.permute.xlu0 0
  %11393 = vperm.xlu0 %11392, %v11363
  %v11394 = vpop.permute.xlu0 %11393
  %11397 = vset.pattern.permute.xlu0 0
  %11398 = vperm.xlu0 %11397, %v11364
  %v11399 = vpop.permute.xlu0 %11398
  %11402 = vset.pattern.permute.xlu0 0
  %11403 = vperm.xlu0 %11402, %v11365
  %v11404 = vpop.permute.xlu0 %11403
  %v11406 = vmul.f32 %v10846, %v11369
  %v11407 = vmul.f32 %v10847, %v11369
  %v11408 = vmul.f32 %v10848, %v11369
  %v11409 = vmul.f32 %v10849, %v11369
  %v11410 = vmul.f32 %v10850, %v11369
  %v11411 = vmul.f32 %v10851, %v11369
  %v11412 = vmul.f32 %v10852, %v11369
  %v11413 = vmul.f32 %v10853, %v11369
  %v11414 = vmul.f32 %v10854, %v11369
  %v11415 = vmul.f32 %v10855, %v11369
  %v11416 = vmul.f32 %v10856, %v11369
  %v11417 = vmul.f32 %v10857, %v11369
  %v11418 = vmul.f32 %v10858, %v11369
  %v11419 = vmul.f32 %v10859, %v11369
  %v11420 = vmul.f32 %v10860, %v11369
  %v11421 = vmul.f32 %v10861, %v11369
  %v11422 = vmul.f32 %v10862, %v11369
  %v11423 = vmul.f32 %v10863, %v11369
  %v11424 = vmul.f32 %v10864, %v11369
  %v11425 = vmul.f32 %v10865, %v11369
  %v11426 = vmul.f32 %v10866, %v11369
  %v11427 = vmul.f32 %v10867, %v11369
  %v11428 = vmul.f32 %v10868, %v11369
  %v11429 = vmul.f32 %v10869, %v11369
  %v11430 = vmul.f32 %v10870, %v11369
  %v11431 = vmul.f32 %v10871, %v11369
  %v11432 = vmul.f32 %v10872, %v11369
  %v11433 = vmul.f32 %v10873, %v11369
  %v11434 = vmul.f32 %v10874, %v11369
  %v11435 = vmul.f32 %v10875, %v11369
  %v11436 = vmul.f32 %v10876, %v11369
  %v11437 = vmul.f32 %v10877, %v11369
  %v11438 = vmul.f32 %v10878, %v11369
  %v11439 = vmul.f32 %v10879, %v11369
  %v11440 = vmul.f32 %v10880, %v11369
  %v11441 = vmul.f32 %v10881, %v11369
  %v11442 = vmul.f32 %v10882, %v11369
  %v11443 = vmul.f32 %v10883, %v11369
  %v11444 = vmul.f32 %v10884, %v11369
  %v11445 = vmul.f32 %v10885, %v11369
  %v11446 = vmul.f32 %v10886, %v11369
  %v11447 = vmul.f32 %v10887, %v11369
  %v11448 = vmul.f32 %v10888, %v11369
  %v11449 = vmul.f32 %v10889, %v11369
  %v11450 = vmul.f32 %v10890, %v11369
  %v11451 = vmul.f32 %v10891, %v11369
  %v11452 = vmul.f32 %v10892, %v11369
  %v11453 = vmul.f32 %v10893, %v11369
  %v11454 = vmul.f32 %v10894, %v11369
  %v11455 = vmul.f32 %v10895, %v11369
  %v11456 = vmul.f32 %v10896, %v11369
  %v11457 = vmul.f32 %v10897, %v11369
  %v11458 = vmul.f32 %v10898, %v11369
  %v11459 = vmul.f32 %v10899, %v11369
  %v11460 = vmul.f32 %v10900, %v11369
  %v11461 = vmul.f32 %v10901, %v11369
  %v11462 = vmul.f32 %v10902, %v11369
  %v11463 = vmul.f32 %v10903, %v11369
  %v11464 = vmul.f32 %v10904, %v11369
  %v11465 = vmul.f32 %v10905, %v11369
  %v11466 = vmul.f32 %v10906, %v11369
  %v11467 = vmul.f32 %v10907, %v11369
  %v11468 = vmul.f32 %v10908, %v11369
  %v11469 = vmul.f32 %v10909, %v11369
  %v11470 = vmul.f32 %v10910, %v11374
  %v11471 = vmul.f32 %v10911, %v11374
  %v11472 = vmul.f32 %v10912, %v11374
  %v11473 = vmul.f32 %v10913, %v11374
  %v11474 = vmul.f32 %v10914, %v11374
  %v11475 = vmul.f32 %v10915, %v11374
  %v11476 = vmul.f32 %v10916, %v11374
  %v11477 = vmul.f32 %v10917, %v11374
  %v11478 = vmul.f32 %v10918, %v11374
  %v11479 = vmul.f32 %v10919, %v11374
  %v11480 = vmul.f32 %v10920, %v11374
  %v11481 = vmul.f32 %v10921, %v11374
  %v11482 = vmul.f32 %v10922, %v11374
  %v11483 = vmul.f32 %v10923, %v11374
  %v11484 = vmul.f32 %v10924, %v11374
  %v11485 = vmul.f32 %v10925, %v11374
  %v11486 = vmul.f32 %v10926, %v11374
  %v11487 = vmul.f32 %v10927, %v11374
  %v11488 = vmul.f32 %v10928, %v11374
  %v11489 = vmul.f32 %v10929, %v11374
  %v11490 = vmul.f32 %v10930, %v11374
  %v11491 = vmul.f32 %v10931, %v11374
  %v11492 = vmul.f32 %v10932, %v11374
  %v11493 = vmul.f32 %v10933, %v11374
  %v11494 = vmul.f32 %v10934, %v11374
  %v11495 = vmul.f32 %v10935, %v11374
  %v11496 = vmul.f32 %v10936, %v11374
  %v11497 = vmul.f32 %v10937, %v11374
  %v11498 = vmul.f32 %v10938, %v11374
  %v11499 = vmul.f32 %v10939, %v11374
  %v11500 = vmul.f32 %v10940, %v11374
  %v11501 = vmul.f32 %v10941, %v11374
  %v11502 = vmul.f32 %v10942, %v11374
  %v11503 = vmul.f32 %v10943, %v11374
  %v11504 = vmul.f32 %v10944, %v11374
  %v11505 = vmul.f32 %v10945, %v11374
  %v11506 = vmul.f32 %v10946, %v11374
  %v11507 = vmul.f32 %v10947, %v11374
  %v11508 = vmul.f32 %v10948, %v11374
  %v11509 = vmul.f32 %v10949, %v11374
  %v11510 = vmul.f32 %v10950, %v11374
  %v11511 = vmul.f32 %v10951, %v11374
  %v11512 = vmul.f32 %v10952, %v11374
  %v11513 = vmul.f32 %v10953, %v11374
  %v11514 = vmul.f32 %v10954, %v11374
  %v11515 = vmul.f32 %v10955, %v11374
  %v11516 = vmul.f32 %v10956, %v11374
  %v11517 = vmul.f32 %v10957, %v11374
  %v11518 = vmul.f32 %v10958, %v11374
  %v11519 = vmul.f32 %v10959, %v11374
  %v11520 = vmul.f32 %v10960, %v11374
  %v11521 = vmul.f32 %v10961, %v11374
  %v11522 = vmul.f32 %v10962, %v11374
  %v11523 = vmul.f32 %v10963, %v11374
  %v11524 = vmul.f32 %v10964, %v11374
  %v11525 = vmul.f32 %v10965, %v11374
  %v11526 = vmul.f32 %v10966, %v11374
  %v11527 = vmul.f32 %v10967, %v11374
  %v11528 = vmul.f32 %v10968, %v11374
  %v11529 = vmul.f32 %v10969, %v11374
  %v11530 = vmul.f32 %v10970, %v11374
  %v11531 = vmul.f32 %v10971, %v11374
  %v11532 = vmul.f32 %v10972, %v11374
  %v11533 = vmul.f32 %v10973, %v11374
  %v11534 = vmul.f32 %v10974, %v11379
  %v11535 = vmul.f32 %v10975, %v11379
  %v11536 = vmul.f32 %v10976, %v11379
  %v11537 = vmul.f32 %v10977, %v11379
  %v11538 = vmul.f32 %v10978, %v11379
  %v11539 = vmul.f32 %v10979, %v11379
  %v11540 = vmul.f32 %v10980, %v11379
  %v11541 = vmul.f32 %v10981, %v11379
  %v11542 = vmul.f32 %v10982, %v11379
  %v11543 = vmul.f32 %v10983, %v11379
  %v11544 = vmul.f32 %v10984, %v11379
  %v11545 = vmul.f32 %v10985, %v11379
  %v11546 = vmul.f32 %v10986, %v11379
  %v11547 = vmul.f32 %v10987, %v11379
  %v11548 = vmul.f32 %v10988, %v11379
  %v11549 = vmul.f32 %v10989, %v11379
  %v11550 = vmul.f32 %v10990, %v11379
  %v11551 = vmul.f32 %v10991, %v11379
  %v11552 = vmul.f32 %v10992, %v11379
  %v11553 = vmul.f32 %v10993, %v11379
  %v11554 = vmul.f32 %v10994, %v11379
  %v11555 = vmul.f32 %v10995, %v11379
  %v11556 = vmul.f32 %v10996, %v11379
  %v11557 = vmul.f32 %v10997, %v11379
  %v11558 = vmul.f32 %v10998, %v11379
  %v11559 = vmul.f32 %v10999, %v11379
  %v11560 = vmul.f32 %v11000, %v11379
  %v11561 = vmul.f32 %v11001, %v11379
  %v11562 = vmul.f32 %v11002, %v11379
  %v11563 = vmul.f32 %v11003, %v11379
  %v11564 = vmul.f32 %v11004, %v11379
  %v11565 = vmul.f32 %v11005, %v11379
  %v11566 = vmul.f32 %v11006, %v11379
  %v11567 = vmul.f32 %v11007, %v11379
  %v11568 = vmul.f32 %v11008, %v11379
  %v11569 = vmul.f32 %v11009, %v11379
  %v11570 = vmul.f32 %v11010, %v11379
  %v11571 = vmul.f32 %v11011, %v11379
  %v11572 = vmul.f32 %v11012, %v11379
  %v11573 = vmul.f32 %v11013, %v11379
  %v11574 = vmul.f32 %v11014, %v11379
  %v11575 = vmul.f32 %v11015, %v11379
  %v11576 = vmul.f32 %v11016, %v11379
  %v11577 = vmul.f32 %v11017, %v11379
  %v11578 = vmul.f32 %v11018, %v11379
  %v11579 = vmul.f32 %v11019, %v11379
  %v11580 = vmul.f32 %v11020, %v11379
  %v11581 = vmul.f32 %v11021, %v11379
  %v11582 = vmul.f32 %v11022, %v11379
  %v11583 = vmul.f32 %v11023, %v11379
  %v11584 = vmul.f32 %v11024, %v11379
  %v11585 = vmul.f32 %v11025, %v11379
  %v11586 = vmul.f32 %v11026, %v11379
  %v11587 = vmul.f32 %v11027, %v11379
  %v11588 = vmul.f32 %v11028, %v11379
  %v11589 = vmul.f32 %v11029, %v11379
  %v11590 = vmul.f32 %v11030, %v11379
  %v11591 = vmul.f32 %v11031, %v11379
  %v11592 = vmul.f32 %v11032, %v11379
  %v11593 = vmul.f32 %v11033, %v11379
  %v11594 = vmul.f32 %v11034, %v11379
  %v11595 = vmul.f32 %v11035, %v11379
  %v11596 = vmul.f32 %v11036, %v11379
  %v11597 = vmul.f32 %v11037, %v11379
  %v11598 = vmul.f32 %v11038, %v11384
  %v11599 = vmul.f32 %v11039, %v11384
  %v11600 = vmul.f32 %v11040, %v11384
  %v11601 = vmul.f32 %v11041, %v11384
  %v11602 = vmul.f32 %v11042, %v11384
  %v11603 = vmul.f32 %v11043, %v11384
  %v11604 = vmul.f32 %v11044, %v11384
  %v11605 = vmul.f32 %v11045, %v11384
  %v11606 = vmul.f32 %v11046, %v11384
  %v11607 = vmul.f32 %v11047, %v11384
  %v11608 = vmul.f32 %v11048, %v11384
  %v11609 = vmul.f32 %v11049, %v11384
  %v11610 = vmul.f32 %v11050, %v11384
  %v11611 = vmul.f32 %v11051, %v11384
  %v11612 = vmul.f32 %v11052, %v11384
  %v11613 = vmul.f32 %v11053, %v11384
  %v11614 = vmul.f32 %v11054, %v11384
  %v11615 = vmul.f32 %v11055, %v11384
  %v11616 = vmul.f32 %v11056, %v11384
  %v11617 = vmul.f32 %v11057, %v11384
  %v11618 = vmul.f32 %v11058, %v11384
  %v11619 = vmul.f32 %v11059, %v11384
  %v11620 = vmul.f32 %v11060, %v11384
  %v11621 = vmul.f32 %v11061, %v11384
  %v11622 = vmul.f32 %v11062, %v11384
  %v11623 = vmul.f32 %v11063, %v11384
  %v11624 = vmul.f32 %v11064, %v11384
  %v11625 = vmul.f32 %v11065, %v11384
  %v11626 = vmul.f32 %v11066, %v11384
  %v11627 = vmul.f32 %v11067, %v11384
  %v11628 = vmul.f32 %v11068, %v11384
  %v11629 = vmul.f32 %v11069, %v11384
  %v11630 = vmul.f32 %v11070, %v11384
  %v11631 = vmul.f32 %v11071, %v11384
  %v11632 = vmul.f32 %v11072, %v11384
  %v11633 = vmul.f32 %v11073, %v11384
  %v11634 = vmul.f32 %v11074, %v11384
  %v11635 = vmul.f32 %v11075, %v11384
  %v11636 = vmul.f32 %v11076, %v11384
  %v11637 = vmul.f32 %v11077, %v11384
  %v11638 = vmul.f32 %v11078, %v11384
  %v11639 = vmul.f32 %v11079, %v11384
  %v11640 = vmul.f32 %v11080, %v11384
  %v11641 = vmul.f32 %v11081, %v11384
  %v11642 = vmul.f32 %v11082, %v11384
  %v11643 = vmul.f32 %v11083, %v11384
  %v11644 = vmul.f32 %v11084, %v11384
  %v11645 = vmul.f32 %v11085, %v11384
  %v11646 = vmul.f32 %v11086, %v11384
  %v11647 = vmul.f32 %v11087, %v11384
  %v11648 = vmul.f32 %v11088, %v11384
  %v11649 = vmul.f32 %v11089, %v11384
  %v11650 = vmul.f32 %v11090, %v11384
  %v11651 = vmul.f32 %v11091, %v11384
  %v11652 = vmul.f32 %v11092, %v11384
  %v11653 = vmul.f32 %v11093, %v11384
  %v11654 = vmul.f32 %v11094, %v11384
  %v11655 = vmul.f32 %v11095, %v11384
  %v11656 = vmul.f32 %v11096, %v11384
  %v11657 = vmul.f32 %v11097, %v11384
  %v11658 = vmul.f32 %v11098, %v11384
  %v11659 = vmul.f32 %v11099, %v11384
  %v11660 = vmul.f32 %v11100, %v11384
  %v11661 = vmul.f32 %v11101, %v11384
  %v11662 = vmul.f32 %v11102, %v11389
  %v11663 = vmul.f32 %v11103, %v11389
  %v11664 = vmul.f32 %v11104, %v11389
  %v11665 = vmul.f32 %v11105, %v11389
  %v11666 = vmul.f32 %v11106, %v11389
  %v11667 = vmul.f32 %v11107, %v11389
  %v11668 = vmul.f32 %v11108, %v11389
  %v11669 = vmul.f32 %v11109, %v11389
  %v11670 = vmul.f32 %v11110, %v11389
  %v11671 = vmul.f32 %v11111, %v11389
  %v11672 = vmul.f32 %v11112, %v11389
  %v11673 = vmul.f32 %v11113, %v11389
  %v11674 = vmul.f32 %v11114, %v11389
  %v11675 = vmul.f32 %v11115, %v11389
  %v11676 = vmul.f32 %v11116, %v11389
  %v11677 = vmul.f32 %v11117, %v11389
  %v11678 = vmul.f32 %v11118, %v11389
  %v11679 = vmul.f32 %v11119, %v11389
  %v11680 = vmul.f32 %v11120, %v11389
  %v11681 = vmul.f32 %v11121, %v11389
  %v11682 = vmul.f32 %v11122, %v11389
  %v11683 = vmul.f32 %v11123, %v11389
  %v11684 = vmul.f32 %v11124, %v11389
  %v11685 = vmul.f32 %v11125, %v11389
  %v11686 = vmul.f32 %v11126, %v11389
  %v11687 = vmul.f32 %v11127, %v11389
  %v11688 = vmul.f32 %v11128, %v11389
  %v11689 = vmul.f32 %v11129, %v11389
  %v11690 = vmul.f32 %v11130, %v11389
  %v11691 = vmul.f32 %v11131, %v11389
  %v11692 = vmul.f32 %v11132, %v11389
  %v11693 = vmul.f32 %v11133, %v11389
  %v11694 = vmul.f32 %v11134, %v11389
  %v11695 = vmul.f32 %v11135, %v11389
  %v11696 = vmul.f32 %v11136, %v11389
  %v11697 = vmul.f32 %v11137, %v11389
  %v11698 = vmul.f32 %v11138, %v11389
  %v11699 = vmul.f32 %v11139, %v11389
  %v11700 = vmul.f32 %v11140, %v11389
  %v11701 = vmul.f32 %v11141, %v11389
  %v11702 = vmul.f32 %v11142, %v11389
  %v11703 = vmul.f32 %v11143, %v11389
  %v11704 = vmul.f32 %v11144, %v11389
  %v11705 = vmul.f32 %v11145, %v11389
  %v11706 = vmul.f32 %v11146, %v11389
  %v11707 = vmul.f32 %v11147, %v11389
  %v11708 = vmul.f32 %v11148, %v11389
  %v11709 = vmul.f32 %v11149, %v11389
  %v11710 = vmul.f32 %v11150, %v11389
  %v11711 = vmul.f32 %v11151, %v11389
  %v11712 = vmul.f32 %v11152, %v11389
  %v11713 = vmul.f32 %v11153, %v11389
  %v11714 = vmul.f32 %v11154, %v11389
  %v11715 = vmul.f32 %v11155, %v11389
  %v11716 = vmul.f32 %v11156, %v11389
  %v11717 = vmul.f32 %v11157, %v11389
  %v11718 = vmul.f32 %v11158, %v11389
  %v11719 = vmul.f32 %v11159, %v11389
  %v11720 = vmul.f32 %v11160, %v11389
  %v11721 = vmul.f32 %v11161, %v11389
  %v11722 = vmul.f32 %v11162, %v11389
  %v11723 = vmul.f32 %v11163, %v11389
  %v11724 = vmul.f32 %v11164, %v11389
  %v11725 = vmul.f32 %v11165, %v11389
  %v11726 = vmul.f32 %v11166, %v11394
  %v11727 = vmul.f32 %v11167, %v11394
  %v11728 = vmul.f32 %v11168, %v11394
  %v11729 = vmul.f32 %v11169, %v11394
  %v11730 = vmul.f32 %v11170, %v11394
  %v11731 = vmul.f32 %v11171, %v11394
  %v11732 = vmul.f32 %v11172, %v11394
  %v11733 = vmul.f32 %v11173, %v11394
  %v11734 = vmul.f32 %v11174, %v11394
  %v11735 = vmul.f32 %v11175, %v11394
  %v11736 = vmul.f32 %v11176, %v11394
  %v11737 = vmul.f32 %v11177, %v11394
  %v11738 = vmul.f32 %v11178, %v11394
  %v11739 = vmul.f32 %v11179, %v11394
  %v11740 = vmul.f32 %v11180, %v11394
  %v11741 = vmul.f32 %v11181, %v11394
  %v11742 = vmul.f32 %v11182, %v11394
  %v11743 = vmul.f32 %v11183, %v11394
  %v11744 = vmul.f32 %v11184, %v11394
  %v11745 = vmul.f32 %v11185, %v11394
  %v11746 = vmul.f32 %v11186, %v11394
  %v11747 = vmul.f32 %v11187, %v11394
  %v11748 = vmul.f32 %v11188, %v11394
  %v11749 = vmul.f32 %v11189, %v11394
  %v11750 = vmul.f32 %v11190, %v11394
  %v11751 = vmul.f32 %v11191, %v11394
  %v11752 = vmul.f32 %v11192, %v11394
  %v11753 = vmul.f32 %v11193, %v11394
  %v11754 = vmul.f32 %v11194, %v11394
  %v11755 = vmul.f32 %v11195, %v11394
  %v11756 = vmul.f32 %v11196, %v11394
  %v11757 = vmul.f32 %v11197, %v11394
  %v11758 = vmul.f32 %v11198, %v11394
  %v11759 = vmul.f32 %v11199, %v11394
  %v11760 = vmul.f32 %v11200, %v11394
  %v11761 = vmul.f32 %v11201, %v11394
  %v11762 = vmul.f32 %v11202, %v11394
  %v11763 = vmul.f32 %v11203, %v11394
  %v11764 = vmul.f32 %v11204, %v11394
  %v11765 = vmul.f32 %v11205, %v11394
  %v11766 = vmul.f32 %v11206, %v11394
  %v11767 = vmul.f32 %v11207, %v11394
  %v11768 = vmul.f32 %v11208, %v11394
  %v11769 = vmul.f32 %v11209, %v11394
  %v11770 = vmul.f32 %v11210, %v11394
  %v11771 = vmul.f32 %v11211, %v11394
  %v11772 = vmul.f32 %v11212, %v11394
  %v11773 = vmul.f32 %v11213, %v11394
  %v11774 = vmul.f32 %v11214, %v11394
  %v11775 = vmul.f32 %v11215, %v11394
  %v11776 = vmul.f32 %v11216, %v11394
  %v11777 = vmul.f32 %v11217, %v11394
  %v11778 = vmul.f32 %v11218, %v11394
  %v11779 = vmul.f32 %v11219, %v11394
  %v11780 = vmul.f32 %v11220, %v11394
  %v11781 = vmul.f32 %v11221, %v11394
  %v11782 = vmul.f32 %v11222, %v11394
  %v11783 = vmul.f32 %v11223, %v11394
  %v11784 = vmul.f32 %v11224, %v11394
  %v11785 = vmul.f32 %v11225, %v11394
  %v11786 = vmul.f32 %v11226, %v11394
  %v11787 = vmul.f32 %v11227, %v11394
  %v11788 = vmul.f32 %v11228, %v11394
  %v11789 = vmul.f32 %v11229, %v11394
  %v11790 = vmul.f32 %v11230, %v11399
  %v11791 = vmul.f32 %v11231, %v11399
  %v11792 = vmul.f32 %v11232, %v11399
  %v11793 = vmul.f32 %v11233, %v11399
  %v11794 = vmul.f32 %v11234, %v11399
  %v11795 = vmul.f32 %v11235, %v11399
  %v11796 = vmul.f32 %v11236, %v11399
  %v11797 = vmul.f32 %v11237, %v11399
  %v11798 = vmul.f32 %v11238, %v11399
  %v11799 = vmul.f32 %v11239, %v11399
  %v11800 = vmul.f32 %v11240, %v11399
  %v11801 = vmul.f32 %v11241, %v11399
  %v11802 = vmul.f32 %v11242, %v11399
  %v11803 = vmul.f32 %v11243, %v11399
  %v11804 = vmul.f32 %v11244, %v11399
  %v11805 = vmul.f32 %v11245, %v11399
  %v11806 = vmul.f32 %v11246, %v11399
  %v11807 = vmul.f32 %v11247, %v11399
  %v11808 = vmul.f32 %v11248, %v11399
  %v11809 = vmul.f32 %v11249, %v11399
  %v11810 = vmul.f32 %v11250, %v11399
  %v11811 = vmul.f32 %v11251, %v11399
  %v11812 = vmul.f32 %v11252, %v11399
  %v11813 = vmul.f32 %v11253, %v11399
  %v11814 = vmul.f32 %v11254, %v11399
  %v11815 = vmul.f32 %v11255, %v11399
  %v11816 = vmul.f32 %v11256, %v11399
  %v11817 = vmul.f32 %v11257, %v11399
  %v11818 = vmul.f32 %v11258, %v11399
  %v11819 = vmul.f32 %v11259, %v11399
  %v11820 = vmul.f32 %v11260, %v11399
  %v11821 = vmul.f32 %v11261, %v11399
  %v11822 = vmul.f32 %v11262, %v11399
  %v11823 = vmul.f32 %v11263, %v11399
  %v11824 = vmul.f32 %v11264, %v11399
  %v11825 = vmul.f32 %v11265, %v11399
  %v11826 = vmul.f32 %v11266, %v11399
  %v11827 = vmul.f32 %v11267, %v11399
  %v11828 = vmul.f32 %v11268, %v11399
  %v11829 = vmul.f32 %v11269, %v11399
  %v11830 = vmul.f32 %v11270, %v11399
  %v11831 = vmul.f32 %v11271, %v11399
  %v11832 = vmul.f32 %v11272, %v11399
  %v11833 = vmul.f32 %v11273, %v11399
  %v11834 = vmul.f32 %v11274, %v11399
  %v11835 = vmul.f32 %v11275, %v11399
  %v11836 = vmul.f32 %v11276, %v11399
  %v11837 = vmul.f32 %v11277, %v11399
  %v11838 = vmul.f32 %v11278, %v11399
  %v11839 = vmul.f32 %v11279, %v11399
  %v11840 = vmul.f32 %v11280, %v11399
  %v11841 = vmul.f32 %v11281, %v11399
  %v11842 = vmul.f32 %v11282, %v11399
  %v11843 = vmul.f32 %v11283, %v11399
  %v11844 = vmul.f32 %v11284, %v11399
  %v11845 = vmul.f32 %v11285, %v11399
  %v11846 = vmul.f32 %v11286, %v11399
  %v11847 = vmul.f32 %v11287, %v11399
  %v11848 = vmul.f32 %v11288, %v11399
  %v11849 = vmul.f32 %v11289, %v11399
  %v11850 = vmul.f32 %v11290, %v11399
  %v11851 = vmul.f32 %v11291, %v11399
  %v11852 = vmul.f32 %v11292, %v11399
  %v11853 = vmul.f32 %v11293, %v11399
  %v11854 = vmul.f32 %v11294, %v11404
  %v11855 = vmul.f32 %v11295, %v11404
  %v11856 = vmul.f32 %v11296, %v11404
  %v11857 = vmul.f32 %v11297, %v11404
  %v11858 = vmul.f32 %v11298, %v11404
  %v11859 = vmul.f32 %v11299, %v11404
  %v11860 = vmul.f32 %v11300, %v11404
  %v11861 = vmul.f32 %v11301, %v11404
  %v11862 = vmul.f32 %v11302, %v11404
  %v11863 = vmul.f32 %v11303, %v11404
  %v11864 = vmul.f32 %v11304, %v11404
  %v11865 = vmul.f32 %v11305, %v11404
  %v11866 = vmul.f32 %v11306, %v11404
  %v11867 = vmul.f32 %v11307, %v11404
  %v11868 = vmul.f32 %v11308, %v11404
  %v11869 = vmul.f32 %v11309, %v11404
  %v11870 = vmul.f32 %v11310, %v11404
  %v11871 = vmul.f32 %v11311, %v11404
  %v11872 = vmul.f32 %v11312, %v11404
  %v11873 = vmul.f32 %v11313, %v11404
  %v11874 = vmul.f32 %v11314, %v11404
  %v11875 = vmul.f32 %v11315, %v11404
  %v11876 = vmul.f32 %v11316, %v11404
  %v11877 = vmul.f32 %v11317, %v11404
  %v11878 = vmul.f32 %v11318, %v11404
  %v11879 = vmul.f32 %v11319, %v11404
  %v11880 = vmul.f32 %v11320, %v11404
  %v11881 = vmul.f32 %v11321, %v11404
  %v11882 = vmul.f32 %v11322, %v11404
  %v11883 = vmul.f32 %v11323, %v11404
  %v11884 = vmul.f32 %v11324, %v11404
  %v11885 = vmul.f32 %v11325, %v11404
  %v11886 = vmul.f32 %v11326, %v11404
  %v11887 = vmul.f32 %v11327, %v11404
  %v11888 = vmul.f32 %v11328, %v11404
  %v11889 = vmul.f32 %v11329, %v11404
  %v11890 = vmul.f32 %v11330, %v11404
  %v11891 = vmul.f32 %v11331, %v11404
  %v11892 = vmul.f32 %v11332, %v11404
  %v11893 = vmul.f32 %v11333, %v11404
  %v11894 = vmul.f32 %v11334, %v11404
  %v11895 = vmul.f32 %v11335, %v11404
  %v11896 = vmul.f32 %v11336, %v11404
  %v11897 = vmul.f32 %v11337, %v11404
  %v11898 = vmul.f32 %v11338, %v11404
  %v11899 = vmul.f32 %v11339, %v11404
  %v11900 = vmul.f32 %v11340, %v11404
  %v11901 = vmul.f32 %v11341, %v11404
  %v11902 = vmul.f32 %v11342, %v11404
  %v11903 = vmul.f32 %v11343, %v11404
  %v11904 = vmul.f32 %v11344, %v11404
  %v11905 = vmul.f32 %v11345, %v11404
  %v11906 = vmul.f32 %v11346, %v11404
  %v11907 = vmul.f32 %v11347, %v11404
  %v11908 = vmul.f32 %v11348, %v11404
  %v11909 = vmul.f32 %v11349, %v11404
  %v11910 = vmul.f32 %v11350, %v11404
  %v11911 = vmul.f32 %v11351, %v11404
  %v11912 = vmul.f32 %v11352, %v11404
  %v11913 = vmul.f32 %v11353, %v11404
  %v11914 = vmul.f32 %v11354, %v11404
  %v11915 = vmul.f32 %v11355, %v11404
  %v11916 = vmul.f32 %v11356, %v11404
  %v11917 = vmul.f32 %v11357, %v11404
  %v11918 = vadd.f32 %v11406, %v11470
  %v11919 = vadd.f32 %v11918, %v11534
  %v11920 = vadd.f32 %v11919, %v11598
  %v11921 = vadd.f32 %v11920, %v11662
  %v11922 = vadd.f32 %v11921, %v11726
  %v11923 = vadd.f32 %v11922, %v11790
  %v11924 = vadd.f32 %v11923, %v11854
  %v11925 = vrot.slane %v11924, 4
  %v11926 = vadd.f32 %v11924, %v11925
  %v11927 = vrot.slane %v11926, 2
  %v11928 = vadd.f32 %v11926, %v11927
  %v11929 = vrot.slane %v11928, 1
  %v11930 = vadd.f32 %v11928, %v11929
  %v11931 = vadd.f32 %v11407, %v11471
  %v11932 = vadd.f32 %v11931, %v11535
  %v11933 = vadd.f32 %v11932, %v11599
  %v11934 = vadd.f32 %v11933, %v11663
  %v11935 = vadd.f32 %v11934, %v11727
  %v11936 = vadd.f32 %v11935, %v11791
  %v11937 = vadd.f32 %v11936, %v11855
  %v11938 = vrot.slane %v11937, 4
  %v11939 = vadd.f32 %v11937, %v11938
  %v11940 = vrot.slane %v11939, 2
  %v11941 = vadd.f32 %v11939, %v11940
  %v11942 = vrot.slane %v11941, 1
  %v11943 = vadd.f32 %v11941, %v11942
  %v11944 = vadd.f32 %v11408, %v11472
  %v11945 = vadd.f32 %v11944, %v11536
  %v11946 = vadd.f32 %v11945, %v11600
  %v11947 = vadd.f32 %v11946, %v11664
  %v11948 = vadd.f32 %v11947, %v11728
  %v11949 = vadd.f32 %v11948, %v11792
  %v11950 = vadd.f32 %v11949, %v11856
  %v11951 = vrot.slane %v11950, 4
  %v11952 = vadd.f32 %v11950, %v11951
  %v11953 = vrot.slane %v11952, 2
  %v11954 = vadd.f32 %v11952, %v11953
  %v11955 = vrot.slane %v11954, 1
  %v11956 = vadd.f32 %v11954, %v11955
  %v11957 = vadd.f32 %v11409, %v11473
  %v11958 = vadd.f32 %v11957, %v11537
  %v11959 = vadd.f32 %v11958, %v11601
  %v11960 = vadd.f32 %v11959, %v11665
  %v11961 = vadd.f32 %v11960, %v11729
  %v11962 = vadd.f32 %v11961, %v11793
  %v11963 = vadd.f32 %v11962, %v11857
  %v11964 = vrot.slane %v11963, 4
  %v11965 = vadd.f32 %v11963, %v11964
  %v11966 = vrot.slane %v11965, 2
  %v11967 = vadd.f32 %v11965, %v11966
  %v11968 = vrot.slane %v11967, 1
  %v11969 = vadd.f32 %v11967, %v11968
  %v11970 = vadd.f32 %v11410, %v11474
  %v11971 = vadd.f32 %v11970, %v11538
  %v11972 = vadd.f32 %v11971, %v11602
  %v11973 = vadd.f32 %v11972, %v11666
  %v11974 = vadd.f32 %v11973, %v11730
  %v11975 = vadd.f32 %v11974, %v11794
  %v11976 = vadd.f32 %v11975, %v11858
  %v11977 = vrot.slane %v11976, 4
  %v11978 = vadd.f32 %v11976, %v11977
  %v11979 = vrot.slane %v11978, 2
  %v11980 = vadd.f32 %v11978, %v11979
  %v11981 = vrot.slane %v11980, 1
  %v11982 = vadd.f32 %v11980, %v11981
  %v11983 = vadd.f32 %v11411, %v11475
  %v11984 = vadd.f32 %v11983, %v11539
  %v11985 = vadd.f32 %v11984, %v11603
  %v11986 = vadd.f32 %v11985, %v11667
  %v11987 = vadd.f32 %v11986, %v11731
  %v11988 = vadd.f32 %v11987, %v11795
  %v11989 = vadd.f32 %v11988, %v11859
  %v11990 = vrot.slane %v11989, 4
  %v11991 = vadd.f32 %v11989, %v11990
  %v11992 = vrot.slane %v11991, 2
  %v11993 = vadd.f32 %v11991, %v11992
  %v11994 = vrot.slane %v11993, 1
  %v11995 = vadd.f32 %v11993, %v11994
  %v11996 = vadd.f32 %v11412, %v11476
  %v11997 = vadd.f32 %v11996, %v11540
  %v11998 = vadd.f32 %v11997, %v11604
  %v11999 = vadd.f32 %v11998, %v11668
  %v12000 = vadd.f32 %v11999, %v11732
  %v12001 = vadd.f32 %v12000, %v11796
  %v12002 = vadd.f32 %v12001, %v11860
  %v12003 = vrot.slane %v12002, 4
  %v12004 = vadd.f32 %v12002, %v12003
  %v12005 = vrot.slane %v12004, 2
  %v12006 = vadd.f32 %v12004, %v12005
  %v12007 = vrot.slane %v12006, 1
  %v12008 = vadd.f32 %v12006, %v12007
  %v12009 = vadd.f32 %v11413, %v11477
  %v12010 = vadd.f32 %v12009, %v11541
  %v12011 = vadd.f32 %v12010, %v11605
  %v12012 = vadd.f32 %v12011, %v11669
  %v12013 = vadd.f32 %v12012, %v11733
  %v12014 = vadd.f32 %v12013, %v11797
  %v12015 = vadd.f32 %v12014, %v11861
  %v12016 = vrot.slane %v12015, 4
  %v12017 = vadd.f32 %v12015, %v12016
  %v12018 = vrot.slane %v12017, 2
  %v12019 = vadd.f32 %v12017, %v12018
  %v12020 = vrot.slane %v12019, 1
  %v12021 = vadd.f32 %v12019, %v12020
  %v12022 = vadd.f32 %v11414, %v11478
  %v12023 = vadd.f32 %v12022, %v11542
  %v12024 = vadd.f32 %v12023, %v11606
  %v12025 = vadd.f32 %v12024, %v11670
  %v12026 = vadd.f32 %v12025, %v11734
  %v12027 = vadd.f32 %v12026, %v11798
  %v12028 = vadd.f32 %v12027, %v11862
  %v12029 = vrot.slane %v12028, 4
  %v12030 = vadd.f32 %v12028, %v12029
  %v12031 = vrot.slane %v12030, 2
  %v12032 = vadd.f32 %v12030, %v12031
  %v12033 = vrot.slane %v12032, 1
  %v12034 = vadd.f32 %v12032, %v12033
  %v12035 = vadd.f32 %v11415, %v11479
  %v12036 = vadd.f32 %v12035, %v11543
  %v12037 = vadd.f32 %v12036, %v11607
  %v12038 = vadd.f32 %v12037, %v11671
  %v12039 = vadd.f32 %v12038, %v11735
  %v12040 = vadd.f32 %v12039, %v11799
  %v12041 = vadd.f32 %v12040, %v11863
  %v12042 = vrot.slane %v12041, 4
  %v12043 = vadd.f32 %v12041, %v12042
  %v12044 = vrot.slane %v12043, 2
  %v12045 = vadd.f32 %v12043, %v12044
  %v12046 = vrot.slane %v12045, 1
  %v12047 = vadd.f32 %v12045, %v12046
  %v12048 = vadd.f32 %v11416, %v11480
  %v12049 = vadd.f32 %v12048, %v11544
  %v12050 = vadd.f32 %v12049, %v11608
  %v12051 = vadd.f32 %v12050, %v11672
  %v12052 = vadd.f32 %v12051, %v11736
  %v12053 = vadd.f32 %v12052, %v11800
  %v12054 = vadd.f32 %v12053, %v11864
  %v12055 = vrot.slane %v12054, 4
  %v12056 = vadd.f32 %v12054, %v12055
  %v12057 = vrot.slane %v12056, 2
  %v12058 = vadd.f32 %v12056, %v12057
  %v12059 = vrot.slane %v12058, 1
  %v12060 = vadd.f32 %v12058, %v12059
  %v12061 = vadd.f32 %v11417, %v11481
  %v12062 = vadd.f32 %v12061, %v11545
  %v12063 = vadd.f32 %v12062, %v11609
  %v12064 = vadd.f32 %v12063, %v11673
  %v12065 = vadd.f32 %v12064, %v11737
  %v12066 = vadd.f32 %v12065, %v11801
  %v12067 = vadd.f32 %v12066, %v11865
  %v12068 = vrot.slane %v12067, 4
  %v12069 = vadd.f32 %v12067, %v12068
  %v12070 = vrot.slane %v12069, 2
  %v12071 = vadd.f32 %v12069, %v12070
  %v12072 = vrot.slane %v12071, 1
  %v12073 = vadd.f32 %v12071, %v12072
  %v12074 = vadd.f32 %v11418, %v11482
  %v12075 = vadd.f32 %v12074, %v11546
  %v12076 = vadd.f32 %v12075, %v11610
  %v12077 = vadd.f32 %v12076, %v11674
  %v12078 = vadd.f32 %v12077, %v11738
  %v12079 = vadd.f32 %v12078, %v11802
  %v12080 = vadd.f32 %v12079, %v11866
  %v12081 = vrot.slane %v12080, 4
  %v12082 = vadd.f32 %v12080, %v12081
  %v12083 = vrot.slane %v12082, 2
  %v12084 = vadd.f32 %v12082, %v12083
  %v12085 = vrot.slane %v12084, 1
  %v12086 = vadd.f32 %v12084, %v12085
  %v12087 = vadd.f32 %v11419, %v11483
  %v12088 = vadd.f32 %v12087, %v11547
  %v12089 = vadd.f32 %v12088, %v11611
  %v12090 = vadd.f32 %v12089, %v11675
  %v12091 = vadd.f32 %v12090, %v11739
  %v12092 = vadd.f32 %v12091, %v11803
  %v12093 = vadd.f32 %v12092, %v11867
  %v12094 = vrot.slane %v12093, 4
  %v12095 = vadd.f32 %v12093, %v12094
  %v12096 = vrot.slane %v12095, 2
  %v12097 = vadd.f32 %v12095, %v12096
  %v12098 = vrot.slane %v12097, 1
  %v12099 = vadd.f32 %v12097, %v12098
  %v12100 = vadd.f32 %v11420, %v11484
  %v12101 = vadd.f32 %v12100, %v11548
  %v12102 = vadd.f32 %v12101, %v11612
  %v12103 = vadd.f32 %v12102, %v11676
  %v12104 = vadd.f32 %v12103, %v11740
  %v12105 = vadd.f32 %v12104, %v11804
  %v12106 = vadd.f32 %v12105, %v11868
  %v12107 = vrot.slane %v12106, 4
  %v12108 = vadd.f32 %v12106, %v12107
  %v12109 = vrot.slane %v12108, 2
  %v12110 = vadd.f32 %v12108, %v12109
  %v12111 = vrot.slane %v12110, 1
  %v12112 = vadd.f32 %v12110, %v12111
  %v12113 = vadd.f32 %v11421, %v11485
  %v12114 = vadd.f32 %v12113, %v11549
  %v12115 = vadd.f32 %v12114, %v11613
  %v12116 = vadd.f32 %v12115, %v11677
  %v12117 = vadd.f32 %v12116, %v11741
  %v12118 = vadd.f32 %v12117, %v11805
  %v12119 = vadd.f32 %v12118, %v11869
  %v12120 = vrot.slane %v12119, 4
  %v12121 = vadd.f32 %v12119, %v12120
  %v12122 = vrot.slane %v12121, 2
  %v12123 = vadd.f32 %v12121, %v12122
  %v12124 = vrot.slane %v12123, 1
  %v12125 = vadd.f32 %v12123, %v12124
  %v12126 = vadd.f32 %v11422, %v11486
  %v12127 = vadd.f32 %v12126, %v11550
  %v12128 = vadd.f32 %v12127, %v11614
  %v12129 = vadd.f32 %v12128, %v11678
  %v12130 = vadd.f32 %v12129, %v11742
  %v12131 = vadd.f32 %v12130, %v11806
  %v12132 = vadd.f32 %v12131, %v11870
  %v12133 = vrot.slane %v12132, 4
  %v12134 = vadd.f32 %v12132, %v12133
  %v12135 = vrot.slane %v12134, 2
  %v12136 = vadd.f32 %v12134, %v12135
  %v12137 = vrot.slane %v12136, 1
  %v12138 = vadd.f32 %v12136, %v12137
  %v12139 = vadd.f32 %v11423, %v11487
  %v12140 = vadd.f32 %v12139, %v11551
  %v12141 = vadd.f32 %v12140, %v11615
  %v12142 = vadd.f32 %v12141, %v11679
  %v12143 = vadd.f32 %v12142, %v11743
  %v12144 = vadd.f32 %v12143, %v11807
  %v12145 = vadd.f32 %v12144, %v11871
  %v12146 = vrot.slane %v12145, 4
  %v12147 = vadd.f32 %v12145, %v12146
  %v12148 = vrot.slane %v12147, 2
  %v12149 = vadd.f32 %v12147, %v12148
  %v12150 = vrot.slane %v12149, 1
  %v12151 = vadd.f32 %v12149, %v12150
  %v12152 = vadd.f32 %v11424, %v11488
  %v12153 = vadd.f32 %v12152, %v11552
  %v12154 = vadd.f32 %v12153, %v11616
  %v12155 = vadd.f32 %v12154, %v11680
  %v12156 = vadd.f32 %v12155, %v11744
  %v12157 = vadd.f32 %v12156, %v11808
  %v12158 = vadd.f32 %v12157, %v11872
  %v12159 = vrot.slane %v12158, 4
  %v12160 = vadd.f32 %v12158, %v12159
  %v12161 = vrot.slane %v12160, 2
  %v12162 = vadd.f32 %v12160, %v12161
  %v12163 = vrot.slane %v12162, 1
  %v12164 = vadd.f32 %v12162, %v12163
  %v12165 = vadd.f32 %v11425, %v11489
  %v12166 = vadd.f32 %v12165, %v11553
  %v12167 = vadd.f32 %v12166, %v11617
  %v12168 = vadd.f32 %v12167, %v11681
  %v12169 = vadd.f32 %v12168, %v11745
  %v12170 = vadd.f32 %v12169, %v11809
  %v12171 = vadd.f32 %v12170, %v11873
  %v12172 = vrot.slane %v12171, 4
  %v12173 = vadd.f32 %v12171, %v12172
  %v12174 = vrot.slane %v12173, 2
  %v12175 = vadd.f32 %v12173, %v12174
  %v12176 = vrot.slane %v12175, 1
  %v12177 = vadd.f32 %v12175, %v12176
  %v12178 = vadd.f32 %v11426, %v11490
  %v12179 = vadd.f32 %v12178, %v11554
  %v12180 = vadd.f32 %v12179, %v11618
  %v12181 = vadd.f32 %v12180, %v11682
  %v12182 = vadd.f32 %v12181, %v11746
  %v12183 = vadd.f32 %v12182, %v11810
  %v12184 = vadd.f32 %v12183, %v11874
  %v12185 = vrot.slane %v12184, 4
  %v12186 = vadd.f32 %v12184, %v12185
  %v12187 = vrot.slane %v12186, 2
  %v12188 = vadd.f32 %v12186, %v12187
  %v12189 = vrot.slane %v12188, 1
  %v12190 = vadd.f32 %v12188, %v12189
  %v12191 = vadd.f32 %v11427, %v11491
  %v12192 = vadd.f32 %v12191, %v11555
  %v12193 = vadd.f32 %v12192, %v11619
  %v12194 = vadd.f32 %v12193, %v11683
  %v12195 = vadd.f32 %v12194, %v11747
  %v12196 = vadd.f32 %v12195, %v11811
  %v12197 = vadd.f32 %v12196, %v11875
  %v12198 = vrot.slane %v12197, 4
  %v12199 = vadd.f32 %v12197, %v12198
  %v12200 = vrot.slane %v12199, 2
  %v12201 = vadd.f32 %v12199, %v12200
  %v12202 = vrot.slane %v12201, 1
  %v12203 = vadd.f32 %v12201, %v12202
  %v12204 = vadd.f32 %v11428, %v11492
  %v12205 = vadd.f32 %v12204, %v11556
  %v12206 = vadd.f32 %v12205, %v11620
  %v12207 = vadd.f32 %v12206, %v11684
  %v12208 = vadd.f32 %v12207, %v11748
  %v12209 = vadd.f32 %v12208, %v11812
  %v12210 = vadd.f32 %v12209, %v11876
  %v12211 = vrot.slane %v12210, 4
  %v12212 = vadd.f32 %v12210, %v12211
  %v12213 = vrot.slane %v12212, 2
  %v12214 = vadd.f32 %v12212, %v12213
  %v12215 = vrot.slane %v12214, 1
  %v12216 = vadd.f32 %v12214, %v12215
  %v12217 = vadd.f32 %v11429, %v11493
  %v12218 = vadd.f32 %v12217, %v11557
  %v12219 = vadd.f32 %v12218, %v11621
  %v12220 = vadd.f32 %v12219, %v11685
  %v12221 = vadd.f32 %v12220, %v11749
  %v12222 = vadd.f32 %v12221, %v11813
  %v12223 = vadd.f32 %v12222, %v11877
  %v12224 = vrot.slane %v12223, 4
  %v12225 = vadd.f32 %v12223, %v12224
  %v12226 = vrot.slane %v12225, 2
  %v12227 = vadd.f32 %v12225, %v12226
  %v12228 = vrot.slane %v12227, 1
  %v12229 = vadd.f32 %v12227, %v12228
  %v12230 = vadd.f32 %v11430, %v11494
  %v12231 = vadd.f32 %v12230, %v11558
  %v12232 = vadd.f32 %v12231, %v11622
  %v12233 = vadd.f32 %v12232, %v11686
  %v12234 = vadd.f32 %v12233, %v11750
  %v12235 = vadd.f32 %v12234, %v11814
  %v12236 = vadd.f32 %v12235, %v11878
  %v12237 = vrot.slane %v12236, 4
  %v12238 = vadd.f32 %v12236, %v12237
  %v12239 = vrot.slane %v12238, 2
  %v12240 = vadd.f32 %v12238, %v12239
  %v12241 = vrot.slane %v12240, 1
  %v12242 = vadd.f32 %v12240, %v12241
  %v12243 = vadd.f32 %v11431, %v11495
  %v12244 = vadd.f32 %v12243, %v11559
  %v12245 = vadd.f32 %v12244, %v11623
  %v12246 = vadd.f32 %v12245, %v11687
  %v12247 = vadd.f32 %v12246, %v11751
  %v12248 = vadd.f32 %v12247, %v11815
  %v12249 = vadd.f32 %v12248, %v11879
  %v12250 = vrot.slane %v12249, 4
  %v12251 = vadd.f32 %v12249, %v12250
  %v12252 = vrot.slane %v12251, 2
  %v12253 = vadd.f32 %v12251, %v12252
  %v12254 = vrot.slane %v12253, 1
  %v12255 = vadd.f32 %v12253, %v12254
  %v12256 = vadd.f32 %v11432, %v11496
  %v12257 = vadd.f32 %v12256, %v11560
  %v12258 = vadd.f32 %v12257, %v11624
  %v12259 = vadd.f32 %v12258, %v11688
  %v12260 = vadd.f32 %v12259, %v11752
  %v12261 = vadd.f32 %v12260, %v11816
  %v12262 = vadd.f32 %v12261, %v11880
  %v12263 = vrot.slane %v12262, 4
  %v12264 = vadd.f32 %v12262, %v12263
  %v12265 = vrot.slane %v12264, 2
  %v12266 = vadd.f32 %v12264, %v12265
  %v12267 = vrot.slane %v12266, 1
  %v12268 = vadd.f32 %v12266, %v12267
  %v12269 = vadd.f32 %v11433, %v11497
  %v12270 = vadd.f32 %v12269, %v11561
  %v12271 = vadd.f32 %v12270, %v11625
  %v12272 = vadd.f32 %v12271, %v11689
  %v12273 = vadd.f32 %v12272, %v11753
  %v12274 = vadd.f32 %v12273, %v11817
  %v12275 = vadd.f32 %v12274, %v11881
  %v12276 = vrot.slane %v12275, 4
  %v12277 = vadd.f32 %v12275, %v12276
  %v12278 = vrot.slane %v12277, 2
  %v12279 = vadd.f32 %v12277, %v12278
  %v12280 = vrot.slane %v12279, 1
  %v12281 = vadd.f32 %v12279, %v12280
  %v12282 = vadd.f32 %v11434, %v11498
  %v12283 = vadd.f32 %v12282, %v11562
  %v12284 = vadd.f32 %v12283, %v11626
  %v12285 = vadd.f32 %v12284, %v11690
  %v12286 = vadd.f32 %v12285, %v11754
  %v12287 = vadd.f32 %v12286, %v11818
  %v12288 = vadd.f32 %v12287, %v11882
  %v12289 = vrot.slane %v12288, 4
  %v12290 = vadd.f32 %v12288, %v12289
  %v12291 = vrot.slane %v12290, 2
  %v12292 = vadd.f32 %v12290, %v12291
  %v12293 = vrot.slane %v12292, 1
  %v12294 = vadd.f32 %v12292, %v12293
  %v12295 = vadd.f32 %v11435, %v11499
  %v12296 = vadd.f32 %v12295, %v11563
  %v12297 = vadd.f32 %v12296, %v11627
  %v12298 = vadd.f32 %v12297, %v11691
  %v12299 = vadd.f32 %v12298, %v11755
  %v12300 = vadd.f32 %v12299, %v11819
  %v12301 = vadd.f32 %v12300, %v11883
  %v12302 = vrot.slane %v12301, 4
  %v12303 = vadd.f32 %v12301, %v12302
  %v12304 = vrot.slane %v12303, 2
  %v12305 = vadd.f32 %v12303, %v12304
  %v12306 = vrot.slane %v12305, 1
  %v12307 = vadd.f32 %v12305, %v12306
  %v12308 = vadd.f32 %v11436, %v11500
  %v12309 = vadd.f32 %v12308, %v11564
  %v12310 = vadd.f32 %v12309, %v11628
  %v12311 = vadd.f32 %v12310, %v11692
  %v12312 = vadd.f32 %v12311, %v11756
  %v12313 = vadd.f32 %v12312, %v11820
  %v12314 = vadd.f32 %v12313, %v11884
  %v12315 = vrot.slane %v12314, 4
  %v12316 = vadd.f32 %v12314, %v12315
  %v12317 = vrot.slane %v12316, 2
  %v12318 = vadd.f32 %v12316, %v12317
  %v12319 = vrot.slane %v12318, 1
  %v12320 = vadd.f32 %v12318, %v12319
  %v12321 = vadd.f32 %v11437, %v11501
  %v12322 = vadd.f32 %v12321, %v11565
  %v12323 = vadd.f32 %v12322, %v11629
  %v12324 = vadd.f32 %v12323, %v11693
  %v12325 = vadd.f32 %v12324, %v11757
  %v12326 = vadd.f32 %v12325, %v11821
  %v12327 = vadd.f32 %v12326, %v11885
  %v12328 = vrot.slane %v12327, 4
  %v12329 = vadd.f32 %v12327, %v12328
  %v12330 = vrot.slane %v12329, 2
  %v12331 = vadd.f32 %v12329, %v12330
  %v12332 = vrot.slane %v12331, 1
  %v12333 = vadd.f32 %v12331, %v12332
  %v12334 = vadd.f32 %v11438, %v11502
  %v12335 = vadd.f32 %v12334, %v11566
  %v12336 = vadd.f32 %v12335, %v11630
  %v12337 = vadd.f32 %v12336, %v11694
  %v12338 = vadd.f32 %v12337, %v11758
  %v12339 = vadd.f32 %v12338, %v11822
  %v12340 = vadd.f32 %v12339, %v11886
  %v12341 = vrot.slane %v12340, 4
  %v12342 = vadd.f32 %v12340, %v12341
  %v12343 = vrot.slane %v12342, 2
  %v12344 = vadd.f32 %v12342, %v12343
  %v12345 = vrot.slane %v12344, 1
  %v12346 = vadd.f32 %v12344, %v12345
  %v12347 = vadd.f32 %v11439, %v11503
  %v12348 = vadd.f32 %v12347, %v11567
  %v12349 = vadd.f32 %v12348, %v11631
  %v12350 = vadd.f32 %v12349, %v11695
  %v12351 = vadd.f32 %v12350, %v11759
  %v12352 = vadd.f32 %v12351, %v11823
  %v12353 = vadd.f32 %v12352, %v11887
  %v12354 = vrot.slane %v12353, 4
  %v12355 = vadd.f32 %v12353, %v12354
  %v12356 = vrot.slane %v12355, 2
  %v12357 = vadd.f32 %v12355, %v12356
  %v12358 = vrot.slane %v12357, 1
  %v12359 = vadd.f32 %v12357, %v12358
  %v12360 = vadd.f32 %v11440, %v11504
  %v12361 = vadd.f32 %v12360, %v11568
  %v12362 = vadd.f32 %v12361, %v11632
  %v12363 = vadd.f32 %v12362, %v11696
  %v12364 = vadd.f32 %v12363, %v11760
  %v12365 = vadd.f32 %v12364, %v11824
  %v12366 = vadd.f32 %v12365, %v11888
  %v12367 = vrot.slane %v12366, 4
  %v12368 = vadd.f32 %v12366, %v12367
  %v12369 = vrot.slane %v12368, 2
  %v12370 = vadd.f32 %v12368, %v12369
  %v12371 = vrot.slane %v12370, 1
  %v12372 = vadd.f32 %v12370, %v12371
  %v12373 = vadd.f32 %v11441, %v11505
  %v12374 = vadd.f32 %v12373, %v11569
  %v12375 = vadd.f32 %v12374, %v11633
  %v12376 = vadd.f32 %v12375, %v11697
  %v12377 = vadd.f32 %v12376, %v11761
  %v12378 = vadd.f32 %v12377, %v11825
  %v12379 = vadd.f32 %v12378, %v11889
  %v12380 = vrot.slane %v12379, 4
  %v12381 = vadd.f32 %v12379, %v12380
  %v12382 = vrot.slane %v12381, 2
  %v12383 = vadd.f32 %v12381, %v12382
  %v12384 = vrot.slane %v12383, 1
  %v12385 = vadd.f32 %v12383, %v12384
  %v12386 = vadd.f32 %v11442, %v11506
  %v12387 = vadd.f32 %v12386, %v11570
  %v12388 = vadd.f32 %v12387, %v11634
  %v12389 = vadd.f32 %v12388, %v11698
  %v12390 = vadd.f32 %v12389, %v11762
  %v12391 = vadd.f32 %v12390, %v11826
  %v12392 = vadd.f32 %v12391, %v11890
  %v12393 = vrot.slane %v12392, 4
  %v12394 = vadd.f32 %v12392, %v12393
  %v12395 = vrot.slane %v12394, 2
  %v12396 = vadd.f32 %v12394, %v12395
  %v12397 = vrot.slane %v12396, 1
  %v12398 = vadd.f32 %v12396, %v12397
  %v12399 = vadd.f32 %v11443, %v11507
  %v12400 = vadd.f32 %v12399, %v11571
  %v12401 = vadd.f32 %v12400, %v11635
  %v12402 = vadd.f32 %v12401, %v11699
  %v12403 = vadd.f32 %v12402, %v11763
  %v12404 = vadd.f32 %v12403, %v11827
  %v12405 = vadd.f32 %v12404, %v11891
  %v12406 = vrot.slane %v12405, 4
  %v12407 = vadd.f32 %v12405, %v12406
  %v12408 = vrot.slane %v12407, 2
  %v12409 = vadd.f32 %v12407, %v12408
  %v12410 = vrot.slane %v12409, 1
  %v12411 = vadd.f32 %v12409, %v12410
  %v12412 = vadd.f32 %v11444, %v11508
  %v12413 = vadd.f32 %v12412, %v11572
  %v12414 = vadd.f32 %v12413, %v11636
  %v12415 = vadd.f32 %v12414, %v11700
  %v12416 = vadd.f32 %v12415, %v11764
  %v12417 = vadd.f32 %v12416, %v11828
  %v12418 = vadd.f32 %v12417, %v11892
  %v12419 = vrot.slane %v12418, 4
  %v12420 = vadd.f32 %v12418, %v12419
  %v12421 = vrot.slane %v12420, 2
  %v12422 = vadd.f32 %v12420, %v12421
  %v12423 = vrot.slane %v12422, 1
  %v12424 = vadd.f32 %v12422, %v12423
  %v12425 = vadd.f32 %v11445, %v11509
  %v12426 = vadd.f32 %v12425, %v11573
  %v12427 = vadd.f32 %v12426, %v11637
  %v12428 = vadd.f32 %v12427, %v11701
  %v12429 = vadd.f32 %v12428, %v11765
  %v12430 = vadd.f32 %v12429, %v11829
  %v12431 = vadd.f32 %v12430, %v11893
  %v12432 = vrot.slane %v12431, 4
  %v12433 = vadd.f32 %v12431, %v12432
  %v12434 = vrot.slane %v12433, 2
  %v12435 = vadd.f32 %v12433, %v12434
  %v12436 = vrot.slane %v12435, 1
  %v12437 = vadd.f32 %v12435, %v12436
  %v12438 = vadd.f32 %v11446, %v11510
  %v12439 = vadd.f32 %v12438, %v11574
  %v12440 = vadd.f32 %v12439, %v11638
  %v12441 = vadd.f32 %v12440, %v11702
  %v12442 = vadd.f32 %v12441, %v11766
  %v12443 = vadd.f32 %v12442, %v11830
  %v12444 = vadd.f32 %v12443, %v11894
  %v12445 = vrot.slane %v12444, 4
  %v12446 = vadd.f32 %v12444, %v12445
  %v12447 = vrot.slane %v12446, 2
  %v12448 = vadd.f32 %v12446, %v12447
  %v12449 = vrot.slane %v12448, 1
  %v12450 = vadd.f32 %v12448, %v12449
  %v12451 = vadd.f32 %v11447, %v11511
  %v12452 = vadd.f32 %v12451, %v11575
  %v12453 = vadd.f32 %v12452, %v11639
  %v12454 = vadd.f32 %v12453, %v11703
  %v12455 = vadd.f32 %v12454, %v11767
  %v12456 = vadd.f32 %v12455, %v11831
  %v12457 = vadd.f32 %v12456, %v11895
  %v12458 = vrot.slane %v12457, 4
  %v12459 = vadd.f32 %v12457, %v12458
  %v12460 = vrot.slane %v12459, 2
  %v12461 = vadd.f32 %v12459, %v12460
  %v12462 = vrot.slane %v12461, 1
  %v12463 = vadd.f32 %v12461, %v12462
  %v12464 = vadd.f32 %v11448, %v11512
  %v12465 = vadd.f32 %v12464, %v11576
  %v12466 = vadd.f32 %v12465, %v11640
  %v12467 = vadd.f32 %v12466, %v11704
  %v12468 = vadd.f32 %v12467, %v11768
  %v12469 = vadd.f32 %v12468, %v11832
  %v12470 = vadd.f32 %v12469, %v11896
  %v12471 = vrot.slane %v12470, 4
  %v12472 = vadd.f32 %v12470, %v12471
  %v12473 = vrot.slane %v12472, 2
  %v12474 = vadd.f32 %v12472, %v12473
  %v12475 = vrot.slane %v12474, 1
  %v12476 = vadd.f32 %v12474, %v12475
  %v12477 = vadd.f32 %v11449, %v11513
  %v12478 = vadd.f32 %v12477, %v11577
  %v12479 = vadd.f32 %v12478, %v11641
  %v12480 = vadd.f32 %v12479, %v11705
  %v12481 = vadd.f32 %v12480, %v11769
  %v12482 = vadd.f32 %v12481, %v11833
  %v12483 = vadd.f32 %v12482, %v11897
  %v12484 = vrot.slane %v12483, 4
  %v12485 = vadd.f32 %v12483, %v12484
  %v12486 = vrot.slane %v12485, 2
  %v12487 = vadd.f32 %v12485, %v12486
  %v12488 = vrot.slane %v12487, 1
  %v12489 = vadd.f32 %v12487, %v12488
  %v12490 = vadd.f32 %v11450, %v11514
  %v12491 = vadd.f32 %v12490, %v11578
  %v12492 = vadd.f32 %v12491, %v11642
  %v12493 = vadd.f32 %v12492, %v11706
  %v12494 = vadd.f32 %v12493, %v11770
  %v12495 = vadd.f32 %v12494, %v11834
  %v12496 = vadd.f32 %v12495, %v11898
  %v12497 = vrot.slane %v12496, 4
  %v12498 = vadd.f32 %v12496, %v12497
  %v12499 = vrot.slane %v12498, 2
  %v12500 = vadd.f32 %v12498, %v12499
  %v12501 = vrot.slane %v12500, 1
  %v12502 = vadd.f32 %v12500, %v12501
  %v12503 = vadd.f32 %v11451, %v11515
  %v12504 = vadd.f32 %v12503, %v11579
  %v12505 = vadd.f32 %v12504, %v11643
  %v12506 = vadd.f32 %v12505, %v11707
  %v12507 = vadd.f32 %v12506, %v11771
  %v12508 = vadd.f32 %v12507, %v11835
  %v12509 = vadd.f32 %v12508, %v11899
  %v12510 = vrot.slane %v12509, 4
  %v12511 = vadd.f32 %v12509, %v12510
  %v12512 = vrot.slane %v12511, 2
  %v12513 = vadd.f32 %v12511, %v12512
  %v12514 = vrot.slane %v12513, 1
  %v12515 = vadd.f32 %v12513, %v12514
  %v12516 = vadd.f32 %v11452, %v11516
  %v12517 = vadd.f32 %v12516, %v11580
  %v12518 = vadd.f32 %v12517, %v11644
  %v12519 = vadd.f32 %v12518, %v11708
  %v12520 = vadd.f32 %v12519, %v11772
  %v12521 = vadd.f32 %v12520, %v11836
  %v12522 = vadd.f32 %v12521, %v11900
  %v12523 = vrot.slane %v12522, 4
  %v12524 = vadd.f32 %v12522, %v12523
  %v12525 = vrot.slane %v12524, 2
  %v12526 = vadd.f32 %v12524, %v12525
  %v12527 = vrot.slane %v12526, 1
  %v12528 = vadd.f32 %v12526, %v12527
  %v12529 = vadd.f32 %v11453, %v11517
  %v12530 = vadd.f32 %v12529, %v11581
  %v12531 = vadd.f32 %v12530, %v11645
  %v12532 = vadd.f32 %v12531, %v11709
  %v12533 = vadd.f32 %v12532, %v11773
  %v12534 = vadd.f32 %v12533, %v11837
  %v12535 = vadd.f32 %v12534, %v11901
  %v12536 = vrot.slane %v12535, 4
  %v12537 = vadd.f32 %v12535, %v12536
  %v12538 = vrot.slane %v12537, 2
  %v12539 = vadd.f32 %v12537, %v12538
  %v12540 = vrot.slane %v12539, 1
  %v12541 = vadd.f32 %v12539, %v12540
  %v12542 = vadd.f32 %v11454, %v11518
  %v12543 = vadd.f32 %v12542, %v11582
  %v12544 = vadd.f32 %v12543, %v11646
  %v12545 = vadd.f32 %v12544, %v11710
  %v12546 = vadd.f32 %v12545, %v11774
  %v12547 = vadd.f32 %v12546, %v11838
  %v12548 = vadd.f32 %v12547, %v11902
  %v12549 = vrot.slane %v12548, 4
  %v12550 = vadd.f32 %v12548, %v12549
  %v12551 = vrot.slane %v12550, 2
  %v12552 = vadd.f32 %v12550, %v12551
  %v12553 = vrot.slane %v12552, 1
  %v12554 = vadd.f32 %v12552, %v12553
  %v12555 = vadd.f32 %v11455, %v11519
  %v12556 = vadd.f32 %v12555, %v11583
  %v12557 = vadd.f32 %v12556, %v11647
  %v12558 = vadd.f32 %v12557, %v11711
  %v12559 = vadd.f32 %v12558, %v11775
  %v12560 = vadd.f32 %v12559, %v11839
  %v12561 = vadd.f32 %v12560, %v11903
  %v12562 = vrot.slane %v12561, 4
  %v12563 = vadd.f32 %v12561, %v12562
  %v12564 = vrot.slane %v12563, 2
  %v12565 = vadd.f32 %v12563, %v12564
  %v12566 = vrot.slane %v12565, 1
  %v12567 = vadd.f32 %v12565, %v12566
  %v12568 = vadd.f32 %v11456, %v11520
  %v12569 = vadd.f32 %v12568, %v11584
  %v12570 = vadd.f32 %v12569, %v11648
  %v12571 = vadd.f32 %v12570, %v11712
  %v12572 = vadd.f32 %v12571, %v11776
  %v12573 = vadd.f32 %v12572, %v11840
  %v12574 = vadd.f32 %v12573, %v11904
  %v12575 = vrot.slane %v12574, 4
  %v12576 = vadd.f32 %v12574, %v12575
  %v12577 = vrot.slane %v12576, 2
  %v12578 = vadd.f32 %v12576, %v12577
  %v12579 = vrot.slane %v12578, 1
  %v12580 = vadd.f32 %v12578, %v12579
  %v12581 = vadd.f32 %v11457, %v11521
  %v12582 = vadd.f32 %v12581, %v11585
  %v12583 = vadd.f32 %v12582, %v11649
  %v12584 = vadd.f32 %v12583, %v11713
  %v12585 = vadd.f32 %v12584, %v11777
  %v12586 = vadd.f32 %v12585, %v11841
  %v12587 = vadd.f32 %v12586, %v11905
  %v12588 = vrot.slane %v12587, 4
  %v12589 = vadd.f32 %v12587, %v12588
  %v12590 = vrot.slane %v12589, 2
  %v12591 = vadd.f32 %v12589, %v12590
  %v12592 = vrot.slane %v12591, 1
  %v12593 = vadd.f32 %v12591, %v12592
  %v12594 = vadd.f32 %v11458, %v11522
  %v12595 = vadd.f32 %v12594, %v11586
  %v12596 = vadd.f32 %v12595, %v11650
  %v12597 = vadd.f32 %v12596, %v11714
  %v12598 = vadd.f32 %v12597, %v11778
  %v12599 = vadd.f32 %v12598, %v11842
  %v12600 = vadd.f32 %v12599, %v11906
  %v12601 = vrot.slane %v12600, 4
  %v12602 = vadd.f32 %v12600, %v12601
  %v12603 = vrot.slane %v12602, 2
  %v12604 = vadd.f32 %v12602, %v12603
  %v12605 = vrot.slane %v12604, 1
  %v12606 = vadd.f32 %v12604, %v12605
  %v12607 = vadd.f32 %v11459, %v11523
  %v12608 = vadd.f32 %v12607, %v11587
  %v12609 = vadd.f32 %v12608, %v11651
  %v12610 = vadd.f32 %v12609, %v11715
  %v12611 = vadd.f32 %v12610, %v11779
  %v12612 = vadd.f32 %v12611, %v11843
  %v12613 = vadd.f32 %v12612, %v11907
  %v12614 = vrot.slane %v12613, 4
  %v12615 = vadd.f32 %v12613, %v12614
  %v12616 = vrot.slane %v12615, 2
  %v12617 = vadd.f32 %v12615, %v12616
  %v12618 = vrot.slane %v12617, 1
  %v12619 = vadd.f32 %v12617, %v12618
  %v12620 = vadd.f32 %v11460, %v11524
  %v12621 = vadd.f32 %v12620, %v11588
  %v12622 = vadd.f32 %v12621, %v11652
  %v12623 = vadd.f32 %v12622, %v11716
  %v12624 = vadd.f32 %v12623, %v11780
  %v12625 = vadd.f32 %v12624, %v11844
  %v12626 = vadd.f32 %v12625, %v11908
  %v12627 = vrot.slane %v12626, 4
  %v12628 = vadd.f32 %v12626, %v12627
  %v12629 = vrot.slane %v12628, 2
  %v12630 = vadd.f32 %v12628, %v12629
  %v12631 = vrot.slane %v12630, 1
  %v12632 = vadd.f32 %v12630, %v12631
  %v12633 = vadd.f32 %v11461, %v11525
  %v12634 = vadd.f32 %v12633, %v11589
  %v12635 = vadd.f32 %v12634, %v11653
  %v12636 = vadd.f32 %v12635, %v11717
  %v12637 = vadd.f32 %v12636, %v11781
  %v12638 = vadd.f32 %v12637, %v11845
  %v12639 = vadd.f32 %v12638, %v11909
  %v12640 = vrot.slane %v12639, 4
  %v12641 = vadd.f32 %v12639, %v12640
  %v12642 = vrot.slane %v12641, 2
  %v12643 = vadd.f32 %v12641, %v12642
  %v12644 = vrot.slane %v12643, 1
  %v12645 = vadd.f32 %v12643, %v12644
  %v12646 = vadd.f32 %v11462, %v11526
  %v12647 = vadd.f32 %v12646, %v11590
  %v12648 = vadd.f32 %v12647, %v11654
  %v12649 = vadd.f32 %v12648, %v11718
  %v12650 = vadd.f32 %v12649, %v11782
  %v12651 = vadd.f32 %v12650, %v11846
  %v12652 = vadd.f32 %v12651, %v11910
  %v12653 = vrot.slane %v12652, 4
  %v12654 = vadd.f32 %v12652, %v12653
  %v12655 = vrot.slane %v12654, 2
  %v12656 = vadd.f32 %v12654, %v12655
  %v12657 = vrot.slane %v12656, 1
  %v12658 = vadd.f32 %v12656, %v12657
  %v12659 = vadd.f32 %v11463, %v11527
  %v12660 = vadd.f32 %v12659, %v11591
  %v12661 = vadd.f32 %v12660, %v11655
  %v12662 = vadd.f32 %v12661, %v11719
  %v12663 = vadd.f32 %v12662, %v11783
  %v12664 = vadd.f32 %v12663, %v11847
  %v12665 = vadd.f32 %v12664, %v11911
  %v12666 = vrot.slane %v12665, 4
  %v12667 = vadd.f32 %v12665, %v12666
  %v12668 = vrot.slane %v12667, 2
  %v12669 = vadd.f32 %v12667, %v12668
  %v12670 = vrot.slane %v12669, 1
  %v12671 = vadd.f32 %v12669, %v12670
  %v12672 = vadd.f32 %v11464, %v11528
  %v12673 = vadd.f32 %v12672, %v11592
  %v12674 = vadd.f32 %v12673, %v11656
  %v12675 = vadd.f32 %v12674, %v11720
  %v12676 = vadd.f32 %v12675, %v11784
  %v12677 = vadd.f32 %v12676, %v11848
  %v12678 = vadd.f32 %v12677, %v11912
  %v12679 = vrot.slane %v12678, 4
  %v12680 = vadd.f32 %v12678, %v12679
  %v12681 = vrot.slane %v12680, 2
  %v12682 = vadd.f32 %v12680, %v12681
  %v12683 = vrot.slane %v12682, 1
  %v12684 = vadd.f32 %v12682, %v12683
  %v12685 = vadd.f32 %v11465, %v11529
  %v12686 = vadd.f32 %v12685, %v11593
  %v12687 = vadd.f32 %v12686, %v11657
  %v12688 = vadd.f32 %v12687, %v11721
  %v12689 = vadd.f32 %v12688, %v11785
  %v12690 = vadd.f32 %v12689, %v11849
  %v12691 = vadd.f32 %v12690, %v11913
  %v12692 = vrot.slane %v12691, 4
  %v12693 = vadd.f32 %v12691, %v12692
  %v12694 = vrot.slane %v12693, 2
  %v12695 = vadd.f32 %v12693, %v12694
  %v12696 = vrot.slane %v12695, 1
  %v12697 = vadd.f32 %v12695, %v12696
  %v12698 = vadd.f32 %v11466, %v11530
  %v12699 = vadd.f32 %v12698, %v11594
  %v12700 = vadd.f32 %v12699, %v11658
  %v12701 = vadd.f32 %v12700, %v11722
  %v12702 = vadd.f32 %v12701, %v11786
  %v12703 = vadd.f32 %v12702, %v11850
  %v12704 = vadd.f32 %v12703, %v11914
  %v12705 = vrot.slane %v12704, 4
  %v12706 = vadd.f32 %v12704, %v12705
  %v12707 = vrot.slane %v12706, 2
  %v12708 = vadd.f32 %v12706, %v12707
  %v12709 = vrot.slane %v12708, 1
  %v12710 = vadd.f32 %v12708, %v12709
  %v12711 = vadd.f32 %v11467, %v11531
  %v12712 = vadd.f32 %v12711, %v11595
  %v12713 = vadd.f32 %v12712, %v11659
  %v12714 = vadd.f32 %v12713, %v11723
  %v12715 = vadd.f32 %v12714, %v11787
  %v12716 = vadd.f32 %v12715, %v11851
  %v12717 = vadd.f32 %v12716, %v11915
  %v12718 = vrot.slane %v12717, 4
  %v12719 = vadd.f32 %v12717, %v12718
  %v12720 = vrot.slane %v12719, 2
  %v12721 = vadd.f32 %v12719, %v12720
  %v12722 = vrot.slane %v12721, 1
  %v12723 = vadd.f32 %v12721, %v12722
  %v12724 = vadd.f32 %v11468, %v11532
  %v12725 = vadd.f32 %v12724, %v11596
  %v12726 = vadd.f32 %v12725, %v11660
  %v12727 = vadd.f32 %v12726, %v11724
  %v12728 = vadd.f32 %v12727, %v11788
  %v12729 = vadd.f32 %v12728, %v11852
  %v12730 = vadd.f32 %v12729, %v11916
  %v12731 = vrot.slane %v12730, 4
  %v12732 = vadd.f32 %v12730, %v12731
  %v12733 = vrot.slane %v12732, 2
  %v12734 = vadd.f32 %v12732, %v12733
  %v12735 = vrot.slane %v12734, 1
  %v12736 = vadd.f32 %v12734, %v12735
  %v12737 = vadd.f32 %v11469, %v11533
  %v12738 = vadd.f32 %v12737, %v11597
  %v12739 = vadd.f32 %v12738, %v11661
  %v12740 = vadd.f32 %v12739, %v11725
  %v12741 = vadd.f32 %v12740, %v11789
  %v12742 = vadd.f32 %v12741, %v11853
  %v12743 = vadd.f32 %v12742, %v11917
  %v12744 = vrot.slane %v12743, 4
  %v12745 = vadd.f32 %v12743, %v12744
  %v12746 = vrot.slane %v12745, 2
  %v12747 = vadd.f32 %v12745, %v12746
  %v12748 = vrot.slane %v12747, 1
  %v12749 = vadd.f32 %v12747, %v12748
  %v12750 = vld [vmem:[#allocation2] sm:$0x1]
  %12752 = vset.pattern.permute.xlu0 0
  %12753 = vperm.xlu0 %12752, %v12750
  %v12754 = vpop.permute.xlu0 %12753
  %v12756 = vlaneseq
  %v12757 = vshrl.u32 %v12756, 7
  %v12758 = vsub.s32 0, %v12757
  %v12759 = vrot.slane %v12754, %v12758
  %v12760 = vadd.f32 %v11930, %v12759
  %v12761 = vadd.f32 %v11943, %v12759
  %v12762 = vadd.f32 %v11956, %v12759
  %v12763 = vadd.f32 %v11969, %v12759
  %v12764 = vadd.f32 %v11982, %v12759
  %v12765 = vadd.f32 %v11995, %v12759
  %v12766 = vadd.f32 %v12008, %v12759
  %v12767 = vadd.f32 %v12021, %v12759
  %v12768 = vadd.f32 %v12034, %v12759
  %v12769 = vadd.f32 %v12047, %v12759
  %v12770 = vadd.f32 %v12060, %v12759
  %v12771 = vadd.f32 %v12073, %v12759
  %v12772 = vadd.f32 %v12086, %v12759
  %v12773 = vadd.f32 %v12099, %v12759
  %v12774 = vadd.f32 %v12112, %v12759
  %v12775 = vadd.f32 %v12125, %v12759
  %v12776 = vadd.f32 %v12138, %v12759
  %v12777 = vadd.f32 %v12151, %v12759
  %v12778 = vadd.f32 %v12164, %v12759
  %v12779 = vadd.f32 %v12177, %v12759
  %v12780 = vadd.f32 %v12190, %v12759
  %v12781 = vadd.f32 %v12203, %v12759
  %v12782 = vadd.f32 %v12216, %v12759
  %v12783 = vadd.f32 %v12229, %v12759
  %v12784 = vadd.f32 %v12242, %v12759
  %v12785 = vadd.f32 %v12255, %v12759
  %v12786 = vadd.f32 %v12268, %v12759
  %v12787 = vadd.f32 %v12281, %v12759
  %v12788 = vadd.f32 %v12294, %v12759
  %v12789 = vadd.f32 %v12307, %v12759
  %v12790 = vadd.f32 %v12320, %v12759
  %v12791 = vadd.f32 %v12333, %v12759
  %v12792 = vadd.f32 %v12346, %v12759
  %v12793 = vadd.f32 %v12359, %v12759
  %v12794 = vadd.f32 %v12372, %v12759
  %v12795 = vadd.f32 %v12385, %v12759
  %v12796 = vadd.f32 %v12398, %v12759
  %v12797 = vadd.f32 %v12411, %v12759
  %v12798 = vadd.f32 %v12424, %v12759
  %v12799 = vadd.f32 %v12437, %v12759
  %v12800 = vadd.f32 %v12450, %v12759
  %v12801 = vadd.f32 %v12463, %v12759
  %v12802 = vadd.f32 %v12476, %v12759
  %v12803 = vadd.f32 %v12489, %v12759
  %v12804 = vadd.f32 %v12502, %v12759
  %v12805 = vadd.f32 %v12515, %v12759
  %v12806 = vadd.f32 %v12528, %v12759
  %v12807 = vadd.f32 %v12541, %v12759
  %v12808 = vadd.f32 %v12554, %v12759
  %v12809 = vadd.f32 %v12567, %v12759
  %v12810 = vadd.f32 %v12580, %v12759
  %v12811 = vadd.f32 %v12593, %v12759
  %v12812 = vadd.f32 %v12606, %v12759
  %v12813 = vadd.f32 %v12619, %v12759
  %v12814 = vadd.f32 %v12632, %v12759
  %v12815 = vadd.f32 %v12645, %v12759
  %v12816 = vadd.f32 %v12658, %v12759
  %v12817 = vadd.f32 %v12671, %v12759
  %v12818 = vadd.f32 %v12684, %v12759
  %v12819 = vadd.f32 %v12697, %v12759
  %v12820 = vadd.f32 %v12710, %v12759
  %v12821 = vadd.f32 %v12723, %v12759
  %v12822 = vadd.f32 %v12736, %v12759
  %v12823 = vadd.f32 %v12749, %v12759
  %v12888 = vcombine.low %v12760, %v12761
  %v12889 = vcombine.low %v12762, %v12763
  %v12890 = vcombine.low %v12764, %v12765
  %v12891 = vcombine.low %v12766, %v12767
  %v12893 = vunpack.c.l.s4 1966171168
  %v12894 = vunpack.c.0.s8 %v12893
  %v12895 = vlaneseq
  %v12896 = vshrl.u32 %v12895, 7
  %v12897 = vsub.s32 %v12894, %v12896
  %v12898 = vrot.slane %v12888, %v12897
  %v12900 = vunpack.c.l.s4 1966171168
  %v12901 = vunpack.c.0.s8 %v12900
  %v12902 = vlaneseq
  %v12903 = vshrl.u32 %v12902, 7
  %v12904 = vsub.s32 %v12901, %v12903
  %v12905 = vrot.slane %v12889, %v12904
  %v12907 = vunpack.c.l.s4 1966171168
  %v12908 = vunpack.c.0.s8 %v12907
  %v12909 = vlaneseq
  %v12910 = vshrl.u32 %v12909, 7
  %v12911 = vsub.s32 %v12908, %v12910
  %v12912 = vrot.slane %v12890, %v12911
  %v12914 = vunpack.c.l.s4 1966171168
  %v12915 = vunpack.c.0.s8 %v12914
  %v12916 = vlaneseq
  %v12917 = vshrl.u32 %v12916, 7
  %v12918 = vsub.s32 %v12915, %v12917
  %v12919 = vrot.slane %v12891, %v12918
  %v12920 = vcombine.low %v12898, %v12905
  %v12921 = vcombine.low %v12912, %v12919
  %v12923 = vunpack.c.l.s4 1966171168
  %v12924 = vunpack.c.0.s8 %v12923
  %v12925 = vlaneseq
  %v12926 = vshrl.u32 %v12925, 7
  %v12927 = vsub.s32 %v12924, %v12926
  %v12928 = vrot.slane %v12920, %v12927
  %v12930 = vunpack.c.l.s4 1966171168
  %v12931 = vunpack.c.0.s8 %v12930
  %v12932 = vlaneseq
  %v12933 = vshrl.u32 %v12932, 7
  %v12934 = vsub.s32 %v12931, %v12933
  %v12935 = vrot.slane %v12921, %v12934
  %v12936 = vcombine.low %v12928, %v12935
  %v12937 = vcombine.low %v12768, %v12769
  %v12938 = vcombine.low %v12770, %v12771
  %v12939 = vcombine.low %v12772, %v12773
  %v12940 = vcombine.low %v12774, %v12775
  %v12942 = vunpack.c.l.s4 1966171168
  %v12943 = vunpack.c.0.s8 %v12942
  %v12944 = vlaneseq
  %v12945 = vshrl.u32 %v12944, 7
  %v12946 = vsub.s32 %v12943, %v12945
  %v12947 = vrot.slane %v12937, %v12946
  %v12949 = vunpack.c.l.s4 1966171168
  %v12950 = vunpack.c.0.s8 %v12949
  %v12951 = vlaneseq
  %v12952 = vshrl.u32 %v12951, 7
  %v12953 = vsub.s32 %v12950, %v12952
  %v12954 = vrot.slane %v12938, %v12953
  %v12956 = vunpack.c.l.s4 1966171168
  %v12957 = vunpack.c.0.s8 %v12956
  %v12958 = vlaneseq
  %v12959 = vshrl.u32 %v12958, 7
  %v12960 = vsub.s32 %v12957, %v12959
  %v12961 = vrot.slane %v12939, %v12960
  %v12963 = vunpack.c.l.s4 1966171168
  %v12964 = vunpack.c.0.s8 %v12963
  %v12965 = vlaneseq
  %v12966 = vshrl.u32 %v12965, 7
  %v12967 = vsub.s32 %v12964, %v12966
  %v12968 = vrot.slane %v12940, %v12967
  %v12969 = vcombine.low %v12947, %v12954
  %v12970 = vcombine.low %v12961, %v12968
  %v12972 = vunpack.c.l.s4 1966171168
  %v12973 = vunpack.c.0.s8 %v12972
  %v12974 = vlaneseq
  %v12975 = vshrl.u32 %v12974, 7
  %v12976 = vsub.s32 %v12973, %v12975
  %v12977 = vrot.slane %v12969, %v12976
  %v12979 = vunpack.c.l.s4 1966171168
  %v12980 = vunpack.c.0.s8 %v12979
  %v12981 = vlaneseq
  %v12982 = vshrl.u32 %v12981, 7
  %v12983 = vsub.s32 %v12980, %v12982
  %v12984 = vrot.slane %v12970, %v12983
  %v12985 = vcombine.low %v12977, %v12984
  %v12986 = vcombine.low %v12776, %v12777
  %v12987 = vcombine.low %v12778, %v12779
  %v12988 = vcombine.low %v12780, %v12781
  %v12989 = vcombine.low %v12782, %v12783
  %v12991 = vunpack.c.l.s4 1966171168
  %v12992 = vunpack.c.0.s8 %v12991
  %v12993 = vlaneseq
  %v12994 = vshrl.u32 %v12993, 7
  %v12995 = vsub.s32 %v12992, %v12994
  %v12996 = vrot.slane %v12986, %v12995
  %v12998 = vunpack.c.l.s4 1966171168
  %v12999 = vunpack.c.0.s8 %v12998
  %v13000 = vlaneseq
  %v13001 = vshrl.u32 %v13000, 7
  %v13002 = vsub.s32 %v12999, %v13001
  %v13003 = vrot.slane %v12987, %v13002
  %v13005 = vunpack.c.l.s4 1966171168
  %v13006 = vunpack.c.0.s8 %v13005
  %v13007 = vlaneseq
  %v13008 = vshrl.u32 %v13007, 7
  %v13009 = vsub.s32 %v13006, %v13008
  %v13010 = vrot.slane %v12988, %v13009
  %v13012 = vunpack.c.l.s4 1966171168
  %v13013 = vunpack.c.0.s8 %v13012
  %v13014 = vlaneseq
  %v13015 = vshrl.u32 %v13014, 7
  %v13016 = vsub.s32 %v13013, %v13015
  %v13017 = vrot.slane %v12989, %v13016
  %v13018 = vcombine.low %v12996, %v13003
  %v13019 = vcombine.low %v13010, %v13017
  %v13021 = vunpack.c.l.s4 1966171168
  %v13022 = vunpack.c.0.s8 %v13021
  %v13023 = vlaneseq
  %v13024 = vshrl.u32 %v13023, 7
  %v13025 = vsub.s32 %v13022, %v13024
  %v13026 = vrot.slane %v13018, %v13025
  %v13028 = vunpack.c.l.s4 1966171168
  %v13029 = vunpack.c.0.s8 %v13028
  %v13030 = vlaneseq
  %v13031 = vshrl.u32 %v13030, 7
  %v13032 = vsub.s32 %v13029, %v13031
  %v13033 = vrot.slane %v13019, %v13032
  %v13034 = vcombine.low %v13026, %v13033
  %v13035 = vcombine.low %v12784, %v12785
  %v13036 = vcombine.low %v12786, %v12787
  %v13037 = vcombine.low %v12788, %v12789
  %v13038 = vcombine.low %v12790, %v12791
  %v13040 = vunpack.c.l.s4 1966171168
  %v13041 = vunpack.c.0.s8 %v13040
  %v13042 = vlaneseq
  %v13043 = vshrl.u32 %v13042, 7
  %v13044 = vsub.s32 %v13041, %v13043
  %v13045 = vrot.slane %v13035, %v13044
  %v13047 = vunpack.c.l.s4 1966171168
  %v13048 = vunpack.c.0.s8 %v13047
  %v13049 = vlaneseq
  %v13050 = vshrl.u32 %v13049, 7
  %v13051 = vsub.s32 %v13048, %v13050
  %v13052 = vrot.slane %v13036, %v13051
  %v13054 = vunpack.c.l.s4 1966171168
  %v13055 = vunpack.c.0.s8 %v13054
  %v13056 = vlaneseq
  %v13057 = vshrl.u32 %v13056, 7
  %v13058 = vsub.s32 %v13055, %v13057
  %v13059 = vrot.slane %v13037, %v13058
  %v13061 = vunpack.c.l.s4 1966171168
  %v13062 = vunpack.c.0.s8 %v13061
  %v13063 = vlaneseq
  %v13064 = vshrl.u32 %v13063, 7
  %v13065 = vsub.s32 %v13062, %v13064
  %v13066 = vrot.slane %v13038, %v13065
  %v13067 = vcombine.low %v13045, %v13052
  %v13068 = vcombine.low %v13059, %v13066
  %v13070 = vunpack.c.l.s4 1966171168
  %v13071 = vunpack.c.0.s8 %v13070
  %v13072 = vlaneseq
  %v13073 = vshrl.u32 %v13072, 7
  %v13074 = vsub.s32 %v13071, %v13073
  %v13075 = vrot.slane %v13067, %v13074
  %v13077 = vunpack.c.l.s4 1966171168
  %v13078 = vunpack.c.0.s8 %v13077
  %v13079 = vlaneseq
  %v13080 = vshrl.u32 %v13079, 7
  %v13081 = vsub.s32 %v13078, %v13080
  %v13082 = vrot.slane %v13068, %v13081
  %v13083 = vcombine.low %v13075, %v13082
  %v13084 = vcombine.low %v12792, %v12793
  %v13085 = vcombine.low %v12794, %v12795
  %v13086 = vcombine.low %v12796, %v12797
  %v13087 = vcombine.low %v12798, %v12799
  %v13089 = vunpack.c.l.s4 1966171168
  %v13090 = vunpack.c.0.s8 %v13089
  %v13091 = vlaneseq
  %v13092 = vshrl.u32 %v13091, 7
  %v13093 = vsub.s32 %v13090, %v13092
  %v13094 = vrot.slane %v13084, %v13093
  %v13096 = vunpack.c.l.s4 1966171168
  %v13097 = vunpack.c.0.s8 %v13096
  %v13098 = vlaneseq
  %v13099 = vshrl.u32 %v13098, 7
  %v13100 = vsub.s32 %v13097, %v13099
  %v13101 = vrot.slane %v13085, %v13100
  %v13103 = vunpack.c.l.s4 1966171168
  %v13104 = vunpack.c.0.s8 %v13103
  %v13105 = vlaneseq
  %v13106 = vshrl.u32 %v13105, 7
  %v13107 = vsub.s32 %v13104, %v13106
  %v13108 = vrot.slane %v13086, %v13107
  %v13110 = vunpack.c.l.s4 1966171168
  %v13111 = vunpack.c.0.s8 %v13110
  %v13112 = vlaneseq
  %v13113 = vshrl.u32 %v13112, 7
  %v13114 = vsub.s32 %v13111, %v13113
  %v13115 = vrot.slane %v13087, %v13114
  %v13116 = vcombine.low %v13094, %v13101
  %v13117 = vcombine.low %v13108, %v13115
  %v13119 = vunpack.c.l.s4 1966171168
  %v13120 = vunpack.c.0.s8 %v13119
  %v13121 = vlaneseq
  %v13122 = vshrl.u32 %v13121, 7
  %v13123 = vsub.s32 %v13120, %v13122
  %v13124 = vrot.slane %v13116, %v13123
  %v13126 = vunpack.c.l.s4 1966171168
  %v13127 = vunpack.c.0.s8 %v13126
  %v13128 = vlaneseq
  %v13129 = vshrl.u32 %v13128, 7
  %v13130 = vsub.s32 %v13127, %v13129
  %v13131 = vrot.slane %v13117, %v13130
  %v13132 = vcombine.low %v13124, %v13131
  %v13133 = vcombine.low %v12800, %v12801
  %v13134 = vcombine.low %v12802, %v12803
  %v13135 = vcombine.low %v12804, %v12805
  %v13136 = vcombine.low %v12806, %v12807
  %v13138 = vunpack.c.l.s4 1966171168
  %v13139 = vunpack.c.0.s8 %v13138
  %v13140 = vlaneseq
  %v13141 = vshrl.u32 %v13140, 7
  %v13142 = vsub.s32 %v13139, %v13141
  %v13143 = vrot.slane %v13133, %v13142
  %v13145 = vunpack.c.l.s4 1966171168
  %v13146 = vunpack.c.0.s8 %v13145
  %v13147 = vlaneseq
  %v13148 = vshrl.u32 %v13147, 7
  %v13149 = vsub.s32 %v13146, %v13148
  %v13150 = vrot.slane %v13134, %v13149
  %v13152 = vunpack.c.l.s4 1966171168
  %v13153 = vunpack.c.0.s8 %v13152
  %v13154 = vlaneseq
  %v13155 = vshrl.u32 %v13154, 7
  %v13156 = vsub.s32 %v13153, %v13155
  %v13157 = vrot.slane %v13135, %v13156
  %v13159 = vunpack.c.l.s4 1966171168
  %v13160 = vunpack.c.0.s8 %v13159
  %v13161 = vlaneseq
  %v13162 = vshrl.u32 %v13161, 7
  %v13163 = vsub.s32 %v13160, %v13162
  %v13164 = vrot.slane %v13136, %v13163
  %v13165 = vcombine.low %v13143, %v13150
  %v13166 = vcombine.low %v13157, %v13164
  %v13168 = vunpack.c.l.s4 1966171168
  %v13169 = vunpack.c.0.s8 %v13168
  %v13170 = vlaneseq
  %v13171 = vshrl.u32 %v13170, 7
  %v13172 = vsub.s32 %v13169, %v13171
  %v13173 = vrot.slane %v13165, %v13172
  %v13175 = vunpack.c.l.s4 1966171168
  %v13176 = vunpack.c.0.s8 %v13175
  %v13177 = vlaneseq
  %v13178 = vshrl.u32 %v13177, 7
  %v13179 = vsub.s32 %v13176, %v13178
  %v13180 = vrot.slane %v13166, %v13179
  %v13181 = vcombine.low %v13173, %v13180
  %v13182 = vcombine.low %v12808, %v12809
  %v13183 = vcombine.low %v12810, %v12811
  %v13184 = vcombine.low %v12812, %v12813
  %v13185 = vcombine.low %v12814, %v12815
  %v13187 = vunpack.c.l.s4 1966171168
  %v13188 = vunpack.c.0.s8 %v13187
  %v13189 = vlaneseq
  %v13190 = vshrl.u32 %v13189, 7
  %v13191 = vsub.s32 %v13188, %v13190
  %v13192 = vrot.slane %v13182, %v13191
  %v13194 = vunpack.c.l.s4 1966171168
  %v13195 = vunpack.c.0.s8 %v13194
  %v13196 = vlaneseq
  %v13197 = vshrl.u32 %v13196, 7
  %v13198 = vsub.s32 %v13195, %v13197
  %v13199 = vrot.slane %v13183, %v13198
  %v13201 = vunpack.c.l.s4 1966171168
  %v13202 = vunpack.c.0.s8 %v13201
  %v13203 = vlaneseq
  %v13204 = vshrl.u32 %v13203, 7
  %v13205 = vsub.s32 %v13202, %v13204
  %v13206 = vrot.slane %v13184, %v13205
  %v13208 = vunpack.c.l.s4 1966171168
  %v13209 = vunpack.c.0.s8 %v13208
  %v13210 = vlaneseq
  %v13211 = vshrl.u32 %v13210, 7
  %v13212 = vsub.s32 %v13209, %v13211
  %v13213 = vrot.slane %v13185, %v13212
  %v13214 = vcombine.low %v13192, %v13199
  %v13215 = vcombine.low %v13206, %v13213
  %v13217 = vunpack.c.l.s4 1966171168
  %v13218 = vunpack.c.0.s8 %v13217
  %v13219 = vlaneseq
  %v13220 = vshrl.u32 %v13219, 7
  %v13221 = vsub.s32 %v13218, %v13220
  %v13222 = vrot.slane %v13214, %v13221
  %v13224 = vunpack.c.l.s4 1966171168
  %v13225 = vunpack.c.0.s8 %v13224
  %v13226 = vlaneseq
  %v13227 = vshrl.u32 %v13226, 7
  %v13228 = vsub.s32 %v13225, %v13227
  %v13229 = vrot.slane %v13215, %v13228
  %v13230 = vcombine.low %v13222, %v13229
  %v13231 = vcombine.low %v12816, %v12817
  %v13232 = vcombine.low %v12818, %v12819
  %v13233 = vcombine.low %v12820, %v12821
  %v13234 = vcombine.low %v12822, %v12823
  %v13236 = vunpack.c.l.s4 1966171168
  %v13237 = vunpack.c.0.s8 %v13236
  %v13238 = vlaneseq
  %v13239 = vshrl.u32 %v13238, 7
  %v13240 = vsub.s32 %v13237, %v13239
  %v13241 = vrot.slane %v13231, %v13240
  %v13243 = vunpack.c.l.s4 1966171168
  %v13244 = vunpack.c.0.s8 %v13243
  %v13245 = vlaneseq
  %v13246 = vshrl.u32 %v13245, 7
  %v13247 = vsub.s32 %v13244, %v13246
  %v13248 = vrot.slane %v13232, %v13247
  %v13250 = vunpack.c.l.s4 1966171168
  %v13251 = vunpack.c.0.s8 %v13250
  %v13252 = vlaneseq
  %v13253 = vshrl.u32 %v13252, 7
  %v13254 = vsub.s32 %v13251, %v13253
  %v13255 = vrot.slane %v13233, %v13254
  %v13257 = vunpack.c.l.s4 1966171168
  %v13258 = vunpack.c.0.s8 %v13257
  %v13259 = vlaneseq
  %v13260 = vshrl.u32 %v13259, 7
  %v13261 = vsub.s32 %v13258, %v13260
  %v13262 = vrot.slane %v13234, %v13261
  %v13263 = vcombine.low %v13241, %v13248
  %v13264 = vcombine.low %v13255, %v13262
  %v13266 = vunpack.c.l.s4 1966171168
  %v13267 = vunpack.c.0.s8 %v13266
  %v13268 = vlaneseq
  %v13269 = vshrl.u32 %v13268, 7
  %v13270 = vsub.s32 %v13267, %v13269
  %v13271 = vrot.slane %v13263, %v13270
  %v13273 = vunpack.c.l.s4 1966171168
  %v13274 = vunpack.c.0.s8 %v13273
  %v13275 = vlaneseq
  %v13276 = vshrl.u32 %v13275, 7
  %v13277 = vsub.s32 %v13274, %v13276
  %v13278 = vrot.slane %v13264, %v13277
  %v13279 = vcombine.low %v13271, %v13278
  %13288 = vst [vmem:[%s7] sm:$0xff] %v12936
  %13289 = vst [vmem:[%s7 + $0x8] sm:$0xff] %v12985
  %13290 = vst [vmem:[%s7 + $0x10] sm:$0xff] %v13034
  %13291 = vst [vmem:[%s7 + $0x18] sm:$0xff] %v13083
  %13292 = vst [vmem:[%s7 + $0x20] sm:$0xff] %v13132
  %13293 = vst [vmem:[%s7 + $0x28] sm:$0xff] %v13181
  %13294 = vst [vmem:[%s7 + $0x30] sm:$0xff] %v13230
  %13295 = vst [vmem:[%s7 + $0x38] sm:$0xff] %v13279
  // Predicated region
  $region30: #{simple_nn_forward.1} parent=0 // pred_check
    _
  $region31: #{simple_nn_forward.1} parent=0 // pred_check_branch
    %13297 = sbr.rel (0) target = $region33
  $region32: #{simple_nn_forward.1} parent=0 // pred_region
    _
  $region33: #{simple_nn_forward.1} parent=0 // pred_fallthru
    _
  // Predicated region
  $region34: #{simple_nn_forward.1} parent=0 // pred_check
    _
  $region35: #{simple_nn_forward.1} parent=0 // pred_check_branch
    %13299 = sbr.rel (0) target = $region37
  $region36: #{simple_nn_forward.1} parent=0 // pred_region
    _
  $region37: #{simple_nn_forward.1} parent=0 // pred_fallthru
    _

</llo_original>
